<compile_context>
chip_gen: v5e
topology: v5e:2x2
jax: 0.10.0
libtpu: 0.0.40
codegen_flags: <defaults>
</compile_context>

<pallas_src>
import jax
import jax.numpy as jnp
from jax import lax
from jax.experimental import pallas as pl
from jax.experimental.pallas import tpu as pltpu

BN_EPS = 1e-5
NEG_SLOPE = 0.2

_VMEM = pl.BlockSpec(memory_space=pltpu.MemorySpace.VMEM)


# ----------------------------------------------------------------------------
# Pallas kernel: fused [pre-activation -> (phased) matmul -> bias -> BN -> tanh]
# ----------------------------------------------------------------------------
def _make_conv_kernel(n_phase, pre, has_bias, has_bn, post):
    def kernel(*refs):
        x_ref, w_ref = refs[0], refs[1]
        i = 2
        b_ref = None
        if has_bias:
            b_ref = refs[i]
            i += 1
        g_ref = beta_ref = None
        if has_bn:
            g_ref, beta_ref = refs[i], refs[i + 1]
            i += 2
        o_ref = refs[-1]

        # (K, M) f32 patches; pre-activation in f32 (act(0)==0 so zero padding
        # inside the patches stays exact), then cast to bf16 for the MXU.
        x = x_ref[...]
        if pre == "leaky":
            x = jnp.where(x >= 0, x, NEG_SLOPE * x)
        elif pre == "relu":
            x = jnp.maximum(x, 0.0)
        xb = x.astype(jnp.bfloat16)

        m = x_ref.shape[1]
        for p in range(n_phase):  # n_phase = 1 (conv) or 4 (transposed conv)
            y = jnp.dot(w_ref[p], xb, preferred_element_type=jnp.float32)
            if has_bias:
                y = y + b_ref[...]
            if post == "tanh":
                y = jnp.tanh(y)
            o_ref[:, p * m:(p + 1) * m] = y

        if has_bn:
            # Train-mode BatchNorm2d over all N*H*W samples, folded scale/shift.
            y = o_ref[...]                                    # (Cout, n_phase*M) f32
            mean = jnp.mean(y, axis=1, keepdims=True)
            var = jnp.mean((y - mean) * (y - mean), axis=1, keepdims=True)
            scale = g_ref[...] * lax.rsqrt(var + BN_EPS)
            shift = beta_ref[...] - mean * scale
            o_ref[...] = y * scale + shift

    return kernel


def _conv_pallas(patches, w_eff, pre, bias=None, bn=None, post=None):
    n_phase, cout, _ = w_eff.shape
    m = patches.shape[1]
    args = [patches, w_eff]
    if bias is not None:
        args.append(bias.reshape(cout, 1).astype(jnp.float32))
    if bn is not None:
        args.append(bn[0].reshape(cout, 1).astype(jnp.float32))
        args.append(bn[1].reshape(cout, 1).astype(jnp.float32))
    kernel = _make_conv_kernel(n_phase, pre, bias is not None, bn is not None, post)
    return pl.pallas_call(
        kernel,
        out_shape=jax.ShapeDtypeStruct((cout, n_phase * m), jnp.float32),
        in_specs=[_VMEM] * len(args),
        out_specs=_VMEM,
    )(*args)


# ----------------------------------------------------------------------------
# Wrapper-side patch extraction / phase interleave (pure data movement)
# ----------------------------------------------------------------------------
def _im2col_down(x):
    # x: (C, B, H, W) -> (16*C, B*(H//2)*(W//2)); rows ordered (ci, kh*4+kw)
    c, b, h, w = x.shape
    ho, wo = h // 2, w // 2
    xp = jnp.pad(x, ((0, 0), (0, 0), (1, 1), (1, 1)))
    taps = []
    for kh in range(4):
        for kw in range(4):
            taps.append(xp[:, :, kh::2, kw::2][:, :, :ho, :wo])
    return jnp.stack(taps, axis=1).reshape(c * 16, b * ho * wo)


def _im2col_up(x):
    # x: (C, B, H, W) -> (9*C, B*H*W); rows ordered (ci, dy*3+dx), unit stride
    c, b, h, w = x.shape
    xp = jnp.pad(x, ((0, 0), (0, 0), (1, 1), (1, 1)))
    taps = []
    for dy in range(3):
        for dx in range(3):
            taps.append(xp[:, :, dy:dy + h, dx:dx + w])
    return jnp.stack(taps, axis=1).reshape(c * 9, b * h * w)


def _up_weight_phases(wt):
    # PyTorch ConvTranspose2d weight (Cin, Cout, 4, 4) -> (4, Cout, 9*Cin) bf16.
    # Phase p = r*2+c produces output pixels (2i+r, 2j+c); tap (dy, dx) reads the
    # 1-padded input at (i+dy, j+dx) with kernel index (3-2dy+r, 3-2dx+c).
    cin, cout = wt.shape[0], wt.shape[1]
    zero = jnp.zeros((cout, cin), jnp.float32)
    phases = []
    for r in range(2):
        for c in range(2):
            taps = []
            for dy in range(3):
                for dx in range(3):
                    if (dy - r) in (0, 1) and (dx - c) in (0, 1):
                        kh = 3 - 2 * dy + r
                        kw = 3 - 2 * dx + c
                        taps.append(jnp.transpose(wt[:, :, kh, kw]))
                    else:
                        taps.append(zero)
            phases.append(jnp.stack(taps, axis=-1).reshape(cout, cin * 9))
    return jnp.stack(phases, axis=0).astype(jnp.bfloat16)


def _down_layer(x, w, pre, bn=None):
    # x: (C, B, H, W); w: PyTorch Conv2d weight (Cout, Cin, 4, 4); stride 2, pad 1
    c, b, h, wd = x.shape
    cout = w.shape[0]
    patches = _im2col_down(x)
    w_eff = w.reshape(cout, c * 16)[None, :, :].astype(jnp.bfloat16)
    out = _conv_pallas(patches, w_eff, pre, bn=bn)
    return out.reshape(cout, b, h // 2, wd // 2)


def _up_layer(x, wt, pre, bn=None, bias=None, post=None):
    # x: (C, B, H, W); wt: PyTorch ConvTranspose2d weight (Cin, Cout, 4, 4)
    c, b, h, wd = x.shape
    cout = wt.shape[1]
    patches = _im2col_up(x)
    w_eff = _up_weight_phases(wt)
    out = _conv_pallas(patches, w_eff, pre, bias=bias, bn=bn, post=post)
    out = out.reshape(cout, 2, 2, b, h, wd)          # (Cout, r, c, B, H, W)
    out = jnp.transpose(out, (0, 3, 4, 1, 5, 2))     # (Cout, B, H, r, W, c)
    return out.reshape(cout, b, 2 * h, 2 * wd)


# ----------------------------------------------------------------------------
# Full UnetGenerator forward (Pallas)
# ----------------------------------------------------------------------------
def unet_forward(x_nchw, params):
    downs, ups = params["down"], params["up"]
    nd = len(downs)
    x = jnp.transpose(x_nchw, (1, 0, 2, 3))          # (C, B, H, W)

    feats = []
    h = x
    for i, layer in enumerate(downs):
        pre = None if i == 0 else "leaky"
        bn = (layer["gamma"], layer["beta"]) if "gamma" in layer else None
        h = _down_layer(h, layer["w"], pre=pre, bn=bn)
        feats.append(h)

    u = None
    for j, layer in enumerate(ups):
        inp = feats[nd - 1] if j == 0 else jnp.concatenate([feats[nd - 1 - j], u], axis=0)
        bn = (layer["gamma"], layer["beta"]) if "gamma" in layer else None
        bias = layer.get("bias")
        post = "tanh" if j == nd - 1 else None
        u = _up_layer(inp, layer["w"], pre="relu", bn=bn, bias=bias, post=post)

    return jnp.transpose(u, (1, 0, 2, 3))            # back to NCHW


# ----------------------------------------------------------------------------
# Parameters (PyTorch layouts), matching the recursive UnetSkipConnectionBlock
# construction with norm_layer=BatchNorm2d (=> conv/convT bias=False except the
# outermost ConvTranspose2d which keeps its default bias=True).
# ----------------------------------------------------------------------------
def init_params(key, input_nc=3, output_nc=3, num_downs=5, ngf=8):
    assert num_downs >= 5
    down_io = [(input_nc, ngf, False)]
    for i in range(1, num_downs):
        if i < 4:
            cin, cout = ngf * (2 ** (i - 1)), ngf * (2 ** i)
        else:
            cin = cout = ngf * 8
        down_io.append((cin, cout, i != num_downs - 1))

    up_io = []
    for j in range(num_downs):
        if j == 0:
            cin, cout = ngf * 8, ngf * 8
        elif j <= num_downs - 5:
            cin, cout = ngf * 16, ngf * 8
        elif j == num_downs - 4:
            cin, cout = ngf * 16, ngf * 4
        elif j == num_downs - 3:
            cin, cout = ngf * 8, ngf * 2
        elif j == num_downs - 2:
            cin, cout = ngf * 4, ngf
        else:
            cin, cout = ngf * 2, output_nc
        up_io.append((cin, cout, j != num_downs - 1))

    keys = jax.random.split(key, 2 * num_downs)
    down = []
    for i, (cin, cout, has_bn) in enumerate(down_io):
        kw, kg, kb = jax.random.split(keys[i], 3)
        layer = {"w": jax.random.normal(kw, (cout, cin, 4, 4), jnp.float32)
                      * (0.5 / (cin * 16) ** 0.5)}
        if has_bn:
            layer["gamma"] = 1.0 + 0.1 * jax.random.normal(kg, (cout,), jnp.float32)
            layer["beta"] = 0.1 * jax.random.normal(kb, (cout,), jnp.float32)
        down.append(layer)

    up = []
    for j, (cin, cout, has_bn) in enumerate(up_io):
        kw, kg, kb = jax.random.split(keys[num_downs + j], 3)
        layer = {"w": jax.random.normal(kw, (cin, cout, 4, 4), jnp.float32)
                      * (0.5 / (cin * 16) ** 0.5)}
        if has_bn:
            layer["gamma"] = 1.0 + 0.1 * jax.random.normal(kg, (cout,), jnp.float32)
            layer["beta"] = 0.1 * jax.random.normal(kb, (cout,), jnp.float32)
        else:
            layer["bias"] = 0.1 * jax.random.normal(kg, (cout,), jnp.float32)
        up.append(layer)

    return {"down": down, "up": up}


# ----------------------------------------------------------------------------
# Pure-JAX reference (lax convolutions, same bf16 operand rounding)
# ----------------------------------------------------------------------------
def _leaky_ref(x):
    return jnp.where(x >= 0, x, NEG_SLOPE * x)


def _relu_ref(x):
    return jnp.maximum(x, 0.0)


def _ref_down(x, w):
    return lax.conv_general_dilated(
        x.astype(jnp.bfloat16), w.astype(jnp.bfloat16),
        window_strides=(2, 2), padding=((1, 1), (1, 1)),
        dimension_numbers=("NCHW", "OIHW", "NCHW"),
        preferred_element_type=jnp.float32)


def _ref_up(x, wt):
    wc = jnp.transpose(wt, (1, 0, 2, 3))[:, :, ::-1, ::-1]
    return lax.conv_general_dilated(
        x.astype(jnp.bfloat16), wc.astype(jnp.bfloat16),
        window_strides=(1, 1), padding=((2, 2), (2, 2)),
        lhs_dilation=(2, 2),
        dimension_numbers=("NCHW", "OIHW", "NCHW"),
        preferred_element_type=jnp.float32)


def _ref_bn(x, gamma, beta):
    mean = jnp.mean(x, axis=(0, 2, 3), keepdims=True)
    var = jnp.mean((x - mean) ** 2, axis=(0, 2, 3), keepdims=True)
    xn = (x - mean) * lax.rsqrt(var + BN_EPS)
    return xn * gamma.reshape(1, -1, 1, 1) + beta.reshape(1, -1, 1, 1)


def reference_forward(x_nchw, params):
    downs, ups = params["down"], params["up"]
    nd = len(downs)
    feats = []
    h = x_nchw
    for i, layer in enumerate(downs):
        if i > 0:
            h = _leaky_ref(h)
        h = _ref_down(h, layer["w"])
        if "gamma" in layer:
            h = _ref_bn(h, layer["gamma"], layer["beta"])
        feats.append(h)

    u = None
    for j, layer in enumerate(ups):
        inp = feats[nd - 1] if j == 0 else jnp.concatenate([feats[nd - 1 - j], u], axis=1)
        h = _ref_up(_relu_ref(inp), layer["w"])
        if "bias" in layer:
            h = h + layer["bias"].reshape(1, -1, 1, 1)
        if "gamma" in layer:
            h = _ref_bn(h, layer["gamma"], layer["beta"])
        if j == nd - 1:
            h = jnp.tanh(h)
        u = h
    return u


# ----------------------------------------------------------------------------
if __name__ == "__main__":
    B, Cin, H, W = 2, 3, 32, 32        # num_downs=5 needs 32x32 to reach a 1x1 bottleneck
    output_nc, num_downs, ngf = 3, 5, 8

    key = jax.random.PRNGKey(0)
    kx, kp = jax.random.split(key)
    x = jax.random.normal(kx, (B, Cin, H, W), jnp.float32)
    params = init_params(kp, input_nc=Cin, output_nc=output_nc,
                         num_downs=num_downs, ngf=ngf)

    out = jax.jit(unet_forward)(x, params)
    out = jax.block_until_ready(out)
    assert out.shape == (B, output_nc, H, W), out.shape

    ref = jax.block_until_ready(jax.jit(reference_forward)(x, params))
    assert bool(jnp.all(jnp.isfinite(out)))
    max_diff = float(jnp.max(jnp.abs(out - ref)))
    assert jnp.allclose(out, ref, atol=1e-2, rtol=1e-2), max_diff

    print("KERNEL_OK")
</pallas_src>

<mosaic_0001>
module attributes {stable_mosaic.version = 11 : i64} {
  func.func @kernel(%arg0: memref<48x512xf32, #tpu.memory_space<vmem>>, %arg1: memref<1x8x48xbf16, #tpu.memory_space<vmem>>, %arg2: memref<8x512xf32, #tpu.memory_space<vmem>>) attributes {dimension_semantics = [], scalar_prefetch = 0 : i64, scratch_operands = 0 : i64, tpu.core_type = #tpu.core_type<tc>} {
    %c0 = arith.constant 0 : index
    %c0_0 = arith.constant 0 : index
    %0 = vector.load %arg0[%c0, %c0_0] : memref<48x512xf32, #tpu.memory_space<vmem>>, vector<48x512xf32>
    %1 = arith.truncf %0 : vector<48x512xf32> to vector<48x512xbf16>
    %c0_1 = arith.constant 0 : index
    %c0_2 = arith.constant 0 : index
    %c0_3 = arith.constant 0 : index
    %2 = vector.load %arg1[%c0_1, %c0_2, %c0_3] : memref<1x8x48xbf16, #tpu.memory_space<vmem>>, vector<1x8x48xbf16>
    %3 = vector.shape_cast %2 : vector<1x8x48xbf16> to vector<8x48xbf16>
    %cst = arith.constant dense<0.000000e+00> : vector<8x512xf32>
    %4 = tpu.matmul %3, %1, %cst {dimension_numbers = #tpu.dot_dimension_numbers<[1], [0], [0], [1], [0, 0, 1, 1], [], []>} : vector<8x48xbf16>, vector<48x512xbf16>, vector<8x512xf32> -> vector<8x512xf32>
    %c0_4 = arith.constant 0 : index
    %c0_5 = arith.constant 0 : index
    %5 = vector.load %arg2[%c0_4, %c0_5] : memref<8x512xf32, #tpu.memory_space<vmem>>, vector<8x512xf32>
    tpu.vector_store %arg2[%c0_4, %c0_5], %4 {strides = array<i32>} : memref<8x512xf32, #tpu.memory_space<vmem>>, vector<8x512xf32>,
    return
  }
}

module attributes {stable_mosaic.version = 11 : i64} {
  func.func @kernel(%arg0: memref<128x128xf32, #tpu.memory_space<vmem>>, %arg1: memref<1x16x128xbf16, #tpu.memory_space<vmem>>, %arg2: memref<16x1xf32, #tpu.memory_space<vmem>>, %arg3: memref<16x1xf32, #tpu.memory_space<vmem>>, %arg4: memref<16x128xf32, #tpu.memory_space<vmem>>) attributes {dimension_semantics = [], scalar_prefetch = 0 : i64, scratch_operands = 0 : i64, tpu.core_type = #tpu.core_type<tc>} {
    %c0 = arith.constant 0 : index
    %c0_0 = arith.constant 0 : index
    %0 = vector.load %arg0[%c0, %c0_0] : memref<128x128xf32, #tpu.memory_space<vmem>>, vector<128x128xf32>
    %cst = arith.constant 0.000000e+00 : f32
    %1 = vector.broadcast %cst : f32 to vector<128x128xf32>
    %2 = arith.cmpf oge, %0, %1 : vector<128x128xf32>
    %cst_1 = arith.constant 2.000000e-01 : f32
    %3 = vector.broadcast %cst_1 : f32 to vector<128x128xf32>
    %4 = arith.mulf %3, %0 : vector<128x128xf32>
    %5 = arith.select %2, %0, %4 : vector<128x128xi1>, vector<128x128xf32>
    %6 = arith.truncf %5 : vector<128x128xf32> to vector<128x128xbf16>
    %c0_2 = arith.constant 0 : index
    %c0_3 = arith.constant 0 : index
    %c0_4 = arith.constant 0 : index
    %7 = vector.load %arg1[%c0_2, %c0_3, %c0_4] : memref<1x16x128xbf16, #tpu.memory_space<vmem>>, vector<1x16x128xbf16>
    %8 = vector.shape_cast %7 : vector<1x16x128xbf16> to vector<16x128xbf16>
    %cst_5 = arith.constant dense<0.000000e+00> : vector<16x128xf32>
    %9 = tpu.matmul %8, %6, %cst_5 {dimension_numbers = #tpu.dot_dimension_numbers<[1], [0], [0], [1], [0, 0, 1, 1], [], []>} : vector<16x128xbf16>, vector<128x128xbf16>, vector<16x128xf32> -> vector<16x128xf32>
    %c0_6 = arith.constant 0 : index
    %c0_7 = arith.constant 0 : index
    %10 = vector.load %arg4[%c0_6, %c0_7] : memref<16x128xf32, #tpu.memory_space<vmem>>, vector<16x128xf32>
    tpu.vector_store %arg4[%c0_6, %c0_7], %9 {strides = array<i32>} : memref<16x128xf32, #tpu.memory_space<vmem>>, vector<16x128xf32>,
    %c0_8 = arith.constant 0 : index
    %c0_9 = arith.constant 0 : index
    %11 = vector.load %arg4[%c0_8, %c0_9] : memref<16x128xf32, #tpu.memory_space<vmem>>, vector<16x128xf32>
    %cst_10 = arith.constant dense<0.000000e+00> : vector<16xf32>
    %12 = vector.multi_reduction <add>, %11, %cst_10 [1] : vector<16x128xf32> to vector<16xf32>
    %13 = vector.shape_cast %12 : vector<16xf32> to vector<16x1xf32>
    %cst_11 = arith.constant 1.280000e+02 : f32
    %14 = vector.broadcast %cst_11 : f32 to vector<16x1xf32>
    %15 = arith.divf %13, %14 : vector<16x1xf32>
    %16 = vector.broadcast %15 : vector<16x1xf32> to vector<16x128xf32>
    %17 = arith.subf %11, %16 : vector<16x128xf32>
    %18 = vector.broadcast %15 : vector<16x1xf32> to vector<16x128xf32>
    %19 = arith.subf %11, %18 : vector<16x128xf32>
    %20 = arith.mulf %17, %19 : vector<16x128xf32>
    %cst_12 = arith.constant dense<0.000000e+00> : vector<16xf32>
    %21 = vector.multi_reduction <add>, %20, %cst_12 [1] : vector<16x128xf32> to vector<16xf32>
    %22 = vector.shape_cast %21 : vector<16xf32> to vector<16x1xf32>
    %cst_13 = arith.constant 1.280000e+02 : f32
    %23 = vector.broadcast %cst_13 : f32 to vector<16x1xf32>
    %24 = arith.divf %22, %23 : vector<16x1xf32>
    %c0_14 = arith.constant 0 : index
    %c0_15 = arith.constant 0 : index
    %25 = vector.load %arg2[%c0_14, %c0_15] : memref<16x1xf32, #tpu.memory_space<vmem>>, vector<16x1xf32>
    %cst_16 = arith.constant 9.99999974E-6 : f32
    %26 = vector.broadcast %cst_16 : f32 to vector<16x1xf32>
    %27 = arith.addf %24, %26 : vector<16x1xf32>
    %28 = math.rsqrt %27 : vector<16x1xf32>
    %29 = arith.mulf %25, %28 : vector<16x1xf32>
    %c0_17 = arith.constant 0 : index
    %c0_18 = arith.constant 0 : index
    %30 = vector.load %arg3[%c0_17, %c0_18] : memref<16x1xf32, #tpu.memory_space<vmem>>, vector<16x1xf32>
    %31 = arith.mulf %15, %29 : vector<16x1xf32>
    %32 = arith.subf %30, %31 : vector<16x1xf32>
    %33 = vector.broadcast %29 : vector<16x1xf32> to vector<16x128xf32>
    %34 = arith.mulf %11, %33 : vector<16x128xf32>
    %35 = vector.broadcast %32 : vector<16x1xf32> to vector<16x128xf32>
    %36 = arith.addf %34, %35 : vector<16x128xf32>
    %c0_19 = arith.constant 0 : index
    %c0_20 = arith.constant 0 : index
    %37 = vector.load %arg4[%c0_19, %c0_20] : memref<16x128xf32, #tpu.memory_space<vmem>>, vector<16x128xf32>
    tpu.vector_store %arg4[%c0_19, %c0_20], %36 {strides = array<i32>} : memref<16x128xf32, #tpu.memory_space<vmem>>, vector<16x128xf32>,
    return
  }
}

module attributes {stable_mosaic.version = 11 : i64} {
  func.func @kernel(%arg0: memref<256x32xf32, #tpu.memory_space<vmem>>, %arg1: memref<1x32x256xbf16, #tpu.memory_space<vmem>>, %arg2: memref<32x1xf32, #tpu.memory_space<vmem>>, %arg3: memref<32x1xf32, #tpu.memory_space<vmem>>, %arg4: memref<32x32xf32, #tpu.memory_space<vmem>>) attributes {dimension_semantics = [], scalar_prefetch = 0 : i64, scratch_operands = 0 : i64, tpu.core_type = #tpu.core_type<tc>} {
    %c0 = arith.constant 0 : index
    %c0_0 = arith.constant 0 : index
    %0 = vector.load %arg0[%c0, %c0_0] : memref<256x32xf32, #tpu.memory_space<vmem>>, vector<256x32xf32>
    %cst = arith.constant 0.000000e+00 : f32
    %1 = vector.broadcast %cst : f32 to vector<256x32xf32>
    %2 = arith.cmpf oge, %0, %1 : vector<256x32xf32>
    %cst_1 = arith.constant 2.000000e-01 : f32
    %3 = vector.broadcast %cst_1 : f32 to vector<256x32xf32>
    %4 = arith.mulf %3, %0 : vector<256x32xf32>
    %5 = arith.select %2, %0, %4 : vector<256x32xi1>, vector<256x32xf32>
    %6 = arith.truncf %5 : vector<256x32xf32> to vector<256x32xbf16>
    %c0_2 = arith.constant 0 : index
    %c0_3 = arith.constant 0 : index
    %c0_4 = arith.constant 0 : index
    %7 = vector.load %arg1[%c0_2, %c0_3, %c0_4] : memref<1x32x256xbf16, #tpu.memory_space<vmem>>, vector<1x32x256xbf16>
    %8 = vector.shape_cast %7 : vector<1x32x256xbf16> to vector<32x256xbf16>
    %cst_5 = arith.constant dense<0.000000e+00> : vector<32x32xf32>
    %9 = tpu.matmul %8, %6, %cst_5 {dimension_numbers = #tpu.dot_dimension_numbers<[1], [0], [0], [1], [0, 0, 1, 1], [], []>} : vector<32x256xbf16>, vector<256x32xbf16>, vector<32x32xf32> -> vector<32x32xf32>
    %c0_6 = arith.constant 0 : index
    %c0_7 = arith.constant 0 : index
    %10 = vector.load %arg4[%c0_6, %c0_7] : memref<32x32xf32, #tpu.memory_space<vmem>>, vector<32x32xf32>
    tpu.vector_store %arg4[%c0_6, %c0_7], %9 {strides = array<i32>} : memref<32x32xf32, #tpu.memory_space<vmem>>, vector<32x32xf32>,
    %c0_8 = arith.constant 0 : index
    %c0_9 = arith.constant 0 : index
    %11 = vector.load %arg4[%c0_8, %c0_9] : memref<32x32xf32, #tpu.memory_space<vmem>>, vector<32x32xf32>
    %cst_10 = arith.constant dense<0.000000e+00> : vector<32xf32>
    %12 = vector.multi_reduction <add>, %11, %cst_10 [1] : vector<32x32xf32> to vector<32xf32>
    %13 = vector.shape_cast %12 : vector<32xf32> to vector<32x1xf32>
    %cst_11 = arith.constant 3.200000e+01 : f32
    %14 = vector.broadcast %cst_11 : f32 to vector<32x1xf32>
    %15 = arith.divf %13, %14 : vector<32x1xf32>
    %16 = vector.broadcast %15 : vector<32x1xf32> to vector<32x32xf32>
    %17 = arith.subf %11, %16 : vector<32x32xf32>
    %18 = vector.broadcast %15 : vector<32x1xf32> to vector<32x32xf32>
    %19 = arith.subf %11, %18 : vector<32x32xf32>
    %20 = arith.mulf %17, %19 : vector<32x32xf32>
    %cst_12 = arith.constant dense<0.000000e+00> : vector<32xf32>
    %21 = vector.multi_reduction <add>, %20, %cst_12 [1] : vector<32x32xf32> to vector<32xf32>
    %22 = vector.shape_cast %21 : vector<32xf32> to vector<32x1xf32>
    %cst_13 = arith.constant 3.200000e+01 : f32
    %23 = vector.broadcast %cst_13 : f32 to vector<32x1xf32>
    %24 = arith.divf %22, %23 : vector<32x1xf32>
    %c0_14 = arith.constant 0 : index
    %c0_15 = arith.constant 0 : index
    %25 = vector.load %arg2[%c0_14, %c0_15] : memref<32x1xf32, #tpu.memory_space<vmem>>, vector<32x1xf32>
    %cst_16 = arith.constant 9.99999974E-6 : f32
    %26 = vector.broadcast %cst_16 : f32 to vector<32x1xf32>
    %27 = arith.addf %24, %26 : vector<32x1xf32>
    %28 = math.rsqrt %27 : vector<32x1xf32>
    %29 = arith.mulf %25, %28 : vector<32x1xf32>
    %c0_17 = arith.constant 0 : index
    %c0_18 = arith.constant 0 : index
    %30 = vector.load %arg3[%c0_17, %c0_18] : memref<32x1xf32, #tpu.memory_space<vmem>>, vector<32x1xf32>
    %31 = arith.mulf %15, %29 : vector<32x1xf32>
    %32 = arith.subf %30, %31 : vector<32x1xf32>
    %33 = vector.broadcast %29 : vector<32x1xf32> to vector<32x32xf32>
    %34 = arith.mulf %11, %33 : vector<32x32xf32>
    %35 = vector.broadcast %32 : vector<32x1xf32> to vector<32x32xf32>
    %36 = arith.addf %34, %35 : vector<32x32xf32>
    %c0_19 = arith.constant 0 : index
    %c0_20 = arith.constant 0 : index
    %37 = vector.load %arg4[%c0_19, %c0_20] : memref<32x32xf32, #tpu.memory_space<vmem>>, vector<32x32xf32>
    tpu.vector_store %arg4[%c0_19, %c0_20], %36 {strides = array<i32>} : memref<32x32xf32, #tpu.memory_space<vmem>>, vector<32x32xf32>,
    return
  }
}

module attributes {stable_mosaic.version = 11 : i64} {
  func.func @kernel(%arg0: memref<512x8xf32, #tpu.memory_space<vmem>>, %arg1: memref<1x64x512xbf16, #tpu.memory_space<vmem>>, %arg2: memref<64x1xf32, #tpu.memory_space<vmem>>, %arg3: memref<64x1xf32, #tpu.memory_space<vmem>>, %arg4: memref<64x8xf32, #tpu.memory_space<vmem>>) attributes {dimension_semantics = [], scalar_prefetch = 0 : i64, scratch_operands = 0 : i64, tpu.core_type = #tpu.core_type<tc>} {
    %c0 = arith.constant 0 : index
    %c0_0 = arith.constant 0 : index
    %0 = vector.load %arg0[%c0, %c0_0] : memref<512x8xf32, #tpu.memory_space<vmem>>, vector<512x8xf32>
    %cst = arith.constant 0.000000e+00 : f32
    %1 = vector.broadcast %cst : f32 to vector<512x8xf32>
    %2 = arith.cmpf oge, %0, %1 : vector<512x8xf32>
    %cst_1 = arith.constant 2.000000e-01 : f32
    %3 = vector.broadcast %cst_1 : f32 to vector<512x8xf32>
    %4 = arith.mulf %3, %0 : vector<512x8xf32>
    %5 = arith.select %2, %0, %4 : vector<512x8xi1>, vector<512x8xf32>
    %6 = arith.truncf %5 : vector<512x8xf32> to vector<512x8xbf16>
    %c0_2 = arith.constant 0 : index
    %c0_3 = arith.constant 0 : index
    %c0_4 = arith.constant 0 : index
    %7 = vector.load %arg1[%c0_2, %c0_3, %c0_4] : memref<1x64x512xbf16, #tpu.memory_space<vmem>>, vector<1x64x512xbf16>
    %8 = vector.shape_cast %7 : vector<1x64x512xbf16> to vector<64x512xbf16>
    %cst_5 = arith.constant dense<0.000000e+00> : vector<64x8xf32>
    %9 = tpu.matmul %8, %6, %cst_5 {dimension_numbers = #tpu.dot_dimension_numbers<[1], [0], [0], [1], [0, 0, 1, 1], [], []>} : vector<64x512xbf16>, vector<512x8xbf16>, vector<64x8xf32> -> vector<64x8xf32>
    %c0_6 = arith.constant 0 : index
    %c0_7 = arith.constant 0 : index
    %10 = vector.load %arg4[%c0_6, %c0_7] : memref<64x8xf32, #tpu.memory_space<vmem>>, vector<64x8xf32>
    tpu.vector_store %arg4[%c0_6, %c0_7], %9 {strides = array<i32>} : memref<64x8xf32, #tpu.memory_space<vmem>>, vector<64x8xf32>,
    %c0_8 = arith.constant 0 : index
    %c0_9 = arith.constant 0 : index
    %11 = vector.load %arg4[%c0_8, %c0_9] : memref<64x8xf32, #tpu.memory_space<vmem>>, vector<64x8xf32>
    %cst_10 = arith.constant dense<0.000000e+00> : vector<64xf32>
    %12 = vector.multi_reduction <add>, %11, %cst_10 [1] : vector<64x8xf32> to vector<64xf32>
    %13 = vector.shape_cast %12 : vector<64xf32> to vector<64x1xf32>
    %cst_11 = arith.constant 8.000000e+00 : f32
    %14 = vector.broadcast %cst_11 : f32 to vector<64x1xf32>
    %15 = arith.divf %13, %14 : vector<64x1xf32>
    %16 = vector.broadcast %15 : vector<64x1xf32> to vector<64x8xf32>
    %17 = arith.subf %11, %16 : vector<64x8xf32>
    %18 = vector.broadcast %15 : vector<64x1xf32> to vector<64x8xf32>
    %19 = arith.subf %11, %18 : vector<64x8xf32>
    %20 = arith.mulf %17, %19 : vector<64x8xf32>
    %cst_12 = arith.constant dense<0.000000e+00> : vector<64xf32>
    %21 = vector.multi_reduction <add>, %20, %cst_12 [1] : vector<64x8xf32> to vector<64xf32>
    %22 = vector.shape_cast %21 : vector<64xf32> to vector<64x1xf32>
    %cst_13 = arith.constant 8.000000e+00 : f32
    %23 = vector.broadcast %cst_13 : f32 to vector<64x1xf32>
    %24 = arith.divf %22, %23 : vector<64x1xf32>
    %c0_14 = arith.constant 0 : index
    %c0_15 = arith.constant 0 : index
    %25 = vector.load %arg2[%c0_14, %c0_15] : memref<64x1xf32, #tpu.memory_space<vmem>>, vector<64x1xf32>
    %cst_16 = arith.constant 9.99999974E-6 : f32
    %26 = vector.broadcast %cst_16 : f32 to vector<64x1xf32>
    %27 = arith.addf %24, %26 : vector<64x1xf32>
    %28 = math.rsqrt %27 : vector<64x1xf32>
    %29 = arith.mulf %25, %28 : vector<64x1xf32>
    %c0_17 = arith.constant 0 : index
    %c0_18 = arith.constant 0 : index
    %30 = vector.load %arg3[%c0_17, %c0_18] : memref<64x1xf32, #tpu.memory_space<vmem>>, vector<64x1xf32>
    %31 = arith.mulf %15, %29 : vector<64x1xf32>
    %32 = arith.subf %30, %31 : vector<64x1xf32>
    %33 = vector.broadcast %29 : vector<64x1xf32> to vector<64x8xf32>
    %34 = arith.mulf %11, %33 : vector<64x8xf32>
    %35 = vector.broadcast %32 : vector<64x1xf32> to vector<64x8xf32>
    %36 = arith.addf %34, %35 : vector<64x8xf32>
    %c0_19 = arith.constant 0 : index
    %c0_20 = arith.constant 0 : index
    %37 = vector.load %arg4[%c0_19, %c0_20] : memref<64x8xf32, #tpu.memory_space<vmem>>, vector<64x8xf32>
    tpu.vector_store %arg4[%c0_19, %c0_20], %36 {strides = array<i32>} : memref<64x8xf32, #tpu.memory_space<vmem>>, vector<64x8xf32>,
    return
  }
}

module attributes {stable_mosaic.version = 11 : i64} {
  func.func @kernel(%arg0: memref<1024x2xf32, #tpu.memory_space<vmem>>, %arg1: memref<1x64x1024xbf16, #tpu.memory_space<vmem>>, %arg2: memref<64x2xf32, #tpu.memory_space<vmem>>) attributes {dimension_semantics = [], scalar_prefetch = 0 : i64, scratch_operands = 0 : i64, tpu.core_type = #tpu.core_type<tc>} {
    %c0 = arith.constant 0 : index
    %c0_0 = arith.constant 0 : index
    %0 = vector.load %arg0[%c0, %c0_0] : memref<1024x2xf32, #tpu.memory_space<vmem>>, vector<1024x2xf32>
    %cst = arith.constant 0.000000e+00 : f32
    %1 = vector.broadcast %cst : f32 to vector<1024x2xf32>
    %2 = arith.cmpf oge, %0, %1 : vector<1024x2xf32>
    %cst_1 = arith.constant 2.000000e-01 : f32
    %3 = vector.broadcast %cst_1 : f32 to vector<1024x2xf32>
    %4 = arith.mulf %3, %0 : vector<1024x2xf32>
    %5 = arith.select %2, %0, %4 : vector<1024x2xi1>, vector<1024x2xf32>
    %6 = arith.truncf %5 : vector<1024x2xf32> to vector<1024x2xbf16>
    %c0_2 = arith.constant 0 : index
    %c0_3 = arith.constant 0 : index
    %c0_4 = arith.constant 0 : index
    %7 = vector.load %arg1[%c0_2, %c0_3, %c0_4] : memref<1x64x1024xbf16, #tpu.memory_space<vmem>>, vector<1x64x1024xbf16>
    %8 = vector.shape_cast %7 : vector<1x64x1024xbf16> to vector<64x1024xbf16>
    %cst_5 = arith.constant dense<0.000000e+00> : vector<64x2xf32>
    %9 = tpu.matmul %8, %6, %cst_5 {dimension_numbers = #tpu.dot_dimension_numbers<[1], [0], [0], [1], [0, 0, 1, 1], [], []>} : vector<64x1024xbf16>, vector<1024x2xbf16>, vector<64x2xf32> -> vector<64x2xf32>
    %c0_6 = arith.constant 0 : index
    %c0_7 = arith.constant 0 : index
    %10 = vector.load %arg2[%c0_6, %c0_7] : memref<64x2xf32, #tpu.memory_space<vmem>>, vector<64x2xf32>
    tpu.vector_store %arg2[%c0_6, %c0_7], %9 {strides = array<i32>} : memref<64x2xf32, #tpu.memory_space<vmem>>, vector<64x2xf32>,
    return
  }
}

module attributes {stable_mosaic.version = 11 : i64} {
  func.func @kernel(%arg0: memref<576x2xf32, #tpu.memory_space<vmem>>, %arg1: memref<4x64x576xbf16, #tpu.memory_space<vmem>>, %arg2: memref<64x1xf32, #tpu.memory_space<vmem>>, %arg3: memref<64x1xf32, #tpu.memory_space<vmem>>, %arg4: memref<64x8xf32, #tpu.memory_space<vmem>>) attributes {dimension_semantics = [], scalar_prefetch = 0 : i64, scratch_operands = 0 : i64, tpu.core_type = #tpu.core_type<tc>} {
    %c0 = arith.constant 0 : index
    %c0_0 = arith.constant 0 : index
    %0 = vector.load %arg0[%c0, %c0_0] : memref<576x2xf32, #tpu.memory_space<vmem>>, vector<576x2xf32>
    %cst = arith.constant 0.000000e+00 : f32
    %1 = vector.broadcast %cst : f32 to vector<576x2xf32>
    %2 = arith.maximumf %0, %1 : vector<576x2xf32>
    %3 = arith.truncf %2 : vector<576x2xf32> to vector<576x2xbf16>
    %c0_1 = arith.constant 0 : index
    %c0_2 = arith.constant 0 : index
    %c0_3 = arith.constant 0 : index
    %4 = vector.load %arg1[%c0_1, %c0_2, %c0_3] : memref<4x64x576xbf16, #tpu.memory_space<vmem>>, vector<1x64x576xbf16>
    %5 = vector.shape_cast %4 : vector<1x64x576xbf16> to vector<64x576xbf16>
    %cst_4 = arith.constant dense<0.000000e+00> : vector<64x2xf32>
    %6 = tpu.matmul %5, %3, %cst_4 {dimension_numbers = #tpu.dot_dimension_numbers<[1], [0], [0], [1], [0, 0, 1, 1], [], []>} : vector<64x576xbf16>, vector<576x2xbf16>, vector<64x2xf32> -> vector<64x2xf32>
    %c0_5 = arith.constant 0 : index
    %c0_6 = arith.constant 0 : index
    %7 = vector.load %arg4[%c0_5, %c0_6] : memref<64x8xf32, #tpu.memory_space<vmem>>, vector<64x2xf32>
    tpu.vector_store %arg4[%c0_5, %c0_6], %6 {strides = array<i32>} : memref<64x8xf32, #tpu.memory_space<vmem>>, vector<64x2xf32>,
    %c1 = arith.constant 1 : index
    %c0_7 = arith.constant 0 : index
    %c0_8 = arith.constant 0 : index
    %8 = vector.load %arg1[%c1, %c0_7, %c0_8] : memref<4x64x576xbf16, #tpu.memory_space<vmem>>, vector<1x64x576xbf16>
    %9 = vector.shape_cast %8 : vector<1x64x576xbf16> to vector<64x576xbf16>
    %cst_9 = arith.constant dense<0.000000e+00> : vector<64x2xf32>
    %10 = tpu.matmul %9, %3, %cst_9 {dimension_numbers = #tpu.dot_dimension_numbers<[1], [0], [0], [1], [0, 0, 1, 1], [], []>} : vector<64x576xbf16>, vector<576x2xbf16>, vector<64x2xf32> -> vector<64x2xf32>
    %c0_10 = arith.constant 0 : index
    %c2 = arith.constant 2 : index
    %11 = vector.load %arg4[%c0_10, %c2] : memref<64x8xf32, #tpu.memory_space<vmem>>, vector<64x2xf32>
    tpu.vector_store %arg4[%c0_10, %c2], %10 {strides = array<i32>} : memref<64x8xf32, #tpu.memory_space<vmem>>, vector<64x2xf32>,
    %c2_11 = arith.constant 2 : index
    %c0_12 = arith.constant 0 : index
    %c0_13 = arith.constant 0 : index
    %12 = vector.load %arg1[%c2_11, %c0_12, %c0_13] : memref<4x64x576xbf16, #tpu.memory_space<vmem>>, vector<1x64x576xbf16>
    %13 = vector.shape_cast %12 : vector<1x64x576xbf16> to vector<64x576xbf16>
    %cst_14 = arith.constant dense<0.000000e+00> : vector<64x2xf32>
    %14 = tpu.matmul %13, %3, %cst_14 {dimension_numbers = #tpu.dot_dimension_numbers<[1], [0], [0], [1], [0, 0, 1, 1], [], []>} : vector<64x576xbf16>, vector<576x2xbf16>, vector<64x2xf32> -> vector<64x2xf32>
    %c0_15 = arith.constant 0 : index
    %c4 = arith.constant 4 : index
    %15 = vector.load %arg4[%c0_15, %c4] : memref<64x8xf32, #tpu.memory_space<vmem>>, vector<64x2xf32>
    tpu.vector_store %arg4[%c0_15, %c4], %14 {strides = array<i32>} : memref<64x8xf32, #tpu.memory_space<vmem>>, vector<64x2xf32>,
    %c3 = arith.constant 3 : index
    %c0_16 = arith.constant 0 : index
    %c0_17 = arith.constant 0 : index
    %16 = vector.load %arg1[%c3, %c0_16, %c0_17] : memref<4x64x576xbf16, #tpu.memory_space<vmem>>, vector<1x64x576xbf16>
    %17 = vector.shape_cast %16 : vector<1x64x576xbf16> to vector<64x576xbf16>
    %cst_18 = arith.constant dense<0.000000e+00> : vector<64x2xf32>
    %18 = tpu.matmul %17, %3, %cst_18 {dimension_numbers = #tpu.dot_dimension_numbers<[1], [0], [0], [1], [0, 0, 1, 1], [], []>} : vector<64x576xbf16>, vector<576x2xbf16>, vector<64x2xf32> -> vector<64x2xf32>
    %c0_19 = arith.constant 0 : index
    %c6 = arith.constant 6 : index
    %19 = vector.load %arg4[%c0_19, %c6] : memref<64x8xf32, #tpu.memory_space<vmem>>, vector<64x2xf32>
    tpu.vector_store %arg4[%c0_19, %c6], %18 {strides = array<i32>} : memref<64x8xf32, #tpu.memory_space<vmem>>, vector<64x2xf32>,
    %c0_20 = arith.constant 0 : index
    %c0_21 = arith.constant 0 : index
    %20 = vector.load %arg4[%c0_20, %c0_21] : memref<64x8xf32, #tpu.memory_space<vmem>>, vector<64x8xf32>
    %cst_22 = arith.constant dense<0.000000e+00> : vector<64xf32>
    %21 = vector.multi_reduction <add>, %20, %cst_22 [1] : vector<64x8xf32> to vector<64xf32>
    %22 = vector.shape_cast %21 : vector<64xf32> to vector<64x1xf32>
    %cst_23 = arith.constant 8.000000e+00 : f32
    %23 = vector.broadcast %cst_23 : f32 to vector<64x1xf32>
    %24 = arith.divf %22, %23 : vector<64x1xf32>
    %25 = vector.broadcast %24 : vector<64x1xf32> to vector<64x8xf32>
    %26 = arith.subf %20, %25 : vector<64x8xf32>
    %27 = vector.broadcast %24 : vector<64x1xf32> to vector<64x8xf32>
    %28 = arith.subf %20, %27 : vector<64x8xf32>
    %29 = arith.mulf %26, %28 : vector<64x8xf32>
    %cst_24 = arith.constant dense<0.000000e+00> : vector<64xf32>
    %30 = vector.multi_reduction <add>, %29, %cst_24 [1] : vector<64x8xf32> to vector<64xf32>
    %31 = vector.shape_cast %30 : vector<64xf32> to vector<64x1xf32>
    %cst_25 = arith.constant 8.000000e+00 : f32
    %32 = vector.broadcast %cst_25 : f32 to vector<64x1xf32>
    %33 = arith.divf %31, %32 : vector<64x1xf32>
    %c0_26 = arith.constant 0 : index
    %c0_27 = arith.constant 0 : index
    %34 = vector.load %arg2[%c0_26, %c0_27] : memref<64x1xf32, #tpu.memory_space<vmem>>, vector<64x1xf32>
    %cst_28 = arith.constant 9.99999974E-6 : f32
    %35 = vector.broadcast %cst_28 : f32 to vector<64x1xf32>
    %36 = arith.addf %33, %35 : vector<64x1xf32>
    %37 = math.rsqrt %36 : vector<64x1xf32>
    %38 = arith.mulf %34, %37 : vector<64x1xf32>
    %c0_29 = arith.constant 0 : index
    %c0_30 = arith.constant 0 : index
    %39 = vector.load %arg3[%c0_29, %c0_30] : memref<64x1xf32, #tpu.memory_space<vmem>>, vector<64x1xf32>
    %40 = arith.mulf %24, %38 : vector<64x1xf32>
    %41 = arith.subf %39, %40 : vector<64x1xf32>
    %42 = vector.broadcast %38 : vector<64x1xf32> to vector<64x8xf32>
    %43 = arith.mulf %20, %42 : vector<64x8xf32>
    %44 = vector.broadcast %41 : vector<64x1xf32> to vector<64x8xf32>
    %45 = arith.addf %43, %44 : vector<64x8xf32>
    %c0_31 = arith.constant 0 : index
    %c0_32 = arith.constant 0 : index
    %46 = vector.load %arg4[%c0_31, %c0_32] : memref<64x8xf32, #tpu.memory_space<vmem>>, vector<64x8xf32>
    tpu.vector_store %arg4[%c0_31, %c0_32], %45 {strides = array<i32>} : memref<64x8xf32, #tpu.memory_space<vmem>>, vector<64x8xf32>,
    return
  }
}

module attributes {stable_mosaic.version = 11 : i64} {
  func.func @kernel(%arg0: memref<1152x8xf32, #tpu.memory_space<vmem>>, %arg1: memref<4x32x1152xbf16, #tpu.memory_space<vmem>>, %arg2: memref<32x1xf32, #tpu.memory_space<vmem>>, %arg3: memref<32x1xf32, #tpu.memory_space<vmem>>, %arg4: memref<32x32xf32, #tpu.memory_space<vmem>>) attributes {dimension_semantics = [], scalar_prefetch = 0 : i64, scratch_operands = 0 : i64, tpu.core_type = #tpu.core_type<tc>} {
    %c0 = arith.constant 0 : index
    %c0_0 = arith.constant 0 : index
    %0 = vector.load %arg0[%c0, %c0_0] : memref<1152x8xf32, #tpu.memory_space<vmem>>, vector<1152x8xf32>
    %cst = arith.constant 0.000000e+00 : f32
    %1 = vector.broadcast %cst : f32 to vector<1152x8xf32>
    %2 = arith.maximumf %0, %1 : vector<1152x8xf32>
    %3 = arith.truncf %2 : vector<1152x8xf32> to vector<1152x8xbf16>
    %c0_1 = arith.constant 0 : index
    %c0_2 = arith.constant 0 : index
    %c0_3 = arith.constant 0 : index
    %4 = vector.load %arg1[%c0_1, %c0_2, %c0_3] : memref<4x32x1152xbf16, #tpu.memory_space<vmem>>, vector<1x32x1152xbf16>
    %5 = vector.shape_cast %4 : vector<1x32x1152xbf16> to vector<32x1152xbf16>
    %cst_4 = arith.constant dense<0.000000e+00> : vector<32x8xf32>
    %6 = tpu.matmul %5, %3, %cst_4 {dimension_numbers = #tpu.dot_dimension_numbers<[1], [0], [0], [1], [0, 0, 1, 1], [], []>} : vector<32x1152xbf16>, vector<1152x8xbf16>, vector<32x8xf32> -> vector<32x8xf32>
    %c0_5 = arith.constant 0 : index
    %c0_6 = arith.constant 0 : index
    %7 = vector.load %arg4[%c0_5, %c0_6] : memref<32x32xf32, #tpu.memory_space<vmem>>, vector<32x8xf32>
    tpu.vector_store %arg4[%c0_5, %c0_6], %6 {strides = array<i32>} : memref<32x32xf32, #tpu.memory_space<vmem>>, vector<32x8xf32>,
    %c1 = arith.constant 1 : index
    %c0_7 = arith.constant 0 : index
    %c0_8 = arith.constant 0 : index
    %8 = vector.load %arg1[%c1, %c0_7, %c0_8] : memref<4x32x1152xbf16, #tpu.memory_space<vmem>>, vector<1x32x1152xbf16>
    %9 = vector.shape_cast %8 : vector<1x32x1152xbf16> to vector<32x1152xbf16>
    %cst_9 = arith.constant dense<0.000000e+00> : vector<32x8xf32>
    %10 = tpu.matmul %9, %3, %cst_9 {dimension_numbers = #tpu.dot_dimension_numbers<[1], [0], [0], [1], [0, 0, 1, 1], [], []>} : vector<32x1152xbf16>, vector<1152x8xbf16>, vector<32x8xf32> -> vector<32x8xf32>
    %c0_10 = arith.constant 0 : index
    %c8 = arith.constant 8 : index
    %11 = vector.load %arg4[%c0_10, %c8] : memref<32x32xf32, #tpu.memory_space<vmem>>, vector<32x8xf32>
    tpu.vector_store %arg4[%c0_10, %c8], %10 {strides = array<i32>} : memref<32x32xf32, #tpu.memory_space<vmem>>, vector<32x8xf32>,
    %c2 = arith.constant 2 : index
    %c0_11 = arith.constant 0 : index
    %c0_12 = arith.constant 0 : index
    %12 = vector.load %arg1[%c2, %c0_11, %c0_12] : memref<4x32x1152xbf16, #tpu.memory_space<vmem>>, vector<1x32x1152xbf16>
    %13 = vector.shape_cast %12 : vector<1x32x1152xbf16> to vector<32x1152xbf16>
    %cst_13 = arith.constant dense<0.000000e+00> : vector<32x8xf32>
    %14 = tpu.matmul %13, %3, %cst_13 {dimension_numbers = #tpu.dot_dimension_numbers<[1], [0], [0], [1], [0, 0, 1, 1], [], []>} : vector<32x1152xbf16>, vector<1152x8xbf16>, vector<32x8xf32> -> vector<32x8xf32>
    %c0_14 = arith.constant 0 : index
    %c16 = arith.constant 16 : index
    %15 = vector.load %arg4[%c0_14, %c16] : memref<32x32xf32, #tpu.memory_space<vmem>>, vector<32x8xf32>
    tpu.vector_store %arg4[%c0_14, %c16], %14 {strides = array<i32>} : memref<32x32xf32, #tpu.memory_space<vmem>>, vector<32x8xf32>,
    %c3 = arith.constant 3 : index
    %c0_15 = arith.constant 0 : index
    %c0_16 = arith.constant 0 : index
    %16 = vector.load %arg1[%c3, %c0_15, %c0_16] : memref<4x32x1152xbf16, #tpu.memory_space<vmem>>, vector<1x32x1152xbf16>
    %17 = vector.shape_cast %16 : vector<1x32x1152xbf16> to vector<32x1152xbf16>
    %cst_17 = arith.constant dense<0.000000e+00> : vector<32x8xf32>
    %18 = tpu.matmul %17, %3, %cst_17 {dimension_numbers = #tpu.dot_dimension_numbers<[1], [0], [0], [1], [0, 0, 1, 1], [], []>} : vector<32x1152xbf16>, vector<1152x8xbf16>, vector<32x8xf32> -> vector<32x8xf32>
    %c0_18 = arith.constant 0 : index
    %c24 = arith.constant 24 : index
    %19 = vector.load %arg4[%c0_18, %c24] : memref<32x32xf32, #tpu.memory_space<vmem>>, vector<32x8xf32>
    tpu.vector_store %arg4[%c0_18, %c24], %18 {strides = array<i32>} : memref<32x32xf32, #tpu.memory_space<vmem>>, vector<32x8xf32>,
    %c0_19 = arith.constant 0 : index
    %c0_20 = arith.constant 0 : index
    %20 = vector.load %arg4[%c0_19, %c0_20] : memref<32x32xf32, #tpu.memory_space<vmem>>, vector<32x32xf32>
    %cst_21 = arith.constant dense<0.000000e+00> : vector<32xf32>
    %21 = vector.multi_reduction <add>, %20, %cst_21 [1] : vector<32x32xf32> to vector<32xf32>
    %22 = vector.shape_cast %21 : vector<32xf32> to vector<32x1xf32>
    %cst_22 = arith.constant 3.200000e+01 : f32
    %23 = vector.broadcast %cst_22 : f32 to vector<32x1xf32>
    %24 = arith.divf %22, %23 : vector<32x1xf32>
    %25 = vector.broadcast %24 : vector<32x1xf32> to vector<32x32xf32>
    %26 = arith.subf %20, %25 : vector<32x32xf32>
    %27 = vector.broadcast %24 : vector<32x1xf32> to vector<32x32xf32>
    %28 = arith.subf %20, %27 : vector<32x32xf32>
    %29 = arith.mulf %26, %28 : vector<32x32xf32>
    %cst_23 = arith.constant dense<0.000000e+00> : vector<32xf32>
    %30 = vector.multi_reduction <add>, %29, %cst_23 [1] : vector<32x32xf32> to vector<32xf32>
    %31 = vector.shape_cast %30 : vector<32xf32> to vector<32x1xf32>
    %cst_24 = arith.constant 3.200000e+01 : f32
    %32 = vector.broadcast %cst_24 : f32 to vector<32x1xf32>
    %33 = arith.divf %31, %32 : vector<32x1xf32>
    %c0_25 = arith.constant 0 : index
    %c0_26 = arith.constant 0 : index
    %34 = vector.load %arg2[%c0_25, %c0_26] : memref<32x1xf32, #tpu.memory_space<vmem>>, vector<32x1xf32>
    %cst_27 = arith.constant 9.99999974E-6 : f32
    %35 = vector.broadcast %cst_27 : f32 to vector<32x1xf32>
    %36 = arith.addf %33, %35 : vector<32x1xf32>
    %37 = math.rsqrt %36 : vector<32x1xf32>
    %38 = arith.mulf %34, %37 : vector<32x1xf32>
    %c0_28 = arith.constant 0 : index
    %c0_29 = arith.constant 0 : index
    %39 = vector.load %arg3[%c0_28, %c0_29] : memref<32x1xf32, #tpu.memory_space<vmem>>, vector<32x1xf32>
    %40 = arith.mulf %24, %38 : vector<32x1xf32>
    %41 = arith.subf %39, %40 : vector<32x1xf32>
    %42 = vector.broadcast %38 : vector<32x1xf32> to vector<32x32xf32>
    %43 = arith.mulf %20, %42 : vector<32x32xf32>
    %44 = vector.broadcast %41 : vector<32x1xf32> to vector<32x32xf32>
    %45 = arith.addf %43, %44 : vector<32x32xf32>
    %c0_30 = arith.constant 0 : index
    %c0_31 = arith.constant 0 : index
    %46 = vector.load %arg4[%c0_30, %c0_31] : memref<32x32xf32, #tpu.memory_space<vmem>>, vector<32x32xf32>
    tpu.vector_store %arg4[%c0_30, %c0_31], %45 {strides = array<i32>} : memref<32x32xf32, #tpu.memory_space<vmem>>, vector<32x32xf32>,
    return
  }
}

module attributes {stable_mosaic.version = 11 : i64} {
  func.func @kernel(%arg0: memref<576x32xf32, #tpu.memory_space<vmem>>, %arg1: memref<4x16x576xbf16, #tpu.memory_space<vmem>>, %arg2: memref<16x1xf32, #tpu.memory_space<vmem>>, %arg3: memref<16x1xf32, #tpu.memory_space<vmem>>, %arg4: memref<16x128xf32, #tpu.memory_space<vmem>>) attributes {dimension_semantics = [], scalar_prefetch = 0 : i64, scratch_operands = 0 : i64, tpu.core_type = #tpu.core_type<tc>} {
    %c0 = arith.constant 0 : index
    %c0_0 = arith.constant 0 : index
    %0 = vector.load %arg0[%c0, %c0_0] : memref<576x32xf32, #tpu.memory_space<vmem>>, vector<576x32xf32>
    %cst = arith.constant 0.000000e+00 : f32
    %1 = vector.broadcast %cst : f32 to vector<576x32xf32>
    %2 = arith.maximumf %0, %1 : vector<576x32xf32>
    %3 = arith.truncf %2 : vector<576x32xf32> to vector<576x32xbf16>
    %c0_1 = arith.constant 0 : index
    %c0_2 = arith.constant 0 : index
    %c0_3 = arith.constant 0 : index
    %4 = vector.load %arg1[%c0_1, %c0_2, %c0_3] : memref<4x16x576xbf16, #tpu.memory_space<vmem>>, vector<1x16x576xbf16>
    %5 = vector.shape_cast %4 : vector<1x16x576xbf16> to vector<16x576xbf16>
    %cst_4 = arith.constant dense<0.000000e+00> : vector<16x32xf32>
    %6 = tpu.matmul %5, %3, %cst_4 {dimension_numbers = #tpu.dot_dimension_numbers<[1], [0], [0], [1], [0, 0, 1, 1], [], []>} : vector<16x576xbf16>, vector<576x32xbf16>, vector<16x32xf32> -> vector<16x32xf32>
    %c0_5 = arith.constant 0 : index
    %c0_6 = arith.constant 0 : index
    %7 = vector.load %arg4[%c0_5, %c0_6] : memref<16x128xf32, #tpu.memory_space<vmem>>, vector<16x32xf32>
    tpu.vector_store %arg4[%c0_5, %c0_6], %6 {strides = array<i32>} : memref<16x128xf32, #tpu.memory_space<vmem>>, vector<16x32xf32>,
    %c1 = arith.constant 1 : index
    %c0_7 = arith.constant 0 : index
    %c0_8 = arith.constant 0 : index
    %8 = vector.load %arg1[%c1, %c0_7, %c0_8] : memref<4x16x576xbf16, #tpu.memory_space<vmem>>, vector<1x16x576xbf16>
    %9 = vector.shape_cast %8 : vector<1x16x576xbf16> to vector<16x576xbf16>
    %cst_9 = arith.constant dense<0.000000e+00> : vector<16x32xf32>
    %10 = tpu.matmul %9, %3, %cst_9 {dimension_numbers = #tpu.dot_dimension_numbers<[1], [0], [0], [1], [0, 0, 1, 1], [], []>} : vector<16x576xbf16>, vector<576x32xbf16>, vector<16x32xf32> -> vector<16x32xf32>
    %c0_10 = arith.constant 0 : index
    %c32 = arith.constant 32 : index
    %11 = vector.load %arg4[%c0_10, %c32] : memref<16x128xf32, #tpu.memory_space<vmem>>, vector<16x32xf32>
    tpu.vector_store %arg4[%c0_10, %c32], %10 {strides = array<i32>} : memref<16x128xf32, #tpu.memory_space<vmem>>, vector<16x32xf32>,
    %c2 = arith.constant 2 : index
    %c0_11 = arith.constant 0 : index
    %c0_12 = arith.constant 0 : index
    %12 = vector.load %arg1[%c2, %c0_11, %c0_12] : memref<4x16x576xbf16, #tpu.memory_space<vmem>>, vector<1x16x576xbf16>
    %13 = vector.shape_cast %12 : vector<1x16x576xbf16> to vector<16x576xbf16>
    %cst_13 = arith.constant dense<0.000000e+00> : vector<16x32xf32>
    %14 = tpu.matmul %13, %3, %cst_13 {dimension_numbers = #tpu.dot_dimension_numbers<[1], [0], [0], [1], [0, 0, 1, 1], [], []>} : vector<16x576xbf16>, vector<576x32xbf16>, vector<16x32xf32> -> vector<16x32xf32>
    %c0_14 = arith.constant 0 : index
    %c64 = arith.constant 64 : index
    %15 = vector.load %arg4[%c0_14, %c64] : memref<16x128xf32, #tpu.memory_space<vmem>>, vector<16x32xf32>
    tpu.vector_store %arg4[%c0_14, %c64], %14 {strides = array<i32>} : memref<16x128xf32, #tpu.memory_space<vmem>>, vector<16x32xf32>,
    %c3 = arith.constant 3 : index
    %c0_15 = arith.constant 0 : index
    %c0_16 = arith.constant 0 : index
    %16 = vector.load %arg1[%c3, %c0_15, %c0_16] : memref<4x16x576xbf16, #tpu.memory_space<vmem>>, vector<1x16x576xbf16>
    %17 = vector.shape_cast %16 : vector<1x16x576xbf16> to vector<16x576xbf16>
    %cst_17 = arith.constant dense<0.000000e+00> : vector<16x32xf32>
    %18 = tpu.matmul %17, %3, %cst_17 {dimension_numbers = #tpu.dot_dimension_numbers<[1], [0], [0], [1], [0, 0, 1, 1], [], []>} : vector<16x576xbf16>, vector<576x32xbf16>, vector<16x32xf32> -> vector<16x32xf32>
    %c0_18 = arith.constant 0 : index
    %c96 = arith.constant 96 : index
    %19 = vector.load %arg4[%c0_18, %c96] : memref<16x128xf32, #tpu.memory_space<vmem>>, vector<16x32xf32>
    tpu.vector_store %arg4[%c0_18, %c96], %18 {strides = array<i32>} : memref<16x128xf32, #tpu.memory_space<vmem>>, vector<16x32xf32>,
    %c0_19 = arith.constant 0 : index
    %c0_20 = arith.constant 0 : index
    %20 = vector.load %arg4[%c0_19, %c0_20] : memref<16x128xf32, #tpu.memory_space<vmem>>, vector<16x128xf32>
    %cst_21 = arith.constant dense<0.000000e+00> : vector<16xf32>
    %21 = vector.multi_reduction <add>, %20, %cst_21 [1] : vector<16x128xf32> to vector<16xf32>
    %22 = vector.shape_cast %21 : vector<16xf32> to vector<16x1xf32>
    %cst_22 = arith.constant 1.280000e+02 : f32
    %23 = vector.broadcast %cst_22 : f32 to vector<16x1xf32>
    %24 = arith.divf %22, %23 : vector<16x1xf32>
    %25 = vector.broadcast %24 : vector<16x1xf32> to vector<16x128xf32>
    %26 = arith.subf %20, %25 : vector<16x128xf32>
    %27 = vector.broadcast %24 : vector<16x1xf32> to vector<16x128xf32>
    %28 = arith.subf %20, %27 : vector<16x128xf32>
    %29 = arith.mulf %26, %28 : vector<16x128xf32>
    %cst_23 = arith.constant dense<0.000000e+00> : vector<16xf32>
    %30 = vector.multi_reduction <add>, %29, %cst_23 [1] : vector<16x128xf32> to vector<16xf32>
    %31 = vector.shape_cast %30 : vector<16xf32> to vector<16x1xf32>
    %cst_24 = arith.constant 1.280000e+02 : f32
    %32 = vector.broadcast %cst_24 : f32 to vector<16x1xf32>
    %33 = arith.divf %31, %32 : vector<16x1xf32>
    %c0_25 = arith.constant 0 : index
    %c0_26 = arith.constant 0 : index
    %34 = vector.load %arg2[%c0_25, %c0_26] : memref<16x1xf32, #tpu.memory_space<vmem>>, vector<16x1xf32>
    %cst_27 = arith.constant 9.99999974E-6 : f32
    %35 = vector.broadcast %cst_27 : f32 to vector<16x1xf32>
    %36 = arith.addf %33, %35 : vector<16x1xf32>
    %37 = math.rsqrt %36 : vector<16x1xf32>
    %38 = arith.mulf %34, %37 : vector<16x1xf32>
    %c0_28 = arith.constant 0 : index
    %c0_29 = arith.constant 0 : index
    %39 = vector.load %arg3[%c0_28, %c0_29] : memref<16x1xf32, #tpu.memory_space<vmem>>, vector<16x1xf32>
    %40 = arith.mulf %24, %38 : vector<16x1xf32>
    %41 = arith.subf %39, %40 : vector<16x1xf32>
    %42 = vector.broadcast %38 : vector<16x1xf32> to vector<16x128xf32>
    %43 = arith.mulf %20, %42 : vector<16x128xf32>
    %44 = vector.broadcast %41 : vector<16x1xf32> to vector<16x128xf32>
    %45 = arith.addf %43, %44 : vector<16x128xf32>
    %c0_30 = arith.constant 0 : index
    %c0_31 = arith.constant 0 : index
    %46 = vector.load %arg4[%c0_30, %c0_31] : memref<16x128xf32, #tpu.memory_space<vmem>>, vector<16x128xf32>
    tpu.vector_store %arg4[%c0_30, %c0_31], %45 {strides = array<i32>} : memref<16x128xf32, #tpu.memory_space<vmem>>, vector<16x128xf32>,
    return
  }
}

module attributes {stable_mosaic.version = 11 : i64} {
  func.func @kernel(%arg0: memref<288x128xf32, #tpu.memory_space<vmem>>, %arg1: memref<4x8x288xbf16, #tpu.memory_space<vmem>>, %arg2: memref<8x1xf32, #tpu.memory_space<vmem>>, %arg3: memref<8x1xf32, #tpu.memory_space<vmem>>, %arg4: memref<8x512xf32, #tpu.memory_space<vmem>>) attributes {dimension_semantics = [], scalar_prefetch = 0 : i64, scratch_operands = 0 : i64, tpu.core_type = #tpu.core_type<tc>} {
    %c0 = arith.constant 0 : index
    %c0_0 = arith.constant 0 : index
    %0 = vector.load %arg0[%c0, %c0_0] : memref<288x128xf32, #tpu.memory_space<vmem>>, vector<288x128xf32>
    %cst = arith.constant 0.000000e+00 : f32
    %1 = vector.broadcast %cst : f32 to vector<288x128xf32>
    %2 = arith.maximumf %0, %1 : vector<288x128xf32>
    %3 = arith.truncf %2 : vector<288x128xf32> to vector<288x128xbf16>
    %c0_1 = arith.constant 0 : index
    %c0_2 = arith.constant 0 : index
    %c0_3 = arith.constant 0 : index
    %4 = vector.load %arg1[%c0_1, %c0_2, %c0_3] : memref<4x8x288xbf16, #tpu.memory_space<vmem>>, vector<1x8x288xbf16>
    %5 = vector.shape_cast %4 : vector<1x8x288xbf16> to vector<8x288xbf16>
    %cst_4 = arith.constant dense<0.000000e+00> : vector<8x128xf32>
    %6 = tpu.matmul %5, %3, %cst_4 {dimension_numbers = #tpu.dot_dimension_numbers<[1], [0], [0], [1], [0, 0, 1, 1], [], []>} : vector<8x288xbf16>, vector<288x128xbf16>, vector<8x128xf32> -> vector<8x128xf32>
    %c0_5 = arith.constant 0 : index
    %c0_6 = arith.constant 0 : index
    %7 = vector.load %arg4[%c0_5, %c0_6] : memref<8x512xf32, #tpu.memory_space<vmem>>, vector<8x128xf32>
    tpu.vector_store %arg4[%c0_5, %c0_6], %6 {strides = array<i32>} : memref<8x512xf32, #tpu.memory_space<vmem>>, vector<8x128xf32>,
    %c1 = arith.constant 1 : index
    %c0_7 = arith.constant 0 : index
    %c0_8 = arith.constant 0 : index
    %8 = vector.load %arg1[%c1, %c0_7, %c0_8] : memref<4x8x288xbf16, #tpu.memory_space<vmem>>, vector<1x8x288xbf16>
    %9 = vector.shape_cast %8 : vector<1x8x288xbf16> to vector<8x288xbf16>
    %cst_9 = arith.constant dense<0.000000e+00> : vector<8x128xf32>
    %10 = tpu.matmul %9, %3, %cst_9 {dimension_numbers = #tpu.dot_dimension_numbers<[1], [0], [0], [1], [0, 0, 1, 1], [], []>} : vector<8x288xbf16>, vector<288x128xbf16>, vector<8x128xf32> -> vector<8x128xf32>
    %c0_10 = arith.constant 0 : index
    %c128 = arith.constant 128 : index
    %11 = vector.load %arg4[%c0_10, %c128] : memref<8x512xf32, #tpu.memory_space<vmem>>, vector<8x128xf32>
    tpu.vector_store %arg4[%c0_10, %c128], %10 {strides = array<i32>} : memref<8x512xf32, #tpu.memory_space<vmem>>, vector<8x128xf32>,
    %c2 = arith.constant 2 : index
    %c0_11 = arith.constant 0 : index
    %c0_12 = arith.constant 0 : index
    %12 = vector.load %arg1[%c2, %c0_11, %c0_12] : memref<4x8x288xbf16, #tpu.memory_space<vmem>>, vector<1x8x288xbf16>
    %13 = vector.shape_cast %12 : vector<1x8x288xbf16> to vector<8x288xbf16>
    %cst_13 = arith.constant dense<0.000000e+00> : vector<8x128xf32>
    %14 = tpu.matmul %13, %3, %cst_13 {dimension_numbers = #tpu.dot_dimension_numbers<[1], [0], [0], [1], [0, 0, 1, 1], [], []>} : vector<8x288xbf16>, vector<288x128xbf16>, vector<8x128xf32> -> vector<8x128xf32>
    %c0_14 = arith.constant 0 : index
    %c256 = arith.constant 256 : index
    %15 = vector.load %arg4[%c0_14, %c256] : memref<8x512xf32, #tpu.memory_space<vmem>>, vector<8x128xf32>
    tpu.vector_store %arg4[%c0_14, %c256], %14 {strides = array<i32>} : memref<8x512xf32, #tpu.memory_space<vmem>>, vector<8x128xf32>,
    %c3 = arith.constant 3 : index
    %c0_15 = arith.constant 0 : index
    %c0_16 = arith.constant 0 : index
    %16 = vector.load %arg1[%c3, %c0_15, %c0_16] : memref<4x8x288xbf16, #tpu.memory_space<vmem>>, vector<1x8x288xbf16>
    %17 = vector.shape_cast %16 : vector<1x8x288xbf16> to vector<8x288xbf16>
    %cst_17 = arith.constant dense<0.000000e+00> : vector<8x128xf32>
    %18 = tpu.matmul %17, %3, %cst_17 {dimension_numbers = #tpu.dot_dimension_numbers<[1], [0], [0], [1], [0, 0, 1, 1], [], []>} : vector<8x288xbf16>, vector<288x128xbf16>, vector<8x128xf32> -> vector<8x128xf32>
    %c0_18 = arith.constant 0 : index
    %c384 = arith.constant 384 : index
    %19 = vector.load %arg4[%c0_18, %c384] : memref<8x512xf32, #tpu.memory_space<vmem>>, vector<8x128xf32>
    tpu.vector_store %arg4[%c0_18, %c384], %18 {strides = array<i32>} : memref<8x512xf32, #tpu.memory_space<vmem>>, vector<8x128xf32>,
    %c0_19 = arith.constant 0 : index
    %c0_20 = arith.constant 0 : index
    %20 = vector.load %arg4[%c0_19, %c0_20] : memref<8x512xf32, #tpu.memory_space<vmem>>, vector<8x512xf32>
    %cst_21 = arith.constant dense<0.000000e+00> : vector<8xf32>
    %21 = vector.multi_reduction <add>, %20, %cst_21 [1] : vector<8x512xf32> to vector<8xf32>
    %22 = vector.shape_cast %21 : vector<8xf32> to vector<8x1xf32>
    %cst_22 = arith.constant 5.120000e+02 : f32
    %23 = vector.broadcast %cst_22 : f32 to vector<8x1xf32>
    %24 = arith.divf %22, %23 : vector<8x1xf32>
    %25 = vector.broadcast %24 : vector<8x1xf32> to vector<8x512xf32>
    %26 = arith.subf %20, %25 : vector<8x512xf32>
    %27 = vector.broadcast %24 : vector<8x1xf32> to vector<8x512xf32>
    %28 = arith.subf %20, %27 : vector<8x512xf32>
    %29 = arith.mulf %26, %28 : vector<8x512xf32>
    %cst_23 = arith.constant dense<0.000000e+00> : vector<8xf32>
    %30 = vector.multi_reduction <add>, %29, %cst_23 [1] : vector<8x512xf32> to vector<8xf32>
    %31 = vector.shape_cast %30 : vector<8xf32> to vector<8x1xf32>
    %cst_24 = arith.constant 5.120000e+02 : f32
    %32 = vector.broadcast %cst_24 : f32 to vector<8x1xf32>
    %33 = arith.divf %31, %32 : vector<8x1xf32>
    %c0_25 = arith.constant 0 : index
    %c0_26 = arith.constant 0 : index
    %34 = vector.load %arg2[%c0_25, %c0_26] : memref<8x1xf32, #tpu.memory_space<vmem>>, vector<8x1xf32>
    %cst_27 = arith.constant 9.99999974E-6 : f32
    %35 = vector.broadcast %cst_27 : f32 to vector<8x1xf32>
    %36 = arith.addf %33, %35 : vector<8x1xf32>
    %37 = math.rsqrt %36 : vector<8x1xf32>
    %38 = arith.mulf %34, %37 : vector<8x1xf32>
    %c0_28 = arith.constant 0 : index
    %c0_29 = arith.constant 0 : index
    %39 = vector.load %arg3[%c0_28, %c0_29] : memref<8x1xf32, #tpu.memory_space<vmem>>, vector<8x1xf32>
    %40 = arith.mulf %24, %38 : vector<8x1xf32>
    %41 = arith.subf %39, %40 : vector<8x1xf32>
    %42 = vector.broadcast %38 : vector<8x1xf32> to vector<8x512xf32>
    %43 = arith.mulf %20, %42 : vector<8x512xf32>
    %44 = vector.broadcast %41 : vector<8x1xf32> to vector<8x512xf32>
    %45 = arith.addf %43, %44 : vector<8x512xf32>
    %c0_30 = arith.constant 0 : index
    %c0_31 = arith.constant 0 : index
    %46 = vector.load %arg4[%c0_30, %c0_31] : memref<8x512xf32, #tpu.memory_space<vmem>>, vector<8x512xf32>
    tpu.vector_store %arg4[%c0_30, %c0_31], %45 {strides = array<i32>} : memref<8x512xf32, #tpu.memory_space<vmem>>, vector<8x512xf32>,
    return
  }
}

module attributes {stable_mosaic.version = 11 : i64} {
  func.func @kernel(%arg0: memref<144x512xf32, #tpu.memory_space<vmem>>, %arg1: memref<4x3x144xbf16, #tpu.memory_space<vmem>>, %arg2: memref<3x1xf32, #tpu.memory_space<vmem>>, %arg3: memref<3x2048xf32, #tpu.memory_space<vmem>>) attributes {dimension_semantics = [], scalar_prefetch = 0 : i64, scratch_operands = 0 : i64, tpu.core_type = #tpu.core_type<tc>} {
    %c0 = arith.constant 0 : index
    %c0_0 = arith.constant 0 : index
    %0 = vector.load %arg0[%c0, %c0_0] : memref<144x512xf32, #tpu.memory_space<vmem>>, vector<144x512xf32>
    %cst = arith.constant 0.000000e+00 : f32
    %1 = vector.broadcast %cst : f32 to vector<144x512xf32>
    %2 = arith.maximumf %0, %1 : vector<144x512xf32>
    %3 = arith.truncf %2 : vector<144x512xf32> to vector<144x512xbf16>
    %c0_1 = arith.constant 0 : index
    %c0_2 = arith.constant 0 : index
    %c0_3 = arith.constant 0 : index
    %4 = vector.load %arg1[%c0_1, %c0_2, %c0_3] : memref<4x3x144xbf16, #tpu.memory_space<vmem>>, vector<1x3x144xbf16>
    %5 = vector.shape_cast %4 : vector<1x3x144xbf16> to vector<3x144xbf16>
    %cst_4 = arith.constant dense<0.000000e+00> : vector<3x512xf32>
    %6 = tpu.matmul %5, %3, %cst_4 {dimension_numbers = #tpu.dot_dimension_numbers<[1], [0], [0], [1], [0, 0, 1, 1], [], []>} : vector<3x144xbf16>, vector<144x512xbf16>, vector<3x512xf32> -> vector<3x512xf32>
    %c0_5 = arith.constant 0 : index
    %c0_6 = arith.constant 0 : index
    %7 = vector.load %arg2[%c0_5, %c0_6] : memref<3x1xf32, #tpu.memory_space<vmem>>, vector<3x1xf32>
    %8 = vector.broadcast %7 : vector<3x1xf32> to vector<3x512xf32>
    %9 = arith.addf %6, %8 : vector<3x512xf32>
    %10 = math.tanh %9 : vector<3x512xf32>
    %c0_7 = arith.constant 0 : index
    %c0_8 = arith.constant 0 : index
    %11 = vector.load %arg3[%c0_7, %c0_8] : memref<3x2048xf32, #tpu.memory_space<vmem>>, vector<3x512xf32>
    tpu.vector_store %arg3[%c0_7, %c0_8], %10 {strides = array<i32>} : memref<3x2048xf32, #tpu.memory_space<vmem>>, vector<3x512xf32>,
    %c1 = arith.constant 1 : index
    %c0_9 = arith.constant 0 : index
    %c0_10 = arith.constant 0 : index
    %12 = vector.load %arg1[%c1, %c0_9, %c0_10] : memref<4x3x144xbf16, #tpu.memory_space<vmem>>, vector<1x3x144xbf16>
    %13 = vector.shape_cast %12 : vector<1x3x144xbf16> to vector<3x144xbf16>
    %cst_11 = arith.constant dense<0.000000e+00> : vector<3x512xf32>
    %14 = tpu.matmul %13, %3, %cst_11 {dimension_numbers = #tpu.dot_dimension_numbers<[1], [0], [0], [1], [0, 0, 1, 1], [], []>} : vector<3x144xbf16>, vector<144x512xbf16>, vector<3x512xf32> -> vector<3x512xf32>
    %c0_12 = arith.constant 0 : index
    %c0_13 = arith.constant 0 : index
    %15 = vector.load %arg2[%c0_12, %c0_13] : memref<3x1xf32, #tpu.memory_space<vmem>>, vector<3x1xf32>
    %16 = vector.broadcast %15 : vector<3x1xf32> to vector<3x512xf32>
    %17 = arith.addf %14, %16 : vector<3x512xf32>
    %18 = math.tanh %17 : vector<3x512xf32>
    %c0_14 = arith.constant 0 : index
    %c512 = arith.constant 512 : index
    %19 = vector.load %arg3[%c0_14, %c512] : memref<3x2048xf32, #tpu.memory_space<vmem>>, vector<3x512xf32>
    tpu.vector_store %arg3[%c0_14, %c512], %18 {strides = array<i32>} : memref<3x2048xf32, #tpu.memory_space<vmem>>, vector<3x512xf32>,
    %c2 = arith.constant 2 : index
    %c0_15 = arith.constant 0 : index
    %c0_16 = arith.constant 0 : index
    %20 = vector.load %arg1[%c2, %c0_15, %c0_16] : memref<4x3x144xbf16, #tpu.memory_space<vmem>>, vector<1x3x144xbf16>
    %21 = vector.shape_cast %20 : vector<1x3x144xbf16> to vector<3x144xbf16>
    %cst_17 = arith.constant dense<0.000000e+00> : vector<3x512xf32>
    %22 = tpu.matmul %21, %3, %cst_17 {dimension_numbers = #tpu.dot_dimension_numbers<[1], [0], [0], [1], [0, 0, 1, 1], [], []>} : vector<3x144xbf16>, vector<144x512xbf16>, vector<3x512xf32> -> vector<3x512xf32>
    %c0_18 = arith.constant 0 : index
    %c0_19 = arith.constant 0 : index
    %23 = vector.load %arg2[%c0_18, %c0_19] : memref<3x1xf32, #tpu.memory_space<vmem>>, vector<3x1xf32>
    %24 = vector.broadcast %23 : vector<3x1xf32> to vector<3x512xf32>
    %25 = arith.addf %22, %24 : vector<3x512xf32>
    %26 = math.tanh %25 : vector<3x512xf32>
    %c0_20 = arith.constant 0 : index
    %c1024 = arith.constant 1024 : index
    %27 = vector.load %arg3[%c0_20, %c1024] : memref<3x2048xf32, #tpu.memory_space<vmem>>, vector<3x512xf32>
    tpu.vector_store %arg3[%c0_20, %c1024], %26 {strides = array<i32>} : memref<3x2048xf32, #tpu.memory_space<vmem>>, vector<3x512xf32>,
    %c3 = arith.constant 3 : index
    %c0_21 = arith.constant 0 : index
    %c0_22 = arith.constant 0 : index
    %28 = vector.load %arg1[%c3, %c0_21, %c0_22] : memref<4x3x144xbf16, #tpu.memory_space<vmem>>, vector<1x3x144xbf16>
    %29 = vector.shape_cast %28 : vector<1x3x144xbf16> to vector<3x144xbf16>
    %cst_23 = arith.constant dense<0.000000e+00> : vector<3x512xf32>
    %30 = tpu.matmul %29, %3, %cst_23 {dimension_numbers = #tpu.dot_dimension_numbers<[1], [0], [0], [1], [0, 0, 1, 1], [], []>} : vector<3x144xbf16>, vector<144x512xbf16>, vector<3x512xf32> -> vector<3x512xf32>
    %c0_24 = arith.constant 0 : index
    %c0_25 = arith.constant 0 : index
    %31 = vector.load %arg2[%c0_24, %c0_25] : memref<3x1xf32, #tpu.memory_space<vmem>>, vector<3x1xf32>
    %32 = vector.broadcast %31 : vector<3x1xf32> to vector<3x512xf32>
    %33 = arith.addf %30, %32 : vector<3x512xf32>
    %34 = math.tanh %33 : vector<3x512xf32>
    %c0_26 = arith.constant 0 : index
    %c1536 = arith.constant 1536 : index
    %35 = vector.load %arg3[%c0_26, %c1536] : memref<3x2048xf32, #tpu.memory_space<vmem>>, vector<3x512xf32>
    tpu.vector_store %arg3[%c0_26, %c1536], %34 {strides = array<i32>} : memref<3x2048xf32, #tpu.memory_space<vmem>>, vector<3x512xf32>,
    return
  }
}

</mosaic_0001>

<llo_original>
// kernel: unet_forward.10
$region0: #{unet_forward.10}
  #allocation0 [shape = 'u32[]', space=smem, size = 0x4, offset = 0x4, fixed_abs, tag = 'smem constant byte address 0x4 - core index']
  #allocation1 [shape = 'u32[72,128]{1,0:T(1,128)}', space=vmem, size = 0x9000, scoped, tag = 'internal scratch']
  %s0 = inlined_call_operand.vmem [shape: f32[48,512], index: 0, kind: input, shape index: {}]
  %s1 = inlined_call_operand.vmem [shape: bf16[1,8,48], index: 1, kind: input, shape index: {}]
  %s2 = inlined_call_operand.vmem [shape: f32[8,512], index: 2, kind: output, shape index: {}]
  %s3 = sld [smem:[#allocation0]]
  $region18: #{unet_forward.10} parent=0
    _
  %s5 = ssub.s32 1, %s3
  %s6 = scalar_select 0, %s5, %s3
  // Predicated region
  $region2: #{unet_forward.10} parent=0 // pred_check
    _
  $region3: #{unet_forward.10} parent=0 // pred_check_branch
    %8 = sbr.rel (0) target = $region5
  $region4: #{unet_forward.10} parent=0 // pred_region
    _
  $region5: #{unet_forward.10} parent=0 // pred_fallthru
    _
  // Predicated region
  $region6: #{unet_forward.10} parent=0 // pred_check
    _
  $region7: #{unet_forward.10} parent=0 // pred_check_branch
    %10 = sbr.rel (0) target = $region9
  $region8: #{unet_forward.10} parent=0 // pred_region
    _
  $region9: #{unet_forward.10} parent=0 // pred_fallthru
    _
  %v12 = vld [vmem:[%s0] sm:$0xff]
  %v13 = vld [vmem:[%s0 + $0x8] sm:$0xff]
  %v14 = vld [vmem:[%s0 + $0x10] sm:$0xff]
  %v15 = vld [vmem:[%s0 + $0x18] sm:$0xff]
  %v16 = vld [vmem:[%s0 + $0x20] sm:$0xff]
  %v17 = vld [vmem:[%s0 + $0x28] sm:$0xff]
  %v18 = vld [vmem:[%s0 + $0x30] sm:$0xff]
  %v19 = vld [vmem:[%s0 + $0x38] sm:$0xff]
  %v20 = vld [vmem:[%s0 + $0x40] sm:$0xff]
  %v21 = vld [vmem:[%s0 + $0x48] sm:$0xff]
  %v22 = vld [vmem:[%s0 + $0x50] sm:$0xff]
  %v23 = vld [vmem:[%s0 + $0x58] sm:$0xff]
  %v24 = vld [vmem:[%s0 + $0x60] sm:$0xff]
  %v25 = vld [vmem:[%s0 + $0x68] sm:$0xff]
  %v26 = vld [vmem:[%s0 + $0x70] sm:$0xff]
  %v27 = vld [vmem:[%s0 + $0x78] sm:$0xff]
  %v28 = vld [vmem:[%s0 + $0x80] sm:$0xff]
  %v29 = vld [vmem:[%s0 + $0x88] sm:$0xff]
  %v30 = vld [vmem:[%s0 + $0x90] sm:$0xff]
  %v31 = vld [vmem:[%s0 + $0x98] sm:$0xff]
  %v32 = vld [vmem:[%s0 + $0xa0] sm:$0xff]
  %v33 = vld [vmem:[%s0 + $0xa8] sm:$0xff]
  %v34 = vld [vmem:[%s0 + $0xb0] sm:$0xff]
  %v35 = vld [vmem:[%s0 + $0xb8] sm:$0xff]
  %v36 = vpack.c.bf16 %v16, %v12
  %v37 = vpack.c.bf16 %v17, %v13
  %v38 = vpack.c.bf16 %v18, %v14
  %v39 = vpack.c.bf16 %v19, %v15
  %v40 = vpack.c.bf16 %v24, %v20
  %v41 = vpack.c.bf16 %v25, %v21
  %v42 = vpack.c.bf16 %v26, %v22
  %v43 = vpack.c.bf16 %v27, %v23
  %v44 = vpack.c.bf16 %v32, %v28
  %v45 = vpack.c.bf16 %v33, %v29
  %v46 = vpack.c.bf16 %v34, %v30
  %v47 = vpack.c.bf16 %v35, %v31
  %v48 = vld [vmem:[%s1] sm:$0xf]
  %vm49 = vcmask 392192
  %v51 = vsel %vm49, %v48, 0
  %53 = vmatpush.bf16.msra.mxu0 0
  %54 = vmatpush.bf16.msra.mxu0 0
  %55 = vmatpush.bf16.msra.mxu0 0
  %56 = vmatpush.bf16.msra.mxu0 0
  %57 = vmatpush.bf16.msra.mxu0 0
  %58 = vmatpush.bf16.msra.mxu0 %v44
  %59 = vmatpush.bf16.msra.mxu0 %v40
  %60 = vmatpush.bf16.msra.mxu0 %v36
  %61 = vmatmul.bf16.gmra.mxu0 %v51
  %v62 = vpop.f32.mrf.mxu0
  %v63 = vadd.f32 0.0, %v62
  %v64 = vpop.f32.mrf.mxu0
  %65 = vdwg.mxu0
  %66 = vmatpush.bf16.msra.mxu0 0
  %67 = vmatpush.bf16.msra.mxu0 0
  %68 = vmatpush.bf16.msra.mxu0 0
  %69 = vmatpush.bf16.msra.mxu0 0
  %70 = vmatpush.bf16.msra.mxu0 0
  %71 = vmatpush.bf16.msra.mxu0 %v45
  %72 = vmatpush.bf16.msra.mxu0 %v41
  %73 = vmatpush.bf16.msra.mxu0 %v37
  %74 = vmatmul.bf16.gmra.mxu0 %v51
  %v75 = vpop.f32.mrf.mxu0
  %v76 = vadd.f32 0.0, %v75
  %v77 = vpop.f32.mrf.mxu0
  %78 = vdwg.mxu0
  %79 = vmatpush.bf16.msra.mxu0 0
  %80 = vmatpush.bf16.msra.mxu0 0
  %81 = vmatpush.bf16.msra.mxu0 0
  %82 = vmatpush.bf16.msra.mxu0 0
  %83 = vmatpush.bf16.msra.mxu0 0
  %84 = vmatpush.bf16.msra.mxu0 %v46
  %85 = vmatpush.bf16.msra.mxu0 %v42
  %86 = vmatpush.bf16.msra.mxu0 %v38
  %87 = vmatmul.bf16.gmra.mxu0 %v51
  %v88 = vpop.f32.mrf.mxu0
  %v89 = vadd.f32 0.0, %v88
  %v90 = vpop.f32.mrf.mxu0
  %91 = vdwg.mxu0
  %92 = vmatpush.bf16.msra.mxu0 0
  %93 = vmatpush.bf16.msra.mxu0 0
  %94 = vmatpush.bf16.msra.mxu0 0
  %95 = vmatpush.bf16.msra.mxu0 0
  %96 = vmatpush.bf16.msra.mxu0 0
  %97 = vmatpush.bf16.msra.mxu0 %v47
  %98 = vmatpush.bf16.msra.mxu0 %v43
  %99 = vmatpush.bf16.msra.mxu0 %v39
  %100 = vmatmul.bf16.gmra.mxu0 %v51
  %v101 = vpop.f32.mrf.mxu0
  %v102 = vadd.f32 0.0, %v101
  %v103 = vpop.f32.mrf.mxu0
  %104 = vdwg.mxu0
  %105 = vst [vmem:[%s2] sm:$0xff] %v63
  %106 = vst [vmem:[%s2 + $0x8] sm:$0xff] %v76
  %107 = vst [vmem:[%s2 + $0x10] sm:$0xff] %v89
  %108 = vst [vmem:[%s2 + $0x18] sm:$0xff] %v102
  // Predicated region
  $region10: #{unet_forward.10} parent=0 // pred_check
    _
  $region11: #{unet_forward.10} parent=0 // pred_check_branch
    %110 = sbr.rel (0) target = $region13
  $region12: #{unet_forward.10} parent=0 // pred_region
    _
  $region13: #{unet_forward.10} parent=0 // pred_fallthru
    _
  // Predicated region
  $region14: #{unet_forward.10} parent=0 // pred_check
    _
  $region15: #{unet_forward.10} parent=0 // pred_check_branch
    %112 = sbr.rel (0) target = $region17
  $region16: #{unet_forward.10} parent=0 // pred_region
    _
  $region17: #{unet_forward.10} parent=0 // pred_fallthru
    _

// kernel: unet_forward.11
$region0: #{unet_forward.11}
  #allocation0 [shape = 'u32[]', space=smem, size = 0x4, offset = 0x4, fixed_abs, tag = 'smem constant byte address 0x4 - core index']
  #allocation1 [shape = 'u32[72,128]{1,0:T(1,128)}', space=vmem, size = 0x9000, scoped, tag = 'internal scratch']
  %s0 = inlined_call_operand.vmem [shape: f32[128,128], index: 0, kind: input, shape index: {}]
  %s1 = inlined_call_operand.vmem [shape: bf16[1,16,128], index: 1, kind: input, shape index: {}]
  %s2 = inlined_call_operand.vmem [shape: f32[16,1], index: 2, kind: input, shape index: {}]
  %s3 = inlined_call_operand.vmem [shape: f32[16,1], index: 3, kind: input, shape index: {}]
  %s4 = inlined_call_operand.vmem [shape: f32[16,128], index: 4, kind: output, shape index: {}]
  %s5 = sld [smem:[#allocation0]]
  $region26: #{unet_forward.11} parent=0
    _
  %s7 = ssub.s32 1, %s5
  %s8 = scalar_select 0, %s7, %s5
  // Predicated region
  $region2: #{unet_forward.11} parent=0 // pred_check
    _
  $region3: #{unet_forward.11} parent=0 // pred_check_branch
    %10 = sbr.rel (0) target = $region5
  $region4: #{unet_forward.11} parent=0 // pred_region
    _
  $region5: #{unet_forward.11} parent=0 // pred_fallthru
    _
  // Predicated region
  $region6: #{unet_forward.11} parent=0 // pred_check
    _
  $region7: #{unet_forward.11} parent=0 // pred_check_branch
    %12 = sbr.rel (0) target = $region9
  $region8: #{unet_forward.11} parent=0 // pred_region
    _
  $region9: #{unet_forward.11} parent=0 // pred_fallthru
    _
  // Predicated region
  $region10: #{unet_forward.11} parent=0 // pred_check
    _
  $region11: #{unet_forward.11} parent=0 // pred_check_branch
    %14 = sbr.rel (0) target = $region13
  $region12: #{unet_forward.11} parent=0 // pred_region
    _
  $region13: #{unet_forward.11} parent=0 // pred_fallthru
    _
  // Predicated region
  $region14: #{unet_forward.11} parent=0 // pred_check
    _
  $region15: #{unet_forward.11} parent=0 // pred_check_branch
    %16 = sbr.rel (0) target = $region17
  $region16: #{unet_forward.11} parent=0 // pred_region
    _
  $region17: #{unet_forward.11} parent=0 // pred_fallthru
    _
  %v17 = vld [vmem:[%s0] sm:$0xff]
  %v18 = vld [vmem:[%s0 + $0x8] sm:$0xff]
  %v19 = vld [vmem:[%s0 + $0x10] sm:$0xff]
  %v20 = vld [vmem:[%s0 + $0x18] sm:$0xff]
  %v21 = vld [vmem:[%s0 + $0x20] sm:$0xff]
  %v22 = vld [vmem:[%s0 + $0x28] sm:$0xff]
  %v23 = vld [vmem:[%s0 + $0x30] sm:$0xff]
  %v24 = vld [vmem:[%s0 + $0x38] sm:$0xff]
  %v25 = vld [vmem:[%s0 + $0x40] sm:$0xff]
  %v26 = vld [vmem:[%s0 + $0x48] sm:$0xff]
  %v27 = vld [vmem:[%s0 + $0x50] sm:$0xff]
  %v28 = vld [vmem:[%s0 + $0x58] sm:$0xff]
  %v29 = vld [vmem:[%s0 + $0x60] sm:$0xff]
  %v30 = vld [vmem:[%s0 + $0x68] sm:$0xff]
  %v31 = vld [vmem:[%s0 + $0x70] sm:$0xff]
  %v32 = vld [vmem:[%s0 + $0x78] sm:$0xff]
  %vm33 = vcmp.ge.f32.partialorder %v17, 0.0
  %vm34 = vcmp.ge.f32.partialorder %v18, 0.0
  %vm35 = vcmp.ge.f32.partialorder %v19, 0.0
  %vm36 = vcmp.ge.f32.partialorder %v20, 0.0
  %vm37 = vcmp.ge.f32.partialorder %v21, 0.0
  %vm38 = vcmp.ge.f32.partialorder %v22, 0.0
  %vm39 = vcmp.ge.f32.partialorder %v23, 0.0
  %vm40 = vcmp.ge.f32.partialorder %v24, 0.0
  %vm41 = vcmp.ge.f32.partialorder %v25, 0.0
  %vm42 = vcmp.ge.f32.partialorder %v26, 0.0
  %vm43 = vcmp.ge.f32.partialorder %v27, 0.0
  %vm44 = vcmp.ge.f32.partialorder %v28, 0.0
  %vm45 = vcmp.ge.f32.partialorder %v29, 0.0
  %vm46 = vcmp.ge.f32.partialorder %v30, 0.0
  %vm47 = vcmp.ge.f32.partialorder %v31, 0.0
  %vm48 = vcmp.ge.f32.partialorder %v32, 0.0
  %v49 = vmul.f32 %v17, 0.2
  %v50 = vmul.f32 %v18, 0.2
  %v51 = vmul.f32 %v19, 0.2
  %v52 = vmul.f32 %v20, 0.2
  %v53 = vmul.f32 %v21, 0.2
  %v54 = vmul.f32 %v22, 0.2
  %v55 = vmul.f32 %v23, 0.2
  %v56 = vmul.f32 %v24, 0.2
  %v57 = vmul.f32 %v25, 0.2
  %v58 = vmul.f32 %v26, 0.2
  %v59 = vmul.f32 %v27, 0.2
  %v60 = vmul.f32 %v28, 0.2
  %v61 = vmul.f32 %v29, 0.2
  %v62 = vmul.f32 %v30, 0.2
  %v63 = vmul.f32 %v31, 0.2
  %v64 = vmul.f32 %v32, 0.2
  %v65 = vsel %vm33, %v17, %v49
  %v66 = vsel %vm34, %v18, %v50
  %v67 = vsel %vm35, %v19, %v51
  %v68 = vsel %vm36, %v20, %v52
  %v69 = vsel %vm37, %v21, %v53
  %v70 = vsel %vm38, %v22, %v54
  %v71 = vsel %vm39, %v23, %v55
  %v72 = vsel %vm40, %v24, %v56
  %v73 = vsel %vm41, %v25, %v57
  %v74 = vsel %vm42, %v26, %v58
  %v75 = vsel %vm43, %v27, %v59
  %v76 = vsel %vm44, %v28, %v60
  %v77 = vsel %vm45, %v29, %v61
  %v78 = vsel %vm46, %v30, %v62
  %v79 = vsel %vm47, %v31, %v63
  %v80 = vsel %vm48, %v32, %v64
  %v81 = vpack.c.bf16 %v66, %v65
  %v82 = vpack.c.bf16 %v68, %v67
  %v83 = vpack.c.bf16 %v70, %v69
  %v84 = vpack.c.bf16 %v72, %v71
  %v85 = vpack.c.bf16 %v74, %v73
  %v86 = vpack.c.bf16 %v76, %v75
  %v87 = vpack.c.bf16 %v78, %v77
  %v88 = vpack.c.bf16 %v80, %v79
  %v89 = vld [vmem:[%s1] sm:$0xf]
  %v90 = vld [vmem:[%s1 + $0x4] sm:$0xf]
  %v93 = vunpack.c.l.b16 %v89
  %v94 = vunpack.c.l.b16 %v90
  %v95 = vpack.c.b16 %v94, %v93
  %97 = vmatpush.bf16.msra.mxu0 %v88
  %98 = vmatpush.bf16.msra.mxu0 %v87
  %99 = vmatpush.bf16.msra.mxu0 %v86
  %100 = vmatpush.bf16.msra.mxu0 %v85
  %101 = vmatpush.bf16.msra.mxu0 %v84
  %102 = vmatpush.bf16.msra.mxu0 %v83
  %103 = vmatpush.bf16.msra.mxu0 %v82
  %104 = vmatpush.bf16.msra.mxu0 %v81
  %105 = vmatmul.bf16.gmra.mxu0 %v95
  %v106 = vpop.f32.mrf.mxu0
  %v107 = vadd.f32 0.0, %v106
  %v108 = vpop.f32.mrf.mxu0
  %v109 = vadd.f32 0.0, %v108
  %110 = vdwg.mxu0
  %111 = vst [vmem:[%s4] sm:$0xff] %v107
  %112 = vst [vmem:[%s4 + $0x8] sm:$0xff] %v109
  %v113 = vld [vmem:[%s4] sm:$0xff]
  %v114 = vld [vmem:[%s4 + $0x8] sm:$0xff]
  %115 = vadd.xlane.f32.xlu0 %v113
  %v116 = vpop.xlane.xlu0 %115
  %117 = vadd.xlane.f32.xlu0 %v114
  %v118 = vpop.xlane.xlu0 %117
  %v119 = vrcp.pop 128.0
  %v120 = vmul.f32 128.0, %v119
  %v121 = vsub.f32 1.0, %v120
  %v122 = vmul.f32 %v119, %v121
  %v123 = vadd.f32 %v119, %v122
  %vm124 = vweird.f32 %v119
  %v125 = vsel %vm124, %v119, %v123
  %v126 = vmul.f32 %v116, %v125
  %v127 = vmul.f32 %v118, %v125
  %v128 = vsub.f32 %v113, %v126
  %v129 = vsub.f32 %v114, %v127
  %v130 = vmul.f32 %v128, %v128
  %v131 = vmul.f32 %v129, %v129
  %132 = vadd.xlane.f32.xlu0 %v130
  %v133 = vpop.xlane.xlu0 %132
  %134 = vadd.xlane.f32.xlu0 %v131
  %v135 = vpop.xlane.xlu0 %134
  %v136 = vmul.f32 %v133, %v125
  %v137 = vmul.f32 %v135, %v125
  %v138 = vld [vmem:[%s2] sm:$0xff]
  %v139 = vld [vmem:[%s2 + $0x8] sm:$0xff]
  %v140 = vadd.f32 %v136, 1e-05
  %v141 = vadd.f32 %v137, 1e-05
  %v142 = vrsqrt.pop %v140
  %v143 = vmul.f32 %v142, %v140
  %v144 = vmul.f32 %v143, %v142
  %v145 = vmul.f32 0.5, %v144
  %v146 = vsub.f32 1.5, %v145
  %v147 = vmul.f32 %v142, %v146
  %vm148 = vweird.f32 %v140
  %vm149 = vweird.f32 %v142
  %vm150 = vmor %vm148, %vm149
  %v151 = vsel %vm150, %v142, %v147
  %v152 = vrsqrt.pop %v141
  %v153 = vmul.f32 %v152, %v141
  %v154 = vmul.f32 %v153, %v152
  %v155 = vmul.f32 0.5, %v154
  %v156 = vsub.f32 1.5, %v155
  %v157 = vmul.f32 %v152, %v156
  %vm158 = vweird.f32 %v141
  %vm159 = vweird.f32 %v152
  %vm160 = vmor %vm158, %vm159
  %v161 = vsel %vm160, %v152, %v157
  %v162 = vmul.f32 %v138, %v151
  %v163 = vmul.f32 %v139, %v161
  %v164 = vld [vmem:[%s3] sm:$0xff]
  %v165 = vld [vmem:[%s3 + $0x8] sm:$0xff]
  %v166 = vmul.f32 %v126, %v162
  %v167 = vmul.f32 %v127, %v163
  %v168 = vsub.f32 %v164, %v166
  %v169 = vsub.f32 %v165, %v167
  %171 = vset.pattern.permute.xlu0 0
  %172 = vperm.xlu0 %171, %v162
  %v173 = vpop.permute.xlu0 %172
  %176 = vset.pattern.permute.xlu0 0
  %177 = vperm.xlu0 %176, %v163
  %v178 = vpop.permute.xlu0 %177
  %v180 = vmul.f32 %v113, %v173
  %v181 = vmul.f32 %v114, %v178
  %183 = vset.pattern.permute.xlu0 0
  %184 = vperm.xlu0 %183, %v168
  %v185 = vpop.permute.xlu0 %184
  %188 = vset.pattern.permute.xlu0 0
  %189 = vperm.xlu0 %188, %v169
  %v190 = vpop.permute.xlu0 %189
  %v192 = vadd.f32 %v180, %v185
  %v193 = vadd.f32 %v181, %v190
  %194 = vst [vmem:[%s4] sm:$0xff] %v192
  %195 = vst [vmem:[%s4 + $0x8] sm:$0xff] %v193
  // Predicated region
  $region18: #{unet_forward.11} parent=0 // pred_check
    _
  $region19: #{unet_forward.11} parent=0 // pred_check_branch
    %197 = sbr.rel (0) target = $region21
  $region20: #{unet_forward.11} parent=0 // pred_region
    _
  $region21: #{unet_forward.11} parent=0 // pred_fallthru
    _
  // Predicated region
  $region22: #{unet_forward.11} parent=0 // pred_check
    _
  $region23: #{unet_forward.11} parent=0 // pred_check_branch
    %199 = sbr.rel (0) target = $region25
  $region24: #{unet_forward.11} parent=0 // pred_region
    _
  $region25: #{unet_forward.11} parent=0 // pred_fallthru
    _

// kernel: unet_forward.12
$region0: #{unet_forward.12}
  #allocation0 [shape = 'u32[]', space=smem, size = 0x4, offset = 0x4, fixed_abs, tag = 'smem constant byte address 0x4 - core index']
  #allocation1 [shape = 'u32[72,128]{1,0:T(1,128)}', space=vmem, size = 0x9000, scoped, tag = 'internal scratch']
  %s0 = inlined_call_operand.vmem [shape: f32[256,32], index: 0, kind: input, shape index: {}]
  %s1 = inlined_call_operand.vmem [shape: bf16[1,32,256], index: 1, kind: input, shape index: {}]
  %s2 = inlined_call_operand.vmem [shape: f32[32,1], index: 2, kind: input, shape index: {}]
  %s3 = inlined_call_operand.vmem [shape: f32[32,1], index: 3, kind: input, shape index: {}]
  %s4 = inlined_call_operand.vmem [shape: f32[32,32], index: 4, kind: output, shape index: {}]
  %s5 = sld [smem:[#allocation0]]
  $region26: #{unet_forward.12} parent=0
    _
  %s7 = ssub.s32 1, %s5
  %s8 = scalar_select 0, %s7, %s5
  // Predicated region
  $region2: #{unet_forward.12} parent=0 // pred_check
    _
  $region3: #{unet_forward.12} parent=0 // pred_check_branch
    %10 = sbr.rel (0) target = $region5
  $region4: #{unet_forward.12} parent=0 // pred_region
    _
  $region5: #{unet_forward.12} parent=0 // pred_fallthru
    _
  // Predicated region
  $region6: #{unet_forward.12} parent=0 // pred_check
    _
  $region7: #{unet_forward.12} parent=0 // pred_check_branch
    %12 = sbr.rel (0) target = $region9
  $region8: #{unet_forward.12} parent=0 // pred_region
    _
  $region9: #{unet_forward.12} parent=0 // pred_fallthru
    _
  // Predicated region
  $region10: #{unet_forward.12} parent=0 // pred_check
    _
  $region11: #{unet_forward.12} parent=0 // pred_check_branch
    %14 = sbr.rel (0) target = $region13
  $region12: #{unet_forward.12} parent=0 // pred_region
    _
  $region13: #{unet_forward.12} parent=0 // pred_fallthru
    _
  // Predicated region
  $region14: #{unet_forward.12} parent=0 // pred_check
    _
  $region15: #{unet_forward.12} parent=0 // pred_check_branch
    %16 = sbr.rel (0) target = $region17
  $region16: #{unet_forward.12} parent=0 // pred_region
    _
  $region17: #{unet_forward.12} parent=0 // pred_fallthru
    _
  %v17 = vld [vmem:[%s0] sm:$0xff]
  %v18 = vld [vmem:[%s0 + $0x8] sm:$0xff]
  %v19 = vld [vmem:[%s0 + $0x10] sm:$0xff]
  %v20 = vld [vmem:[%s0 + $0x18] sm:$0xff]
  %v21 = vld [vmem:[%s0 + $0x20] sm:$0xff]
  %v22 = vld [vmem:[%s0 + $0x28] sm:$0xff]
  %v23 = vld [vmem:[%s0 + $0x30] sm:$0xff]
  %v24 = vld [vmem:[%s0 + $0x38] sm:$0xff]
  %v25 = vld [vmem:[%s0 + $0x40] sm:$0xff]
  %v26 = vld [vmem:[%s0 + $0x48] sm:$0xff]
  %v27 = vld [vmem:[%s0 + $0x50] sm:$0xff]
  %v28 = vld [vmem:[%s0 + $0x58] sm:$0xff]
  %v29 = vld [vmem:[%s0 + $0x60] sm:$0xff]
  %v30 = vld [vmem:[%s0 + $0x68] sm:$0xff]
  %v31 = vld [vmem:[%s0 + $0x70] sm:$0xff]
  %v32 = vld [vmem:[%s0 + $0x78] sm:$0xff]
  %v33 = vld [vmem:[%s0 + $0x80] sm:$0xff]
  %v34 = vld [vmem:[%s0 + $0x88] sm:$0xff]
  %v35 = vld [vmem:[%s0 + $0x90] sm:$0xff]
  %v36 = vld [vmem:[%s0 + $0x98] sm:$0xff]
  %v37 = vld [vmem:[%s0 + $0xa0] sm:$0xff]
  %v38 = vld [vmem:[%s0 + $0xa8] sm:$0xff]
  %v39 = vld [vmem:[%s0 + $0xb0] sm:$0xff]
  %v40 = vld [vmem:[%s0 + $0xb8] sm:$0xff]
  %v41 = vld [vmem:[%s0 + $0xc0] sm:$0xff]
  %v42 = vld [vmem:[%s0 + $0xc8] sm:$0xff]
  %v43 = vld [vmem:[%s0 + $0xd0] sm:$0xff]
  %v44 = vld [vmem:[%s0 + $0xd8] sm:$0xff]
  %v45 = vld [vmem:[%s0 + $0xe0] sm:$0xff]
  %v46 = vld [vmem:[%s0 + $0xe8] sm:$0xff]
  %v47 = vld [vmem:[%s0 + $0xf0] sm:$0xff]
  %v48 = vld [vmem:[%s0 + $0xf8] sm:$0xff]
  %vm49 = vcmp.ge.f32.partialorder %v17, 0.0
  %vm50 = vcmp.ge.f32.partialorder %v18, 0.0
  %vm51 = vcmp.ge.f32.partialorder %v19, 0.0
  %vm52 = vcmp.ge.f32.partialorder %v20, 0.0
  %vm53 = vcmp.ge.f32.partialorder %v21, 0.0
  %vm54 = vcmp.ge.f32.partialorder %v22, 0.0
  %vm55 = vcmp.ge.f32.partialorder %v23, 0.0
  %vm56 = vcmp.ge.f32.partialorder %v24, 0.0
  %vm57 = vcmp.ge.f32.partialorder %v25, 0.0
  %vm58 = vcmp.ge.f32.partialorder %v26, 0.0
  %vm59 = vcmp.ge.f32.partialorder %v27, 0.0
  %vm60 = vcmp.ge.f32.partialorder %v28, 0.0
  %vm61 = vcmp.ge.f32.partialorder %v29, 0.0
  %vm62 = vcmp.ge.f32.partialorder %v30, 0.0
  %vm63 = vcmp.ge.f32.partialorder %v31, 0.0
  %vm64 = vcmp.ge.f32.partialorder %v32, 0.0
  %vm65 = vcmp.ge.f32.partialorder %v33, 0.0
  %vm66 = vcmp.ge.f32.partialorder %v34, 0.0
  %vm67 = vcmp.ge.f32.partialorder %v35, 0.0
  %vm68 = vcmp.ge.f32.partialorder %v36, 0.0
  %vm69 = vcmp.ge.f32.partialorder %v37, 0.0
  %vm70 = vcmp.ge.f32.partialorder %v38, 0.0
  %vm71 = vcmp.ge.f32.partialorder %v39, 0.0
  %vm72 = vcmp.ge.f32.partialorder %v40, 0.0
  %vm73 = vcmp.ge.f32.partialorder %v41, 0.0
  %vm74 = vcmp.ge.f32.partialorder %v42, 0.0
  %vm75 = vcmp.ge.f32.partialorder %v43, 0.0
  %vm76 = vcmp.ge.f32.partialorder %v44, 0.0
  %vm77 = vcmp.ge.f32.partialorder %v45, 0.0
  %vm78 = vcmp.ge.f32.partialorder %v46, 0.0
  %vm79 = vcmp.ge.f32.partialorder %v47, 0.0
  %vm80 = vcmp.ge.f32.partialorder %v48, 0.0
  %v81 = vmul.f32 %v17, 0.2
  %v82 = vmul.f32 %v18, 0.2
  %v83 = vmul.f32 %v19, 0.2
  %v84 = vmul.f32 %v20, 0.2
  %v85 = vmul.f32 %v21, 0.2
  %v86 = vmul.f32 %v22, 0.2
  %v87 = vmul.f32 %v23, 0.2
  %v88 = vmul.f32 %v24, 0.2
  %v89 = vmul.f32 %v25, 0.2
  %v90 = vmul.f32 %v26, 0.2
  %v91 = vmul.f32 %v27, 0.2
  %v92 = vmul.f32 %v28, 0.2
  %v93 = vmul.f32 %v29, 0.2
  %v94 = vmul.f32 %v30, 0.2
  %v95 = vmul.f32 %v31, 0.2
  %v96 = vmul.f32 %v32, 0.2
  %v97 = vmul.f32 %v33, 0.2
  %v98 = vmul.f32 %v34, 0.2
  %v99 = vmul.f32 %v35, 0.2
  %v100 = vmul.f32 %v36, 0.2
  %v101 = vmul.f32 %v37, 0.2
  %v102 = vmul.f32 %v38, 0.2
  %v103 = vmul.f32 %v39, 0.2
  %v104 = vmul.f32 %v40, 0.2
  %v105 = vmul.f32 %v41, 0.2
  %v106 = vmul.f32 %v42, 0.2
  %v107 = vmul.f32 %v43, 0.2
  %v108 = vmul.f32 %v44, 0.2
  %v109 = vmul.f32 %v45, 0.2
  %v110 = vmul.f32 %v46, 0.2
  %v111 = vmul.f32 %v47, 0.2
  %v112 = vmul.f32 %v48, 0.2
  %v113 = vsel %vm49, %v17, %v81
  %v114 = vsel %vm50, %v18, %v82
  %v115 = vsel %vm51, %v19, %v83
  %v116 = vsel %vm52, %v20, %v84
  %v117 = vsel %vm53, %v21, %v85
  %v118 = vsel %vm54, %v22, %v86
  %v119 = vsel %vm55, %v23, %v87
  %v120 = vsel %vm56, %v24, %v88
  %v121 = vsel %vm57, %v25, %v89
  %v122 = vsel %vm58, %v26, %v90
  %v123 = vsel %vm59, %v27, %v91
  %v124 = vsel %vm60, %v28, %v92
  %v125 = vsel %vm61, %v29, %v93
  %v126 = vsel %vm62, %v30, %v94
  %v127 = vsel %vm63, %v31, %v95
  %v128 = vsel %vm64, %v32, %v96
  %v129 = vsel %vm65, %v33, %v97
  %v130 = vsel %vm66, %v34, %v98
  %v131 = vsel %vm67, %v35, %v99
  %v132 = vsel %vm68, %v36, %v100
  %v133 = vsel %vm69, %v37, %v101
  %v134 = vsel %vm70, %v38, %v102
  %v135 = vsel %vm71, %v39, %v103
  %v136 = vsel %vm72, %v40, %v104
  %v137 = vsel %vm73, %v41, %v105
  %v138 = vsel %vm74, %v42, %v106
  %v139 = vsel %vm75, %v43, %v107
  %v140 = vsel %vm76, %v44, %v108
  %v141 = vsel %vm77, %v45, %v109
  %v142 = vsel %vm78, %v46, %v110
  %v143 = vsel %vm79, %v47, %v111
  %v144 = vsel %vm80, %v48, %v112
  %v145 = vpack.c.bf16 %v114, %v113
  %v146 = vpack.c.bf16 %v116, %v115
  %v147 = vpack.c.bf16 %v118, %v117
  %v148 = vpack.c.bf16 %v120, %v119
  %v149 = vpack.c.bf16 %v122, %v121
  %v150 = vpack.c.bf16 %v124, %v123
  %v151 = vpack.c.bf16 %v126, %v125
  %v152 = vpack.c.bf16 %v128, %v127
  %v153 = vpack.c.bf16 %v130, %v129
  %v154 = vpack.c.bf16 %v132, %v131
  %v155 = vpack.c.bf16 %v134, %v133
  %v156 = vpack.c.bf16 %v136, %v135
  %v157 = vpack.c.bf16 %v138, %v137
  %v158 = vpack.c.bf16 %v140, %v139
  %v159 = vpack.c.bf16 %v142, %v141
  %v160 = vpack.c.bf16 %v144, %v143
  %v161 = vld [vmem:[%s1] sm:$0xff]
  %v162 = vld [vmem:[%s1 + $0x8] sm:$0xff]
  %v163 = vld [vmem:[%s1 + $0x10] sm:$0xff]
  %v164 = vld [vmem:[%s1 + $0x18] sm:$0xff]
  %v169 = vunpack.c.l.b16 %v161
  %v170 = vunpack.c.h.b16 %v161
  %v171 = vunpack.c.l.b16 %v162
  %v172 = vunpack.c.h.b16 %v162
  %v173 = vunpack.c.l.b16 %v163
  %v174 = vunpack.c.h.b16 %v163
  %v175 = vunpack.c.l.b16 %v164
  %v176 = vunpack.c.h.b16 %v164
  %v177 = vpack.c.b16 %v171, %v169
  %v178 = vpack.c.b16 %v172, %v170
  %v179 = vpack.c.b16 %v175, %v173
  %v180 = vpack.c.b16 %v176, %v174
  %185 = vmatpush.bf16.msra.mxu0 %v152
  %186 = vmatpush.bf16.msra.mxu0 %v151
  %187 = vmatpush.bf16.msra.mxu0 %v150
  %188 = vmatpush.bf16.msra.mxu0 %v149
  %189 = vmatpush.bf16.msra.mxu0 %v148
  %190 = vmatpush.bf16.msra.mxu0 %v147
  %191 = vmatpush.bf16.msra.mxu0 %v146
  %192 = vmatpush.bf16.msra.mxu0 %v145
  %193 = vmatmul.bf16.gmra.mxu0 %v177
  %v194 = vpop.f32.mrf.mxu0
  %v195 = vadd.f32 0.0, %v194
  %v196 = vpop.f32.mrf.mxu0
  %v197 = vadd.f32 0.0, %v196
  %198 = vmatmul.bf16.gmra.mxu0 %v179
  %v199 = vpop.f32.mrf.mxu0
  %v200 = vadd.f32 0.0, %v199
  %v201 = vpop.f32.mrf.mxu0
  %v202 = vadd.f32 0.0, %v201
  %203 = vdwg.mxu0
  %204 = vmatpush.bf16.msra.mxu0 %v160
  %205 = vmatpush.bf16.msra.mxu0 %v159
  %206 = vmatpush.bf16.msra.mxu0 %v158
  %207 = vmatpush.bf16.msra.mxu0 %v157
  %208 = vmatpush.bf16.msra.mxu0 %v156
  %209 = vmatpush.bf16.msra.mxu0 %v155
  %210 = vmatpush.bf16.msra.mxu0 %v154
  %211 = vmatpush.bf16.msra.mxu0 %v153
  %212 = vmatmul.bf16.gmra.mxu0 %v178
  %v213 = vpop.f32.mrf.mxu0
  %v214 = vadd.f32 %v195, %v213
  %v215 = vpop.f32.mrf.mxu0
  %v216 = vadd.f32 %v197, %v215
  %217 = vmatmul.bf16.gmra.mxu0 %v180
  %v218 = vpop.f32.mrf.mxu0
  %v219 = vadd.f32 %v200, %v218
  %v220 = vpop.f32.mrf.mxu0
  %v221 = vadd.f32 %v202, %v220
  %222 = vdwg.mxu0
  %vm223 = vcmask 261120
  %224 = vst.msk [vmem:[%s4] sm:$0xff] %vm223, %v214
  %225 = vst.msk [vmem:[%s4 + $0x8] sm:$0xff] %vm223, %v216
  %226 = vst.msk [vmem:[%s4 + $0x10] sm:$0xff] %vm223, %v219
  %227 = vst.msk [vmem:[%s4 + $0x18] sm:$0xff] %vm223, %v221
  %v228 = vld [vmem:[%s4] sm:$0xff]
  %v229 = vld [vmem:[%s4 + $0x8] sm:$0xff]
  %v230 = vld [vmem:[%s4 + $0x10] sm:$0xff]
  %v231 = vld [vmem:[%s4 + $0x18] sm:$0xff]
  %v232 = vsel %vm223, %v228, 0.0
  %233 = vadd.xlane.f32.xlu0 %v232
  %v234 = vpop.xlane.xlu0 %233
  %v235 = vsel %vm223, %v229, 0.0
  %236 = vadd.xlane.f32.xlu0 %v235
  %v237 = vpop.xlane.xlu0 %236
  %v238 = vsel %vm223, %v230, 0.0
  %239 = vadd.xlane.f32.xlu0 %v238
  %v240 = vpop.xlane.xlu0 %239
  %v241 = vsel %vm223, %v231, 0.0
  %242 = vadd.xlane.f32.xlu0 %v241
  %v243 = vpop.xlane.xlu0 %242
  %v244 = vrcp.pop 32.0
  %v245 = vmul.f32 32.0, %v244
  %v246 = vsub.f32 1.0, %v245
  %v247 = vmul.f32 %v244, %v246
  %v248 = vadd.f32 %v244, %v247
  %vm249 = vweird.f32 %v244
  %v250 = vsel %vm249, %v244, %v248
  %v251 = vmul.f32 %v234, %v250
  %v252 = vmul.f32 %v237, %v250
  %v253 = vmul.f32 %v240, %v250
  %v254 = vmul.f32 %v243, %v250
  %v255 = vsub.f32 %v228, %v251
  %v256 = vsub.f32 %v229, %v252
  %v257 = vsub.f32 %v230, %v253
  %v258 = vsub.f32 %v231, %v254
  %v259 = vmul.f32 %v255, %v255
  %v260 = vmul.f32 %v256, %v256
  %v261 = vmul.f32 %v257, %v257
  %v262 = vmul.f32 %v258, %v258
  %v263 = vsel %vm223, %v259, 0.0
  %264 = vadd.xlane.f32.xlu0 %v263
  %v265 = vpop.xlane.xlu0 %264
  %v266 = vsel %vm223, %v260, 0.0
  %267 = vadd.xlane.f32.xlu0 %v266
  %v268 = vpop.xlane.xlu0 %267
  %v269 = vsel %vm223, %v261, 0.0
  %270 = vadd.xlane.f32.xlu0 %v269
  %v271 = vpop.xlane.xlu0 %270
  %v272 = vsel %vm223, %v262, 0.0
  %273 = vadd.xlane.f32.xlu0 %v272
  %v274 = vpop.xlane.xlu0 %273
  %v275 = vmul.f32 %v265, %v250
  %v276 = vmul.f32 %v268, %v250
  %v277 = vmul.f32 %v271, %v250
  %v278 = vmul.f32 %v274, %v250
  %v279 = vld [vmem:[%s2] sm:$0xff]
  %v280 = vld [vmem:[%s2 + $0x8] sm:$0xff]
  %v281 = vld [vmem:[%s2 + $0x10] sm:$0xff]
  %v282 = vld [vmem:[%s2 + $0x18] sm:$0xff]
  %v283 = vadd.f32 %v275, 1e-05
  %v284 = vadd.f32 %v276, 1e-05
  %v285 = vadd.f32 %v277, 1e-05
  %v286 = vadd.f32 %v278, 1e-05
  %v287 = vrsqrt.pop %v283
  %v288 = vmul.f32 %v287, %v283
  %v289 = vmul.f32 %v288, %v287
  %v290 = vmul.f32 0.5, %v289
  %v291 = vsub.f32 1.5, %v290
  %v292 = vmul.f32 %v287, %v291
  %vm293 = vweird.f32 %v283
  %vm294 = vweird.f32 %v287
  %vm295 = vmor %vm293, %vm294
  %v296 = vsel %vm295, %v287, %v292
  %v297 = vrsqrt.pop %v284
  %v298 = vmul.f32 %v297, %v284
  %v299 = vmul.f32 %v298, %v297
  %v300 = vmul.f32 0.5, %v299
  %v301 = vsub.f32 1.5, %v300
  %v302 = vmul.f32 %v297, %v301
  %vm303 = vweird.f32 %v284
  %vm304 = vweird.f32 %v297
  %vm305 = vmor %vm303, %vm304
  %v306 = vsel %vm305, %v297, %v302
  %v307 = vrsqrt.pop %v285
  %v308 = vmul.f32 %v307, %v285
  %v309 = vmul.f32 %v308, %v307
  %v310 = vmul.f32 0.5, %v309
  %v311 = vsub.f32 1.5, %v310
  %v312 = vmul.f32 %v307, %v311
  %vm313 = vweird.f32 %v285
  %vm314 = vweird.f32 %v307
  %vm315 = vmor %vm313, %vm314
  %v316 = vsel %vm315, %v307, %v312
  %v317 = vrsqrt.pop %v286
  %v318 = vmul.f32 %v317, %v286
  %v319 = vmul.f32 %v318, %v317
  %v320 = vmul.f32 0.5, %v319
  %v321 = vsub.f32 1.5, %v320
  %v322 = vmul.f32 %v317, %v321
  %vm323 = vweird.f32 %v286
  %vm324 = vweird.f32 %v317
  %vm325 = vmor %vm323, %vm324
  %v326 = vsel %vm325, %v317, %v322
  %v327 = vmul.f32 %v279, %v296
  %v328 = vmul.f32 %v280, %v306
  %v329 = vmul.f32 %v281, %v316
  %v330 = vmul.f32 %v282, %v326
  %v331 = vld [vmem:[%s3] sm:$0xff]
  %v332 = vld [vmem:[%s3 + $0x8] sm:$0xff]
  %v333 = vld [vmem:[%s3 + $0x10] sm:$0xff]
  %v334 = vld [vmem:[%s3 + $0x18] sm:$0xff]
  %v335 = vmul.f32 %v251, %v327
  %v336 = vmul.f32 %v252, %v328
  %v337 = vmul.f32 %v253, %v329
  %v338 = vmul.f32 %v254, %v330
  %v339 = vsub.f32 %v331, %v335
  %v340 = vsub.f32 %v332, %v336
  %v341 = vsub.f32 %v333, %v337
  %v342 = vsub.f32 %v334, %v338
  %344 = vset.pattern.permute.xlu0 0
  %345 = vperm.xlu0 %344, %v327
  %v346 = vpop.permute.xlu0 %345
  %349 = vset.pattern.permute.xlu0 0
  %350 = vperm.xlu0 %349, %v328
  %v351 = vpop.permute.xlu0 %350
  %354 = vset.pattern.permute.xlu0 0
  %355 = vperm.xlu0 %354, %v329
  %v356 = vpop.permute.xlu0 %355
  %359 = vset.pattern.permute.xlu0 0
  %360 = vperm.xlu0 %359, %v330
  %v361 = vpop.permute.xlu0 %360
  %v363 = vmul.f32 %v228, %v346
  %v364 = vmul.f32 %v229, %v351
  %v365 = vmul.f32 %v230, %v356
  %v366 = vmul.f32 %v231, %v361
  %368 = vset.pattern.permute.xlu0 0
  %369 = vperm.xlu0 %368, %v339
  %v370 = vpop.permute.xlu0 %369
  %373 = vset.pattern.permute.xlu0 0
  %374 = vperm.xlu0 %373, %v340
  %v375 = vpop.permute.xlu0 %374
  %378 = vset.pattern.permute.xlu0 0
  %379 = vperm.xlu0 %378, %v341
  %v380 = vpop.permute.xlu0 %379
  %383 = vset.pattern.permute.xlu0 0
  %384 = vperm.xlu0 %383, %v342
  %v385 = vpop.permute.xlu0 %384
  %v387 = vadd.f32 %v363, %v370
  %v388 = vadd.f32 %v364, %v375
  %v389 = vadd.f32 %v365, %v380
  %v390 = vadd.f32 %v366, %v385
  %391 = vst.msk [vmem:[%s4] sm:$0xff] %vm223, %v387
  %392 = vst.msk [vmem:[%s4 + $0x8] sm:$0xff] %vm223, %v388
  %393 = vst.msk [vmem:[%s4 + $0x10] sm:$0xff] %vm223, %v389
  %394 = vst.msk [vmem:[%s4 + $0x18] sm:$0xff] %vm223, %v390
  // Predicated region
  $region18: #{unet_forward.12} parent=0 // pred_check
    _
  $region19: #{unet_forward.12} parent=0 // pred_check_branch
    %396 = sbr.rel (0) target = $region21
  $region20: #{unet_forward.12} parent=0 // pred_region
    _
  $region21: #{unet_forward.12} parent=0 // pred_fallthru
    _
  // Predicated region
  $region22: #{unet_forward.12} parent=0 // pred_check
    _
  $region23: #{unet_forward.12} parent=0 // pred_check_branch
    %398 = sbr.rel (0) target = $region25
  $region24: #{unet_forward.12} parent=0 // pred_region
    _
  $region25: #{unet_forward.12} parent=0 // pred_fallthru
    _

// kernel: unet_forward.13
$region0: #{unet_forward.13}
  #allocation0 [shape = 'u32[]', space=smem, size = 0x4, offset = 0x4, fixed_abs, tag = 'smem constant byte address 0x4 - core index']
  #allocation1 [shape = 'u32[72,128]{1,0:T(1,128)}', space=vmem, size = 0x9000, scoped, tag = 'internal scratch']
  %s0 = inlined_call_operand.vmem [shape: f32[512,8], index: 0, kind: input, shape index: {}]
  %s1 = inlined_call_operand.vmem [shape: bf16[1,64,512], index: 1, kind: input, shape index: {}]
  %s2 = inlined_call_operand.vmem [shape: f32[64,1], index: 2, kind: input, shape index: {}]
  %s3 = inlined_call_operand.vmem [shape: f32[64,1], index: 3, kind: input, shape index: {}]
  %s4 = inlined_call_operand.vmem [shape: f32[64,8], index: 4, kind: output, shape index: {}]
  %s5 = sld [smem:[#allocation0]]
  $region26: #{unet_forward.13} parent=0
    _
  %s7 = ssub.s32 1, %s5
  %s8 = scalar_select 0, %s7, %s5
  // Predicated region
  $region2: #{unet_forward.13} parent=0 // pred_check
    _
  $region3: #{unet_forward.13} parent=0 // pred_check_branch
    %10 = sbr.rel (0) target = $region5
  $region4: #{unet_forward.13} parent=0 // pred_region
    _
  $region5: #{unet_forward.13} parent=0 // pred_fallthru
    _
  // Predicated region
  $region6: #{unet_forward.13} parent=0 // pred_check
    _
  $region7: #{unet_forward.13} parent=0 // pred_check_branch
    %12 = sbr.rel (0) target = $region9
  $region8: #{unet_forward.13} parent=0 // pred_region
    _
  $region9: #{unet_forward.13} parent=0 // pred_fallthru
    _
  // Predicated region
  $region10: #{unet_forward.13} parent=0 // pred_check
    _
  $region11: #{unet_forward.13} parent=0 // pred_check_branch
    %14 = sbr.rel (0) target = $region13
  $region12: #{unet_forward.13} parent=0 // pred_region
    _
  $region13: #{unet_forward.13} parent=0 // pred_fallthru
    _
  // Predicated region
  $region14: #{unet_forward.13} parent=0 // pred_check
    _
  $region15: #{unet_forward.13} parent=0 // pred_check_branch
    %16 = sbr.rel (0) target = $region17
  $region16: #{unet_forward.13} parent=0 // pred_region
    _
  $region17: #{unet_forward.13} parent=0 // pred_fallthru
    _
  %v17 = vld [vmem:[%s0] sm:$0xff]
  %v18 = vld [vmem:[%s0 + $0x8] sm:$0xff]
  %v19 = vld [vmem:[%s0 + $0x10] sm:$0xff]
  %v20 = vld [vmem:[%s0 + $0x18] sm:$0xff]
  %v21 = vld [vmem:[%s0 + $0x20] sm:$0xff]
  %v22 = vld [vmem:[%s0 + $0x28] sm:$0xff]
  %v23 = vld [vmem:[%s0 + $0x30] sm:$0xff]
  %v24 = vld [vmem:[%s0 + $0x38] sm:$0xff]
  %v25 = vld [vmem:[%s0 + $0x40] sm:$0xff]
  %v26 = vld [vmem:[%s0 + $0x48] sm:$0xff]
  %v27 = vld [vmem:[%s0 + $0x50] sm:$0xff]
  %v28 = vld [vmem:[%s0 + $0x58] sm:$0xff]
  %v29 = vld [vmem:[%s0 + $0x60] sm:$0xff]
  %v30 = vld [vmem:[%s0 + $0x68] sm:$0xff]
  %v31 = vld [vmem:[%s0 + $0x70] sm:$0xff]
  %v32 = vld [vmem:[%s0 + $0x78] sm:$0xff]
  %v33 = vld [vmem:[%s0 + $0x80] sm:$0xff]
  %v34 = vld [vmem:[%s0 + $0x88] sm:$0xff]
  %v35 = vld [vmem:[%s0 + $0x90] sm:$0xff]
  %v36 = vld [vmem:[%s0 + $0x98] sm:$0xff]
  %v37 = vld [vmem:[%s0 + $0xa0] sm:$0xff]
  %v38 = vld [vmem:[%s0 + $0xa8] sm:$0xff]
  %v39 = vld [vmem:[%s0 + $0xb0] sm:$0xff]
  %v40 = vld [vmem:[%s0 + $0xb8] sm:$0xff]
  %v41 = vld [vmem:[%s0 + $0xc0] sm:$0xff]
  %v42 = vld [vmem:[%s0 + $0xc8] sm:$0xff]
  %v43 = vld [vmem:[%s0 + $0xd0] sm:$0xff]
  %v44 = vld [vmem:[%s0 + $0xd8] sm:$0xff]
  %v45 = vld [vmem:[%s0 + $0xe0] sm:$0xff]
  %v46 = vld [vmem:[%s0 + $0xe8] sm:$0xff]
  %v47 = vld [vmem:[%s0 + $0xf0] sm:$0xff]
  %v48 = vld [vmem:[%s0 + $0xf8] sm:$0xff]
  %v49 = vld [vmem:[%s0 + $0x100] sm:$0xff]
  %v50 = vld [vmem:[%s0 + $0x108] sm:$0xff]
  %v51 = vld [vmem:[%s0 + $0x110] sm:$0xff]
  %v52 = vld [vmem:[%s0 + $0x118] sm:$0xff]
  %v53 = vld [vmem:[%s0 + $0x120] sm:$0xff]
  %v54 = vld [vmem:[%s0 + $0x128] sm:$0xff]
  %v55 = vld [vmem:[%s0 + $0x130] sm:$0xff]
  %v56 = vld [vmem:[%s0 + $0x138] sm:$0xff]
  %v57 = vld [vmem:[%s0 + $0x140] sm:$0xff]
  %v58 = vld [vmem:[%s0 + $0x148] sm:$0xff]
  %v59 = vld [vmem:[%s0 + $0x150] sm:$0xff]
  %v60 = vld [vmem:[%s0 + $0x158] sm:$0xff]
  %v61 = vld [vmem:[%s0 + $0x160] sm:$0xff]
  %v62 = vld [vmem:[%s0 + $0x168] sm:$0xff]
  %v63 = vld [vmem:[%s0 + $0x170] sm:$0xff]
  %v64 = vld [vmem:[%s0 + $0x178] sm:$0xff]
  %v65 = vld [vmem:[%s0 + $0x180] sm:$0xff]
  %v66 = vld [vmem:[%s0 + $0x188] sm:$0xff]
  %v67 = vld [vmem:[%s0 + $0x190] sm:$0xff]
  %v68 = vld [vmem:[%s0 + $0x198] sm:$0xff]
  %v69 = vld [vmem:[%s0 + $0x1a0] sm:$0xff]
  %v70 = vld [vmem:[%s0 + $0x1a8] sm:$0xff]
  %v71 = vld [vmem:[%s0 + $0x1b0] sm:$0xff]
  %v72 = vld [vmem:[%s0 + $0x1b8] sm:$0xff]
  %v73 = vld [vmem:[%s0 + $0x1c0] sm:$0xff]
  %v74 = vld [vmem:[%s0 + $0x1c8] sm:$0xff]
  %v75 = vld [vmem:[%s0 + $0x1d0] sm:$0xff]
  %v76 = vld [vmem:[%s0 + $0x1d8] sm:$0xff]
  %v77 = vld [vmem:[%s0 + $0x1e0] sm:$0xff]
  %v78 = vld [vmem:[%s0 + $0x1e8] sm:$0xff]
  %v79 = vld [vmem:[%s0 + $0x1f0] sm:$0xff]
  %v80 = vld [vmem:[%s0 + $0x1f8] sm:$0xff]
  %vm81 = vcmp.ge.f32.partialorder %v17, 0.0
  %vm82 = vcmp.ge.f32.partialorder %v18, 0.0
  %vm83 = vcmp.ge.f32.partialorder %v19, 0.0
  %vm84 = vcmp.ge.f32.partialorder %v20, 0.0
  %vm85 = vcmp.ge.f32.partialorder %v21, 0.0
  %vm86 = vcmp.ge.f32.partialorder %v22, 0.0
  %vm87 = vcmp.ge.f32.partialorder %v23, 0.0
  %vm88 = vcmp.ge.f32.partialorder %v24, 0.0
  %vm89 = vcmp.ge.f32.partialorder %v25, 0.0
  %vm90 = vcmp.ge.f32.partialorder %v26, 0.0
  %vm91 = vcmp.ge.f32.partialorder %v27, 0.0
  %vm92 = vcmp.ge.f32.partialorder %v28, 0.0
  %vm93 = vcmp.ge.f32.partialorder %v29, 0.0
  %vm94 = vcmp.ge.f32.partialorder %v30, 0.0
  %vm95 = vcmp.ge.f32.partialorder %v31, 0.0
  %vm96 = vcmp.ge.f32.partialorder %v32, 0.0
  %vm97 = vcmp.ge.f32.partialorder %v33, 0.0
  %vm98 = vcmp.ge.f32.partialorder %v34, 0.0
  %vm99 = vcmp.ge.f32.partialorder %v35, 0.0
  %vm100 = vcmp.ge.f32.partialorder %v36, 0.0
  %vm101 = vcmp.ge.f32.partialorder %v37, 0.0
  %vm102 = vcmp.ge.f32.partialorder %v38, 0.0
  %vm103 = vcmp.ge.f32.partialorder %v39, 0.0
  %vm104 = vcmp.ge.f32.partialorder %v40, 0.0
  %vm105 = vcmp.ge.f32.partialorder %v41, 0.0
  %vm106 = vcmp.ge.f32.partialorder %v42, 0.0
  %vm107 = vcmp.ge.f32.partialorder %v43, 0.0
  %vm108 = vcmp.ge.f32.partialorder %v44, 0.0
  %vm109 = vcmp.ge.f32.partialorder %v45, 0.0
  %vm110 = vcmp.ge.f32.partialorder %v46, 0.0
  %vm111 = vcmp.ge.f32.partialorder %v47, 0.0
  %vm112 = vcmp.ge.f32.partialorder %v48, 0.0
  %vm113 = vcmp.ge.f32.partialorder %v49, 0.0
  %vm114 = vcmp.ge.f32.partialorder %v50, 0.0
  %vm115 = vcmp.ge.f32.partialorder %v51, 0.0
  %vm116 = vcmp.ge.f32.partialorder %v52, 0.0
  %vm117 = vcmp.ge.f32.partialorder %v53, 0.0
  %vm118 = vcmp.ge.f32.partialorder %v54, 0.0
  %vm119 = vcmp.ge.f32.partialorder %v55, 0.0
  %vm120 = vcmp.ge.f32.partialorder %v56, 0.0
  %vm121 = vcmp.ge.f32.partialorder %v57, 0.0
  %vm122 = vcmp.ge.f32.partialorder %v58, 0.0
  %vm123 = vcmp.ge.f32.partialorder %v59, 0.0
  %vm124 = vcmp.ge.f32.partialorder %v60, 0.0
  %vm125 = vcmp.ge.f32.partialorder %v61, 0.0
  %vm126 = vcmp.ge.f32.partialorder %v62, 0.0
  %vm127 = vcmp.ge.f32.partialorder %v63, 0.0
  %vm128 = vcmp.ge.f32.partialorder %v64, 0.0
  %vm129 = vcmp.ge.f32.partialorder %v65, 0.0
  %vm130 = vcmp.ge.f32.partialorder %v66, 0.0
  %vm131 = vcmp.ge.f32.partialorder %v67, 0.0
  %vm132 = vcmp.ge.f32.partialorder %v68, 0.0
  %vm133 = vcmp.ge.f32.partialorder %v69, 0.0
  %vm134 = vcmp.ge.f32.partialorder %v70, 0.0
  %vm135 = vcmp.ge.f32.partialorder %v71, 0.0
  %vm136 = vcmp.ge.f32.partialorder %v72, 0.0
  %vm137 = vcmp.ge.f32.partialorder %v73, 0.0
  %vm138 = vcmp.ge.f32.partialorder %v74, 0.0
  %vm139 = vcmp.ge.f32.partialorder %v75, 0.0
  %vm140 = vcmp.ge.f32.partialorder %v76, 0.0
  %vm141 = vcmp.ge.f32.partialorder %v77, 0.0
  %vm142 = vcmp.ge.f32.partialorder %v78, 0.0
  %vm143 = vcmp.ge.f32.partialorder %v79, 0.0
  %vm144 = vcmp.ge.f32.partialorder %v80, 0.0
  %v145 = vmul.f32 %v17, 0.2
  %v146 = vmul.f32 %v18, 0.2
  %v147 = vmul.f32 %v19, 0.2
  %v148 = vmul.f32 %v20, 0.2
  %v149 = vmul.f32 %v21, 0.2
  %v150 = vmul.f32 %v22, 0.2
  %v151 = vmul.f32 %v23, 0.2
  %v152 = vmul.f32 %v24, 0.2
  %v153 = vmul.f32 %v25, 0.2
  %v154 = vmul.f32 %v26, 0.2
  %v155 = vmul.f32 %v27, 0.2
  %v156 = vmul.f32 %v28, 0.2
  %v157 = vmul.f32 %v29, 0.2
  %v158 = vmul.f32 %v30, 0.2
  %v159 = vmul.f32 %v31, 0.2
  %v160 = vmul.f32 %v32, 0.2
  %v161 = vmul.f32 %v33, 0.2
  %v162 = vmul.f32 %v34, 0.2
  %v163 = vmul.f32 %v35, 0.2
  %v164 = vmul.f32 %v36, 0.2
  %v165 = vmul.f32 %v37, 0.2
  %v166 = vmul.f32 %v38, 0.2
  %v167 = vmul.f32 %v39, 0.2
  %v168 = vmul.f32 %v40, 0.2
  %v169 = vmul.f32 %v41, 0.2
  %v170 = vmul.f32 %v42, 0.2
  %v171 = vmul.f32 %v43, 0.2
  %v172 = vmul.f32 %v44, 0.2
  %v173 = vmul.f32 %v45, 0.2
  %v174 = vmul.f32 %v46, 0.2
  %v175 = vmul.f32 %v47, 0.2
  %v176 = vmul.f32 %v48, 0.2
  %v177 = vmul.f32 %v49, 0.2
  %v178 = vmul.f32 %v50, 0.2
  %v179 = vmul.f32 %v51, 0.2
  %v180 = vmul.f32 %v52, 0.2
  %v181 = vmul.f32 %v53, 0.2
  %v182 = vmul.f32 %v54, 0.2
  %v183 = vmul.f32 %v55, 0.2
  %v184 = vmul.f32 %v56, 0.2
  %v185 = vmul.f32 %v57, 0.2
  %v186 = vmul.f32 %v58, 0.2
  %v187 = vmul.f32 %v59, 0.2
  %v188 = vmul.f32 %v60, 0.2
  %v189 = vmul.f32 %v61, 0.2
  %v190 = vmul.f32 %v62, 0.2
  %v191 = vmul.f32 %v63, 0.2
  %v192 = vmul.f32 %v64, 0.2
  %v193 = vmul.f32 %v65, 0.2
  %v194 = vmul.f32 %v66, 0.2
  %v195 = vmul.f32 %v67, 0.2
  %v196 = vmul.f32 %v68, 0.2
  %v197 = vmul.f32 %v69, 0.2
  %v198 = vmul.f32 %v70, 0.2
  %v199 = vmul.f32 %v71, 0.2
  %v200 = vmul.f32 %v72, 0.2
  %v201 = vmul.f32 %v73, 0.2
  %v202 = vmul.f32 %v74, 0.2
  %v203 = vmul.f32 %v75, 0.2
  %v204 = vmul.f32 %v76, 0.2
  %v205 = vmul.f32 %v77, 0.2
  %v206 = vmul.f32 %v78, 0.2
  %v207 = vmul.f32 %v79, 0.2
  %v208 = vmul.f32 %v80, 0.2
  %v209 = vsel %vm81, %v17, %v145
  %v210 = vsel %vm82, %v18, %v146
  %v211 = vsel %vm83, %v19, %v147
  %v212 = vsel %vm84, %v20, %v148
  %v213 = vsel %vm85, %v21, %v149
  %v214 = vsel %vm86, %v22, %v150
  %v215 = vsel %vm87, %v23, %v151
  %v216 = vsel %vm88, %v24, %v152
  %v217 = vsel %vm89, %v25, %v153
  %v218 = vsel %vm90, %v26, %v154
  %v219 = vsel %vm91, %v27, %v155
  %v220 = vsel %vm92, %v28, %v156
  %v221 = vsel %vm93, %v29, %v157
  %v222 = vsel %vm94, %v30, %v158
  %v223 = vsel %vm95, %v31, %v159
  %v224 = vsel %vm96, %v32, %v160
  %v225 = vsel %vm97, %v33, %v161
  %v226 = vsel %vm98, %v34, %v162
  %v227 = vsel %vm99, %v35, %v163
  %v228 = vsel %vm100, %v36, %v164
  %v229 = vsel %vm101, %v37, %v165
  %v230 = vsel %vm102, %v38, %v166
  %v231 = vsel %vm103, %v39, %v167
  %v232 = vsel %vm104, %v40, %v168
  %v233 = vsel %vm105, %v41, %v169
  %v234 = vsel %vm106, %v42, %v170
  %v235 = vsel %vm107, %v43, %v171
  %v236 = vsel %vm108, %v44, %v172
  %v237 = vsel %vm109, %v45, %v173
  %v238 = vsel %vm110, %v46, %v174
  %v239 = vsel %vm111, %v47, %v175
  %v240 = vsel %vm112, %v48, %v176
  %v241 = vsel %vm113, %v49, %v177
  %v242 = vsel %vm114, %v50, %v178
  %v243 = vsel %vm115, %v51, %v179
  %v244 = vsel %vm116, %v52, %v180
  %v245 = vsel %vm117, %v53, %v181
  %v246 = vsel %vm118, %v54, %v182
  %v247 = vsel %vm119, %v55, %v183
  %v248 = vsel %vm120, %v56, %v184
  %v249 = vsel %vm121, %v57, %v185
  %v250 = vsel %vm122, %v58, %v186
  %v251 = vsel %vm123, %v59, %v187
  %v252 = vsel %vm124, %v60, %v188
  %v253 = vsel %vm125, %v61, %v189
  %v254 = vsel %vm126, %v62, %v190
  %v255 = vsel %vm127, %v63, %v191
  %v256 = vsel %vm128, %v64, %v192
  %v257 = vsel %vm129, %v65, %v193
  %v258 = vsel %vm130, %v66, %v194
  %v259 = vsel %vm131, %v67, %v195
  %v260 = vsel %vm132, %v68, %v196
  %v261 = vsel %vm133, %v69, %v197
  %v262 = vsel %vm134, %v70, %v198
  %v263 = vsel %vm135, %v71, %v199
  %v264 = vsel %vm136, %v72, %v200
  %v265 = vsel %vm137, %v73, %v201
  %v266 = vsel %vm138, %v74, %v202
  %v267 = vsel %vm139, %v75, %v203
  %v268 = vsel %vm140, %v76, %v204
  %v269 = vsel %vm141, %v77, %v205
  %v270 = vsel %vm142, %v78, %v206
  %v271 = vsel %vm143, %v79, %v207
  %v272 = vsel %vm144, %v80, %v208
  %v273 = vpack.c.bf16 %v210, %v209
  %v274 = vpack.c.bf16 %v212, %v211
  %v275 = vpack.c.bf16 %v214, %v213
  %v276 = vpack.c.bf16 %v216, %v215
  %v277 = vpack.c.bf16 %v218, %v217
  %v278 = vpack.c.bf16 %v220, %v219
  %v279 = vpack.c.bf16 %v222, %v221
  %v280 = vpack.c.bf16 %v224, %v223
  %v281 = vpack.c.bf16 %v226, %v225
  %v282 = vpack.c.bf16 %v228, %v227
  %v283 = vpack.c.bf16 %v230, %v229
  %v284 = vpack.c.bf16 %v232, %v231
  %v285 = vpack.c.bf16 %v234, %v233
  %v286 = vpack.c.bf16 %v236, %v235
  %v287 = vpack.c.bf16 %v238, %v237
  %v288 = vpack.c.bf16 %v240, %v239
  %v289 = vpack.c.bf16 %v242, %v241
  %v290 = vpack.c.bf16 %v244, %v243
  %v291 = vpack.c.bf16 %v246, %v245
  %v292 = vpack.c.bf16 %v248, %v247
  %v293 = vpack.c.bf16 %v250, %v249
  %v294 = vpack.c.bf16 %v252, %v251
  %v295 = vpack.c.bf16 %v254, %v253
  %v296 = vpack.c.bf16 %v256, %v255
  %v297 = vpack.c.bf16 %v258, %v257
  %v298 = vpack.c.bf16 %v260, %v259
  %v299 = vpack.c.bf16 %v262, %v261
  %v300 = vpack.c.bf16 %v264, %v263
  %v301 = vpack.c.bf16 %v266, %v265
  %v302 = vpack.c.bf16 %v268, %v267
  %v303 = vpack.c.bf16 %v270, %v269
  %v304 = vpack.c.bf16 %v272, %v271
  %v305 = vld [vmem:[%s1] sm:$0xff]
  %v306 = vld [vmem:[%s1 + $0x8] sm:$0xff]
  %v307 = vld [vmem:[%s1 + $0x10] sm:$0xff]
  %v308 = vld [vmem:[%s1 + $0x18] sm:$0xff]
  %v309 = vld [vmem:[%s1 + $0x20] sm:$0xff]
  %v310 = vld [vmem:[%s1 + $0x28] sm:$0xff]
  %v311 = vld [vmem:[%s1 + $0x30] sm:$0xff]
  %v312 = vld [vmem:[%s1 + $0x38] sm:$0xff]
  %v313 = vld [vmem:[%s1 + $0x40] sm:$0xff]
  %v314 = vld [vmem:[%s1 + $0x48] sm:$0xff]
  %v315 = vld [vmem:[%s1 + $0x50] sm:$0xff]
  %v316 = vld [vmem:[%s1 + $0x58] sm:$0xff]
  %v317 = vld [vmem:[%s1 + $0x60] sm:$0xff]
  %v318 = vld [vmem:[%s1 + $0x68] sm:$0xff]
  %v319 = vld [vmem:[%s1 + $0x70] sm:$0xff]
  %v320 = vld [vmem:[%s1 + $0x78] sm:$0xff]
  %v337 = vunpack.c.l.b16 %v305
  %v338 = vunpack.c.h.b16 %v305
  %v339 = vunpack.c.l.b16 %v306
  %v340 = vunpack.c.h.b16 %v306
  %v341 = vunpack.c.l.b16 %v307
  %v342 = vunpack.c.h.b16 %v307
  %v343 = vunpack.c.l.b16 %v308
  %v344 = vunpack.c.h.b16 %v308
  %v345 = vunpack.c.l.b16 %v309
  %v346 = vunpack.c.h.b16 %v309
  %v347 = vunpack.c.l.b16 %v310
  %v348 = vunpack.c.h.b16 %v310
  %v349 = vunpack.c.l.b16 %v311
  %v350 = vunpack.c.h.b16 %v311
  %v351 = vunpack.c.l.b16 %v312
  %v352 = vunpack.c.h.b16 %v312
  %v353 = vunpack.c.l.b16 %v313
  %v354 = vunpack.c.h.b16 %v313
  %v355 = vunpack.c.l.b16 %v314
  %v356 = vunpack.c.h.b16 %v314
  %v357 = vunpack.c.l.b16 %v315
  %v358 = vunpack.c.h.b16 %v315
  %v359 = vunpack.c.l.b16 %v316
  %v360 = vunpack.c.h.b16 %v316
  %v361 = vunpack.c.l.b16 %v317
  %v362 = vunpack.c.h.b16 %v317
  %v363 = vunpack.c.l.b16 %v318
  %v364 = vunpack.c.h.b16 %v318
  %v365 = vunpack.c.l.b16 %v319
  %v366 = vunpack.c.h.b16 %v319
  %v367 = vunpack.c.l.b16 %v320
  %v368 = vunpack.c.h.b16 %v320
  %v369 = vpack.c.b16 %v341, %v337
  %v370 = vpack.c.b16 %v342, %v338
  %v371 = vpack.c.b16 %v343, %v339
  %v372 = vpack.c.b16 %v344, %v340
  %v373 = vpack.c.b16 %v349, %v345
  %v374 = vpack.c.b16 %v350, %v346
  %v375 = vpack.c.b16 %v351, %v347
  %v376 = vpack.c.b16 %v352, %v348
  %v377 = vpack.c.b16 %v357, %v353
  %v378 = vpack.c.b16 %v358, %v354
  %v379 = vpack.c.b16 %v359, %v355
  %v380 = vpack.c.b16 %v360, %v356
  %v381 = vpack.c.b16 %v365, %v361
  %v382 = vpack.c.b16 %v366, %v362
  %v383 = vpack.c.b16 %v367, %v363
  %v384 = vpack.c.b16 %v368, %v364
  %401 = vmatpush.bf16.msra.mxu0 %v280
  %402 = vmatpush.bf16.msra.mxu0 %v279
  %403 = vmatpush.bf16.msra.mxu0 %v278
  %404 = vmatpush.bf16.msra.mxu0 %v277
  %405 = vmatpush.bf16.msra.mxu0 %v276
  %406 = vmatpush.bf16.msra.mxu0 %v275
  %407 = vmatpush.bf16.msra.mxu0 %v274
  %408 = vmatpush.bf16.msra.mxu0 %v273
  %409 = vmatmul.bf16.gmra.mxu0 %v369
  %v410 = vpop.f32.mrf.mxu0
  %v411 = vadd.f32 0.0, %v410
  %v412 = vpop.f32.mrf.mxu0
  %v413 = vadd.f32 0.0, %v412
  %414 = vmatmul.bf16.gmra.mxu0 %v373
  %v415 = vpop.f32.mrf.mxu0
  %v416 = vadd.f32 0.0, %v415
  %v417 = vpop.f32.mrf.mxu0
  %v418 = vadd.f32 0.0, %v417
  %419 = vmatmul.bf16.gmra.mxu0 %v377
  %v420 = vpop.f32.mrf.mxu0
  %v421 = vadd.f32 0.0, %v420
  %v422 = vpop.f32.mrf.mxu0
  %v423 = vadd.f32 0.0, %v422
  %424 = vmatmul.bf16.gmra.mxu0 %v381
  %v425 = vpop.f32.mrf.mxu0
  %v426 = vadd.f32 0.0, %v425
  %v427 = vpop.f32.mrf.mxu0
  %v428 = vadd.f32 0.0, %v427
  %429 = vdwg.mxu0
  %430 = vmatpush.bf16.msra.mxu0 %v288
  %431 = vmatpush.bf16.msra.mxu0 %v287
  %432 = vmatpush.bf16.msra.mxu0 %v286
  %433 = vmatpush.bf16.msra.mxu0 %v285
  %434 = vmatpush.bf16.msra.mxu0 %v284
  %435 = vmatpush.bf16.msra.mxu0 %v283
  %436 = vmatpush.bf16.msra.mxu0 %v282
  %437 = vmatpush.bf16.msra.mxu0 %v281
  %438 = vmatmul.bf16.gmra.mxu0 %v370
  %v439 = vpop.f32.mrf.mxu0
  %v440 = vadd.f32 %v411, %v439
  %v441 = vpop.f32.mrf.mxu0
  %v442 = vadd.f32 %v413, %v441
  %443 = vmatmul.bf16.gmra.mxu0 %v374
  %v444 = vpop.f32.mrf.mxu0
  %v445 = vadd.f32 %v416, %v444
  %v446 = vpop.f32.mrf.mxu0
  %v447 = vadd.f32 %v418, %v446
  %448 = vmatmul.bf16.gmra.mxu0 %v378
  %v449 = vpop.f32.mrf.mxu0
  %v450 = vadd.f32 %v421, %v449
  %v451 = vpop.f32.mrf.mxu0
  %v452 = vadd.f32 %v423, %v451
  %453 = vmatmul.bf16.gmra.mxu0 %v382
  %v454 = vpop.f32.mrf.mxu0
  %v455 = vadd.f32 %v426, %v454
  %v456 = vpop.f32.mrf.mxu0
  %v457 = vadd.f32 %v428, %v456
  %458 = vdwg.mxu0
  %459 = vmatpush.bf16.msra.mxu0 %v296
  %460 = vmatpush.bf16.msra.mxu0 %v295
  %461 = vmatpush.bf16.msra.mxu0 %v294
  %462 = vmatpush.bf16.msra.mxu0 %v293
  %463 = vmatpush.bf16.msra.mxu0 %v292
  %464 = vmatpush.bf16.msra.mxu0 %v291
  %465 = vmatpush.bf16.msra.mxu0 %v290
  %466 = vmatpush.bf16.msra.mxu0 %v289
  %467 = vmatmul.bf16.gmra.mxu0 %v371
  %v468 = vpop.f32.mrf.mxu0
  %v469 = vadd.f32 %v440, %v468
  %v470 = vpop.f32.mrf.mxu0
  %v471 = vadd.f32 %v442, %v470
  %472 = vmatmul.bf16.gmra.mxu0 %v375
  %v473 = vpop.f32.mrf.mxu0
  %v474 = vadd.f32 %v445, %v473
  %v475 = vpop.f32.mrf.mxu0
  %v476 = vadd.f32 %v447, %v475
  %477 = vmatmul.bf16.gmra.mxu0 %v379
  %v478 = vpop.f32.mrf.mxu0
  %v479 = vadd.f32 %v450, %v478
  %v480 = vpop.f32.mrf.mxu0
  %v481 = vadd.f32 %v452, %v480
  %482 = vmatmul.bf16.gmra.mxu0 %v383
  %v483 = vpop.f32.mrf.mxu0
  %v484 = vadd.f32 %v455, %v483
  %v485 = vpop.f32.mrf.mxu0
  %v486 = vadd.f32 %v457, %v485
  %487 = vdwg.mxu0
  %488 = vmatpush.bf16.msra.mxu0 %v304
  %489 = vmatpush.bf16.msra.mxu0 %v303
  %490 = vmatpush.bf16.msra.mxu0 %v302
  %491 = vmatpush.bf16.msra.mxu0 %v301
  %492 = vmatpush.bf16.msra.mxu0 %v300
  %493 = vmatpush.bf16.msra.mxu0 %v299
  %494 = vmatpush.bf16.msra.mxu0 %v298
  %495 = vmatpush.bf16.msra.mxu0 %v297
  %496 = vmatmul.bf16.gmra.mxu0 %v372
  %v497 = vpop.f32.mrf.mxu0
  %v498 = vadd.f32 %v469, %v497
  %v499 = vpop.f32.mrf.mxu0
  %v500 = vadd.f32 %v471, %v499
  %501 = vmatmul.bf16.gmra.mxu0 %v376
  %v502 = vpop.f32.mrf.mxu0
  %v503 = vadd.f32 %v474, %v502
  %v504 = vpop.f32.mrf.mxu0
  %v505 = vadd.f32 %v476, %v504
  %506 = vmatmul.bf16.gmra.mxu0 %v380
  %v507 = vpop.f32.mrf.mxu0
  %v508 = vadd.f32 %v479, %v507
  %v509 = vpop.f32.mrf.mxu0
  %v510 = vadd.f32 %v481, %v509
  %511 = vmatmul.bf16.gmra.mxu0 %v384
  %v512 = vpop.f32.mrf.mxu0
  %v513 = vadd.f32 %v484, %v512
  %v514 = vpop.f32.mrf.mxu0
  %v515 = vadd.f32 %v486, %v514
  %516 = vdwg.mxu0
  %vm517 = vcmask 64512
  %518 = vst.msk [vmem:[%s4] sm:$0xff] %vm517, %v498
  %519 = vst.msk [vmem:[%s4 + $0x8] sm:$0xff] %vm517, %v500
  %520 = vst.msk [vmem:[%s4 + $0x10] sm:$0xff] %vm517, %v503
  %521 = vst.msk [vmem:[%s4 + $0x18] sm:$0xff] %vm517, %v505
  %522 = vst.msk [vmem:[%s4 + $0x20] sm:$0xff] %vm517, %v508
  %523 = vst.msk [vmem:[%s4 + $0x28] sm:$0xff] %vm517, %v510
  %524 = vst.msk [vmem:[%s4 + $0x30] sm:$0xff] %vm517, %v513
  %525 = vst.msk [vmem:[%s4 + $0x38] sm:$0xff] %vm517, %v515
  %v526 = vld [vmem:[%s4] sm:$0xff]
  %v527 = vld [vmem:[%s4 + $0x8] sm:$0xff]
  %v528 = vld [vmem:[%s4 + $0x10] sm:$0xff]
  %v529 = vld [vmem:[%s4 + $0x18] sm:$0xff]
  %v530 = vld [vmem:[%s4 + $0x20] sm:$0xff]
  %v531 = vld [vmem:[%s4 + $0x28] sm:$0xff]
  %v532 = vld [vmem:[%s4 + $0x30] sm:$0xff]
  %v533 = vld [vmem:[%s4 + $0x38] sm:$0xff]
  %v534 = vsel %vm517, %v526, 0.0
  %535 = vadd.xlane.f32.xlu0 %v534
  %v536 = vpop.xlane.xlu0 %535
  %v537 = vsel %vm517, %v527, 0.0
  %538 = vadd.xlane.f32.xlu0 %v537
  %v539 = vpop.xlane.xlu0 %538
  %v540 = vsel %vm517, %v528, 0.0
  %541 = vadd.xlane.f32.xlu0 %v540
  %v542 = vpop.xlane.xlu0 %541
  %v543 = vsel %vm517, %v529, 0.0
  %544 = vadd.xlane.f32.xlu0 %v543
  %v545 = vpop.xlane.xlu0 %544
  %v546 = vsel %vm517, %v530, 0.0
  %547 = vadd.xlane.f32.xlu0 %v546
  %v548 = vpop.xlane.xlu0 %547
  %v549 = vsel %vm517, %v531, 0.0
  %550 = vadd.xlane.f32.xlu0 %v549
  %v551 = vpop.xlane.xlu0 %550
  %v552 = vsel %vm517, %v532, 0.0
  %553 = vadd.xlane.f32.xlu0 %v552
  %v554 = vpop.xlane.xlu0 %553
  %v555 = vsel %vm517, %v533, 0.0
  %556 = vadd.xlane.f32.xlu0 %v555
  %v557 = vpop.xlane.xlu0 %556
  %v558 = vrcp.pop 8.0
  %v559 = vmul.f32 8.0, %v558
  %v560 = vsub.f32 1.0, %v559
  %v561 = vmul.f32 %v558, %v560
  %v562 = vadd.f32 %v558, %v561
  %vm563 = vweird.f32 %v558
  %v564 = vsel %vm563, %v558, %v562
  %v565 = vmul.f32 %v536, %v564
  %v566 = vmul.f32 %v539, %v564
  %v567 = vmul.f32 %v542, %v564
  %v568 = vmul.f32 %v545, %v564
  %v569 = vmul.f32 %v548, %v564
  %v570 = vmul.f32 %v551, %v564
  %v571 = vmul.f32 %v554, %v564
  %v572 = vmul.f32 %v557, %v564
  %v573 = vsub.f32 %v526, %v565
  %v574 = vsub.f32 %v527, %v566
  %v575 = vsub.f32 %v528, %v567
  %v576 = vsub.f32 %v529, %v568
  %v577 = vsub.f32 %v530, %v569
  %v578 = vsub.f32 %v531, %v570
  %v579 = vsub.f32 %v532, %v571
  %v580 = vsub.f32 %v533, %v572
  %v581 = vmul.f32 %v573, %v573
  %v582 = vmul.f32 %v574, %v574
  %v583 = vmul.f32 %v575, %v575
  %v584 = vmul.f32 %v576, %v576
  %v585 = vmul.f32 %v577, %v577
  %v586 = vmul.f32 %v578, %v578
  %v587 = vmul.f32 %v579, %v579
  %v588 = vmul.f32 %v580, %v580
  %v589 = vsel %vm517, %v581, 0.0
  %590 = vadd.xlane.f32.xlu0 %v589
  %v591 = vpop.xlane.xlu0 %590
  %v592 = vsel %vm517, %v582, 0.0
  %593 = vadd.xlane.f32.xlu0 %v592
  %v594 = vpop.xlane.xlu0 %593
  %v595 = vsel %vm517, %v583, 0.0
  %596 = vadd.xlane.f32.xlu0 %v595
  %v597 = vpop.xlane.xlu0 %596
  %v598 = vsel %vm517, %v584, 0.0
  %599 = vadd.xlane.f32.xlu0 %v598
  %v600 = vpop.xlane.xlu0 %599
  %v601 = vsel %vm517, %v585, 0.0
  %602 = vadd.xlane.f32.xlu0 %v601
  %v603 = vpop.xlane.xlu0 %602
  %v604 = vsel %vm517, %v586, 0.0
  %605 = vadd.xlane.f32.xlu0 %v604
  %v606 = vpop.xlane.xlu0 %605
  %v607 = vsel %vm517, %v587, 0.0
  %608 = vadd.xlane.f32.xlu0 %v607
  %v609 = vpop.xlane.xlu0 %608
  %v610 = vsel %vm517, %v588, 0.0
  %611 = vadd.xlane.f32.xlu0 %v610
  %v612 = vpop.xlane.xlu0 %611
  %v613 = vmul.f32 %v591, %v564
  %v614 = vmul.f32 %v594, %v564
  %v615 = vmul.f32 %v597, %v564
  %v616 = vmul.f32 %v600, %v564
  %v617 = vmul.f32 %v603, %v564
  %v618 = vmul.f32 %v606, %v564
  %v619 = vmul.f32 %v609, %v564
  %v620 = vmul.f32 %v612, %v564
  %v621 = vld [vmem:[%s2] sm:$0xff]
  %v622 = vld [vmem:[%s2 + $0x8] sm:$0xff]
  %v623 = vld [vmem:[%s2 + $0x10] sm:$0xff]
  %v624 = vld [vmem:[%s2 + $0x18] sm:$0xff]
  %v625 = vld [vmem:[%s2 + $0x20] sm:$0xff]
  %v626 = vld [vmem:[%s2 + $0x28] sm:$0xff]
  %v627 = vld [vmem:[%s2 + $0x30] sm:$0xff]
  %v628 = vld [vmem:[%s2 + $0x38] sm:$0xff]
  %v629 = vadd.f32 %v613, 1e-05
  %v630 = vadd.f32 %v614, 1e-05
  %v631 = vadd.f32 %v615, 1e-05
  %v632 = vadd.f32 %v616, 1e-05
  %v633 = vadd.f32 %v617, 1e-05
  %v634 = vadd.f32 %v618, 1e-05
  %v635 = vadd.f32 %v619, 1e-05
  %v636 = vadd.f32 %v620, 1e-05
  %v637 = vrsqrt.pop %v629
  %v638 = vmul.f32 %v637, %v629
  %v639 = vmul.f32 %v638, %v637
  %v640 = vmul.f32 0.5, %v639
  %v641 = vsub.f32 1.5, %v640
  %v642 = vmul.f32 %v637, %v641
  %vm643 = vweird.f32 %v629
  %vm644 = vweird.f32 %v637
  %vm645 = vmor %vm643, %vm644
  %v646 = vsel %vm645, %v637, %v642
  %v647 = vrsqrt.pop %v630
  %v648 = vmul.f32 %v647, %v630
  %v649 = vmul.f32 %v648, %v647
  %v650 = vmul.f32 0.5, %v649
  %v651 = vsub.f32 1.5, %v650
  %v652 = vmul.f32 %v647, %v651
  %vm653 = vweird.f32 %v630
  %vm654 = vweird.f32 %v647
  %vm655 = vmor %vm653, %vm654
  %v656 = vsel %vm655, %v647, %v652
  %v657 = vrsqrt.pop %v631
  %v658 = vmul.f32 %v657, %v631
  %v659 = vmul.f32 %v658, %v657
  %v660 = vmul.f32 0.5, %v659
  %v661 = vsub.f32 1.5, %v660
  %v662 = vmul.f32 %v657, %v661
  %vm663 = vweird.f32 %v631
  %vm664 = vweird.f32 %v657
  %vm665 = vmor %vm663, %vm664
  %v666 = vsel %vm665, %v657, %v662
  %v667 = vrsqrt.pop %v632
  %v668 = vmul.f32 %v667, %v632
  %v669 = vmul.f32 %v668, %v667
  %v670 = vmul.f32 0.5, %v669
  %v671 = vsub.f32 1.5, %v670
  %v672 = vmul.f32 %v667, %v671
  %vm673 = vweird.f32 %v632
  %vm674 = vweird.f32 %v667
  %vm675 = vmor %vm673, %vm674
  %v676 = vsel %vm675, %v667, %v672
  %v677 = vrsqrt.pop %v633
  %v678 = vmul.f32 %v677, %v633
  %v679 = vmul.f32 %v678, %v677
  %v680 = vmul.f32 0.5, %v679
  %v681 = vsub.f32 1.5, %v680
  %v682 = vmul.f32 %v677, %v681
  %vm683 = vweird.f32 %v633
  %vm684 = vweird.f32 %v677
  %vm685 = vmor %vm683, %vm684
  %v686 = vsel %vm685, %v677, %v682
  %v687 = vrsqrt.pop %v634
  %v688 = vmul.f32 %v687, %v634
  %v689 = vmul.f32 %v688, %v687
  %v690 = vmul.f32 0.5, %v689
  %v691 = vsub.f32 1.5, %v690
  %v692 = vmul.f32 %v687, %v691
  %vm693 = vweird.f32 %v634
  %vm694 = vweird.f32 %v687
  %vm695 = vmor %vm693, %vm694
  %v696 = vsel %vm695, %v687, %v692
  %v697 = vrsqrt.pop %v635
  %v698 = vmul.f32 %v697, %v635
  %v699 = vmul.f32 %v698, %v697
  %v700 = vmul.f32 0.5, %v699
  %v701 = vsub.f32 1.5, %v700
  %v702 = vmul.f32 %v697, %v701
  %vm703 = vweird.f32 %v635
  %vm704 = vweird.f32 %v697
  %vm705 = vmor %vm703, %vm704
  %v706 = vsel %vm705, %v697, %v702
  %v707 = vrsqrt.pop %v636
  %v708 = vmul.f32 %v707, %v636
  %v709 = vmul.f32 %v708, %v707
  %v710 = vmul.f32 0.5, %v709
  %v711 = vsub.f32 1.5, %v710
  %v712 = vmul.f32 %v707, %v711
  %vm713 = vweird.f32 %v636
  %vm714 = vweird.f32 %v707
  %vm715 = vmor %vm713, %vm714
  %v716 = vsel %vm715, %v707, %v712
  %v717 = vmul.f32 %v621, %v646
  %v718 = vmul.f32 %v622, %v656
  %v719 = vmul.f32 %v623, %v666
  %v720 = vmul.f32 %v624, %v676
  %v721 = vmul.f32 %v625, %v686
  %v722 = vmul.f32 %v626, %v696
  %v723 = vmul.f32 %v627, %v706
  %v724 = vmul.f32 %v628, %v716
  %v725 = vld [vmem:[%s3] sm:$0xff]
  %v726 = vld [vmem:[%s3 + $0x8] sm:$0xff]
  %v727 = vld [vmem:[%s3 + $0x10] sm:$0xff]
  %v728 = vld [vmem:[%s3 + $0x18] sm:$0xff]
  %v729 = vld [vmem:[%s3 + $0x20] sm:$0xff]
  %v730 = vld [vmem:[%s3 + $0x28] sm:$0xff]
  %v731 = vld [vmem:[%s3 + $0x30] sm:$0xff]
  %v732 = vld [vmem:[%s3 + $0x38] sm:$0xff]
  %v733 = vmul.f32 %v565, %v717
  %v734 = vmul.f32 %v566, %v718
  %v735 = vmul.f32 %v567, %v719
  %v736 = vmul.f32 %v568, %v720
  %v737 = vmul.f32 %v569, %v721
  %v738 = vmul.f32 %v570, %v722
  %v739 = vmul.f32 %v571, %v723
  %v740 = vmul.f32 %v572, %v724
  %v741 = vsub.f32 %v725, %v733
  %v742 = vsub.f32 %v726, %v734
  %v743 = vsub.f32 %v727, %v735
  %v744 = vsub.f32 %v728, %v736
  %v745 = vsub.f32 %v729, %v737
  %v746 = vsub.f32 %v730, %v738
  %v747 = vsub.f32 %v731, %v739
  %v748 = vsub.f32 %v732, %v740
  %750 = vset.pattern.permute.xlu0 0
  %751 = vperm.xlu0 %750, %v717
  %v752 = vpop.permute.xlu0 %751
  %755 = vset.pattern.permute.xlu0 0
  %756 = vperm.xlu0 %755, %v718
  %v757 = vpop.permute.xlu0 %756
  %760 = vset.pattern.permute.xlu0 0
  %761 = vperm.xlu0 %760, %v719
  %v762 = vpop.permute.xlu0 %761
  %765 = vset.pattern.permute.xlu0 0
  %766 = vperm.xlu0 %765, %v720
  %v767 = vpop.permute.xlu0 %766
  %770 = vset.pattern.permute.xlu0 0
  %771 = vperm.xlu0 %770, %v721
  %v772 = vpop.permute.xlu0 %771
  %775 = vset.pattern.permute.xlu0 0
  %776 = vperm.xlu0 %775, %v722
  %v777 = vpop.permute.xlu0 %776
  %780 = vset.pattern.permute.xlu0 0
  %781 = vperm.xlu0 %780, %v723
  %v782 = vpop.permute.xlu0 %781
  %785 = vset.pattern.permute.xlu0 0
  %786 = vperm.xlu0 %785, %v724
  %v787 = vpop.permute.xlu0 %786
  %v789 = vmul.f32 %v526, %v752
  %v790 = vmul.f32 %v527, %v757
  %v791 = vmul.f32 %v528, %v762
  %v792 = vmul.f32 %v529, %v767
  %v793 = vmul.f32 %v530, %v772
  %v794 = vmul.f32 %v531, %v777
  %v795 = vmul.f32 %v532, %v782
  %v796 = vmul.f32 %v533, %v787
  %798 = vset.pattern.permute.xlu0 0
  %799 = vperm.xlu0 %798, %v741
  %v800 = vpop.permute.xlu0 %799
  %803 = vset.pattern.permute.xlu0 0
  %804 = vperm.xlu0 %803, %v742
  %v805 = vpop.permute.xlu0 %804
  %808 = vset.pattern.permute.xlu0 0
  %809 = vperm.xlu0 %808, %v743
  %v810 = vpop.permute.xlu0 %809
  %813 = vset.pattern.permute.xlu0 0
  %814 = vperm.xlu0 %813, %v744
  %v815 = vpop.permute.xlu0 %814
  %818 = vset.pattern.permute.xlu0 0
  %819 = vperm.xlu0 %818, %v745
  %v820 = vpop.permute.xlu0 %819
  %823 = vset.pattern.permute.xlu0 0
  %824 = vperm.xlu0 %823, %v746
  %v825 = vpop.permute.xlu0 %824
  %828 = vset.pattern.permute.xlu0 0
  %829 = vperm.xlu0 %828, %v747
  %v830 = vpop.permute.xlu0 %829
  %833 = vset.pattern.permute.xlu0 0
  %834 = vperm.xlu0 %833, %v748
  %v835 = vpop.permute.xlu0 %834
  %v837 = vadd.f32 %v789, %v800
  %v838 = vadd.f32 %v790, %v805
  %v839 = vadd.f32 %v791, %v810
  %v840 = vadd.f32 %v792, %v815
  %v841 = vadd.f32 %v793, %v820
  %v842 = vadd.f32 %v794, %v825
  %v843 = vadd.f32 %v795, %v830
  %v844 = vadd.f32 %v796, %v835
  %845 = vst.msk [vmem:[%s4] sm:$0xff] %vm517, %v837
  %846 = vst.msk [vmem:[%s4 + $0x8] sm:$0xff] %vm517, %v838
  %847 = vst.msk [vmem:[%s4 + $0x10] sm:$0xff] %vm517, %v839
  %848 = vst.msk [vmem:[%s4 + $0x18] sm:$0xff] %vm517, %v840
  %849 = vst.msk [vmem:[%s4 + $0x20] sm:$0xff] %vm517, %v841
  %850 = vst.msk [vmem:[%s4 + $0x28] sm:$0xff] %vm517, %v842
  %851 = vst.msk [vmem:[%s4 + $0x30] sm:$0xff] %vm517, %v843
  %852 = vst.msk [vmem:[%s4 + $0x38] sm:$0xff] %vm517, %v844
  // Predicated region
  $region18: #{unet_forward.13} parent=0 // pred_check
    _
  $region19: #{unet_forward.13} parent=0 // pred_check_branch
    %854 = sbr.rel (0) target = $region21
  $region20: #{unet_forward.13} parent=0 // pred_region
    _
  $region21: #{unet_forward.13} parent=0 // pred_fallthru
    _
  // Predicated region
  $region22: #{unet_forward.13} parent=0 // pred_check
    _
  $region23: #{unet_forward.13} parent=0 // pred_check_branch
    %856 = sbr.rel (0) target = $region25
  $region24: #{unet_forward.13} parent=0 // pred_region
    _
  $region25: #{unet_forward.13} parent=0 // pred_fallthru
    _

// kernel: unet_forward.14
$region0: #{unet_forward.14}
  #allocation0 [shape = 'u32[]', space=smem, size = 0x4, offset = 0x4, fixed_abs, tag = 'smem constant byte address 0x4 - core index']
  #allocation1 [shape = 'u32[72,128]{1,0:T(1,128)}', space=vmem, size = 0x9000, scoped, tag = 'internal scratch']
  %s0 = inlined_call_operand.vmem [shape: f32[1024,2], index: 0, kind: input, shape index: {}]
  %s1 = inlined_call_operand.vmem [shape: bf16[1,64,1024], index: 1, kind: input, shape index: {}]
  %s2 = inlined_call_operand.vmem [shape: f32[64,2], index: 2, kind: output, shape index: {}]
  %s3 = sld [smem:[#allocation0]]
  $region18: #{unet_forward.14} parent=0
    _
  %s5 = ssub.s32 1, %s3
  %s6 = scalar_select 0, %s5, %s3
  // Predicated region
  $region2: #{unet_forward.14} parent=0 // pred_check
    _
  $region3: #{unet_forward.14} parent=0 // pred_check_branch
    %8 = sbr.rel (0) target = $region5
  $region4: #{unet_forward.14} parent=0 // pred_region
    _
  $region5: #{unet_forward.14} parent=0 // pred_fallthru
    _
  // Predicated region
  $region6: #{unet_forward.14} parent=0 // pred_check
    _
  $region7: #{unet_forward.14} parent=0 // pred_check_branch
    %10 = sbr.rel (0) target = $region9
  $region8: #{unet_forward.14} parent=0 // pred_region
    _
  $region9: #{unet_forward.14} parent=0 // pred_fallthru
    _
  %v11 = vld [vmem:[%s0] sm:$0xff]
  %v12 = vld [vmem:[%s0 + $0x8] sm:$0xff]
  %v13 = vld [vmem:[%s0 + $0x10] sm:$0xff]
  %v14 = vld [vmem:[%s0 + $0x18] sm:$0xff]
  %v15 = vld [vmem:[%s0 + $0x20] sm:$0xff]
  %v16 = vld [vmem:[%s0 + $0x28] sm:$0xff]
  %v17 = vld [vmem:[%s0 + $0x30] sm:$0xff]
  %v18 = vld [vmem:[%s0 + $0x38] sm:$0xff]
  %v19 = vld [vmem:[%s0 + $0x40] sm:$0xff]
  %v20 = vld [vmem:[%s0 + $0x48] sm:$0xff]
  %v21 = vld [vmem:[%s0 + $0x50] sm:$0xff]
  %v22 = vld [vmem:[%s0 + $0x58] sm:$0xff]
  %v23 = vld [vmem:[%s0 + $0x60] sm:$0xff]
  %v24 = vld [vmem:[%s0 + $0x68] sm:$0xff]
  %v25 = vld [vmem:[%s0 + $0x70] sm:$0xff]
  %v26 = vld [vmem:[%s0 + $0x78] sm:$0xff]
  %v27 = vld [vmem:[%s0 + $0x80] sm:$0xff]
  %v28 = vld [vmem:[%s0 + $0x88] sm:$0xff]
  %v29 = vld [vmem:[%s0 + $0x90] sm:$0xff]
  %v30 = vld [vmem:[%s0 + $0x98] sm:$0xff]
  %v31 = vld [vmem:[%s0 + $0xa0] sm:$0xff]
  %v32 = vld [vmem:[%s0 + $0xa8] sm:$0xff]
  %v33 = vld [vmem:[%s0 + $0xb0] sm:$0xff]
  %v34 = vld [vmem:[%s0 + $0xb8] sm:$0xff]
  %v35 = vld [vmem:[%s0 + $0xc0] sm:$0xff]
  %v36 = vld [vmem:[%s0 + $0xc8] sm:$0xff]
  %v37 = vld [vmem:[%s0 + $0xd0] sm:$0xff]
  %v38 = vld [vmem:[%s0 + $0xd8] sm:$0xff]
  %v39 = vld [vmem:[%s0 + $0xe0] sm:$0xff]
  %v40 = vld [vmem:[%s0 + $0xe8] sm:$0xff]
  %v41 = vld [vmem:[%s0 + $0xf0] sm:$0xff]
  %v42 = vld [vmem:[%s0 + $0xf8] sm:$0xff]
  %v43 = vld [vmem:[%s0 + $0x100] sm:$0xff]
  %v44 = vld [vmem:[%s0 + $0x108] sm:$0xff]
  %v45 = vld [vmem:[%s0 + $0x110] sm:$0xff]
  %v46 = vld [vmem:[%s0 + $0x118] sm:$0xff]
  %v47 = vld [vmem:[%s0 + $0x120] sm:$0xff]
  %v48 = vld [vmem:[%s0 + $0x128] sm:$0xff]
  %v49 = vld [vmem:[%s0 + $0x130] sm:$0xff]
  %v50 = vld [vmem:[%s0 + $0x138] sm:$0xff]
  %v51 = vld [vmem:[%s0 + $0x140] sm:$0xff]
  %v52 = vld [vmem:[%s0 + $0x148] sm:$0xff]
  %v53 = vld [vmem:[%s0 + $0x150] sm:$0xff]
  %v54 = vld [vmem:[%s0 + $0x158] sm:$0xff]
  %v55 = vld [vmem:[%s0 + $0x160] sm:$0xff]
  %v56 = vld [vmem:[%s0 + $0x168] sm:$0xff]
  %v57 = vld [vmem:[%s0 + $0x170] sm:$0xff]
  %v58 = vld [vmem:[%s0 + $0x178] sm:$0xff]
  %v59 = vld [vmem:[%s0 + $0x180] sm:$0xff]
  %v60 = vld [vmem:[%s0 + $0x188] sm:$0xff]
  %v61 = vld [vmem:[%s0 + $0x190] sm:$0xff]
  %v62 = vld [vmem:[%s0 + $0x198] sm:$0xff]
  %v63 = vld [vmem:[%s0 + $0x1a0] sm:$0xff]
  %v64 = vld [vmem:[%s0 + $0x1a8] sm:$0xff]
  %v65 = vld [vmem:[%s0 + $0x1b0] sm:$0xff]
  %v66 = vld [vmem:[%s0 + $0x1b8] sm:$0xff]
  %v67 = vld [vmem:[%s0 + $0x1c0] sm:$0xff]
  %v68 = vld [vmem:[%s0 + $0x1c8] sm:$0xff]
  %v69 = vld [vmem:[%s0 + $0x1d0] sm:$0xff]
  %v70 = vld [vmem:[%s0 + $0x1d8] sm:$0xff]
  %v71 = vld [vmem:[%s0 + $0x1e0] sm:$0xff]
  %v72 = vld [vmem:[%s0 + $0x1e8] sm:$0xff]
  %v73 = vld [vmem:[%s0 + $0x1f0] sm:$0xff]
  %v74 = vld [vmem:[%s0 + $0x1f8] sm:$0xff]
  %v75 = vld [vmem:[%s0 + $0x200] sm:$0xff]
  %v76 = vld [vmem:[%s0 + $0x208] sm:$0xff]
  %v77 = vld [vmem:[%s0 + $0x210] sm:$0xff]
  %v78 = vld [vmem:[%s0 + $0x218] sm:$0xff]
  %v79 = vld [vmem:[%s0 + $0x220] sm:$0xff]
  %v80 = vld [vmem:[%s0 + $0x228] sm:$0xff]
  %v81 = vld [vmem:[%s0 + $0x230] sm:$0xff]
  %v82 = vld [vmem:[%s0 + $0x238] sm:$0xff]
  %v83 = vld [vmem:[%s0 + $0x240] sm:$0xff]
  %v84 = vld [vmem:[%s0 + $0x248] sm:$0xff]
  %v85 = vld [vmem:[%s0 + $0x250] sm:$0xff]
  %v86 = vld [vmem:[%s0 + $0x258] sm:$0xff]
  %v87 = vld [vmem:[%s0 + $0x260] sm:$0xff]
  %v88 = vld [vmem:[%s0 + $0x268] sm:$0xff]
  %v89 = vld [vmem:[%s0 + $0x270] sm:$0xff]
  %v90 = vld [vmem:[%s0 + $0x278] sm:$0xff]
  %v91 = vld [vmem:[%s0 + $0x280] sm:$0xff]
  %v92 = vld [vmem:[%s0 + $0x288] sm:$0xff]
  %v93 = vld [vmem:[%s0 + $0x290] sm:$0xff]
  %v94 = vld [vmem:[%s0 + $0x298] sm:$0xff]
  %v95 = vld [vmem:[%s0 + $0x2a0] sm:$0xff]
  %v96 = vld [vmem:[%s0 + $0x2a8] sm:$0xff]
  %v97 = vld [vmem:[%s0 + $0x2b0] sm:$0xff]
  %v98 = vld [vmem:[%s0 + $0x2b8] sm:$0xff]
  %v99 = vld [vmem:[%s0 + $0x2c0] sm:$0xff]
  %v100 = vld [vmem:[%s0 + $0x2c8] sm:$0xff]
  %v101 = vld [vmem:[%s0 + $0x2d0] sm:$0xff]
  %v102 = vld [vmem:[%s0 + $0x2d8] sm:$0xff]
  %v103 = vld [vmem:[%s0 + $0x2e0] sm:$0xff]
  %v104 = vld [vmem:[%s0 + $0x2e8] sm:$0xff]
  %v105 = vld [vmem:[%s0 + $0x2f0] sm:$0xff]
  %v106 = vld [vmem:[%s0 + $0x2f8] sm:$0xff]
  %v107 = vld [vmem:[%s0 + $0x300] sm:$0xff]
  %v108 = vld [vmem:[%s0 + $0x308] sm:$0xff]
  %v109 = vld [vmem:[%s0 + $0x310] sm:$0xff]
  %v110 = vld [vmem:[%s0 + $0x318] sm:$0xff]
  %v111 = vld [vmem:[%s0 + $0x320] sm:$0xff]
  %v112 = vld [vmem:[%s0 + $0x328] sm:$0xff]
  %v113 = vld [vmem:[%s0 + $0x330] sm:$0xff]
  %v114 = vld [vmem:[%s0 + $0x338] sm:$0xff]
  %v115 = vld [vmem:[%s0 + $0x340] sm:$0xff]
  %v116 = vld [vmem:[%s0 + $0x348] sm:$0xff]
  %v117 = vld [vmem:[%s0 + $0x350] sm:$0xff]
  %v118 = vld [vmem:[%s0 + $0x358] sm:$0xff]
  %v119 = vld [vmem:[%s0 + $0x360] sm:$0xff]
  %v120 = vld [vmem:[%s0 + $0x368] sm:$0xff]
  %v121 = vld [vmem:[%s0 + $0x370] sm:$0xff]
  %v122 = vld [vmem:[%s0 + $0x378] sm:$0xff]
  %v123 = vld [vmem:[%s0 + $0x380] sm:$0xff]
  %v124 = vld [vmem:[%s0 + $0x388] sm:$0xff]
  %v125 = vld [vmem:[%s0 + $0x390] sm:$0xff]
  %v126 = vld [vmem:[%s0 + $0x398] sm:$0xff]
  %v127 = vld [vmem:[%s0 + $0x3a0] sm:$0xff]
  %v128 = vld [vmem:[%s0 + $0x3a8] sm:$0xff]
  %v129 = vld [vmem:[%s0 + $0x3b0] sm:$0xff]
  %v130 = vld [vmem:[%s0 + $0x3b8] sm:$0xff]
  %v131 = vld [vmem:[%s0 + $0x3c0] sm:$0xff]
  %v132 = vld [vmem:[%s0 + $0x3c8] sm:$0xff]
  %v133 = vld [vmem:[%s0 + $0x3d0] sm:$0xff]
  %v134 = vld [vmem:[%s0 + $0x3d8] sm:$0xff]
  %v135 = vld [vmem:[%s0 + $0x3e0] sm:$0xff]
  %v136 = vld [vmem:[%s0 + $0x3e8] sm:$0xff]
  %v137 = vld [vmem:[%s0 + $0x3f0] sm:$0xff]
  %v138 = vld [vmem:[%s0 + $0x3f8] sm:$0xff]
  %vm139 = vcmp.ge.f32.partialorder %v11, 0.0
  %vm140 = vcmp.ge.f32.partialorder %v12, 0.0
  %vm141 = vcmp.ge.f32.partialorder %v13, 0.0
  %vm142 = vcmp.ge.f32.partialorder %v14, 0.0
  %vm143 = vcmp.ge.f32.partialorder %v15, 0.0
  %vm144 = vcmp.ge.f32.partialorder %v16, 0.0
  %vm145 = vcmp.ge.f32.partialorder %v17, 0.0
  %vm146 = vcmp.ge.f32.partialorder %v18, 0.0
  %vm147 = vcmp.ge.f32.partialorder %v19, 0.0
  %vm148 = vcmp.ge.f32.partialorder %v20, 0.0
  %vm149 = vcmp.ge.f32.partialorder %v21, 0.0
  %vm150 = vcmp.ge.f32.partialorder %v22, 0.0
  %vm151 = vcmp.ge.f32.partialorder %v23, 0.0
  %vm152 = vcmp.ge.f32.partialorder %v24, 0.0
  %vm153 = vcmp.ge.f32.partialorder %v25, 0.0
  %vm154 = vcmp.ge.f32.partialorder %v26, 0.0
  %vm155 = vcmp.ge.f32.partialorder %v27, 0.0
  %vm156 = vcmp.ge.f32.partialorder %v28, 0.0
  %vm157 = vcmp.ge.f32.partialorder %v29, 0.0
  %vm158 = vcmp.ge.f32.partialorder %v30, 0.0
  %vm159 = vcmp.ge.f32.partialorder %v31, 0.0
  %vm160 = vcmp.ge.f32.partialorder %v32, 0.0
  %vm161 = vcmp.ge.f32.partialorder %v33, 0.0
  %vm162 = vcmp.ge.f32.partialorder %v34, 0.0
  %vm163 = vcmp.ge.f32.partialorder %v35, 0.0
  %vm164 = vcmp.ge.f32.partialorder %v36, 0.0
  %vm165 = vcmp.ge.f32.partialorder %v37, 0.0
  %vm166 = vcmp.ge.f32.partialorder %v38, 0.0
  %vm167 = vcmp.ge.f32.partialorder %v39, 0.0
  %vm168 = vcmp.ge.f32.partialorder %v40, 0.0
  %vm169 = vcmp.ge.f32.partialorder %v41, 0.0
  %vm170 = vcmp.ge.f32.partialorder %v42, 0.0
  %vm171 = vcmp.ge.f32.partialorder %v43, 0.0
  %vm172 = vcmp.ge.f32.partialorder %v44, 0.0
  %vm173 = vcmp.ge.f32.partialorder %v45, 0.0
  %vm174 = vcmp.ge.f32.partialorder %v46, 0.0
  %vm175 = vcmp.ge.f32.partialorder %v47, 0.0
  %vm176 = vcmp.ge.f32.partialorder %v48, 0.0
  %vm177 = vcmp.ge.f32.partialorder %v49, 0.0
  %vm178 = vcmp.ge.f32.partialorder %v50, 0.0
  %vm179 = vcmp.ge.f32.partialorder %v51, 0.0
  %vm180 = vcmp.ge.f32.partialorder %v52, 0.0
  %vm181 = vcmp.ge.f32.partialorder %v53, 0.0
  %vm182 = vcmp.ge.f32.partialorder %v54, 0.0
  %vm183 = vcmp.ge.f32.partialorder %v55, 0.0
  %vm184 = vcmp.ge.f32.partialorder %v56, 0.0
  %vm185 = vcmp.ge.f32.partialorder %v57, 0.0
  %vm186 = vcmp.ge.f32.partialorder %v58, 0.0
  %vm187 = vcmp.ge.f32.partialorder %v59, 0.0
  %vm188 = vcmp.ge.f32.partialorder %v60, 0.0
  %vm189 = vcmp.ge.f32.partialorder %v61, 0.0
  %vm190 = vcmp.ge.f32.partialorder %v62, 0.0
  %vm191 = vcmp.ge.f32.partialorder %v63, 0.0
  %vm192 = vcmp.ge.f32.partialorder %v64, 0.0
  %vm193 = vcmp.ge.f32.partialorder %v65, 0.0
  %vm194 = vcmp.ge.f32.partialorder %v66, 0.0
  %vm195 = vcmp.ge.f32.partialorder %v67, 0.0
  %vm196 = vcmp.ge.f32.partialorder %v68, 0.0
  %vm197 = vcmp.ge.f32.partialorder %v69, 0.0
  %vm198 = vcmp.ge.f32.partialorder %v70, 0.0
  %vm199 = vcmp.ge.f32.partialorder %v71, 0.0
  %vm200 = vcmp.ge.f32.partialorder %v72, 0.0
  %vm201 = vcmp.ge.f32.partialorder %v73, 0.0
  %vm202 = vcmp.ge.f32.partialorder %v74, 0.0
  %vm203 = vcmp.ge.f32.partialorder %v75, 0.0
  %vm204 = vcmp.ge.f32.partialorder %v76, 0.0
  %vm205 = vcmp.ge.f32.partialorder %v77, 0.0
  %vm206 = vcmp.ge.f32.partialorder %v78, 0.0
  %vm207 = vcmp.ge.f32.partialorder %v79, 0.0
  %vm208 = vcmp.ge.f32.partialorder %v80, 0.0
  %vm209 = vcmp.ge.f32.partialorder %v81, 0.0
  %vm210 = vcmp.ge.f32.partialorder %v82, 0.0
  %vm211 = vcmp.ge.f32.partialorder %v83, 0.0
  %vm212 = vcmp.ge.f32.partialorder %v84, 0.0
  %vm213 = vcmp.ge.f32.partialorder %v85, 0.0
  %vm214 = vcmp.ge.f32.partialorder %v86, 0.0
  %vm215 = vcmp.ge.f32.partialorder %v87, 0.0
  %vm216 = vcmp.ge.f32.partialorder %v88, 0.0
  %vm217 = vcmp.ge.f32.partialorder %v89, 0.0
  %vm218 = vcmp.ge.f32.partialorder %v90, 0.0
  %vm219 = vcmp.ge.f32.partialorder %v91, 0.0
  %vm220 = vcmp.ge.f32.partialorder %v92, 0.0
  %vm221 = vcmp.ge.f32.partialorder %v93, 0.0
  %vm222 = vcmp.ge.f32.partialorder %v94, 0.0
  %vm223 = vcmp.ge.f32.partialorder %v95, 0.0
  %vm224 = vcmp.ge.f32.partialorder %v96, 0.0
  %vm225 = vcmp.ge.f32.partialorder %v97, 0.0
  %vm226 = vcmp.ge.f32.partialorder %v98, 0.0
  %vm227 = vcmp.ge.f32.partialorder %v99, 0.0
  %vm228 = vcmp.ge.f32.partialorder %v100, 0.0
  %vm229 = vcmp.ge.f32.partialorder %v101, 0.0
  %vm230 = vcmp.ge.f32.partialorder %v102, 0.0
  %vm231 = vcmp.ge.f32.partialorder %v103, 0.0
  %vm232 = vcmp.ge.f32.partialorder %v104, 0.0
  %vm233 = vcmp.ge.f32.partialorder %v105, 0.0
  %vm234 = vcmp.ge.f32.partialorder %v106, 0.0
  %vm235 = vcmp.ge.f32.partialorder %v107, 0.0
  %vm236 = vcmp.ge.f32.partialorder %v108, 0.0
  %vm237 = vcmp.ge.f32.partialorder %v109, 0.0
  %vm238 = vcmp.ge.f32.partialorder %v110, 0.0
  %vm239 = vcmp.ge.f32.partialorder %v111, 0.0
  %vm240 = vcmp.ge.f32.partialorder %v112, 0.0
  %vm241 = vcmp.ge.f32.partialorder %v113, 0.0
  %vm242 = vcmp.ge.f32.partialorder %v114, 0.0
  %vm243 = vcmp.ge.f32.partialorder %v115, 0.0
  %vm244 = vcmp.ge.f32.partialorder %v116, 0.0
  %vm245 = vcmp.ge.f32.partialorder %v117, 0.0
  %vm246 = vcmp.ge.f32.partialorder %v118, 0.0
  %vm247 = vcmp.ge.f32.partialorder %v119, 0.0
  %vm248 = vcmp.ge.f32.partialorder %v120, 0.0
  %vm249 = vcmp.ge.f32.partialorder %v121, 0.0
  %vm250 = vcmp.ge.f32.partialorder %v122, 0.0
  %vm251 = vcmp.ge.f32.partialorder %v123, 0.0
  %vm252 = vcmp.ge.f32.partialorder %v124, 0.0
  %vm253 = vcmp.ge.f32.partialorder %v125, 0.0
  %vm254 = vcmp.ge.f32.partialorder %v126, 0.0
  %vm255 = vcmp.ge.f32.partialorder %v127, 0.0
  %vm256 = vcmp.ge.f32.partialorder %v128, 0.0
  %vm257 = vcmp.ge.f32.partialorder %v129, 0.0
  %vm258 = vcmp.ge.f32.partialorder %v130, 0.0
  %vm259 = vcmp.ge.f32.partialorder %v131, 0.0
  %vm260 = vcmp.ge.f32.partialorder %v132, 0.0
  %vm261 = vcmp.ge.f32.partialorder %v133, 0.0
  %vm262 = vcmp.ge.f32.partialorder %v134, 0.0
  %vm263 = vcmp.ge.f32.partialorder %v135, 0.0
  %vm264 = vcmp.ge.f32.partialorder %v136, 0.0
  %vm265 = vcmp.ge.f32.partialorder %v137, 0.0
  %vm266 = vcmp.ge.f32.partialorder %v138, 0.0
  %v267 = vmul.f32 %v11, 0.2
  %v268 = vmul.f32 %v12, 0.2
  %v269 = vmul.f32 %v13, 0.2
  %v270 = vmul.f32 %v14, 0.2
  %v271 = vmul.f32 %v15, 0.2
  %v272 = vmul.f32 %v16, 0.2
  %v273 = vmul.f32 %v17, 0.2
  %v274 = vmul.f32 %v18, 0.2
  %v275 = vmul.f32 %v19, 0.2
  %v276 = vmul.f32 %v20, 0.2
  %v277 = vmul.f32 %v21, 0.2
  %v278 = vmul.f32 %v22, 0.2
  %v279 = vmul.f32 %v23, 0.2
  %v280 = vmul.f32 %v24, 0.2
  %v281 = vmul.f32 %v25, 0.2
  %v282 = vmul.f32 %v26, 0.2
  %v283 = vmul.f32 %v27, 0.2
  %v284 = vmul.f32 %v28, 0.2
  %v285 = vmul.f32 %v29, 0.2
  %v286 = vmul.f32 %v30, 0.2
  %v287 = vmul.f32 %v31, 0.2
  %v288 = vmul.f32 %v32, 0.2
  %v289 = vmul.f32 %v33, 0.2
  %v290 = vmul.f32 %v34, 0.2
  %v291 = vmul.f32 %v35, 0.2
  %v292 = vmul.f32 %v36, 0.2
  %v293 = vmul.f32 %v37, 0.2
  %v294 = vmul.f32 %v38, 0.2
  %v295 = vmul.f32 %v39, 0.2
  %v296 = vmul.f32 %v40, 0.2
  %v297 = vmul.f32 %v41, 0.2
  %v298 = vmul.f32 %v42, 0.2
  %v299 = vmul.f32 %v43, 0.2
  %v300 = vmul.f32 %v44, 0.2
  %v301 = vmul.f32 %v45, 0.2
  %v302 = vmul.f32 %v46, 0.2
  %v303 = vmul.f32 %v47, 0.2
  %v304 = vmul.f32 %v48, 0.2
  %v305 = vmul.f32 %v49, 0.2
  %v306 = vmul.f32 %v50, 0.2
  %v307 = vmul.f32 %v51, 0.2
  %v308 = vmul.f32 %v52, 0.2
  %v309 = vmul.f32 %v53, 0.2
  %v310 = vmul.f32 %v54, 0.2
  %v311 = vmul.f32 %v55, 0.2
  %v312 = vmul.f32 %v56, 0.2
  %v313 = vmul.f32 %v57, 0.2
  %v314 = vmul.f32 %v58, 0.2
  %v315 = vmul.f32 %v59, 0.2
  %v316 = vmul.f32 %v60, 0.2
  %v317 = vmul.f32 %v61, 0.2
  %v318 = vmul.f32 %v62, 0.2
  %v319 = vmul.f32 %v63, 0.2
  %v320 = vmul.f32 %v64, 0.2
  %v321 = vmul.f32 %v65, 0.2
  %v322 = vmul.f32 %v66, 0.2
  %v323 = vmul.f32 %v67, 0.2
  %v324 = vmul.f32 %v68, 0.2
  %v325 = vmul.f32 %v69, 0.2
  %v326 = vmul.f32 %v70, 0.2
  %v327 = vmul.f32 %v71, 0.2
  %v328 = vmul.f32 %v72, 0.2
  %v329 = vmul.f32 %v73, 0.2
  %v330 = vmul.f32 %v74, 0.2
  %v331 = vmul.f32 %v75, 0.2
  %v332 = vmul.f32 %v76, 0.2
  %v333 = vmul.f32 %v77, 0.2
  %v334 = vmul.f32 %v78, 0.2
  %v335 = vmul.f32 %v79, 0.2
  %v336 = vmul.f32 %v80, 0.2
  %v337 = vmul.f32 %v81, 0.2
  %v338 = vmul.f32 %v82, 0.2
  %v339 = vmul.f32 %v83, 0.2
  %v340 = vmul.f32 %v84, 0.2
  %v341 = vmul.f32 %v85, 0.2
  %v342 = vmul.f32 %v86, 0.2
  %v343 = vmul.f32 %v87, 0.2
  %v344 = vmul.f32 %v88, 0.2
  %v345 = vmul.f32 %v89, 0.2
  %v346 = vmul.f32 %v90, 0.2
  %v347 = vmul.f32 %v91, 0.2
  %v348 = vmul.f32 %v92, 0.2
  %v349 = vmul.f32 %v93, 0.2
  %v350 = vmul.f32 %v94, 0.2
  %v351 = vmul.f32 %v95, 0.2
  %v352 = vmul.f32 %v96, 0.2
  %v353 = vmul.f32 %v97, 0.2
  %v354 = vmul.f32 %v98, 0.2
  %v355 = vmul.f32 %v99, 0.2
  %v356 = vmul.f32 %v100, 0.2
  %v357 = vmul.f32 %v101, 0.2
  %v358 = vmul.f32 %v102, 0.2
  %v359 = vmul.f32 %v103, 0.2
  %v360 = vmul.f32 %v104, 0.2
  %v361 = vmul.f32 %v105, 0.2
  %v362 = vmul.f32 %v106, 0.2
  %v363 = vmul.f32 %v107, 0.2
  %v364 = vmul.f32 %v108, 0.2
  %v365 = vmul.f32 %v109, 0.2
  %v366 = vmul.f32 %v110, 0.2
  %v367 = vmul.f32 %v111, 0.2
  %v368 = vmul.f32 %v112, 0.2
  %v369 = vmul.f32 %v113, 0.2
  %v370 = vmul.f32 %v114, 0.2
  %v371 = vmul.f32 %v115, 0.2
  %v372 = vmul.f32 %v116, 0.2
  %v373 = vmul.f32 %v117, 0.2
  %v374 = vmul.f32 %v118, 0.2
  %v375 = vmul.f32 %v119, 0.2
  %v376 = vmul.f32 %v120, 0.2
  %v377 = vmul.f32 %v121, 0.2
  %v378 = vmul.f32 %v122, 0.2
  %v379 = vmul.f32 %v123, 0.2
  %v380 = vmul.f32 %v124, 0.2
  %v381 = vmul.f32 %v125, 0.2
  %v382 = vmul.f32 %v126, 0.2
  %v383 = vmul.f32 %v127, 0.2
  %v384 = vmul.f32 %v128, 0.2
  %v385 = vmul.f32 %v129, 0.2
  %v386 = vmul.f32 %v130, 0.2
  %v387 = vmul.f32 %v131, 0.2
  %v388 = vmul.f32 %v132, 0.2
  %v389 = vmul.f32 %v133, 0.2
  %v390 = vmul.f32 %v134, 0.2
  %v391 = vmul.f32 %v135, 0.2
  %v392 = vmul.f32 %v136, 0.2
  %v393 = vmul.f32 %v137, 0.2
  %v394 = vmul.f32 %v138, 0.2
  %v395 = vsel %vm139, %v11, %v267
  %v396 = vsel %vm140, %v12, %v268
  %v397 = vsel %vm141, %v13, %v269
  %v398 = vsel %vm142, %v14, %v270
  %v399 = vsel %vm143, %v15, %v271
  %v400 = vsel %vm144, %v16, %v272
  %v401 = vsel %vm145, %v17, %v273
  %v402 = vsel %vm146, %v18, %v274
  %v403 = vsel %vm147, %v19, %v275
  %v404 = vsel %vm148, %v20, %v276
  %v405 = vsel %vm149, %v21, %v277
  %v406 = vsel %vm150, %v22, %v278
  %v407 = vsel %vm151, %v23, %v279
  %v408 = vsel %vm152, %v24, %v280
  %v409 = vsel %vm153, %v25, %v281
  %v410 = vsel %vm154, %v26, %v282
  %v411 = vsel %vm155, %v27, %v283
  %v412 = vsel %vm156, %v28, %v284
  %v413 = vsel %vm157, %v29, %v285
  %v414 = vsel %vm158, %v30, %v286
  %v415 = vsel %vm159, %v31, %v287
  %v416 = vsel %vm160, %v32, %v288
  %v417 = vsel %vm161, %v33, %v289
  %v418 = vsel %vm162, %v34, %v290
  %v419 = vsel %vm163, %v35, %v291
  %v420 = vsel %vm164, %v36, %v292
  %v421 = vsel %vm165, %v37, %v293
  %v422 = vsel %vm166, %v38, %v294
  %v423 = vsel %vm167, %v39, %v295
  %v424 = vsel %vm168, %v40, %v296
  %v425 = vsel %vm169, %v41, %v297
  %v426 = vsel %vm170, %v42, %v298
  %v427 = vsel %vm171, %v43, %v299
  %v428 = vsel %vm172, %v44, %v300
  %v429 = vsel %vm173, %v45, %v301
  %v430 = vsel %vm174, %v46, %v302
  %v431 = vsel %vm175, %v47, %v303
  %v432 = vsel %vm176, %v48, %v304
  %v433 = vsel %vm177, %v49, %v305
  %v434 = vsel %vm178, %v50, %v306
  %v435 = vsel %vm179, %v51, %v307
  %v436 = vsel %vm180, %v52, %v308
  %v437 = vsel %vm181, %v53, %v309
  %v438 = vsel %vm182, %v54, %v310
  %v439 = vsel %vm183, %v55, %v311
  %v440 = vsel %vm184, %v56, %v312
  %v441 = vsel %vm185, %v57, %v313
  %v442 = vsel %vm186, %v58, %v314
  %v443 = vsel %vm187, %v59, %v315
  %v444 = vsel %vm188, %v60, %v316
  %v445 = vsel %vm189, %v61, %v317
  %v446 = vsel %vm190, %v62, %v318
  %v447 = vsel %vm191, %v63, %v319
  %v448 = vsel %vm192, %v64, %v320
  %v449 = vsel %vm193, %v65, %v321
  %v450 = vsel %vm194, %v66, %v322
  %v451 = vsel %vm195, %v67, %v323
  %v452 = vsel %vm196, %v68, %v324
  %v453 = vsel %vm197, %v69, %v325
  %v454 = vsel %vm198, %v70, %v326
  %v455 = vsel %vm199, %v71, %v327
  %v456 = vsel %vm200, %v72, %v328
  %v457 = vsel %vm201, %v73, %v329
  %v458 = vsel %vm202, %v74, %v330
  %v459 = vsel %vm203, %v75, %v331
  %v460 = vsel %vm204, %v76, %v332
  %v461 = vsel %vm205, %v77, %v333
  %v462 = vsel %vm206, %v78, %v334
  %v463 = vsel %vm207, %v79, %v335
  %v464 = vsel %vm208, %v80, %v336
  %v465 = vsel %vm209, %v81, %v337
  %v466 = vsel %vm210, %v82, %v338
  %v467 = vsel %vm211, %v83, %v339
  %v468 = vsel %vm212, %v84, %v340
  %v469 = vsel %vm213, %v85, %v341
  %v470 = vsel %vm214, %v86, %v342
  %v471 = vsel %vm215, %v87, %v343
  %v472 = vsel %vm216, %v88, %v344
  %v473 = vsel %vm217, %v89, %v345
  %v474 = vsel %vm218, %v90, %v346
  %v475 = vsel %vm219, %v91, %v347
  %v476 = vsel %vm220, %v92, %v348
  %v477 = vsel %vm221, %v93, %v349
  %v478 = vsel %vm222, %v94, %v350
  %v479 = vsel %vm223, %v95, %v351
  %v480 = vsel %vm224, %v96, %v352
  %v481 = vsel %vm225, %v97, %v353
  %v482 = vsel %vm226, %v98, %v354
  %v483 = vsel %vm227, %v99, %v355
  %v484 = vsel %vm228, %v100, %v356
  %v485 = vsel %vm229, %v101, %v357
  %v486 = vsel %vm230, %v102, %v358
  %v487 = vsel %vm231, %v103, %v359
  %v488 = vsel %vm232, %v104, %v360
  %v489 = vsel %vm233, %v105, %v361
  %v490 = vsel %vm234, %v106, %v362
  %v491 = vsel %vm235, %v107, %v363
  %v492 = vsel %vm236, %v108, %v364
  %v493 = vsel %vm237, %v109, %v365
  %v494 = vsel %vm238, %v110, %v366
  %v495 = vsel %vm239, %v111, %v367
  %v496 = vsel %vm240, %v112, %v368
  %v497 = vsel %vm241, %v113, %v369
  %v498 = vsel %vm242, %v114, %v370
  %v499 = vsel %vm243, %v115, %v371
  %v500 = vsel %vm244, %v116, %v372
  %v501 = vsel %vm245, %v117, %v373
  %v502 = vsel %vm246, %v118, %v374
  %v503 = vsel %vm247, %v119, %v375
  %v504 = vsel %vm248, %v120, %v376
  %v505 = vsel %vm249, %v121, %v377
  %v506 = vsel %vm250, %v122, %v378
  %v507 = vsel %vm251, %v123, %v379
  %v508 = vsel %vm252, %v124, %v380
  %v509 = vsel %vm253, %v125, %v381
  %v510 = vsel %vm254, %v126, %v382
  %v511 = vsel %vm255, %v127, %v383
  %v512 = vsel %vm256, %v128, %v384
  %v513 = vsel %vm257, %v129, %v385
  %v514 = vsel %vm258, %v130, %v386
  %v515 = vsel %vm259, %v131, %v387
  %v516 = vsel %vm260, %v132, %v388
  %v517 = vsel %vm261, %v133, %v389
  %v518 = vsel %vm262, %v134, %v390
  %v519 = vsel %vm263, %v135, %v391
  %v520 = vsel %vm264, %v136, %v392
  %v521 = vsel %vm265, %v137, %v393
  %v522 = vsel %vm266, %v138, %v394
  %v523 = vpack.c.bf16 %v396, %v395
  %v524 = vpack.c.bf16 %v398, %v397
  %v525 = vpack.c.bf16 %v400, %v399
  %v526 = vpack.c.bf16 %v402, %v401
  %v527 = vpack.c.bf16 %v404, %v403
  %v528 = vpack.c.bf16 %v406, %v405
  %v529 = vpack.c.bf16 %v408, %v407
  %v530 = vpack.c.bf16 %v410, %v409
  %v531 = vpack.c.bf16 %v412, %v411
  %v532 = vpack.c.bf16 %v414, %v413
  %v533 = vpack.c.bf16 %v416, %v415
  %v534 = vpack.c.bf16 %v418, %v417
  %v535 = vpack.c.bf16 %v420, %v419
  %v536 = vpack.c.bf16 %v422, %v421
  %v537 = vpack.c.bf16 %v424, %v423
  %v538 = vpack.c.bf16 %v426, %v425
  %v539 = vpack.c.bf16 %v428, %v427
  %v540 = vpack.c.bf16 %v430, %v429
  %v541 = vpack.c.bf16 %v432, %v431
  %v542 = vpack.c.bf16 %v434, %v433
  %v543 = vpack.c.bf16 %v436, %v435
  %v544 = vpack.c.bf16 %v438, %v437
  %v545 = vpack.c.bf16 %v440, %v439
  %v546 = vpack.c.bf16 %v442, %v441
  %v547 = vpack.c.bf16 %v444, %v443
  %v548 = vpack.c.bf16 %v446, %v445
  %v549 = vpack.c.bf16 %v448, %v447
  %v550 = vpack.c.bf16 %v450, %v449
  %v551 = vpack.c.bf16 %v452, %v451
  %v552 = vpack.c.bf16 %v454, %v453
  %v553 = vpack.c.bf16 %v456, %v455
  %v554 = vpack.c.bf16 %v458, %v457
  %v555 = vpack.c.bf16 %v460, %v459
  %v556 = vpack.c.bf16 %v462, %v461
  %v557 = vpack.c.bf16 %v464, %v463
  %v558 = vpack.c.bf16 %v466, %v465
  %v559 = vpack.c.bf16 %v468, %v467
  %v560 = vpack.c.bf16 %v470, %v469
  %v561 = vpack.c.bf16 %v472, %v471
  %v562 = vpack.c.bf16 %v474, %v473
  %v563 = vpack.c.bf16 %v476, %v475
  %v564 = vpack.c.bf16 %v478, %v477
  %v565 = vpack.c.bf16 %v480, %v479
  %v566 = vpack.c.bf16 %v482, %v481
  %v567 = vpack.c.bf16 %v484, %v483
  %v568 = vpack.c.bf16 %v486, %v485
  %v569 = vpack.c.bf16 %v488, %v487
  %v570 = vpack.c.bf16 %v490, %v489
  %v571 = vpack.c.bf16 %v492, %v491
  %v572 = vpack.c.bf16 %v494, %v493
  %v573 = vpack.c.bf16 %v496, %v495
  %v574 = vpack.c.bf16 %v498, %v497
  %v575 = vpack.c.bf16 %v500, %v499
  %v576 = vpack.c.bf16 %v502, %v501
  %v577 = vpack.c.bf16 %v504, %v503
  %v578 = vpack.c.bf16 %v506, %v505
  %v579 = vpack.c.bf16 %v508, %v507
  %v580 = vpack.c.bf16 %v510, %v509
  %v581 = vpack.c.bf16 %v512, %v511
  %v582 = vpack.c.bf16 %v514, %v513
  %v583 = vpack.c.bf16 %v516, %v515
  %v584 = vpack.c.bf16 %v518, %v517
  %v585 = vpack.c.bf16 %v520, %v519
  %v586 = vpack.c.bf16 %v522, %v521
  %v587 = vld [vmem:[%s1] sm:$0xff]
  %v588 = vld [vmem:[%s1 + $0x8] sm:$0xff]
  %v589 = vld [vmem:[%s1 + $0x10] sm:$0xff]
  %v590 = vld [vmem:[%s1 + $0x18] sm:$0xff]
  %v591 = vld [vmem:[%s1 + $0x20] sm:$0xff]
  %v592 = vld [vmem:[%s1 + $0x28] sm:$0xff]
  %v593 = vld [vmem:[%s1 + $0x30] sm:$0xff]
  %v594 = vld [vmem:[%s1 + $0x38] sm:$0xff]
  %v595 = vld [vmem:[%s1 + $0x40] sm:$0xff]
  %v596 = vld [vmem:[%s1 + $0x48] sm:$0xff]
  %v597 = vld [vmem:[%s1 + $0x50] sm:$0xff]
  %v598 = vld [vmem:[%s1 + $0x58] sm:$0xff]
  %v599 = vld [vmem:[%s1 + $0x60] sm:$0xff]
  %v600 = vld [vmem:[%s1 + $0x68] sm:$0xff]
  %v601 = vld [vmem:[%s1 + $0x70] sm:$0xff]
  %v602 = vld [vmem:[%s1 + $0x78] sm:$0xff]
  %v603 = vld [vmem:[%s1 + $0x80] sm:$0xff]
  %v604 = vld [vmem:[%s1 + $0x88] sm:$0xff]
  %v605 = vld [vmem:[%s1 + $0x90] sm:$0xff]
  %v606 = vld [vmem:[%s1 + $0x98] sm:$0xff]
  %v607 = vld [vmem:[%s1 + $0xa0] sm:$0xff]
  %v608 = vld [vmem:[%s1 + $0xa8] sm:$0xff]
  %v609 = vld [vmem:[%s1 + $0xb0] sm:$0xff]
  %v610 = vld [vmem:[%s1 + $0xb8] sm:$0xff]
  %v611 = vld [vmem:[%s1 + $0xc0] sm:$0xff]
  %v612 = vld [vmem:[%s1 + $0xc8] sm:$0xff]
  %v613 = vld [vmem:[%s1 + $0xd0] sm:$0xff]
  %v614 = vld [vmem:[%s1 + $0xd8] sm:$0xff]
  %v615 = vld [vmem:[%s1 + $0xe0] sm:$0xff]
  %v616 = vld [vmem:[%s1 + $0xe8] sm:$0xff]
  %v617 = vld [vmem:[%s1 + $0xf0] sm:$0xff]
  %v618 = vld [vmem:[%s1 + $0xf8] sm:$0xff]
  %v651 = vunpack.c.l.b16 %v587
  %v652 = vunpack.c.h.b16 %v587
  %v653 = vunpack.c.l.b16 %v588
  %v654 = vunpack.c.h.b16 %v588
  %v655 = vunpack.c.l.b16 %v589
  %v656 = vunpack.c.h.b16 %v589
  %v657 = vunpack.c.l.b16 %v590
  %v658 = vunpack.c.h.b16 %v590
  %v659 = vunpack.c.l.b16 %v591
  %v660 = vunpack.c.h.b16 %v591
  %v661 = vunpack.c.l.b16 %v592
  %v662 = vunpack.c.h.b16 %v592
  %v663 = vunpack.c.l.b16 %v593
  %v664 = vunpack.c.h.b16 %v593
  %v665 = vunpack.c.l.b16 %v594
  %v666 = vunpack.c.h.b16 %v594
  %v667 = vunpack.c.l.b16 %v595
  %v668 = vunpack.c.h.b16 %v595
  %v669 = vunpack.c.l.b16 %v596
  %v670 = vunpack.c.h.b16 %v596
  %v671 = vunpack.c.l.b16 %v597
  %v672 = vunpack.c.h.b16 %v597
  %v673 = vunpack.c.l.b16 %v598
  %v674 = vunpack.c.h.b16 %v598
  %v675 = vunpack.c.l.b16 %v599
  %v676 = vunpack.c.h.b16 %v599
  %v677 = vunpack.c.l.b16 %v600
  %v678 = vunpack.c.h.b16 %v600
  %v679 = vunpack.c.l.b16 %v601
  %v680 = vunpack.c.h.b16 %v601
  %v681 = vunpack.c.l.b16 %v602
  %v682 = vunpack.c.h.b16 %v602
  %v683 = vunpack.c.l.b16 %v603
  %v684 = vunpack.c.h.b16 %v603
  %v685 = vunpack.c.l.b16 %v604
  %v686 = vunpack.c.h.b16 %v604
  %v687 = vunpack.c.l.b16 %v605
  %v688 = vunpack.c.h.b16 %v605
  %v689 = vunpack.c.l.b16 %v606
  %v690 = vunpack.c.h.b16 %v606
  %v691 = vunpack.c.l.b16 %v607
  %v692 = vunpack.c.h.b16 %v607
  %v693 = vunpack.c.l.b16 %v608
  %v694 = vunpack.c.h.b16 %v608
  %v695 = vunpack.c.l.b16 %v609
  %v696 = vunpack.c.h.b16 %v609
  %v697 = vunpack.c.l.b16 %v610
  %v698 = vunpack.c.h.b16 %v610
  %v699 = vunpack.c.l.b16 %v611
  %v700 = vunpack.c.h.b16 %v611
  %v701 = vunpack.c.l.b16 %v612
  %v702 = vunpack.c.h.b16 %v612
  %v703 = vunpack.c.l.b16 %v613
  %v704 = vunpack.c.h.b16 %v613
  %v705 = vunpack.c.l.b16 %v614
  %v706 = vunpack.c.h.b16 %v614
  %v707 = vunpack.c.l.b16 %v615
  %v708 = vunpack.c.h.b16 %v615
  %v709 = vunpack.c.l.b16 %v616
  %v710 = vunpack.c.h.b16 %v616
  %v711 = vunpack.c.l.b16 %v617
  %v712 = vunpack.c.h.b16 %v617
  %v713 = vunpack.c.l.b16 %v618
  %v714 = vunpack.c.h.b16 %v618
  %v715 = vpack.c.b16 %v659, %v651
  %v716 = vpack.c.b16 %v660, %v652
  %v717 = vpack.c.b16 %v661, %v653
  %v718 = vpack.c.b16 %v662, %v654
  %v719 = vpack.c.b16 %v663, %v655
  %v720 = vpack.c.b16 %v664, %v656
  %v721 = vpack.c.b16 %v665, %v657
  %v722 = vpack.c.b16 %v666, %v658
  %v723 = vpack.c.b16 %v675, %v667
  %v724 = vpack.c.b16 %v676, %v668
  %v725 = vpack.c.b16 %v677, %v669
  %v726 = vpack.c.b16 %v678, %v670
  %v727 = vpack.c.b16 %v679, %v671
  %v728 = vpack.c.b16 %v680, %v672
  %v729 = vpack.c.b16 %v681, %v673
  %v730 = vpack.c.b16 %v682, %v674
  %v731 = vpack.c.b16 %v691, %v683
  %v732 = vpack.c.b16 %v692, %v684
  %v733 = vpack.c.b16 %v693, %v685
  %v734 = vpack.c.b16 %v694, %v686
  %v735 = vpack.c.b16 %v695, %v687
  %v736 = vpack.c.b16 %v696, %v688
  %v737 = vpack.c.b16 %v697, %v689
  %v738 = vpack.c.b16 %v698, %v690
  %v739 = vpack.c.b16 %v707, %v699
  %v740 = vpack.c.b16 %v708, %v700
  %v741 = vpack.c.b16 %v709, %v701
  %v742 = vpack.c.b16 %v710, %v702
  %v743 = vpack.c.b16 %v711, %v703
  %v744 = vpack.c.b16 %v712, %v704
  %v745 = vpack.c.b16 %v713, %v705
  %v746 = vpack.c.b16 %v714, %v706
  %779 = vmatpush.bf16.msra.mxu0 %v530
  %780 = vmatpush.bf16.msra.mxu0 %v529
  %781 = vmatpush.bf16.msra.mxu0 %v528
  %782 = vmatpush.bf16.msra.mxu0 %v527
  %783 = vmatpush.bf16.msra.mxu0 %v526
  %784 = vmatpush.bf16.msra.mxu0 %v525
  %785 = vmatpush.bf16.msra.mxu0 %v524
  %786 = vmatpush.bf16.msra.mxu0 %v523
  %787 = vmatmul.bf16.gmra.mxu0 %v715
  %v788 = vpop.f32.mrf.mxu0
  %v789 = vadd.f32 0.0, %v788
  %v790 = vpop.f32.mrf.mxu0
  %v791 = vadd.f32 0.0, %v790
  %792 = vmatmul.bf16.gmra.mxu0 %v723
  %v793 = vpop.f32.mrf.mxu0
  %v794 = vadd.f32 0.0, %v793
  %v795 = vpop.f32.mrf.mxu0
  %v796 = vadd.f32 0.0, %v795
  %797 = vmatmul.bf16.gmra.mxu0 %v731
  %v798 = vpop.f32.mrf.mxu0
  %v799 = vadd.f32 0.0, %v798
  %v800 = vpop.f32.mrf.mxu0
  %v801 = vadd.f32 0.0, %v800
  %802 = vmatmul.bf16.gmra.mxu0 %v739
  %v803 = vpop.f32.mrf.mxu0
  %v804 = vadd.f32 0.0, %v803
  %v805 = vpop.f32.mrf.mxu0
  %v806 = vadd.f32 0.0, %v805
  %807 = vdwg.mxu0
  %808 = vmatpush.bf16.msra.mxu0 %v538
  %809 = vmatpush.bf16.msra.mxu0 %v537
  %810 = vmatpush.bf16.msra.mxu0 %v536
  %811 = vmatpush.bf16.msra.mxu0 %v535
  %812 = vmatpush.bf16.msra.mxu0 %v534
  %813 = vmatpush.bf16.msra.mxu0 %v533
  %814 = vmatpush.bf16.msra.mxu0 %v532
  %815 = vmatpush.bf16.msra.mxu0 %v531
  %816 = vmatmul.bf16.gmra.mxu0 %v716
  %v817 = vpop.f32.mrf.mxu0
  %v818 = vadd.f32 %v789, %v817
  %v819 = vpop.f32.mrf.mxu0
  %v820 = vadd.f32 %v791, %v819
  %821 = vmatmul.bf16.gmra.mxu0 %v724
  %v822 = vpop.f32.mrf.mxu0
  %v823 = vadd.f32 %v794, %v822
  %v824 = vpop.f32.mrf.mxu0
  %v825 = vadd.f32 %v796, %v824
  %826 = vmatmul.bf16.gmra.mxu0 %v732
  %v827 = vpop.f32.mrf.mxu0
  %v828 = vadd.f32 %v799, %v827
  %v829 = vpop.f32.mrf.mxu0
  %v830 = vadd.f32 %v801, %v829
  %831 = vmatmul.bf16.gmra.mxu0 %v740
  %v832 = vpop.f32.mrf.mxu0
  %v833 = vadd.f32 %v804, %v832
  %v834 = vpop.f32.mrf.mxu0
  %v835 = vadd.f32 %v806, %v834
  %836 = vdwg.mxu0
  %837 = vmatpush.bf16.msra.mxu0 %v546
  %838 = vmatpush.bf16.msra.mxu0 %v545
  %839 = vmatpush.bf16.msra.mxu0 %v544
  %840 = vmatpush.bf16.msra.mxu0 %v543
  %841 = vmatpush.bf16.msra.mxu0 %v542
  %842 = vmatpush.bf16.msra.mxu0 %v541
  %843 = vmatpush.bf16.msra.mxu0 %v540
  %844 = vmatpush.bf16.msra.mxu0 %v539
  %845 = vmatmul.bf16.gmra.mxu0 %v717
  %v846 = vpop.f32.mrf.mxu0
  %v847 = vadd.f32 %v818, %v846
  %v848 = vpop.f32.mrf.mxu0
  %v849 = vadd.f32 %v820, %v848
  %850 = vmatmul.bf16.gmra.mxu0 %v725
  %v851 = vpop.f32.mrf.mxu0
  %v852 = vadd.f32 %v823, %v851
  %v853 = vpop.f32.mrf.mxu0
  %v854 = vadd.f32 %v825, %v853
  %855 = vmatmul.bf16.gmra.mxu0 %v733
  %v856 = vpop.f32.mrf.mxu0
  %v857 = vadd.f32 %v828, %v856
  %v858 = vpop.f32.mrf.mxu0
  %v859 = vadd.f32 %v830, %v858
  %860 = vmatmul.bf16.gmra.mxu0 %v741
  %v861 = vpop.f32.mrf.mxu0
  %v862 = vadd.f32 %v833, %v861
  %v863 = vpop.f32.mrf.mxu0
  %v864 = vadd.f32 %v835, %v863
  %865 = vdwg.mxu0
  %866 = vmatpush.bf16.msra.mxu0 %v554
  %867 = vmatpush.bf16.msra.mxu0 %v553
  %868 = vmatpush.bf16.msra.mxu0 %v552
  %869 = vmatpush.bf16.msra.mxu0 %v551
  %870 = vmatpush.bf16.msra.mxu0 %v550
  %871 = vmatpush.bf16.msra.mxu0 %v549
  %872 = vmatpush.bf16.msra.mxu0 %v548
  %873 = vmatpush.bf16.msra.mxu0 %v547
  %874 = vmatmul.bf16.gmra.mxu0 %v718
  %v875 = vpop.f32.mrf.mxu0
  %v876 = vadd.f32 %v847, %v875
  %v877 = vpop.f32.mrf.mxu0
  %v878 = vadd.f32 %v849, %v877
  %879 = vmatmul.bf16.gmra.mxu0 %v726
  %v880 = vpop.f32.mrf.mxu0
  %v881 = vadd.f32 %v852, %v880
  %v882 = vpop.f32.mrf.mxu0
  %v883 = vadd.f32 %v854, %v882
  %884 = vmatmul.bf16.gmra.mxu0 %v734
  %v885 = vpop.f32.mrf.mxu0
  %v886 = vadd.f32 %v857, %v885
  %v887 = vpop.f32.mrf.mxu0
  %v888 = vadd.f32 %v859, %v887
  %889 = vmatmul.bf16.gmra.mxu0 %v742
  %v890 = vpop.f32.mrf.mxu0
  %v891 = vadd.f32 %v862, %v890
  %v892 = vpop.f32.mrf.mxu0
  %v893 = vadd.f32 %v864, %v892
  %894 = vdwg.mxu0
  %895 = vmatpush.bf16.msra.mxu0 %v562
  %896 = vmatpush.bf16.msra.mxu0 %v561
  %897 = vmatpush.bf16.msra.mxu0 %v560
  %898 = vmatpush.bf16.msra.mxu0 %v559
  %899 = vmatpush.bf16.msra.mxu0 %v558
  %900 = vmatpush.bf16.msra.mxu0 %v557
  %901 = vmatpush.bf16.msra.mxu0 %v556
  %902 = vmatpush.bf16.msra.mxu0 %v555
  %903 = vmatmul.bf16.gmra.mxu0 %v719
  %v904 = vpop.f32.mrf.mxu0
  %v905 = vadd.f32 %v876, %v904
  %v906 = vpop.f32.mrf.mxu0
  %v907 = vadd.f32 %v878, %v906
  %908 = vmatmul.bf16.gmra.mxu0 %v727
  %v909 = vpop.f32.mrf.mxu0
  %v910 = vadd.f32 %v881, %v909
  %v911 = vpop.f32.mrf.mxu0
  %v912 = vadd.f32 %v883, %v911
  %913 = vmatmul.bf16.gmra.mxu0 %v735
  %v914 = vpop.f32.mrf.mxu0
  %v915 = vadd.f32 %v886, %v914
  %v916 = vpop.f32.mrf.mxu0
  %v917 = vadd.f32 %v888, %v916
  %918 = vmatmul.bf16.gmra.mxu0 %v743
  %v919 = vpop.f32.mrf.mxu0
  %v920 = vadd.f32 %v891, %v919
  %v921 = vpop.f32.mrf.mxu0
  %v922 = vadd.f32 %v893, %v921
  %923 = vdwg.mxu0
  %924 = vmatpush.bf16.msra.mxu0 %v570
  %925 = vmatpush.bf16.msra.mxu0 %v569
  %926 = vmatpush.bf16.msra.mxu0 %v568
  %927 = vmatpush.bf16.msra.mxu0 %v567
  %928 = vmatpush.bf16.msra.mxu0 %v566
  %929 = vmatpush.bf16.msra.mxu0 %v565
  %930 = vmatpush.bf16.msra.mxu0 %v564
  %931 = vmatpush.bf16.msra.mxu0 %v563
  %932 = vmatmul.bf16.gmra.mxu0 %v720
  %v933 = vpop.f32.mrf.mxu0
  %v934 = vadd.f32 %v905, %v933
  %v935 = vpop.f32.mrf.mxu0
  %v936 = vadd.f32 %v907, %v935
  %937 = vmatmul.bf16.gmra.mxu0 %v728
  %v938 = vpop.f32.mrf.mxu0
  %v939 = vadd.f32 %v910, %v938
  %v940 = vpop.f32.mrf.mxu0
  %v941 = vadd.f32 %v912, %v940
  %942 = vmatmul.bf16.gmra.mxu0 %v736
  %v943 = vpop.f32.mrf.mxu0
  %v944 = vadd.f32 %v915, %v943
  %v945 = vpop.f32.mrf.mxu0
  %v946 = vadd.f32 %v917, %v945
  %947 = vmatmul.bf16.gmra.mxu0 %v744
  %v948 = vpop.f32.mrf.mxu0
  %v949 = vadd.f32 %v920, %v948
  %v950 = vpop.f32.mrf.mxu0
  %v951 = vadd.f32 %v922, %v950
  %952 = vdwg.mxu0
  %953 = vmatpush.bf16.msra.mxu0 %v578
  %954 = vmatpush.bf16.msra.mxu0 %v577
  %955 = vmatpush.bf16.msra.mxu0 %v576
  %956 = vmatpush.bf16.msra.mxu0 %v575
  %957 = vmatpush.bf16.msra.mxu0 %v574
  %958 = vmatpush.bf16.msra.mxu0 %v573
  %959 = vmatpush.bf16.msra.mxu0 %v572
  %960 = vmatpush.bf16.msra.mxu0 %v571
  %961 = vmatmul.bf16.gmra.mxu0 %v721
  %v962 = vpop.f32.mrf.mxu0
  %v963 = vadd.f32 %v934, %v962
  %v964 = vpop.f32.mrf.mxu0
  %v965 = vadd.f32 %v936, %v964
  %966 = vmatmul.bf16.gmra.mxu0 %v729
  %v967 = vpop.f32.mrf.mxu0
  %v968 = vadd.f32 %v939, %v967
  %v969 = vpop.f32.mrf.mxu0
  %v970 = vadd.f32 %v941, %v969
  %971 = vmatmul.bf16.gmra.mxu0 %v737
  %v972 = vpop.f32.mrf.mxu0
  %v973 = vadd.f32 %v944, %v972
  %v974 = vpop.f32.mrf.mxu0
  %v975 = vadd.f32 %v946, %v974
  %976 = vmatmul.bf16.gmra.mxu0 %v745
  %v977 = vpop.f32.mrf.mxu0
  %v978 = vadd.f32 %v949, %v977
  %v979 = vpop.f32.mrf.mxu0
  %v980 = vadd.f32 %v951, %v979
  %981 = vdwg.mxu0
  %982 = vmatpush.bf16.msra.mxu0 %v586
  %983 = vmatpush.bf16.msra.mxu0 %v585
  %984 = vmatpush.bf16.msra.mxu0 %v584
  %985 = vmatpush.bf16.msra.mxu0 %v583
  %986 = vmatpush.bf16.msra.mxu0 %v582
  %987 = vmatpush.bf16.msra.mxu0 %v581
  %988 = vmatpush.bf16.msra.mxu0 %v580
  %989 = vmatpush.bf16.msra.mxu0 %v579
  %990 = vmatmul.bf16.gmra.mxu0 %v722
  %v991 = vpop.f32.mrf.mxu0
  %v992 = vadd.f32 %v963, %v991
  %v993 = vpop.f32.mrf.mxu0
  %v994 = vadd.f32 %v965, %v993
  %995 = vmatmul.bf16.gmra.mxu0 %v730
  %v996 = vpop.f32.mrf.mxu0
  %v997 = vadd.f32 %v968, %v996
  %v998 = vpop.f32.mrf.mxu0
  %v999 = vadd.f32 %v970, %v998
  %1000 = vmatmul.bf16.gmra.mxu0 %v738
  %v1001 = vpop.f32.mrf.mxu0
  %v1002 = vadd.f32 %v973, %v1001
  %v1003 = vpop.f32.mrf.mxu0
  %v1004 = vadd.f32 %v975, %v1003
  %1005 = vmatmul.bf16.gmra.mxu0 %v746
  %v1006 = vpop.f32.mrf.mxu0
  %v1007 = vadd.f32 %v978, %v1006
  %v1008 = vpop.f32.mrf.mxu0
  %v1009 = vadd.f32 %v980, %v1008
  %1010 = vdwg.mxu0
  %vm1011 = vcmask 15360
  %1012 = vst.msk [vmem:[%s2] sm:$0xff] %vm1011, %v992
  %1013 = vst.msk [vmem:[%s2 + $0x8] sm:$0xff] %vm1011, %v994
  %1014 = vst.msk [vmem:[%s2 + $0x10] sm:$0xff] %vm1011, %v997
  %1015 = vst.msk [vmem:[%s2 + $0x18] sm:$0xff] %vm1011, %v999
  %1016 = vst.msk [vmem:[%s2 + $0x20] sm:$0xff] %vm1011, %v1002
  %1017 = vst.msk [vmem:[%s2 + $0x28] sm:$0xff] %vm1011, %v1004
  %1018 = vst.msk [vmem:[%s2 + $0x30] sm:$0xff] %vm1011, %v1007
  %1019 = vst.msk [vmem:[%s2 + $0x38] sm:$0xff] %vm1011, %v1009
  // Predicated region
  $region10: #{unet_forward.14} parent=0 // pred_check
    _
  $region11: #{unet_forward.14} parent=0 // pred_check_branch
    %1021 = sbr.rel (0) target = $region13
  $region12: #{unet_forward.14} parent=0 // pred_region
    _
  $region13: #{unet_forward.14} parent=0 // pred_fallthru
    _
  // Predicated region
  $region14: #{unet_forward.14} parent=0 // pred_check
    _
  $region15: #{unet_forward.14} parent=0 // pred_check_branch
    %1023 = sbr.rel (0) target = $region17
  $region16: #{unet_forward.14} parent=0 // pred_region
    _
  $region17: #{unet_forward.14} parent=0 // pred_fallthru
    _

// kernel: unet_forward.15
$region0: #{unet_forward.15}
  #allocation0 [shape = 'u32[]', space=smem, size = 0x4, offset = 0x4, fixed_abs, tag = 'smem constant byte address 0x4 - core index']
  #allocation1 [shape = 'u32[72,128]{1,0:T(1,128)}', space=vmem, size = 0x9000, scoped, tag = 'internal scratch']
  %s0 = inlined_call_operand.vmem [shape: f32[576,2], index: 0, kind: input, shape index: {}]
  %s1 = inlined_call_operand.vmem [shape: bf16[4,64,576], index: 1, kind: input, shape index: {}]
  %s2 = inlined_call_operand.vmem [shape: f32[64,1], index: 2, kind: input, shape index: {}]
  %s3 = inlined_call_operand.vmem [shape: f32[64,1], index: 3, kind: input, shape index: {}]
  %s4 = inlined_call_operand.vmem [shape: f32[64,8], index: 4, kind: output, shape index: {}]
  %s5 = sld [smem:[#allocation0]]
  $region26: #{unet_forward.15} parent=0
    _
  %s7 = ssub.s32 1, %s5
  %s8 = scalar_select 0, %s7, %s5
  // Predicated region
  $region2: #{unet_forward.15} parent=0 // pred_check
    _
  $region3: #{unet_forward.15} parent=0 // pred_check_branch
    %10 = sbr.rel (0) target = $region5
  $region4: #{unet_forward.15} parent=0 // pred_region
    _
  $region5: #{unet_forward.15} parent=0 // pred_fallthru
    _
  // Predicated region
  $region6: #{unet_forward.15} parent=0 // pred_check
    _
  $region7: #{unet_forward.15} parent=0 // pred_check_branch
    %12 = sbr.rel (0) target = $region9
  $region8: #{unet_forward.15} parent=0 // pred_region
    _
  $region9: #{unet_forward.15} parent=0 // pred_fallthru
    _
  // Predicated region
  $region10: #{unet_forward.15} parent=0 // pred_check
    _
  $region11: #{unet_forward.15} parent=0 // pred_check_branch
    %14 = sbr.rel (0) target = $region13
  $region12: #{unet_forward.15} parent=0 // pred_region
    _
  $region13: #{unet_forward.15} parent=0 // pred_fallthru
    _
  // Predicated region
  $region14: #{unet_forward.15} parent=0 // pred_check
    _
  $region15: #{unet_forward.15} parent=0 // pred_check_branch
    %16 = sbr.rel (0) target = $region17
  $region16: #{unet_forward.15} parent=0 // pred_region
    _
  $region17: #{unet_forward.15} parent=0 // pred_fallthru
    _
  %v18 = vld [vmem:[%s0] sm:$0xff]
  %v19 = vld [vmem:[%s0 + $0x8] sm:$0xff]
  %v20 = vld [vmem:[%s0 + $0x10] sm:$0xff]
  %v21 = vld [vmem:[%s0 + $0x18] sm:$0xff]
  %v22 = vld [vmem:[%s0 + $0x20] sm:$0xff]
  %v23 = vld [vmem:[%s0 + $0x28] sm:$0xff]
  %v24 = vld [vmem:[%s0 + $0x30] sm:$0xff]
  %v25 = vld [vmem:[%s0 + $0x38] sm:$0xff]
  %v26 = vld [vmem:[%s0 + $0x40] sm:$0xff]
  %v27 = vld [vmem:[%s0 + $0x48] sm:$0xff]
  %v28 = vld [vmem:[%s0 + $0x50] sm:$0xff]
  %v29 = vld [vmem:[%s0 + $0x58] sm:$0xff]
  %v30 = vld [vmem:[%s0 + $0x60] sm:$0xff]
  %v31 = vld [vmem:[%s0 + $0x68] sm:$0xff]
  %v32 = vld [vmem:[%s0 + $0x70] sm:$0xff]
  %v33 = vld [vmem:[%s0 + $0x78] sm:$0xff]
  %v34 = vld [vmem:[%s0 + $0x80] sm:$0xff]
  %v35 = vld [vmem:[%s0 + $0x88] sm:$0xff]
  %v36 = vld [vmem:[%s0 + $0x90] sm:$0xff]
  %v37 = vld [vmem:[%s0 + $0x98] sm:$0xff]
  %v38 = vld [vmem:[%s0 + $0xa0] sm:$0xff]
  %v39 = vld [vmem:[%s0 + $0xa8] sm:$0xff]
  %v40 = vld [vmem:[%s0 + $0xb0] sm:$0xff]
  %v41 = vld [vmem:[%s0 + $0xb8] sm:$0xff]
  %v42 = vld [vmem:[%s0 + $0xc0] sm:$0xff]
  %v43 = vld [vmem:[%s0 + $0xc8] sm:$0xff]
  %v44 = vld [vmem:[%s0 + $0xd0] sm:$0xff]
  %v45 = vld [vmem:[%s0 + $0xd8] sm:$0xff]
  %v46 = vld [vmem:[%s0 + $0xe0] sm:$0xff]
  %v47 = vld [vmem:[%s0 + $0xe8] sm:$0xff]
  %v48 = vld [vmem:[%s0 + $0xf0] sm:$0xff]
  %v49 = vld [vmem:[%s0 + $0xf8] sm:$0xff]
  %v50 = vld [vmem:[%s0 + $0x100] sm:$0xff]
  %v51 = vld [vmem:[%s0 + $0x108] sm:$0xff]
  %v52 = vld [vmem:[%s0 + $0x110] sm:$0xff]
  %v53 = vld [vmem:[%s0 + $0x118] sm:$0xff]
  %v54 = vld [vmem:[%s0 + $0x120] sm:$0xff]
  %v55 = vld [vmem:[%s0 + $0x128] sm:$0xff]
  %v56 = vld [vmem:[%s0 + $0x130] sm:$0xff]
  %v57 = vld [vmem:[%s0 + $0x138] sm:$0xff]
  %v58 = vld [vmem:[%s0 + $0x140] sm:$0xff]
  %v59 = vld [vmem:[%s0 + $0x148] sm:$0xff]
  %v60 = vld [vmem:[%s0 + $0x150] sm:$0xff]
  %v61 = vld [vmem:[%s0 + $0x158] sm:$0xff]
  %v62 = vld [vmem:[%s0 + $0x160] sm:$0xff]
  %v63 = vld [vmem:[%s0 + $0x168] sm:$0xff]
  %v64 = vld [vmem:[%s0 + $0x170] sm:$0xff]
  %v65 = vld [vmem:[%s0 + $0x178] sm:$0xff]
  %v66 = vld [vmem:[%s0 + $0x180] sm:$0xff]
  %v67 = vld [vmem:[%s0 + $0x188] sm:$0xff]
  %v68 = vld [vmem:[%s0 + $0x190] sm:$0xff]
  %v69 = vld [vmem:[%s0 + $0x198] sm:$0xff]
  %v70 = vld [vmem:[%s0 + $0x1a0] sm:$0xff]
  %v71 = vld [vmem:[%s0 + $0x1a8] sm:$0xff]
  %v72 = vld [vmem:[%s0 + $0x1b0] sm:$0xff]
  %v73 = vld [vmem:[%s0 + $0x1b8] sm:$0xff]
  %v74 = vld [vmem:[%s0 + $0x1c0] sm:$0xff]
  %v75 = vld [vmem:[%s0 + $0x1c8] sm:$0xff]
  %v76 = vld [vmem:[%s0 + $0x1d0] sm:$0xff]
  %v77 = vld [vmem:[%s0 + $0x1d8] sm:$0xff]
  %v78 = vld [vmem:[%s0 + $0x1e0] sm:$0xff]
  %v79 = vld [vmem:[%s0 + $0x1e8] sm:$0xff]
  %v80 = vld [vmem:[%s0 + $0x1f0] sm:$0xff]
  %v81 = vld [vmem:[%s0 + $0x1f8] sm:$0xff]
  %v82 = vld [vmem:[%s0 + $0x200] sm:$0xff]
  %v83 = vld [vmem:[%s0 + $0x208] sm:$0xff]
  %v84 = vld [vmem:[%s0 + $0x210] sm:$0xff]
  %v85 = vld [vmem:[%s0 + $0x218] sm:$0xff]
  %v86 = vld [vmem:[%s0 + $0x220] sm:$0xff]
  %v87 = vld [vmem:[%s0 + $0x228] sm:$0xff]
  %v88 = vld [vmem:[%s0 + $0x230] sm:$0xff]
  %v89 = vld [vmem:[%s0 + $0x238] sm:$0xff]
  %v90 = vmax.f32 %v18, 0.0
  %v91 = vmax.f32 %v19, 0.0
  %v92 = vmax.f32 %v20, 0.0
  %v93 = vmax.f32 %v21, 0.0
  %v94 = vmax.f32 %v22, 0.0
  %v95 = vmax.f32 %v23, 0.0
  %v96 = vmax.f32 %v24, 0.0
  %v97 = vmax.f32 %v25, 0.0
  %v98 = vmax.f32 %v26, 0.0
  %v99 = vmax.f32 %v27, 0.0
  %v100 = vmax.f32 %v28, 0.0
  %v101 = vmax.f32 %v29, 0.0
  %v102 = vmax.f32 %v30, 0.0
  %v103 = vmax.f32 %v31, 0.0
  %v104 = vmax.f32 %v32, 0.0
  %v105 = vmax.f32 %v33, 0.0
  %v106 = vmax.f32 %v34, 0.0
  %v107 = vmax.f32 %v35, 0.0
  %v108 = vmax.f32 %v36, 0.0
  %v109 = vmax.f32 %v37, 0.0
  %v110 = vmax.f32 %v38, 0.0
  %v111 = vmax.f32 %v39, 0.0
  %v112 = vmax.f32 %v40, 0.0
  %v113 = vmax.f32 %v41, 0.0
  %v114 = vmax.f32 %v42, 0.0
  %v115 = vmax.f32 %v43, 0.0
  %v116 = vmax.f32 %v44, 0.0
  %v117 = vmax.f32 %v45, 0.0
  %v118 = vmax.f32 %v46, 0.0
  %v119 = vmax.f32 %v47, 0.0
  %v120 = vmax.f32 %v48, 0.0
  %v121 = vmax.f32 %v49, 0.0
  %v122 = vmax.f32 %v50, 0.0
  %v123 = vmax.f32 %v51, 0.0
  %v124 = vmax.f32 %v52, 0.0
  %v125 = vmax.f32 %v53, 0.0
  %v126 = vmax.f32 %v54, 0.0
  %v127 = vmax.f32 %v55, 0.0
  %v128 = vmax.f32 %v56, 0.0
  %v129 = vmax.f32 %v57, 0.0
  %v130 = vmax.f32 %v58, 0.0
  %v131 = vmax.f32 %v59, 0.0
  %v132 = vmax.f32 %v60, 0.0
  %v133 = vmax.f32 %v61, 0.0
  %v134 = vmax.f32 %v62, 0.0
  %v135 = vmax.f32 %v63, 0.0
  %v136 = vmax.f32 %v64, 0.0
  %v137 = vmax.f32 %v65, 0.0
  %v138 = vmax.f32 %v66, 0.0
  %v139 = vmax.f32 %v67, 0.0
  %v140 = vmax.f32 %v68, 0.0
  %v141 = vmax.f32 %v69, 0.0
  %v142 = vmax.f32 %v70, 0.0
  %v143 = vmax.f32 %v71, 0.0
  %v144 = vmax.f32 %v72, 0.0
  %v145 = vmax.f32 %v73, 0.0
  %v146 = vmax.f32 %v74, 0.0
  %v147 = vmax.f32 %v75, 0.0
  %v148 = vmax.f32 %v76, 0.0
  %v149 = vmax.f32 %v77, 0.0
  %v150 = vmax.f32 %v78, 0.0
  %v151 = vmax.f32 %v79, 0.0
  %v152 = vmax.f32 %v80, 0.0
  %v153 = vmax.f32 %v81, 0.0
  %v154 = vmax.f32 %v82, 0.0
  %v155 = vmax.f32 %v83, 0.0
  %v156 = vmax.f32 %v84, 0.0
  %v157 = vmax.f32 %v85, 0.0
  %v158 = vmax.f32 %v86, 0.0
  %v159 = vmax.f32 %v87, 0.0
  %v160 = vmax.f32 %v88, 0.0
  %v161 = vmax.f32 %v89, 0.0
  %v162 = vpack.c.bf16 %v91, %v90
  %v163 = vpack.c.bf16 %v93, %v92
  %v164 = vpack.c.bf16 %v95, %v94
  %v165 = vpack.c.bf16 %v97, %v96
  %v166 = vpack.c.bf16 %v99, %v98
  %v167 = vpack.c.bf16 %v101, %v100
  %v168 = vpack.c.bf16 %v103, %v102
  %v169 = vpack.c.bf16 %v105, %v104
  %v170 = vpack.c.bf16 %v107, %v106
  %v171 = vpack.c.bf16 %v109, %v108
  %v172 = vpack.c.bf16 %v111, %v110
  %v173 = vpack.c.bf16 %v113, %v112
  %v174 = vpack.c.bf16 %v115, %v114
  %v175 = vpack.c.bf16 %v117, %v116
  %v176 = vpack.c.bf16 %v119, %v118
  %v177 = vpack.c.bf16 %v121, %v120
  %v178 = vpack.c.bf16 %v123, %v122
  %v179 = vpack.c.bf16 %v125, %v124
  %v180 = vpack.c.bf16 %v127, %v126
  %v181 = vpack.c.bf16 %v129, %v128
  %v182 = vpack.c.bf16 %v131, %v130
  %v183 = vpack.c.bf16 %v133, %v132
  %v184 = vpack.c.bf16 %v135, %v134
  %v185 = vpack.c.bf16 %v137, %v136
  %v186 = vpack.c.bf16 %v139, %v138
  %v187 = vpack.c.bf16 %v141, %v140
  %v188 = vpack.c.bf16 %v143, %v142
  %v189 = vpack.c.bf16 %v145, %v144
  %v190 = vpack.c.bf16 %v147, %v146
  %v191 = vpack.c.bf16 %v149, %v148
  %v192 = vpack.c.bf16 %v151, %v150
  %v193 = vpack.c.bf16 %v153, %v152
  %v194 = vpack.c.bf16 %v155, %v154
  %v195 = vpack.c.bf16 %v157, %v156
  %v196 = vpack.c.bf16 %v159, %v158
  %v197 = vpack.c.bf16 %v161, %v160
  %v198 = vld [vmem:[%s1] sm:$0xff]
  %v199 = vld [vmem:[%s1 + $0x8] sm:$0xff]
  %v200 = vld [vmem:[%s1 + $0x10] sm:$0xf]
  %v201 = vld [vmem:[%s1 + $0x14] sm:$0xff]
  %v202 = vld [vmem:[%s1 + $0x1c] sm:$0xff]
  %v203 = vld [vmem:[%s1 + $0x24] sm:$0xf]
  %v204 = vld [vmem:[%s1 + $0x28] sm:$0xff]
  %v205 = vld [vmem:[%s1 + $0x30] sm:$0xff]
  %v206 = vld [vmem:[%s1 + $0x38] sm:$0xf]
  %v207 = vld [vmem:[%s1 + $0x3c] sm:$0xff]
  %v208 = vld [vmem:[%s1 + $0x44] sm:$0xff]
  %v209 = vld [vmem:[%s1 + $0x4c] sm:$0xf]
  %v210 = vld [vmem:[%s1 + $0x50] sm:$0xff]
  %v211 = vld [vmem:[%s1 + $0x58] sm:$0xff]
  %v212 = vld [vmem:[%s1 + $0x60] sm:$0xf]
  %v213 = vld [vmem:[%s1 + $0x64] sm:$0xff]
  %v214 = vld [vmem:[%s1 + $0x6c] sm:$0xff]
  %v215 = vld [vmem:[%s1 + $0x74] sm:$0xf]
  %v216 = vld [vmem:[%s1 + $0x78] sm:$0xff]
  %v217 = vld [vmem:[%s1 + $0x80] sm:$0xff]
  %v218 = vld [vmem:[%s1 + $0x88] sm:$0xf]
  %v219 = vld [vmem:[%s1 + $0x8c] sm:$0xff]
  %v220 = vld [vmem:[%s1 + $0x94] sm:$0xff]
  %v221 = vld [vmem:[%s1 + $0x9c] sm:$0xf]
  %v246 = vunpack.c.l.b16 %v198
  %v247 = vunpack.c.h.b16 %v198
  %v248 = vunpack.c.l.b16 %v199
  %v249 = vunpack.c.h.b16 %v199
  %v250 = vunpack.c.l.b16 %v200
  %v251 = vunpack.c.l.b16 %v201
  %v252 = vunpack.c.h.b16 %v201
  %v253 = vunpack.c.l.b16 %v202
  %v254 = vunpack.c.h.b16 %v202
  %v255 = vunpack.c.l.b16 %v203
  %v256 = vunpack.c.l.b16 %v204
  %v257 = vunpack.c.h.b16 %v204
  %v258 = vunpack.c.l.b16 %v205
  %v259 = vunpack.c.h.b16 %v205
  %v260 = vunpack.c.l.b16 %v206
  %v261 = vunpack.c.l.b16 %v207
  %v262 = vunpack.c.h.b16 %v207
  %v263 = vunpack.c.l.b16 %v208
  %v264 = vunpack.c.h.b16 %v208
  %v265 = vunpack.c.l.b16 %v209
  %v266 = vunpack.c.l.b16 %v210
  %v267 = vunpack.c.h.b16 %v210
  %v268 = vunpack.c.l.b16 %v211
  %v269 = vunpack.c.h.b16 %v211
  %v270 = vunpack.c.l.b16 %v212
  %v271 = vunpack.c.l.b16 %v213
  %v272 = vunpack.c.h.b16 %v213
  %v273 = vunpack.c.l.b16 %v214
  %v274 = vunpack.c.h.b16 %v214
  %v275 = vunpack.c.l.b16 %v215
  %v276 = vunpack.c.l.b16 %v216
  %v277 = vunpack.c.h.b16 %v216
  %v278 = vunpack.c.l.b16 %v217
  %v279 = vunpack.c.h.b16 %v217
  %v280 = vunpack.c.l.b16 %v218
  %v281 = vunpack.c.l.b16 %v219
  %v282 = vunpack.c.h.b16 %v219
  %v283 = vunpack.c.l.b16 %v220
  %v284 = vunpack.c.h.b16 %v220
  %v285 = vunpack.c.l.b16 %v221
  %v286 = vpack.c.b16 %v251, %v246
  %v287 = vpack.c.b16 %v252, %v247
  %v288 = vpack.c.b16 %v253, %v248
  %v289 = vpack.c.b16 %v254, %v249
  %v290 = vpack.c.b16 %v255, %v250
  %v291 = vpack.c.b16 %v261, %v256
  %v292 = vpack.c.b16 %v262, %v257
  %v293 = vpack.c.b16 %v263, %v258
  %v294 = vpack.c.b16 %v264, %v259
  %v295 = vpack.c.b16 %v265, %v260
  %v296 = vpack.c.b16 %v271, %v266
  %v297 = vpack.c.b16 %v272, %v267
  %v298 = vpack.c.b16 %v273, %v268
  %v299 = vpack.c.b16 %v274, %v269
  %v300 = vpack.c.b16 %v275, %v270
  %v301 = vpack.c.b16 %v281, %v276
  %v302 = vpack.c.b16 %v282, %v277
  %v303 = vpack.c.b16 %v283, %v278
  %v304 = vpack.c.b16 %v284, %v279
  %v305 = vpack.c.b16 %v285, %v280
  %vm322 = vcmask 523264
  %v324 = vsel %vm322, %v290, 0
  %v327 = vsel %vm322, %v295, 0
  %v330 = vsel %vm322, %v300, 0
  %v333 = vsel %vm322, %v305, 0
  %335 = vmatpush.bf16.msra.mxu0 %v169
  %336 = vmatpush.bf16.msra.mxu0 %v168
  %337 = vmatpush.bf16.msra.mxu0 %v167
  %338 = vmatpush.bf16.msra.mxu0 %v166
  %339 = vmatpush.bf16.msra.mxu0 %v165
  %340 = vmatpush.bf16.msra.mxu0 %v164
  %341 = vmatpush.bf16.msra.mxu0 %v163
  %342 = vmatpush.bf16.msra.mxu0 %v162
  %343 = vmatmul.bf16.gmra.mxu0 %v286
  %v344 = vpop.f32.mrf.mxu0
  %v345 = vadd.f32 0.0, %v344
  %v346 = vpop.f32.mrf.mxu0
  %v347 = vadd.f32 0.0, %v346
  %348 = vmatmul.bf16.gmra.mxu0 %v291
  %v349 = vpop.f32.mrf.mxu0
  %v350 = vadd.f32 0.0, %v349
  %v351 = vpop.f32.mrf.mxu0
  %v352 = vadd.f32 0.0, %v351
  %353 = vmatmul.bf16.gmra.mxu0 %v296
  %v354 = vpop.f32.mrf.mxu0
  %v355 = vadd.f32 0.0, %v354
  %v356 = vpop.f32.mrf.mxu0
  %v357 = vadd.f32 0.0, %v356
  %358 = vmatmul.bf16.gmra.mxu0 %v301
  %v359 = vpop.f32.mrf.mxu0
  %v360 = vadd.f32 0.0, %v359
  %v361 = vpop.f32.mrf.mxu0
  %v362 = vadd.f32 0.0, %v361
  %363 = vdwg.mxu0
  %364 = vmatpush.bf16.msra.mxu0 %v177
  %365 = vmatpush.bf16.msra.mxu0 %v176
  %366 = vmatpush.bf16.msra.mxu0 %v175
  %367 = vmatpush.bf16.msra.mxu0 %v174
  %368 = vmatpush.bf16.msra.mxu0 %v173
  %369 = vmatpush.bf16.msra.mxu0 %v172
  %370 = vmatpush.bf16.msra.mxu0 %v171
  %371 = vmatpush.bf16.msra.mxu0 %v170
  %372 = vmatmul.bf16.gmra.mxu0 %v287
  %v373 = vpop.f32.mrf.mxu0
  %v374 = vadd.f32 %v345, %v373
  %v375 = vpop.f32.mrf.mxu0
  %v376 = vadd.f32 %v347, %v375
  %377 = vmatmul.bf16.gmra.mxu0 %v292
  %v378 = vpop.f32.mrf.mxu0
  %v379 = vadd.f32 %v350, %v378
  %v380 = vpop.f32.mrf.mxu0
  %v381 = vadd.f32 %v352, %v380
  %382 = vmatmul.bf16.gmra.mxu0 %v297
  %v383 = vpop.f32.mrf.mxu0
  %v384 = vadd.f32 %v355, %v383
  %v385 = vpop.f32.mrf.mxu0
  %v386 = vadd.f32 %v357, %v385
  %387 = vmatmul.bf16.gmra.mxu0 %v302
  %v388 = vpop.f32.mrf.mxu0
  %v389 = vadd.f32 %v360, %v388
  %v390 = vpop.f32.mrf.mxu0
  %v391 = vadd.f32 %v362, %v390
  %392 = vdwg.mxu0
  %393 = vmatpush.bf16.msra.mxu0 %v185
  %394 = vmatpush.bf16.msra.mxu0 %v184
  %395 = vmatpush.bf16.msra.mxu0 %v183
  %396 = vmatpush.bf16.msra.mxu0 %v182
  %397 = vmatpush.bf16.msra.mxu0 %v181
  %398 = vmatpush.bf16.msra.mxu0 %v180
  %399 = vmatpush.bf16.msra.mxu0 %v179
  %400 = vmatpush.bf16.msra.mxu0 %v178
  %401 = vmatmul.bf16.gmra.mxu0 %v288
  %v402 = vpop.f32.mrf.mxu0
  %v403 = vadd.f32 %v374, %v402
  %v404 = vpop.f32.mrf.mxu0
  %v405 = vadd.f32 %v376, %v404
  %406 = vmatmul.bf16.gmra.mxu0 %v293
  %v407 = vpop.f32.mrf.mxu0
  %v408 = vadd.f32 %v379, %v407
  %v409 = vpop.f32.mrf.mxu0
  %v410 = vadd.f32 %v381, %v409
  %411 = vmatmul.bf16.gmra.mxu0 %v298
  %v412 = vpop.f32.mrf.mxu0
  %v413 = vadd.f32 %v384, %v412
  %v414 = vpop.f32.mrf.mxu0
  %v415 = vadd.f32 %v386, %v414
  %416 = vmatmul.bf16.gmra.mxu0 %v303
  %v417 = vpop.f32.mrf.mxu0
  %v418 = vadd.f32 %v389, %v417
  %v419 = vpop.f32.mrf.mxu0
  %v420 = vadd.f32 %v391, %v419
  %421 = vdwg.mxu0
  %422 = vmatpush.bf16.msra.mxu0 %v193
  %423 = vmatpush.bf16.msra.mxu0 %v192
  %424 = vmatpush.bf16.msra.mxu0 %v191
  %425 = vmatpush.bf16.msra.mxu0 %v190
  %426 = vmatpush.bf16.msra.mxu0 %v189
  %427 = vmatpush.bf16.msra.mxu0 %v188
  %428 = vmatpush.bf16.msra.mxu0 %v187
  %429 = vmatpush.bf16.msra.mxu0 %v186
  %430 = vmatmul.bf16.gmra.mxu0 %v289
  %v431 = vpop.f32.mrf.mxu0
  %v432 = vadd.f32 %v403, %v431
  %v433 = vpop.f32.mrf.mxu0
  %v434 = vadd.f32 %v405, %v433
  %435 = vmatmul.bf16.gmra.mxu0 %v294
  %v436 = vpop.f32.mrf.mxu0
  %v437 = vadd.f32 %v408, %v436
  %v438 = vpop.f32.mrf.mxu0
  %v439 = vadd.f32 %v410, %v438
  %440 = vmatmul.bf16.gmra.mxu0 %v299
  %v441 = vpop.f32.mrf.mxu0
  %v442 = vadd.f32 %v413, %v441
  %v443 = vpop.f32.mrf.mxu0
  %v444 = vadd.f32 %v415, %v443
  %445 = vmatmul.bf16.gmra.mxu0 %v304
  %v446 = vpop.f32.mrf.mxu0
  %v447 = vadd.f32 %v418, %v446
  %v448 = vpop.f32.mrf.mxu0
  %v449 = vadd.f32 %v420, %v448
  %450 = vdwg.mxu0
  %451 = vmatpush.bf16.msra.mxu0 0
  %452 = vmatpush.bf16.msra.mxu0 0
  %453 = vmatpush.bf16.msra.mxu0 0
  %454 = vmatpush.bf16.msra.mxu0 0
  %455 = vmatpush.bf16.msra.mxu0 %v197
  %456 = vmatpush.bf16.msra.mxu0 %v196
  %457 = vmatpush.bf16.msra.mxu0 %v195
  %458 = vmatpush.bf16.msra.mxu0 %v194
  %459 = vmatmul.bf16.gmra.mxu0 %v324
  %v460 = vpop.f32.mrf.mxu0
  %v461 = vadd.f32 %v432, %v460
  %v462 = vpop.f32.mrf.mxu0
  %v463 = vadd.f32 %v434, %v462
  %464 = vmatmul.bf16.gmra.mxu0 %v327
  %v465 = vpop.f32.mrf.mxu0
  %v466 = vadd.f32 %v437, %v465
  %v467 = vpop.f32.mrf.mxu0
  %v468 = vadd.f32 %v439, %v467
  %469 = vmatmul.bf16.gmra.mxu0 %v330
  %v470 = vpop.f32.mrf.mxu0
  %v471 = vadd.f32 %v442, %v470
  %v472 = vpop.f32.mrf.mxu0
  %v473 = vadd.f32 %v444, %v472
  %474 = vmatmul.bf16.gmra.mxu0 %v333
  %v475 = vpop.f32.mrf.mxu0
  %v476 = vadd.f32 %v447, %v475
  %v477 = vpop.f32.mrf.mxu0
  %v478 = vadd.f32 %v449, %v477
  %479 = vdwg.mxu0
  %vm480 = vcmask 15360
  %481 = vst.msk [vmem:[%s4] sm:$0xff] %vm480, %v461
  %482 = vst.msk [vmem:[%s4 + $0x8] sm:$0xff] %vm480, %v463
  %483 = vst.msk [vmem:[%s4 + $0x10] sm:$0xff] %vm480, %v466
  %484 = vst.msk [vmem:[%s4 + $0x18] sm:$0xff] %vm480, %v468
  %485 = vst.msk [vmem:[%s4 + $0x20] sm:$0xff] %vm480, %v471
  %486 = vst.msk [vmem:[%s4 + $0x28] sm:$0xff] %vm480, %v473
  %487 = vst.msk [vmem:[%s4 + $0x30] sm:$0xff] %vm480, %v476
  %488 = vst.msk [vmem:[%s4 + $0x38] sm:$0xff] %vm480, %v478
  %s489 = scalar_lea.vmem %s1, 160
  %v490 = vld [vmem:[%s489] sm:$0xff]
  %v491 = vld [vmem:[%s489 + $0x8] sm:$0xff]
  %v492 = vld [vmem:[%s489 + $0x10] sm:$0xf]
  %v493 = vld [vmem:[%s489 + $0x14] sm:$0xff]
  %v494 = vld [vmem:[%s489 + $0x1c] sm:$0xff]
  %v495 = vld [vmem:[%s489 + $0x24] sm:$0xf]
  %v496 = vld [vmem:[%s489 + $0x28] sm:$0xff]
  %v497 = vld [vmem:[%s489 + $0x30] sm:$0xff]
  %v498 = vld [vmem:[%s489 + $0x38] sm:$0xf]
  %v499 = vld [vmem:[%s489 + $0x3c] sm:$0xff]
  %v500 = vld [vmem:[%s489 + $0x44] sm:$0xff]
  %v501 = vld [vmem:[%s489 + $0x4c] sm:$0xf]
  %v502 = vld [vmem:[%s489 + $0x50] sm:$0xff]
  %v503 = vld [vmem:[%s489 + $0x58] sm:$0xff]
  %v504 = vld [vmem:[%s489 + $0x60] sm:$0xf]
  %v505 = vld [vmem:[%s489 + $0x64] sm:$0xff]
  %v506 = vld [vmem:[%s489 + $0x6c] sm:$0xff]
  %v507 = vld [vmem:[%s489 + $0x74] sm:$0xf]
  %v508 = vld [vmem:[%s489 + $0x78] sm:$0xff]
  %v509 = vld [vmem:[%s489 + $0x80] sm:$0xff]
  %v510 = vld [vmem:[%s489 + $0x88] sm:$0xf]
  %v511 = vld [vmem:[%s489 + $0x8c] sm:$0xff]
  %v512 = vld [vmem:[%s489 + $0x94] sm:$0xff]
  %v513 = vld [vmem:[%s489 + $0x9c] sm:$0xf]
  %v538 = vunpack.c.l.b16 %v490
  %v539 = vunpack.c.h.b16 %v490
  %v540 = vunpack.c.l.b16 %v491
  %v541 = vunpack.c.h.b16 %v491
  %v542 = vunpack.c.l.b16 %v492
  %v543 = vunpack.c.l.b16 %v493
  %v544 = vunpack.c.h.b16 %v493
  %v545 = vunpack.c.l.b16 %v494
  %v546 = vunpack.c.h.b16 %v494
  %v547 = vunpack.c.l.b16 %v495
  %v548 = vunpack.c.l.b16 %v496
  %v549 = vunpack.c.h.b16 %v496
  %v550 = vunpack.c.l.b16 %v497
  %v551 = vunpack.c.h.b16 %v497
  %v552 = vunpack.c.l.b16 %v498
  %v553 = vunpack.c.l.b16 %v499
  %v554 = vunpack.c.h.b16 %v499
  %v555 = vunpack.c.l.b16 %v500
  %v556 = vunpack.c.h.b16 %v500
  %v557 = vunpack.c.l.b16 %v501
  %v558 = vunpack.c.l.b16 %v502
  %v559 = vunpack.c.h.b16 %v502
  %v560 = vunpack.c.l.b16 %v503
  %v561 = vunpack.c.h.b16 %v503
  %v562 = vunpack.c.l.b16 %v504
  %v563 = vunpack.c.l.b16 %v505
  %v564 = vunpack.c.h.b16 %v505
  %v565 = vunpack.c.l.b16 %v506
  %v566 = vunpack.c.h.b16 %v506
  %v567 = vunpack.c.l.b16 %v507
  %v568 = vunpack.c.l.b16 %v508
  %v569 = vunpack.c.h.b16 %v508
  %v570 = vunpack.c.l.b16 %v509
  %v571 = vunpack.c.h.b16 %v509
  %v572 = vunpack.c.l.b16 %v510
  %v573 = vunpack.c.l.b16 %v511
  %v574 = vunpack.c.h.b16 %v511
  %v575 = vunpack.c.l.b16 %v512
  %v576 = vunpack.c.h.b16 %v512
  %v577 = vunpack.c.l.b16 %v513
  %v578 = vpack.c.b16 %v543, %v538
  %v579 = vpack.c.b16 %v544, %v539
  %v580 = vpack.c.b16 %v545, %v540
  %v581 = vpack.c.b16 %v546, %v541
  %v582 = vpack.c.b16 %v547, %v542
  %v583 = vpack.c.b16 %v553, %v548
  %v584 = vpack.c.b16 %v554, %v549
  %v585 = vpack.c.b16 %v555, %v550
  %v586 = vpack.c.b16 %v556, %v551
  %v587 = vpack.c.b16 %v557, %v552
  %v588 = vpack.c.b16 %v563, %v558
  %v589 = vpack.c.b16 %v564, %v559
  %v590 = vpack.c.b16 %v565, %v560
  %v591 = vpack.c.b16 %v566, %v561
  %v592 = vpack.c.b16 %v567, %v562
  %v593 = vpack.c.b16 %v573, %v568
  %v594 = vpack.c.b16 %v574, %v569
  %v595 = vpack.c.b16 %v575, %v570
  %v596 = vpack.c.b16 %v576, %v571
  %v597 = vpack.c.b16 %v577, %v572
  %v615 = vsel %vm322, %v582, 0
  %v618 = vsel %vm322, %v587, 0
  %v621 = vsel %vm322, %v592, 0
  %v624 = vsel %vm322, %v597, 0
  %626 = vmatpush.bf16.msra.mxu0 %v169
  %627 = vmatpush.bf16.msra.mxu0 %v168
  %628 = vmatpush.bf16.msra.mxu0 %v167
  %629 = vmatpush.bf16.msra.mxu0 %v166
  %630 = vmatpush.bf16.msra.mxu0 %v165
  %631 = vmatpush.bf16.msra.mxu0 %v164
  %632 = vmatpush.bf16.msra.mxu0 %v163
  %633 = vmatpush.bf16.msra.mxu0 %v162
  %634 = vmatmul.bf16.gmra.mxu0 %v578
  %v635 = vpop.f32.mrf.mxu0
  %v636 = vadd.f32 0.0, %v635
  %v637 = vpop.f32.mrf.mxu0
  %v638 = vadd.f32 0.0, %v637
  %639 = vmatmul.bf16.gmra.mxu0 %v583
  %v640 = vpop.f32.mrf.mxu0
  %v641 = vadd.f32 0.0, %v640
  %v642 = vpop.f32.mrf.mxu0
  %v643 = vadd.f32 0.0, %v642
  %644 = vmatmul.bf16.gmra.mxu0 %v588
  %v645 = vpop.f32.mrf.mxu0
  %v646 = vadd.f32 0.0, %v645
  %v647 = vpop.f32.mrf.mxu0
  %v648 = vadd.f32 0.0, %v647
  %649 = vmatmul.bf16.gmra.mxu0 %v593
  %v650 = vpop.f32.mrf.mxu0
  %v651 = vadd.f32 0.0, %v650
  %v652 = vpop.f32.mrf.mxu0
  %v653 = vadd.f32 0.0, %v652
  %654 = vdwg.mxu0
  %655 = vmatpush.bf16.msra.mxu0 %v177
  %656 = vmatpush.bf16.msra.mxu0 %v176
  %657 = vmatpush.bf16.msra.mxu0 %v175
  %658 = vmatpush.bf16.msra.mxu0 %v174
  %659 = vmatpush.bf16.msra.mxu0 %v173
  %660 = vmatpush.bf16.msra.mxu0 %v172
  %661 = vmatpush.bf16.msra.mxu0 %v171
  %662 = vmatpush.bf16.msra.mxu0 %v170
  %663 = vmatmul.bf16.gmra.mxu0 %v579
  %v664 = vpop.f32.mrf.mxu0
  %v665 = vadd.f32 %v636, %v664
  %v666 = vpop.f32.mrf.mxu0
  %v667 = vadd.f32 %v638, %v666
  %668 = vmatmul.bf16.gmra.mxu0 %v584
  %v669 = vpop.f32.mrf.mxu0
  %v670 = vadd.f32 %v641, %v669
  %v671 = vpop.f32.mrf.mxu0
  %v672 = vadd.f32 %v643, %v671
  %673 = vmatmul.bf16.gmra.mxu0 %v589
  %v674 = vpop.f32.mrf.mxu0
  %v675 = vadd.f32 %v646, %v674
  %v676 = vpop.f32.mrf.mxu0
  %v677 = vadd.f32 %v648, %v676
  %678 = vmatmul.bf16.gmra.mxu0 %v594
  %v679 = vpop.f32.mrf.mxu0
  %v680 = vadd.f32 %v651, %v679
  %v681 = vpop.f32.mrf.mxu0
  %v682 = vadd.f32 %v653, %v681
  %683 = vdwg.mxu0
  %684 = vmatpush.bf16.msra.mxu0 %v185
  %685 = vmatpush.bf16.msra.mxu0 %v184
  %686 = vmatpush.bf16.msra.mxu0 %v183
  %687 = vmatpush.bf16.msra.mxu0 %v182
  %688 = vmatpush.bf16.msra.mxu0 %v181
  %689 = vmatpush.bf16.msra.mxu0 %v180
  %690 = vmatpush.bf16.msra.mxu0 %v179
  %691 = vmatpush.bf16.msra.mxu0 %v178
  %692 = vmatmul.bf16.gmra.mxu0 %v580
  %v693 = vpop.f32.mrf.mxu0
  %v694 = vadd.f32 %v665, %v693
  %v695 = vpop.f32.mrf.mxu0
  %v696 = vadd.f32 %v667, %v695
  %697 = vmatmul.bf16.gmra.mxu0 %v585
  %v698 = vpop.f32.mrf.mxu0
  %v699 = vadd.f32 %v670, %v698
  %v700 = vpop.f32.mrf.mxu0
  %v701 = vadd.f32 %v672, %v700
  %702 = vmatmul.bf16.gmra.mxu0 %v590
  %v703 = vpop.f32.mrf.mxu0
  %v704 = vadd.f32 %v675, %v703
  %v705 = vpop.f32.mrf.mxu0
  %v706 = vadd.f32 %v677, %v705
  %707 = vmatmul.bf16.gmra.mxu0 %v595
  %v708 = vpop.f32.mrf.mxu0
  %v709 = vadd.f32 %v680, %v708
  %v710 = vpop.f32.mrf.mxu0
  %v711 = vadd.f32 %v682, %v710
  %712 = vdwg.mxu0
  %713 = vmatpush.bf16.msra.mxu0 %v193
  %714 = vmatpush.bf16.msra.mxu0 %v192
  %715 = vmatpush.bf16.msra.mxu0 %v191
  %716 = vmatpush.bf16.msra.mxu0 %v190
  %717 = vmatpush.bf16.msra.mxu0 %v189
  %718 = vmatpush.bf16.msra.mxu0 %v188
  %719 = vmatpush.bf16.msra.mxu0 %v187
  %720 = vmatpush.bf16.msra.mxu0 %v186
  %721 = vmatmul.bf16.gmra.mxu0 %v581
  %v722 = vpop.f32.mrf.mxu0
  %v723 = vadd.f32 %v694, %v722
  %v724 = vpop.f32.mrf.mxu0
  %v725 = vadd.f32 %v696, %v724
  %726 = vmatmul.bf16.gmra.mxu0 %v586
  %v727 = vpop.f32.mrf.mxu0
  %v728 = vadd.f32 %v699, %v727
  %v729 = vpop.f32.mrf.mxu0
  %v730 = vadd.f32 %v701, %v729
  %731 = vmatmul.bf16.gmra.mxu0 %v591
  %v732 = vpop.f32.mrf.mxu0
  %v733 = vadd.f32 %v704, %v732
  %v734 = vpop.f32.mrf.mxu0
  %v735 = vadd.f32 %v706, %v734
  %736 = vmatmul.bf16.gmra.mxu0 %v596
  %v737 = vpop.f32.mrf.mxu0
  %v738 = vadd.f32 %v709, %v737
  %v739 = vpop.f32.mrf.mxu0
  %v740 = vadd.f32 %v711, %v739
  %741 = vdwg.mxu0
  %742 = vmatpush.bf16.msra.mxu0 0
  %743 = vmatpush.bf16.msra.mxu0 0
  %744 = vmatpush.bf16.msra.mxu0 0
  %745 = vmatpush.bf16.msra.mxu0 0
  %746 = vmatpush.bf16.msra.mxu0 %v197
  %747 = vmatpush.bf16.msra.mxu0 %v196
  %748 = vmatpush.bf16.msra.mxu0 %v195
  %749 = vmatpush.bf16.msra.mxu0 %v194
  %750 = vmatmul.bf16.gmra.mxu0 %v615
  %v751 = vpop.f32.mrf.mxu0
  %v752 = vadd.f32 %v723, %v751
  %v753 = vpop.f32.mrf.mxu0
  %v754 = vadd.f32 %v725, %v753
  %755 = vmatmul.bf16.gmra.mxu0 %v618
  %v756 = vpop.f32.mrf.mxu0
  %v757 = vadd.f32 %v728, %v756
  %v758 = vpop.f32.mrf.mxu0
  %v759 = vadd.f32 %v730, %v758
  %760 = vmatmul.bf16.gmra.mxu0 %v621
  %v761 = vpop.f32.mrf.mxu0
  %v762 = vadd.f32 %v733, %v761
  %v763 = vpop.f32.mrf.mxu0
  %v764 = vadd.f32 %v735, %v763
  %765 = vmatmul.bf16.gmra.mxu0 %v624
  %v766 = vpop.f32.mrf.mxu0
  %v767 = vadd.f32 %v738, %v766
  %v768 = vpop.f32.mrf.mxu0
  %v769 = vadd.f32 %v740, %v768
  %770 = vdwg.mxu0
  %779 = vrot.lane.b32.xlu0 %v752, 2
  %v780 = vpop.permute.xlu0 %779
  %781 = vrot.lane.b32.xlu0 %v754, 2
  %v782 = vpop.permute.xlu0 %781
  %783 = vrot.lane.b32.xlu0 %v757, 2
  %v784 = vpop.permute.xlu0 %783
  %785 = vrot.lane.b32.xlu0 %v759, 2
  %v786 = vpop.permute.xlu0 %785
  %787 = vrot.lane.b32.xlu0 %v762, 2
  %v788 = vpop.permute.xlu0 %787
  %789 = vrot.lane.b32.xlu0 %v764, 2
  %v790 = vpop.permute.xlu0 %789
  %791 = vrot.lane.b32.xlu0 %v767, 2
  %v792 = vpop.permute.xlu0 %791
  %793 = vrot.lane.b32.xlu0 %v769, 2
  %v794 = vpop.permute.xlu0 %793
  %vm803 = vcmask 31760
  %804 = vst.msk [vmem:[%s4] sm:$0xff] %vm803, %v780
  %805 = vst.msk [vmem:[%s4 + $0x8] sm:$0xff] %vm803, %v782
  %806 = vst.msk [vmem:[%s4 + $0x10] sm:$0xff] %vm803, %v784
  %807 = vst.msk [vmem:[%s4 + $0x18] sm:$0xff] %vm803, %v786
  %808 = vst.msk [vmem:[%s4 + $0x20] sm:$0xff] %vm803, %v788
  %809 = vst.msk [vmem:[%s4 + $0x28] sm:$0xff] %vm803, %v790
  %810 = vst.msk [vmem:[%s4 + $0x30] sm:$0xff] %vm803, %v792
  %811 = vst.msk [vmem:[%s4 + $0x38] sm:$0xff] %vm803, %v794
  %s812 = scalar_lea.vmem %s1, 320
  %v813 = vld [vmem:[%s812] sm:$0xff]
  %v814 = vld [vmem:[%s812 + $0x8] sm:$0xff]
  %v815 = vld [vmem:[%s812 + $0x10] sm:$0xf]
  %v816 = vld [vmem:[%s812 + $0x14] sm:$0xff]
  %v817 = vld [vmem:[%s812 + $0x1c] sm:$0xff]
  %v818 = vld [vmem:[%s812 + $0x24] sm:$0xf]
  %v819 = vld [vmem:[%s812 + $0x28] sm:$0xff]
  %v820 = vld [vmem:[%s812 + $0x30] sm:$0xff]
  %v821 = vld [vmem:[%s812 + $0x38] sm:$0xf]
  %v822 = vld [vmem:[%s812 + $0x3c] sm:$0xff]
  %v823 = vld [vmem:[%s812 + $0x44] sm:$0xff]
  %v824 = vld [vmem:[%s812 + $0x4c] sm:$0xf]
  %v825 = vld [vmem:[%s812 + $0x50] sm:$0xff]
  %v826 = vld [vmem:[%s812 + $0x58] sm:$0xff]
  %v827 = vld [vmem:[%s812 + $0x60] sm:$0xf]
  %v828 = vld [vmem:[%s812 + $0x64] sm:$0xff]
  %v829 = vld [vmem:[%s812 + $0x6c] sm:$0xff]
  %v830 = vld [vmem:[%s812 + $0x74] sm:$0xf]
  %v831 = vld [vmem:[%s812 + $0x78] sm:$0xff]
  %v832 = vld [vmem:[%s812 + $0x80] sm:$0xff]
  %v833 = vld [vmem:[%s812 + $0x88] sm:$0xf]
  %v834 = vld [vmem:[%s812 + $0x8c] sm:$0xff]
  %v835 = vld [vmem:[%s812 + $0x94] sm:$0xff]
  %v836 = vld [vmem:[%s812 + $0x9c] sm:$0xf]
  %v861 = vunpack.c.l.b16 %v813
  %v862 = vunpack.c.h.b16 %v813
  %v863 = vunpack.c.l.b16 %v814
  %v864 = vunpack.c.h.b16 %v814
  %v865 = vunpack.c.l.b16 %v815
  %v866 = vunpack.c.l.b16 %v816
  %v867 = vunpack.c.h.b16 %v816
  %v868 = vunpack.c.l.b16 %v817
  %v869 = vunpack.c.h.b16 %v817
  %v870 = vunpack.c.l.b16 %v818
  %v871 = vunpack.c.l.b16 %v819
  %v872 = vunpack.c.h.b16 %v819
  %v873 = vunpack.c.l.b16 %v820
  %v874 = vunpack.c.h.b16 %v820
  %v875 = vunpack.c.l.b16 %v821
  %v876 = vunpack.c.l.b16 %v822
  %v877 = vunpack.c.h.b16 %v822
  %v878 = vunpack.c.l.b16 %v823
  %v879 = vunpack.c.h.b16 %v823
  %v880 = vunpack.c.l.b16 %v824
  %v881 = vunpack.c.l.b16 %v825
  %v882 = vunpack.c.h.b16 %v825
  %v883 = vunpack.c.l.b16 %v826
  %v884 = vunpack.c.h.b16 %v826
  %v885 = vunpack.c.l.b16 %v827
  %v886 = vunpack.c.l.b16 %v828
  %v887 = vunpack.c.h.b16 %v828
  %v888 = vunpack.c.l.b16 %v829
  %v889 = vunpack.c.h.b16 %v829
  %v890 = vunpack.c.l.b16 %v830
  %v891 = vunpack.c.l.b16 %v831
  %v892 = vunpack.c.h.b16 %v831
  %v893 = vunpack.c.l.b16 %v832
  %v894 = vunpack.c.h.b16 %v832
  %v895 = vunpack.c.l.b16 %v833
  %v896 = vunpack.c.l.b16 %v834
  %v897 = vunpack.c.h.b16 %v834
  %v898 = vunpack.c.l.b16 %v835
  %v899 = vunpack.c.h.b16 %v835
  %v900 = vunpack.c.l.b16 %v836
  %v901 = vpack.c.b16 %v866, %v861
  %v902 = vpack.c.b16 %v867, %v862
  %v903 = vpack.c.b16 %v868, %v863
  %v904 = vpack.c.b16 %v869, %v864
  %v905 = vpack.c.b16 %v870, %v865
  %v906 = vpack.c.b16 %v876, %v871
  %v907 = vpack.c.b16 %v877, %v872
  %v908 = vpack.c.b16 %v878, %v873
  %v909 = vpack.c.b16 %v879, %v874
  %v910 = vpack.c.b16 %v880, %v875
  %v911 = vpack.c.b16 %v886, %v881
  %v912 = vpack.c.b16 %v887, %v882
  %v913 = vpack.c.b16 %v888, %v883
  %v914 = vpack.c.b16 %v889, %v884
  %v915 = vpack.c.b16 %v890, %v885
  %v916 = vpack.c.b16 %v896, %v891
  %v917 = vpack.c.b16 %v897, %v892
  %v918 = vpack.c.b16 %v898, %v893
  %v919 = vpack.c.b16 %v899, %v894
  %v920 = vpack.c.b16 %v900, %v895
  %v938 = vsel %vm322, %v905, 0
  %v941 = vsel %vm322, %v910, 0
  %v944 = vsel %vm322, %v915, 0
  %v947 = vsel %vm322, %v920, 0
  %949 = vmatpush.bf16.msra.mxu0 %v169
  %950 = vmatpush.bf16.msra.mxu0 %v168
  %951 = vmatpush.bf16.msra.mxu0 %v167
  %952 = vmatpush.bf16.msra.mxu0 %v166
  %953 = vmatpush.bf16.msra.mxu0 %v165
  %954 = vmatpush.bf16.msra.mxu0 %v164
  %955 = vmatpush.bf16.msra.mxu0 %v163
  %956 = vmatpush.bf16.msra.mxu0 %v162
  %957 = vmatmul.bf16.gmra.mxu0 %v901
  %v958 = vpop.f32.mrf.mxu0
  %v959 = vadd.f32 0.0, %v958
  %v960 = vpop.f32.mrf.mxu0
  %v961 = vadd.f32 0.0, %v960
  %962 = vmatmul.bf16.gmra.mxu0 %v906
  %v963 = vpop.f32.mrf.mxu0
  %v964 = vadd.f32 0.0, %v963
  %v965 = vpop.f32.mrf.mxu0
  %v966 = vadd.f32 0.0, %v965
  %967 = vmatmul.bf16.gmra.mxu0 %v911
  %v968 = vpop.f32.mrf.mxu0
  %v969 = vadd.f32 0.0, %v968
  %v970 = vpop.f32.mrf.mxu0
  %v971 = vadd.f32 0.0, %v970
  %972 = vmatmul.bf16.gmra.mxu0 %v916
  %v973 = vpop.f32.mrf.mxu0
  %v974 = vadd.f32 0.0, %v973
  %v975 = vpop.f32.mrf.mxu0
  %v976 = vadd.f32 0.0, %v975
  %977 = vdwg.mxu0
  %978 = vmatpush.bf16.msra.mxu0 %v177
  %979 = vmatpush.bf16.msra.mxu0 %v176
  %980 = vmatpush.bf16.msra.mxu0 %v175
  %981 = vmatpush.bf16.msra.mxu0 %v174
  %982 = vmatpush.bf16.msra.mxu0 %v173
  %983 = vmatpush.bf16.msra.mxu0 %v172
  %984 = vmatpush.bf16.msra.mxu0 %v171
  %985 = vmatpush.bf16.msra.mxu0 %v170
  %986 = vmatmul.bf16.gmra.mxu0 %v902
  %v987 = vpop.f32.mrf.mxu0
  %v988 = vadd.f32 %v959, %v987
  %v989 = vpop.f32.mrf.mxu0
  %v990 = vadd.f32 %v961, %v989
  %991 = vmatmul.bf16.gmra.mxu0 %v907
  %v992 = vpop.f32.mrf.mxu0
  %v993 = vadd.f32 %v964, %v992
  %v994 = vpop.f32.mrf.mxu0
  %v995 = vadd.f32 %v966, %v994
  %996 = vmatmul.bf16.gmra.mxu0 %v912
  %v997 = vpop.f32.mrf.mxu0
  %v998 = vadd.f32 %v969, %v997
  %v999 = vpop.f32.mrf.mxu0
  %v1000 = vadd.f32 %v971, %v999
  %1001 = vmatmul.bf16.gmra.mxu0 %v917
  %v1002 = vpop.f32.mrf.mxu0
  %v1003 = vadd.f32 %v974, %v1002
  %v1004 = vpop.f32.mrf.mxu0
  %v1005 = vadd.f32 %v976, %v1004
  %1006 = vdwg.mxu0
  %1007 = vmatpush.bf16.msra.mxu0 %v185
  %1008 = vmatpush.bf16.msra.mxu0 %v184
  %1009 = vmatpush.bf16.msra.mxu0 %v183
  %1010 = vmatpush.bf16.msra.mxu0 %v182
  %1011 = vmatpush.bf16.msra.mxu0 %v181
  %1012 = vmatpush.bf16.msra.mxu0 %v180
  %1013 = vmatpush.bf16.msra.mxu0 %v179
  %1014 = vmatpush.bf16.msra.mxu0 %v178
  %1015 = vmatmul.bf16.gmra.mxu0 %v903
  %v1016 = vpop.f32.mrf.mxu0
  %v1017 = vadd.f32 %v988, %v1016
  %v1018 = vpop.f32.mrf.mxu0
  %v1019 = vadd.f32 %v990, %v1018
  %1020 = vmatmul.bf16.gmra.mxu0 %v908
  %v1021 = vpop.f32.mrf.mxu0
  %v1022 = vadd.f32 %v993, %v1021
  %v1023 = vpop.f32.mrf.mxu0
  %v1024 = vadd.f32 %v995, %v1023
  %1025 = vmatmul.bf16.gmra.mxu0 %v913
  %v1026 = vpop.f32.mrf.mxu0
  %v1027 = vadd.f32 %v998, %v1026
  %v1028 = vpop.f32.mrf.mxu0
  %v1029 = vadd.f32 %v1000, %v1028
  %1030 = vmatmul.bf16.gmra.mxu0 %v918
  %v1031 = vpop.f32.mrf.mxu0
  %v1032 = vadd.f32 %v1003, %v1031
  %v1033 = vpop.f32.mrf.mxu0
  %v1034 = vadd.f32 %v1005, %v1033
  %1035 = vdwg.mxu0
  %1036 = vmatpush.bf16.msra.mxu0 %v193
  %1037 = vmatpush.bf16.msra.mxu0 %v192
  %1038 = vmatpush.bf16.msra.mxu0 %v191
  %1039 = vmatpush.bf16.msra.mxu0 %v190
  %1040 = vmatpush.bf16.msra.mxu0 %v189
  %1041 = vmatpush.bf16.msra.mxu0 %v188
  %1042 = vmatpush.bf16.msra.mxu0 %v187
  %1043 = vmatpush.bf16.msra.mxu0 %v186
  %1044 = vmatmul.bf16.gmra.mxu0 %v904
  %v1045 = vpop.f32.mrf.mxu0
  %v1046 = vadd.f32 %v1017, %v1045
  %v1047 = vpop.f32.mrf.mxu0
  %v1048 = vadd.f32 %v1019, %v1047
  %1049 = vmatmul.bf16.gmra.mxu0 %v909
  %v1050 = vpop.f32.mrf.mxu0
  %v1051 = vadd.f32 %v1022, %v1050
  %v1052 = vpop.f32.mrf.mxu0
  %v1053 = vadd.f32 %v1024, %v1052
  %1054 = vmatmul.bf16.gmra.mxu0 %v914
  %v1055 = vpop.f32.mrf.mxu0
  %v1056 = vadd.f32 %v1027, %v1055
  %v1057 = vpop.f32.mrf.mxu0
  %v1058 = vadd.f32 %v1029, %v1057
  %1059 = vmatmul.bf16.gmra.mxu0 %v919
  %v1060 = vpop.f32.mrf.mxu0
  %v1061 = vadd.f32 %v1032, %v1060
  %v1062 = vpop.f32.mrf.mxu0
  %v1063 = vadd.f32 %v1034, %v1062
  %1064 = vdwg.mxu0
  %1065 = vmatpush.bf16.msra.mxu0 0
  %1066 = vmatpush.bf16.msra.mxu0 0
  %1067 = vmatpush.bf16.msra.mxu0 0
  %1068 = vmatpush.bf16.msra.mxu0 0
  %1069 = vmatpush.bf16.msra.mxu0 %v197
  %1070 = vmatpush.bf16.msra.mxu0 %v196
  %1071 = vmatpush.bf16.msra.mxu0 %v195
  %1072 = vmatpush.bf16.msra.mxu0 %v194
  %1073 = vmatmul.bf16.gmra.mxu0 %v938
  %v1074 = vpop.f32.mrf.mxu0
  %v1075 = vadd.f32 %v1046, %v1074
  %v1076 = vpop.f32.mrf.mxu0
  %v1077 = vadd.f32 %v1048, %v1076
  %1078 = vmatmul.bf16.gmra.mxu0 %v941
  %v1079 = vpop.f32.mrf.mxu0
  %v1080 = vadd.f32 %v1051, %v1079
  %v1081 = vpop.f32.mrf.mxu0
  %v1082 = vadd.f32 %v1053, %v1081
  %1083 = vmatmul.bf16.gmra.mxu0 %v944
  %v1084 = vpop.f32.mrf.mxu0
  %v1085 = vadd.f32 %v1056, %v1084
  %v1086 = vpop.f32.mrf.mxu0
  %v1087 = vadd.f32 %v1058, %v1086
  %1088 = vmatmul.bf16.gmra.mxu0 %v947
  %v1089 = vpop.f32.mrf.mxu0
  %v1090 = vadd.f32 %v1061, %v1089
  %v1091 = vpop.f32.mrf.mxu0
  %v1092 = vadd.f32 %v1063, %v1091
  %1093 = vdwg.mxu0
  %1102 = vrot.lane.b32.xlu0 %v1075, 4
  %v1103 = vpop.permute.xlu0 %1102
  %1104 = vrot.lane.b32.xlu0 %v1077, 4
  %v1105 = vpop.permute.xlu0 %1104
  %1106 = vrot.lane.b32.xlu0 %v1080, 4
  %v1107 = vpop.permute.xlu0 %1106
  %1108 = vrot.lane.b32.xlu0 %v1082, 4
  %v1109 = vpop.permute.xlu0 %1108
  %1110 = vrot.lane.b32.xlu0 %v1085, 4
  %v1111 = vpop.permute.xlu0 %1110
  %1112 = vrot.lane.b32.xlu0 %v1087, 4
  %v1113 = vpop.permute.xlu0 %1112
  %1114 = vrot.lane.b32.xlu0 %v1090, 4
  %v1115 = vpop.permute.xlu0 %1114
  %1116 = vrot.lane.b32.xlu0 %v1092, 4
  %v1117 = vpop.permute.xlu0 %1116
  %vm1126 = vcmask 48160
  %1127 = vst.msk [vmem:[%s4] sm:$0xff] %vm1126, %v1103
  %1128 = vst.msk [vmem:[%s4 + $0x8] sm:$0xff] %vm1126, %v1105
  %1129 = vst.msk [vmem:[%s4 + $0x10] sm:$0xff] %vm1126, %v1107
  %1130 = vst.msk [vmem:[%s4 + $0x18] sm:$0xff] %vm1126, %v1109
  %1131 = vst.msk [vmem:[%s4 + $0x20] sm:$0xff] %vm1126, %v1111
  %1132 = vst.msk [vmem:[%s4 + $0x28] sm:$0xff] %vm1126, %v1113
  %1133 = vst.msk [vmem:[%s4 + $0x30] sm:$0xff] %vm1126, %v1115
  %1134 = vst.msk [vmem:[%s4 + $0x38] sm:$0xff] %vm1126, %v1117
  %s1135 = scalar_lea.vmem %s1, 480
  %v1136 = vld [vmem:[%s1135] sm:$0xff]
  %v1137 = vld [vmem:[%s1135 + $0x8] sm:$0xff]
  %v1138 = vld [vmem:[%s1135 + $0x10] sm:$0xf]
  %v1139 = vld [vmem:[%s1135 + $0x14] sm:$0xff]
  %v1140 = vld [vmem:[%s1135 + $0x1c] sm:$0xff]
  %v1141 = vld [vmem:[%s1135 + $0x24] sm:$0xf]
  %v1142 = vld [vmem:[%s1135 + $0x28] sm:$0xff]
  %v1143 = vld [vmem:[%s1135 + $0x30] sm:$0xff]
  %v1144 = vld [vmem:[%s1135 + $0x38] sm:$0xf]
  %v1145 = vld [vmem:[%s1135 + $0x3c] sm:$0xff]
  %v1146 = vld [vmem:[%s1135 + $0x44] sm:$0xff]
  %v1147 = vld [vmem:[%s1135 + $0x4c] sm:$0xf]
  %v1148 = vld [vmem:[%s1135 + $0x50] sm:$0xff]
  %v1149 = vld [vmem:[%s1135 + $0x58] sm:$0xff]
  %v1150 = vld [vmem:[%s1135 + $0x60] sm:$0xf]
  %v1151 = vld [vmem:[%s1135 + $0x64] sm:$0xff]
  %v1152 = vld [vmem:[%s1135 + $0x6c] sm:$0xff]
  %v1153 = vld [vmem:[%s1135 + $0x74] sm:$0xf]
  %v1154 = vld [vmem:[%s1135 + $0x78] sm:$0xff]
  %v1155 = vld [vmem:[%s1135 + $0x80] sm:$0xff]
  %v1156 = vld [vmem:[%s1135 + $0x88] sm:$0xf]
  %v1157 = vld [vmem:[%s1135 + $0x8c] sm:$0xff]
  %v1158 = vld [vmem:[%s1135 + $0x94] sm:$0xff]
  %v1159 = vld [vmem:[%s1135 + $0x9c] sm:$0xf]
  %v1184 = vunpack.c.l.b16 %v1136
  %v1185 = vunpack.c.h.b16 %v1136
  %v1186 = vunpack.c.l.b16 %v1137
  %v1187 = vunpack.c.h.b16 %v1137
  %v1188 = vunpack.c.l.b16 %v1138
  %v1189 = vunpack.c.l.b16 %v1139
  %v1190 = vunpack.c.h.b16 %v1139
  %v1191 = vunpack.c.l.b16 %v1140
  %v1192 = vunpack.c.h.b16 %v1140
  %v1193 = vunpack.c.l.b16 %v1141
  %v1194 = vunpack.c.l.b16 %v1142
  %v1195 = vunpack.c.h.b16 %v1142
  %v1196 = vunpack.c.l.b16 %v1143
  %v1197 = vunpack.c.h.b16 %v1143
  %v1198 = vunpack.c.l.b16 %v1144
  %v1199 = vunpack.c.l.b16 %v1145
  %v1200 = vunpack.c.h.b16 %v1145
  %v1201 = vunpack.c.l.b16 %v1146
  %v1202 = vunpack.c.h.b16 %v1146
  %v1203 = vunpack.c.l.b16 %v1147
  %v1204 = vunpack.c.l.b16 %v1148
  %v1205 = vunpack.c.h.b16 %v1148
  %v1206 = vunpack.c.l.b16 %v1149
  %v1207 = vunpack.c.h.b16 %v1149
  %v1208 = vunpack.c.l.b16 %v1150
  %v1209 = vunpack.c.l.b16 %v1151
  %v1210 = vunpack.c.h.b16 %v1151
  %v1211 = vunpack.c.l.b16 %v1152
  %v1212 = vunpack.c.h.b16 %v1152
  %v1213 = vunpack.c.l.b16 %v1153
  %v1214 = vunpack.c.l.b16 %v1154
  %v1215 = vunpack.c.h.b16 %v1154
  %v1216 = vunpack.c.l.b16 %v1155
  %v1217 = vunpack.c.h.b16 %v1155
  %v1218 = vunpack.c.l.b16 %v1156
  %v1219 = vunpack.c.l.b16 %v1157
  %v1220 = vunpack.c.h.b16 %v1157
  %v1221 = vunpack.c.l.b16 %v1158
  %v1222 = vunpack.c.h.b16 %v1158
  %v1223 = vunpack.c.l.b16 %v1159
  %v1224 = vpack.c.b16 %v1189, %v1184
  %v1225 = vpack.c.b16 %v1190, %v1185
  %v1226 = vpack.c.b16 %v1191, %v1186
  %v1227 = vpack.c.b16 %v1192, %v1187
  %v1228 = vpack.c.b16 %v1193, %v1188
  %v1229 = vpack.c.b16 %v1199, %v1194
  %v1230 = vpack.c.b16 %v1200, %v1195
  %v1231 = vpack.c.b16 %v1201, %v1196
  %v1232 = vpack.c.b16 %v1202, %v1197
  %v1233 = vpack.c.b16 %v1203, %v1198
  %v1234 = vpack.c.b16 %v1209, %v1204
  %v1235 = vpack.c.b16 %v1210, %v1205
  %v1236 = vpack.c.b16 %v1211, %v1206
  %v1237 = vpack.c.b16 %v1212, %v1207
  %v1238 = vpack.c.b16 %v1213, %v1208
  %v1239 = vpack.c.b16 %v1219, %v1214
  %v1240 = vpack.c.b16 %v1220, %v1215
  %v1241 = vpack.c.b16 %v1221, %v1216
  %v1242 = vpack.c.b16 %v1222, %v1217
  %v1243 = vpack.c.b16 %v1223, %v1218
  %v1261 = vsel %vm322, %v1228, 0
  %v1264 = vsel %vm322, %v1233, 0
  %v1267 = vsel %vm322, %v1238, 0
  %v1270 = vsel %vm322, %v1243, 0
  %1272 = vmatpush.bf16.msra.mxu0 %v169
  %1273 = vmatpush.bf16.msra.mxu0 %v168
  %1274 = vmatpush.bf16.msra.mxu0 %v167
  %1275 = vmatpush.bf16.msra.mxu0 %v166
  %1276 = vmatpush.bf16.msra.mxu0 %v165
  %1277 = vmatpush.bf16.msra.mxu0 %v164
  %1278 = vmatpush.bf16.msra.mxu0 %v163
  %1279 = vmatpush.bf16.msra.mxu0 %v162
  %1280 = vmatmul.bf16.gmra.mxu0 %v1224
  %v1281 = vpop.f32.mrf.mxu0
  %v1282 = vadd.f32 0.0, %v1281
  %v1283 = vpop.f32.mrf.mxu0
  %v1284 = vadd.f32 0.0, %v1283
  %1285 = vmatmul.bf16.gmra.mxu0 %v1229
  %v1286 = vpop.f32.mrf.mxu0
  %v1287 = vadd.f32 0.0, %v1286
  %v1288 = vpop.f32.mrf.mxu0
  %v1289 = vadd.f32 0.0, %v1288
  %1290 = vmatmul.bf16.gmra.mxu0 %v1234
  %v1291 = vpop.f32.mrf.mxu0
  %v1292 = vadd.f32 0.0, %v1291
  %v1293 = vpop.f32.mrf.mxu0
  %v1294 = vadd.f32 0.0, %v1293
  %1295 = vmatmul.bf16.gmra.mxu0 %v1239
  %v1296 = vpop.f32.mrf.mxu0
  %v1297 = vadd.f32 0.0, %v1296
  %v1298 = vpop.f32.mrf.mxu0
  %v1299 = vadd.f32 0.0, %v1298
  %1300 = vdwg.mxu0
  %1301 = vmatpush.bf16.msra.mxu0 %v177
  %1302 = vmatpush.bf16.msra.mxu0 %v176
  %1303 = vmatpush.bf16.msra.mxu0 %v175
  %1304 = vmatpush.bf16.msra.mxu0 %v174
  %1305 = vmatpush.bf16.msra.mxu0 %v173
  %1306 = vmatpush.bf16.msra.mxu0 %v172
  %1307 = vmatpush.bf16.msra.mxu0 %v171
  %1308 = vmatpush.bf16.msra.mxu0 %v170
  %1309 = vmatmul.bf16.gmra.mxu0 %v1225
  %v1310 = vpop.f32.mrf.mxu0
  %v1311 = vadd.f32 %v1282, %v1310
  %v1312 = vpop.f32.mrf.mxu0
  %v1313 = vadd.f32 %v1284, %v1312
  %1314 = vmatmul.bf16.gmra.mxu0 %v1230
  %v1315 = vpop.f32.mrf.mxu0
  %v1316 = vadd.f32 %v1287, %v1315
  %v1317 = vpop.f32.mrf.mxu0
  %v1318 = vadd.f32 %v1289, %v1317
  %1319 = vmatmul.bf16.gmra.mxu0 %v1235
  %v1320 = vpop.f32.mrf.mxu0
  %v1321 = vadd.f32 %v1292, %v1320
  %v1322 = vpop.f32.mrf.mxu0
  %v1323 = vadd.f32 %v1294, %v1322
  %1324 = vmatmul.bf16.gmra.mxu0 %v1240
  %v1325 = vpop.f32.mrf.mxu0
  %v1326 = vadd.f32 %v1297, %v1325
  %v1327 = vpop.f32.mrf.mxu0
  %v1328 = vadd.f32 %v1299, %v1327
  %1329 = vdwg.mxu0
  %1330 = vmatpush.bf16.msra.mxu0 %v185
  %1331 = vmatpush.bf16.msra.mxu0 %v184
  %1332 = vmatpush.bf16.msra.mxu0 %v183
  %1333 = vmatpush.bf16.msra.mxu0 %v182
  %1334 = vmatpush.bf16.msra.mxu0 %v181
  %1335 = vmatpush.bf16.msra.mxu0 %v180
  %1336 = vmatpush.bf16.msra.mxu0 %v179
  %1337 = vmatpush.bf16.msra.mxu0 %v178
  %1338 = vmatmul.bf16.gmra.mxu0 %v1226
  %v1339 = vpop.f32.mrf.mxu0
  %v1340 = vadd.f32 %v1311, %v1339
  %v1341 = vpop.f32.mrf.mxu0
  %v1342 = vadd.f32 %v1313, %v1341
  %1343 = vmatmul.bf16.gmra.mxu0 %v1231
  %v1344 = vpop.f32.mrf.mxu0
  %v1345 = vadd.f32 %v1316, %v1344
  %v1346 = vpop.f32.mrf.mxu0
  %v1347 = vadd.f32 %v1318, %v1346
  %1348 = vmatmul.bf16.gmra.mxu0 %v1236
  %v1349 = vpop.f32.mrf.mxu0
  %v1350 = vadd.f32 %v1321, %v1349
  %v1351 = vpop.f32.mrf.mxu0
  %v1352 = vadd.f32 %v1323, %v1351
  %1353 = vmatmul.bf16.gmra.mxu0 %v1241
  %v1354 = vpop.f32.mrf.mxu0
  %v1355 = vadd.f32 %v1326, %v1354
  %v1356 = vpop.f32.mrf.mxu0
  %v1357 = vadd.f32 %v1328, %v1356
  %1358 = vdwg.mxu0
  %1359 = vmatpush.bf16.msra.mxu0 %v193
  %1360 = vmatpush.bf16.msra.mxu0 %v192
  %1361 = vmatpush.bf16.msra.mxu0 %v191
  %1362 = vmatpush.bf16.msra.mxu0 %v190
  %1363 = vmatpush.bf16.msra.mxu0 %v189
  %1364 = vmatpush.bf16.msra.mxu0 %v188
  %1365 = vmatpush.bf16.msra.mxu0 %v187
  %1366 = vmatpush.bf16.msra.mxu0 %v186
  %1367 = vmatmul.bf16.gmra.mxu0 %v1227
  %v1368 = vpop.f32.mrf.mxu0
  %v1369 = vadd.f32 %v1340, %v1368
  %v1370 = vpop.f32.mrf.mxu0
  %v1371 = vadd.f32 %v1342, %v1370
  %1372 = vmatmul.bf16.gmra.mxu0 %v1232
  %v1373 = vpop.f32.mrf.mxu0
  %v1374 = vadd.f32 %v1345, %v1373
  %v1375 = vpop.f32.mrf.mxu0
  %v1376 = vadd.f32 %v1347, %v1375
  %1377 = vmatmul.bf16.gmra.mxu0 %v1237
  %v1378 = vpop.f32.mrf.mxu0
  %v1379 = vadd.f32 %v1350, %v1378
  %v1380 = vpop.f32.mrf.mxu0
  %v1381 = vadd.f32 %v1352, %v1380
  %1382 = vmatmul.bf16.gmra.mxu0 %v1242
  %v1383 = vpop.f32.mrf.mxu0
  %v1384 = vadd.f32 %v1355, %v1383
  %v1385 = vpop.f32.mrf.mxu0
  %v1386 = vadd.f32 %v1357, %v1385
  %1387 = vdwg.mxu0
  %1388 = vmatpush.bf16.msra.mxu0 0
  %1389 = vmatpush.bf16.msra.mxu0 0
  %1390 = vmatpush.bf16.msra.mxu0 0
  %1391 = vmatpush.bf16.msra.mxu0 0
  %1392 = vmatpush.bf16.msra.mxu0 %v197
  %1393 = vmatpush.bf16.msra.mxu0 %v196
  %1394 = vmatpush.bf16.msra.mxu0 %v195
  %1395 = vmatpush.bf16.msra.mxu0 %v194
  %1396 = vmatmul.bf16.gmra.mxu0 %v1261
  %v1397 = vpop.f32.mrf.mxu0
  %v1398 = vadd.f32 %v1369, %v1397
  %v1399 = vpop.f32.mrf.mxu0
  %v1400 = vadd.f32 %v1371, %v1399
  %1401 = vmatmul.bf16.gmra.mxu0 %v1264
  %v1402 = vpop.f32.mrf.mxu0
  %v1403 = vadd.f32 %v1374, %v1402
  %v1404 = vpop.f32.mrf.mxu0
  %v1405 = vadd.f32 %v1376, %v1404
  %1406 = vmatmul.bf16.gmra.mxu0 %v1267
  %v1407 = vpop.f32.mrf.mxu0
  %v1408 = vadd.f32 %v1379, %v1407
  %v1409 = vpop.f32.mrf.mxu0
  %v1410 = vadd.f32 %v1381, %v1409
  %1411 = vmatmul.bf16.gmra.mxu0 %v1270
  %v1412 = vpop.f32.mrf.mxu0
  %v1413 = vadd.f32 %v1384, %v1412
  %v1414 = vpop.f32.mrf.mxu0
  %v1415 = vadd.f32 %v1386, %v1414
  %1416 = vdwg.mxu0
  %1425 = vrot.lane.b32.xlu0 %v1398, 6
  %v1426 = vpop.permute.xlu0 %1425
  %1427 = vrot.lane.b32.xlu0 %v1400, 6
  %v1428 = vpop.permute.xlu0 %1427
  %1429 = vrot.lane.b32.xlu0 %v1403, 6
  %v1430 = vpop.permute.xlu0 %1429
  %1431 = vrot.lane.b32.xlu0 %v1405, 6
  %v1432 = vpop.permute.xlu0 %1431
  %1433 = vrot.lane.b32.xlu0 %v1408, 6
  %v1434 = vpop.permute.xlu0 %1433
  %1435 = vrot.lane.b32.xlu0 %v1410, 6
  %v1436 = vpop.permute.xlu0 %1435
  %1437 = vrot.lane.b32.xlu0 %v1413, 6
  %v1438 = vpop.permute.xlu0 %1437
  %1439 = vrot.lane.b32.xlu0 %v1415, 6
  %v1440 = vpop.permute.xlu0 %1439
  %vm1449 = vcmask 64560
  %1450 = vst.msk [vmem:[%s4] sm:$0xff] %vm1449, %v1426
  %1451 = vst.msk [vmem:[%s4 + $0x8] sm:$0xff] %vm1449, %v1428
  %1452 = vst.msk [vmem:[%s4 + $0x10] sm:$0xff] %vm1449, %v1430
  %1453 = vst.msk [vmem:[%s4 + $0x18] sm:$0xff] %vm1449, %v1432
  %1454 = vst.msk [vmem:[%s4 + $0x20] sm:$0xff] %vm1449, %v1434
  %1455 = vst.msk [vmem:[%s4 + $0x28] sm:$0xff] %vm1449, %v1436
  %1456 = vst.msk [vmem:[%s4 + $0x30] sm:$0xff] %vm1449, %v1438
  %1457 = vst.msk [vmem:[%s4 + $0x38] sm:$0xff] %vm1449, %v1440
  %v1458 = vld [vmem:[%s4] sm:$0xff]
  %v1459 = vld [vmem:[%s4 + $0x8] sm:$0xff]
  %v1460 = vld [vmem:[%s4 + $0x10] sm:$0xff]
  %v1461 = vld [vmem:[%s4 + $0x18] sm:$0xff]
  %v1462 = vld [vmem:[%s4 + $0x20] sm:$0xff]
  %v1463 = vld [vmem:[%s4 + $0x28] sm:$0xff]
  %v1464 = vld [vmem:[%s4 + $0x30] sm:$0xff]
  %v1465 = vld [vmem:[%s4 + $0x38] sm:$0xff]
  %vm1466 = vcmask 64512
  %v1467 = vsel %vm1466, %v1458, 0.0
  %1468 = vadd.xlane.f32.xlu0 %v1467
  %v1469 = vpop.xlane.xlu0 %1468
  %v1470 = vsel %vm1466, %v1459, 0.0
  %1471 = vadd.xlane.f32.xlu0 %v1470
  %v1472 = vpop.xlane.xlu0 %1471
  %v1473 = vsel %vm1466, %v1460, 0.0
  %1474 = vadd.xlane.f32.xlu0 %v1473
  %v1475 = vpop.xlane.xlu0 %1474
  %v1476 = vsel %vm1466, %v1461, 0.0
  %1477 = vadd.xlane.f32.xlu0 %v1476
  %v1478 = vpop.xlane.xlu0 %1477
  %v1479 = vsel %vm1466, %v1462, 0.0
  %1480 = vadd.xlane.f32.xlu0 %v1479
  %v1481 = vpop.xlane.xlu0 %1480
  %v1482 = vsel %vm1466, %v1463, 0.0
  %1483 = vadd.xlane.f32.xlu0 %v1482
  %v1484 = vpop.xlane.xlu0 %1483
  %v1485 = vsel %vm1466, %v1464, 0.0
  %1486 = vadd.xlane.f32.xlu0 %v1485
  %v1487 = vpop.xlane.xlu0 %1486
  %v1488 = vsel %vm1466, %v1465, 0.0
  %1489 = vadd.xlane.f32.xlu0 %v1488
  %v1490 = vpop.xlane.xlu0 %1489
  %v1491 = vrcp.pop 8.0
  %v1492 = vmul.f32 8.0, %v1491
  %v1493 = vsub.f32 1.0, %v1492
  %v1494 = vmul.f32 %v1491, %v1493
  %v1495 = vadd.f32 %v1491, %v1494
  %vm1496 = vweird.f32 %v1491
  %v1497 = vsel %vm1496, %v1491, %v1495
  %v1498 = vmul.f32 %v1469, %v1497
  %v1499 = vmul.f32 %v1472, %v1497
  %v1500 = vmul.f32 %v1475, %v1497
  %v1501 = vmul.f32 %v1478, %v1497
  %v1502 = vmul.f32 %v1481, %v1497
  %v1503 = vmul.f32 %v1484, %v1497
  %v1504 = vmul.f32 %v1487, %v1497
  %v1505 = vmul.f32 %v1490, %v1497
  %v1506 = vsub.f32 %v1458, %v1498
  %v1507 = vsub.f32 %v1459, %v1499
  %v1508 = vsub.f32 %v1460, %v1500
  %v1509 = vsub.f32 %v1461, %v1501
  %v1510 = vsub.f32 %v1462, %v1502
  %v1511 = vsub.f32 %v1463, %v1503
  %v1512 = vsub.f32 %v1464, %v1504
  %v1513 = vsub.f32 %v1465, %v1505
  %v1514 = vmul.f32 %v1506, %v1506
  %v1515 = vmul.f32 %v1507, %v1507
  %v1516 = vmul.f32 %v1508, %v1508
  %v1517 = vmul.f32 %v1509, %v1509
  %v1518 = vmul.f32 %v1510, %v1510
  %v1519 = vmul.f32 %v1511, %v1511
  %v1520 = vmul.f32 %v1512, %v1512
  %v1521 = vmul.f32 %v1513, %v1513
  %v1522 = vsel %vm1466, %v1514, 0.0
  %1523 = vadd.xlane.f32.xlu0 %v1522
  %v1524 = vpop.xlane.xlu0 %1523
  %v1525 = vsel %vm1466, %v1515, 0.0
  %1526 = vadd.xlane.f32.xlu0 %v1525
  %v1527 = vpop.xlane.xlu0 %1526
  %v1528 = vsel %vm1466, %v1516, 0.0
  %1529 = vadd.xlane.f32.xlu0 %v1528
  %v1530 = vpop.xlane.xlu0 %1529
  %v1531 = vsel %vm1466, %v1517, 0.0
  %1532 = vadd.xlane.f32.xlu0 %v1531
  %v1533 = vpop.xlane.xlu0 %1532
  %v1534 = vsel %vm1466, %v1518, 0.0
  %1535 = vadd.xlane.f32.xlu0 %v1534
  %v1536 = vpop.xlane.xlu0 %1535
  %v1537 = vsel %vm1466, %v1519, 0.0
  %1538 = vadd.xlane.f32.xlu0 %v1537
  %v1539 = vpop.xlane.xlu0 %1538
  %v1540 = vsel %vm1466, %v1520, 0.0
  %1541 = vadd.xlane.f32.xlu0 %v1540
  %v1542 = vpop.xlane.xlu0 %1541
  %v1543 = vsel %vm1466, %v1521, 0.0
  %1544 = vadd.xlane.f32.xlu0 %v1543
  %v1545 = vpop.xlane.xlu0 %1544
  %v1546 = vmul.f32 %v1524, %v1497
  %v1547 = vmul.f32 %v1527, %v1497
  %v1548 = vmul.f32 %v1530, %v1497
  %v1549 = vmul.f32 %v1533, %v1497
  %v1550 = vmul.f32 %v1536, %v1497
  %v1551 = vmul.f32 %v1539, %v1497
  %v1552 = vmul.f32 %v1542, %v1497
  %v1553 = vmul.f32 %v1545, %v1497
  %v1554 = vld [vmem:[%s2] sm:$0xff]
  %v1555 = vld [vmem:[%s2 + $0x8] sm:$0xff]
  %v1556 = vld [vmem:[%s2 + $0x10] sm:$0xff]
  %v1557 = vld [vmem:[%s2 + $0x18] sm:$0xff]
  %v1558 = vld [vmem:[%s2 + $0x20] sm:$0xff]
  %v1559 = vld [vmem:[%s2 + $0x28] sm:$0xff]
  %v1560 = vld [vmem:[%s2 + $0x30] sm:$0xff]
  %v1561 = vld [vmem:[%s2 + $0x38] sm:$0xff]
  %v1562 = vadd.f32 %v1546, 1e-05
  %v1563 = vadd.f32 %v1547, 1e-05
  %v1564 = vadd.f32 %v1548, 1e-05
  %v1565 = vadd.f32 %v1549, 1e-05
  %v1566 = vadd.f32 %v1550, 1e-05
  %v1567 = vadd.f32 %v1551, 1e-05
  %v1568 = vadd.f32 %v1552, 1e-05
  %v1569 = vadd.f32 %v1553, 1e-05
  %v1570 = vrsqrt.pop %v1562
  %v1571 = vmul.f32 %v1570, %v1562
  %v1572 = vmul.f32 %v1571, %v1570
  %v1573 = vmul.f32 0.5, %v1572
  %v1574 = vsub.f32 1.5, %v1573
  %v1575 = vmul.f32 %v1570, %v1574
  %vm1576 = vweird.f32 %v1562
  %vm1577 = vweird.f32 %v1570
  %vm1578 = vmor %vm1576, %vm1577
  %v1579 = vsel %vm1578, %v1570, %v1575
  %v1580 = vrsqrt.pop %v1563
  %v1581 = vmul.f32 %v1580, %v1563
  %v1582 = vmul.f32 %v1581, %v1580
  %v1583 = vmul.f32 0.5, %v1582
  %v1584 = vsub.f32 1.5, %v1583
  %v1585 = vmul.f32 %v1580, %v1584
  %vm1586 = vweird.f32 %v1563
  %vm1587 = vweird.f32 %v1580
  %vm1588 = vmor %vm1586, %vm1587
  %v1589 = vsel %vm1588, %v1580, %v1585
  %v1590 = vrsqrt.pop %v1564
  %v1591 = vmul.f32 %v1590, %v1564
  %v1592 = vmul.f32 %v1591, %v1590
  %v1593 = vmul.f32 0.5, %v1592
  %v1594 = vsub.f32 1.5, %v1593
  %v1595 = vmul.f32 %v1590, %v1594
  %vm1596 = vweird.f32 %v1564
  %vm1597 = vweird.f32 %v1590
  %vm1598 = vmor %vm1596, %vm1597
  %v1599 = vsel %vm1598, %v1590, %v1595
  %v1600 = vrsqrt.pop %v1565
  %v1601 = vmul.f32 %v1600, %v1565
  %v1602 = vmul.f32 %v1601, %v1600
  %v1603 = vmul.f32 0.5, %v1602
  %v1604 = vsub.f32 1.5, %v1603
  %v1605 = vmul.f32 %v1600, %v1604
  %vm1606 = vweird.f32 %v1565
  %vm1607 = vweird.f32 %v1600
  %vm1608 = vmor %vm1606, %vm1607
  %v1609 = vsel %vm1608, %v1600, %v1605
  %v1610 = vrsqrt.pop %v1566
  %v1611 = vmul.f32 %v1610, %v1566
  %v1612 = vmul.f32 %v1611, %v1610
  %v1613 = vmul.f32 0.5, %v1612
  %v1614 = vsub.f32 1.5, %v1613
  %v1615 = vmul.f32 %v1610, %v1614
  %vm1616 = vweird.f32 %v1566
  %vm1617 = vweird.f32 %v1610
  %vm1618 = vmor %vm1616, %vm1617
  %v1619 = vsel %vm1618, %v1610, %v1615
  %v1620 = vrsqrt.pop %v1567
  %v1621 = vmul.f32 %v1620, %v1567
  %v1622 = vmul.f32 %v1621, %v1620
  %v1623 = vmul.f32 0.5, %v1622
  %v1624 = vsub.f32 1.5, %v1623
  %v1625 = vmul.f32 %v1620, %v1624
  %vm1626 = vweird.f32 %v1567
  %vm1627 = vweird.f32 %v1620
  %vm1628 = vmor %vm1626, %vm1627
  %v1629 = vsel %vm1628, %v1620, %v1625
  %v1630 = vrsqrt.pop %v1568
  %v1631 = vmul.f32 %v1630, %v1568
  %v1632 = vmul.f32 %v1631, %v1630
  %v1633 = vmul.f32 0.5, %v1632
  %v1634 = vsub.f32 1.5, %v1633
  %v1635 = vmul.f32 %v1630, %v1634
  %vm1636 = vweird.f32 %v1568
  %vm1637 = vweird.f32 %v1630
  %vm1638 = vmor %vm1636, %vm1637
  %v1639 = vsel %vm1638, %v1630, %v1635
  %v1640 = vrsqrt.pop %v1569
  %v1641 = vmul.f32 %v1640, %v1569
  %v1642 = vmul.f32 %v1641, %v1640
  %v1643 = vmul.f32 0.5, %v1642
  %v1644 = vsub.f32 1.5, %v1643
  %v1645 = vmul.f32 %v1640, %v1644
  %vm1646 = vweird.f32 %v1569
  %vm1647 = vweird.f32 %v1640
  %vm1648 = vmor %vm1646, %vm1647
  %v1649 = vsel %vm1648, %v1640, %v1645
  %v1650 = vmul.f32 %v1554, %v1579
  %v1651 = vmul.f32 %v1555, %v1589
  %v1652 = vmul.f32 %v1556, %v1599
  %v1653 = vmul.f32 %v1557, %v1609
  %v1654 = vmul.f32 %v1558, %v1619
  %v1655 = vmul.f32 %v1559, %v1629
  %v1656 = vmul.f32 %v1560, %v1639
  %v1657 = vmul.f32 %v1561, %v1649
  %v1658 = vld [vmem:[%s3] sm:$0xff]
  %v1659 = vld [vmem:[%s3 + $0x8] sm:$0xff]
  %v1660 = vld [vmem:[%s3 + $0x10] sm:$0xff]
  %v1661 = vld [vmem:[%s3 + $0x18] sm:$0xff]
  %v1662 = vld [vmem:[%s3 + $0x20] sm:$0xff]
  %v1663 = vld [vmem:[%s3 + $0x28] sm:$0xff]
  %v1664 = vld [vmem:[%s3 + $0x30] sm:$0xff]
  %v1665 = vld [vmem:[%s3 + $0x38] sm:$0xff]
  %v1666 = vmul.f32 %v1498, %v1650
  %v1667 = vmul.f32 %v1499, %v1651
  %v1668 = vmul.f32 %v1500, %v1652
  %v1669 = vmul.f32 %v1501, %v1653
  %v1670 = vmul.f32 %v1502, %v1654
  %v1671 = vmul.f32 %v1503, %v1655
  %v1672 = vmul.f32 %v1504, %v1656
  %v1673 = vmul.f32 %v1505, %v1657
  %v1674 = vsub.f32 %v1658, %v1666
  %v1675 = vsub.f32 %v1659, %v1667
  %v1676 = vsub.f32 %v1660, %v1668
  %v1677 = vsub.f32 %v1661, %v1669
  %v1678 = vsub.f32 %v1662, %v1670
  %v1679 = vsub.f32 %v1663, %v1671
  %v1680 = vsub.f32 %v1664, %v1672
  %v1681 = vsub.f32 %v1665, %v1673
  %1683 = vset.pattern.permute.xlu0 0
  %1684 = vperm.xlu0 %1683, %v1650
  %v1685 = vpop.permute.xlu0 %1684
  %1688 = vset.pattern.permute.xlu0 0
  %1689 = vperm.xlu0 %1688, %v1651
  %v1690 = vpop.permute.xlu0 %1689
  %1693 = vset.pattern.permute.xlu0 0
  %1694 = vperm.xlu0 %1693, %v1652
  %v1695 = vpop.permute.xlu0 %1694
  %1698 = vset.pattern.permute.xlu0 0
  %1699 = vperm.xlu0 %1698, %v1653
  %v1700 = vpop.permute.xlu0 %1699
  %1703 = vset.pattern.permute.xlu0 0
  %1704 = vperm.xlu0 %1703, %v1654
  %v1705 = vpop.permute.xlu0 %1704
  %1708 = vset.pattern.permute.xlu0 0
  %1709 = vperm.xlu0 %1708, %v1655
  %v1710 = vpop.permute.xlu0 %1709
  %1713 = vset.pattern.permute.xlu0 0
  %1714 = vperm.xlu0 %1713, %v1656
  %v1715 = vpop.permute.xlu0 %1714
  %1718 = vset.pattern.permute.xlu0 0
  %1719 = vperm.xlu0 %1718, %v1657
  %v1720 = vpop.permute.xlu0 %1719
  %v1722 = vmul.f32 %v1458, %v1685
  %v1723 = vmul.f32 %v1459, %v1690
  %v1724 = vmul.f32 %v1460, %v1695
  %v1725 = vmul.f32 %v1461, %v1700
  %v1726 = vmul.f32 %v1462, %v1705
  %v1727 = vmul.f32 %v1463, %v1710
  %v1728 = vmul.f32 %v1464, %v1715
  %v1729 = vmul.f32 %v1465, %v1720
  %1731 = vset.pattern.permute.xlu0 0
  %1732 = vperm.xlu0 %1731, %v1674
  %v1733 = vpop.permute.xlu0 %1732
  %1736 = vset.pattern.permute.xlu0 0
  %1737 = vperm.xlu0 %1736, %v1675
  %v1738 = vpop.permute.xlu0 %1737
  %1741 = vset.pattern.permute.xlu0 0
  %1742 = vperm.xlu0 %1741, %v1676
  %v1743 = vpop.permute.xlu0 %1742
  %1746 = vset.pattern.permute.xlu0 0
  %1747 = vperm.xlu0 %1746, %v1677
  %v1748 = vpop.permute.xlu0 %1747
  %1751 = vset.pattern.permute.xlu0 0
  %1752 = vperm.xlu0 %1751, %v1678
  %v1753 = vpop.permute.xlu0 %1752
  %1756 = vset.pattern.permute.xlu0 0
  %1757 = vperm.xlu0 %1756, %v1679
  %v1758 = vpop.permute.xlu0 %1757
  %1761 = vset.pattern.permute.xlu0 0
  %1762 = vperm.xlu0 %1761, %v1680
  %v1763 = vpop.permute.xlu0 %1762
  %1766 = vset.pattern.permute.xlu0 0
  %1767 = vperm.xlu0 %1766, %v1681
  %v1768 = vpop.permute.xlu0 %1767
  %v1770 = vadd.f32 %v1722, %v1733
  %v1771 = vadd.f32 %v1723, %v1738
  %v1772 = vadd.f32 %v1724, %v1743
  %v1773 = vadd.f32 %v1725, %v1748
  %v1774 = vadd.f32 %v1726, %v1753
  %v1775 = vadd.f32 %v1727, %v1758
  %v1776 = vadd.f32 %v1728, %v1763
  %v1777 = vadd.f32 %v1729, %v1768
  %1778 = vst.msk [vmem:[%s4] sm:$0xff] %vm1466, %v1770
  %1779 = vst.msk [vmem:[%s4 + $0x8] sm:$0xff] %vm1466, %v1771
  %1780 = vst.msk [vmem:[%s4 + $0x10] sm:$0xff] %vm1466, %v1772
  %1781 = vst.msk [vmem:[%s4 + $0x18] sm:$0xff] %vm1466, %v1773
  %1782 = vst.msk [vmem:[%s4 + $0x20] sm:$0xff] %vm1466, %v1774
  %1783 = vst.msk [vmem:[%s4 + $0x28] sm:$0xff] %vm1466, %v1775
  %1784 = vst.msk [vmem:[%s4 + $0x30] sm:$0xff] %vm1466, %v1776
  %1785 = vst.msk [vmem:[%s4 + $0x38] sm:$0xff] %vm1466, %v1777
  // Predicated region
  $region18: #{unet_forward.15} parent=0 // pred_check
    _
  $region19: #{unet_forward.15} parent=0 // pred_check_branch
    %1787 = sbr.rel (0) target = $region21
  $region20: #{unet_forward.15} parent=0 // pred_region
    _
  $region21: #{unet_forward.15} parent=0 // pred_fallthru
    _
  // Predicated region
  $region22: #{unet_forward.15} parent=0 // pred_check
    _
  $region23: #{unet_forward.15} parent=0 // pred_check_branch
    %1789 = sbr.rel (0) target = $region25
  $region24: #{unet_forward.15} parent=0 // pred_region
    _
  $region25: #{unet_forward.15} parent=0 // pred_fallthru
    _

// kernel: unet_forward.16
$region0: #{unet_forward.16}
  #allocation0 [shape = 'u32[]', space=smem, size = 0x4, offset = 0x4, fixed_abs, tag = 'smem constant byte address 0x4 - core index']
  #allocation1 [shape = 'u32[72,128]{1,0:T(1,128)}', space=vmem, size = 0x9000, scoped, tag = 'internal scratch']
  %s0 = inlined_call_operand.vmem [shape: f32[1152,8], index: 0, kind: input, shape index: {}]
  %s1 = inlined_call_operand.vmem [shape: bf16[4,32,1152], index: 1, kind: input, shape index: {}]
  %s2 = inlined_call_operand.vmem [shape: f32[32,1], index: 2, kind: input, shape index: {}]
  %s3 = inlined_call_operand.vmem [shape: f32[32,1], index: 3, kind: input, shape index: {}]
  %s4 = inlined_call_operand.vmem [shape: f32[32,32], index: 4, kind: output, shape index: {}]
  %s5 = sld [smem:[#allocation0]]
  $region26: #{unet_forward.16} parent=0
    _
  %s7 = ssub.s32 1, %s5
  %s8 = scalar_select 0, %s7, %s5
  // Predicated region
  $region2: #{unet_forward.16} parent=0 // pred_check
    _
  $region3: #{unet_forward.16} parent=0 // pred_check_branch
    %10 = sbr.rel (0) target = $region5
  $region4: #{unet_forward.16} parent=0 // pred_region
    _
  $region5: #{unet_forward.16} parent=0 // pred_fallthru
    _
  // Predicated region
  $region6: #{unet_forward.16} parent=0 // pred_check
    _
  $region7: #{unet_forward.16} parent=0 // pred_check_branch
    %12 = sbr.rel (0) target = $region9
  $region8: #{unet_forward.16} parent=0 // pred_region
    _
  $region9: #{unet_forward.16} parent=0 // pred_fallthru
    _
  // Predicated region
  $region10: #{unet_forward.16} parent=0 // pred_check
    _
  $region11: #{unet_forward.16} parent=0 // pred_check_branch
    %14 = sbr.rel (0) target = $region13
  $region12: #{unet_forward.16} parent=0 // pred_region
    _
  $region13: #{unet_forward.16} parent=0 // pred_fallthru
    _
  // Predicated region
  $region14: #{unet_forward.16} parent=0 // pred_check
    _
  $region15: #{unet_forward.16} parent=0 // pred_check_branch
    %16 = sbr.rel (0) target = $region17
  $region16: #{unet_forward.16} parent=0 // pred_region
    _
  $region17: #{unet_forward.16} parent=0 // pred_fallthru
    _
  %v17 = vld [vmem:[%s0] sm:$0xff]
  %v18 = vld [vmem:[%s0 + $0x8] sm:$0xff]
  %v19 = vld [vmem:[%s0 + $0x10] sm:$0xff]
  %v20 = vld [vmem:[%s0 + $0x18] sm:$0xff]
  %v21 = vld [vmem:[%s0 + $0x20] sm:$0xff]
  %v22 = vld [vmem:[%s0 + $0x28] sm:$0xff]
  %v23 = vld [vmem:[%s0 + $0x30] sm:$0xff]
  %v24 = vld [vmem:[%s0 + $0x38] sm:$0xff]
  %v25 = vld [vmem:[%s0 + $0x40] sm:$0xff]
  %v26 = vld [vmem:[%s0 + $0x48] sm:$0xff]
  %v27 = vld [vmem:[%s0 + $0x50] sm:$0xff]
  %v28 = vld [vmem:[%s0 + $0x58] sm:$0xff]
  %v29 = vld [vmem:[%s0 + $0x60] sm:$0xff]
  %v30 = vld [vmem:[%s0 + $0x68] sm:$0xff]
  %v31 = vld [vmem:[%s0 + $0x70] sm:$0xff]
  %v32 = vld [vmem:[%s0 + $0x78] sm:$0xff]
  %v33 = vld [vmem:[%s0 + $0x80] sm:$0xff]
  %v34 = vld [vmem:[%s0 + $0x88] sm:$0xff]
  %v35 = vld [vmem:[%s0 + $0x90] sm:$0xff]
  %v36 = vld [vmem:[%s0 + $0x98] sm:$0xff]
  %v37 = vld [vmem:[%s0 + $0xa0] sm:$0xff]
  %v38 = vld [vmem:[%s0 + $0xa8] sm:$0xff]
  %v39 = vld [vmem:[%s0 + $0xb0] sm:$0xff]
  %v40 = vld [vmem:[%s0 + $0xb8] sm:$0xff]
  %v41 = vld [vmem:[%s0 + $0xc0] sm:$0xff]
  %v42 = vld [vmem:[%s0 + $0xc8] sm:$0xff]
  %v43 = vld [vmem:[%s0 + $0xd0] sm:$0xff]
  %v44 = vld [vmem:[%s0 + $0xd8] sm:$0xff]
  %v45 = vld [vmem:[%s0 + $0xe0] sm:$0xff]
  %v46 = vld [vmem:[%s0 + $0xe8] sm:$0xff]
  %v47 = vld [vmem:[%s0 + $0xf0] sm:$0xff]
  %v48 = vld [vmem:[%s0 + $0xf8] sm:$0xff]
  %v49 = vld [vmem:[%s0 + $0x100] sm:$0xff]
  %v50 = vld [vmem:[%s0 + $0x108] sm:$0xff]
  %v51 = vld [vmem:[%s0 + $0x110] sm:$0xff]
  %v52 = vld [vmem:[%s0 + $0x118] sm:$0xff]
  %v53 = vld [vmem:[%s0 + $0x120] sm:$0xff]
  %v54 = vld [vmem:[%s0 + $0x128] sm:$0xff]
  %v55 = vld [vmem:[%s0 + $0x130] sm:$0xff]
  %v56 = vld [vmem:[%s0 + $0x138] sm:$0xff]
  %v57 = vld [vmem:[%s0 + $0x140] sm:$0xff]
  %v58 = vld [vmem:[%s0 + $0x148] sm:$0xff]
  %v59 = vld [vmem:[%s0 + $0x150] sm:$0xff]
  %v60 = vld [vmem:[%s0 + $0x158] sm:$0xff]
  %v61 = vld [vmem:[%s0 + $0x160] sm:$0xff]
  %v62 = vld [vmem:[%s0 + $0x168] sm:$0xff]
  %v63 = vld [vmem:[%s0 + $0x170] sm:$0xff]
  %v64 = vld [vmem:[%s0 + $0x178] sm:$0xff]
  %v65 = vld [vmem:[%s0 + $0x180] sm:$0xff]
  %v66 = vld [vmem:[%s0 + $0x188] sm:$0xff]
  %v67 = vld [vmem:[%s0 + $0x190] sm:$0xff]
  %v68 = vld [vmem:[%s0 + $0x198] sm:$0xff]
  %v69 = vld [vmem:[%s0 + $0x1a0] sm:$0xff]
  %v70 = vld [vmem:[%s0 + $0x1a8] sm:$0xff]
  %v71 = vld [vmem:[%s0 + $0x1b0] sm:$0xff]
  %v72 = vld [vmem:[%s0 + $0x1b8] sm:$0xff]
  %v73 = vld [vmem:[%s0 + $0x1c0] sm:$0xff]
  %v74 = vld [vmem:[%s0 + $0x1c8] sm:$0xff]
  %v75 = vld [vmem:[%s0 + $0x1d0] sm:$0xff]
  %v76 = vld [vmem:[%s0 + $0x1d8] sm:$0xff]
  %v77 = vld [vmem:[%s0 + $0x1e0] sm:$0xff]
  %v78 = vld [vmem:[%s0 + $0x1e8] sm:$0xff]
  %v79 = vld [vmem:[%s0 + $0x1f0] sm:$0xff]
  %v80 = vld [vmem:[%s0 + $0x1f8] sm:$0xff]
  %v81 = vld [vmem:[%s0 + $0x200] sm:$0xff]
  %v82 = vld [vmem:[%s0 + $0x208] sm:$0xff]
  %v83 = vld [vmem:[%s0 + $0x210] sm:$0xff]
  %v84 = vld [vmem:[%s0 + $0x218] sm:$0xff]
  %v85 = vld [vmem:[%s0 + $0x220] sm:$0xff]
  %v86 = vld [vmem:[%s0 + $0x228] sm:$0xff]
  %v87 = vld [vmem:[%s0 + $0x230] sm:$0xff]
  %v88 = vld [vmem:[%s0 + $0x238] sm:$0xff]
  %v89 = vld [vmem:[%s0 + $0x240] sm:$0xff]
  %v90 = vld [vmem:[%s0 + $0x248] sm:$0xff]
  %v91 = vld [vmem:[%s0 + $0x250] sm:$0xff]
  %v92 = vld [vmem:[%s0 + $0x258] sm:$0xff]
  %v93 = vld [vmem:[%s0 + $0x260] sm:$0xff]
  %v94 = vld [vmem:[%s0 + $0x268] sm:$0xff]
  %v95 = vld [vmem:[%s0 + $0x270] sm:$0xff]
  %v96 = vld [vmem:[%s0 + $0x278] sm:$0xff]
  %v97 = vld [vmem:[%s0 + $0x280] sm:$0xff]
  %v98 = vld [vmem:[%s0 + $0x288] sm:$0xff]
  %v99 = vld [vmem:[%s0 + $0x290] sm:$0xff]
  %v100 = vld [vmem:[%s0 + $0x298] sm:$0xff]
  %v101 = vld [vmem:[%s0 + $0x2a0] sm:$0xff]
  %v102 = vld [vmem:[%s0 + $0x2a8] sm:$0xff]
  %v103 = vld [vmem:[%s0 + $0x2b0] sm:$0xff]
  %v104 = vld [vmem:[%s0 + $0x2b8] sm:$0xff]
  %v105 = vld [vmem:[%s0 + $0x2c0] sm:$0xff]
  %v106 = vld [vmem:[%s0 + $0x2c8] sm:$0xff]
  %v107 = vld [vmem:[%s0 + $0x2d0] sm:$0xff]
  %v108 = vld [vmem:[%s0 + $0x2d8] sm:$0xff]
  %v109 = vld [vmem:[%s0 + $0x2e0] sm:$0xff]
  %v110 = vld [vmem:[%s0 + $0x2e8] sm:$0xff]
  %v111 = vld [vmem:[%s0 + $0x2f0] sm:$0xff]
  %v112 = vld [vmem:[%s0 + $0x2f8] sm:$0xff]
  %v113 = vld [vmem:[%s0 + $0x300] sm:$0xff]
  %v114 = vld [vmem:[%s0 + $0x308] sm:$0xff]
  %v115 = vld [vmem:[%s0 + $0x310] sm:$0xff]
  %v116 = vld [vmem:[%s0 + $0x318] sm:$0xff]
  %v117 = vld [vmem:[%s0 + $0x320] sm:$0xff]
  %v118 = vld [vmem:[%s0 + $0x328] sm:$0xff]
  %v119 = vld [vmem:[%s0 + $0x330] sm:$0xff]
  %v120 = vld [vmem:[%s0 + $0x338] sm:$0xff]
  %v121 = vld [vmem:[%s0 + $0x340] sm:$0xff]
  %v122 = vld [vmem:[%s0 + $0x348] sm:$0xff]
  %v123 = vld [vmem:[%s0 + $0x350] sm:$0xff]
  %v124 = vld [vmem:[%s0 + $0x358] sm:$0xff]
  %v125 = vld [vmem:[%s0 + $0x360] sm:$0xff]
  %v126 = vld [vmem:[%s0 + $0x368] sm:$0xff]
  %v127 = vld [vmem:[%s0 + $0x370] sm:$0xff]
  %v128 = vld [vmem:[%s0 + $0x378] sm:$0xff]
  %v129 = vld [vmem:[%s0 + $0x380] sm:$0xff]
  %v130 = vld [vmem:[%s0 + $0x388] sm:$0xff]
  %v131 = vld [vmem:[%s0 + $0x390] sm:$0xff]
  %v132 = vld [vmem:[%s0 + $0x398] sm:$0xff]
  %v133 = vld [vmem:[%s0 + $0x3a0] sm:$0xff]
  %v134 = vld [vmem:[%s0 + $0x3a8] sm:$0xff]
  %v135 = vld [vmem:[%s0 + $0x3b0] sm:$0xff]
  %v136 = vld [vmem:[%s0 + $0x3b8] sm:$0xff]
  %v137 = vld [vmem:[%s0 + $0x3c0] sm:$0xff]
  %v138 = vld [vmem:[%s0 + $0x3c8] sm:$0xff]
  %v139 = vld [vmem:[%s0 + $0x3d0] sm:$0xff]
  %v140 = vld [vmem:[%s0 + $0x3d8] sm:$0xff]
  %v141 = vld [vmem:[%s0 + $0x3e0] sm:$0xff]
  %v142 = vld [vmem:[%s0 + $0x3e8] sm:$0xff]
  %v143 = vld [vmem:[%s0 + $0x3f0] sm:$0xff]
  %v144 = vld [vmem:[%s0 + $0x3f8] sm:$0xff]
  %v145 = vld [vmem:[%s0 + $0x400] sm:$0xff]
  %v146 = vld [vmem:[%s0 + $0x408] sm:$0xff]
  %v147 = vld [vmem:[%s0 + $0x410] sm:$0xff]
  %v148 = vld [vmem:[%s0 + $0x418] sm:$0xff]
  %v149 = vld [vmem:[%s0 + $0x420] sm:$0xff]
  %v150 = vld [vmem:[%s0 + $0x428] sm:$0xff]
  %v151 = vld [vmem:[%s0 + $0x430] sm:$0xff]
  %v152 = vld [vmem:[%s0 + $0x438] sm:$0xff]
  %v153 = vld [vmem:[%s0 + $0x440] sm:$0xff]
  %v154 = vld [vmem:[%s0 + $0x448] sm:$0xff]
  %v155 = vld [vmem:[%s0 + $0x450] sm:$0xff]
  %v156 = vld [vmem:[%s0 + $0x458] sm:$0xff]
  %v157 = vld [vmem:[%s0 + $0x460] sm:$0xff]
  %v158 = vld [vmem:[%s0 + $0x468] sm:$0xff]
  %v159 = vld [vmem:[%s0 + $0x470] sm:$0xff]
  %v160 = vld [vmem:[%s0 + $0x478] sm:$0xff]
  %v161 = vmax.f32 %v17, 0.0
  %v162 = vmax.f32 %v18, 0.0
  %v163 = vmax.f32 %v19, 0.0
  %v164 = vmax.f32 %v20, 0.0
  %v165 = vmax.f32 %v21, 0.0
  %v166 = vmax.f32 %v22, 0.0
  %v167 = vmax.f32 %v23, 0.0
  %v168 = vmax.f32 %v24, 0.0
  %v169 = vmax.f32 %v25, 0.0
  %v170 = vmax.f32 %v26, 0.0
  %v171 = vmax.f32 %v27, 0.0
  %v172 = vmax.f32 %v28, 0.0
  %v173 = vmax.f32 %v29, 0.0
  %v174 = vmax.f32 %v30, 0.0
  %v175 = vmax.f32 %v31, 0.0
  %v176 = vmax.f32 %v32, 0.0
  %v177 = vmax.f32 %v33, 0.0
  %v178 = vmax.f32 %v34, 0.0
  %v179 = vmax.f32 %v35, 0.0
  %v180 = vmax.f32 %v36, 0.0
  %v181 = vmax.f32 %v37, 0.0
  %v182 = vmax.f32 %v38, 0.0
  %v183 = vmax.f32 %v39, 0.0
  %v184 = vmax.f32 %v40, 0.0
  %v185 = vmax.f32 %v41, 0.0
  %v186 = vmax.f32 %v42, 0.0
  %v187 = vmax.f32 %v43, 0.0
  %v188 = vmax.f32 %v44, 0.0
  %v189 = vmax.f32 %v45, 0.0
  %v190 = vmax.f32 %v46, 0.0
  %v191 = vmax.f32 %v47, 0.0
  %v192 = vmax.f32 %v48, 0.0
  %v193 = vmax.f32 %v49, 0.0
  %v194 = vmax.f32 %v50, 0.0
  %v195 = vmax.f32 %v51, 0.0
  %v196 = vmax.f32 %v52, 0.0
  %v197 = vmax.f32 %v53, 0.0
  %v198 = vmax.f32 %v54, 0.0
  %v199 = vmax.f32 %v55, 0.0
  %v200 = vmax.f32 %v56, 0.0
  %v201 = vmax.f32 %v57, 0.0
  %v202 = vmax.f32 %v58, 0.0
  %v203 = vmax.f32 %v59, 0.0
  %v204 = vmax.f32 %v60, 0.0
  %v205 = vmax.f32 %v61, 0.0
  %v206 = vmax.f32 %v62, 0.0
  %v207 = vmax.f32 %v63, 0.0
  %v208 = vmax.f32 %v64, 0.0
  %v209 = vmax.f32 %v65, 0.0
  %v210 = vmax.f32 %v66, 0.0
  %v211 = vmax.f32 %v67, 0.0
  %v212 = vmax.f32 %v68, 0.0
  %v213 = vmax.f32 %v69, 0.0
  %v214 = vmax.f32 %v70, 0.0
  %v215 = vmax.f32 %v71, 0.0
  %v216 = vmax.f32 %v72, 0.0
  %v217 = vmax.f32 %v73, 0.0
  %v218 = vmax.f32 %v74, 0.0
  %v219 = vmax.f32 %v75, 0.0
  %v220 = vmax.f32 %v76, 0.0
  %v221 = vmax.f32 %v77, 0.0
  %v222 = vmax.f32 %v78, 0.0
  %v223 = vmax.f32 %v79, 0.0
  %v224 = vmax.f32 %v80, 0.0
  %v225 = vmax.f32 %v81, 0.0
  %v226 = vmax.f32 %v82, 0.0
  %v227 = vmax.f32 %v83, 0.0
  %v228 = vmax.f32 %v84, 0.0
  %v229 = vmax.f32 %v85, 0.0
  %v230 = vmax.f32 %v86, 0.0
  %v231 = vmax.f32 %v87, 0.0
  %v232 = vmax.f32 %v88, 0.0
  %v233 = vmax.f32 %v89, 0.0
  %v234 = vmax.f32 %v90, 0.0
  %v235 = vmax.f32 %v91, 0.0
  %v236 = vmax.f32 %v92, 0.0
  %v237 = vmax.f32 %v93, 0.0
  %v238 = vmax.f32 %v94, 0.0
  %v239 = vmax.f32 %v95, 0.0
  %v240 = vmax.f32 %v96, 0.0
  %v241 = vmax.f32 %v97, 0.0
  %v242 = vmax.f32 %v98, 0.0
  %v243 = vmax.f32 %v99, 0.0
  %v244 = vmax.f32 %v100, 0.0
  %v245 = vmax.f32 %v101, 0.0
  %v246 = vmax.f32 %v102, 0.0
  %v247 = vmax.f32 %v103, 0.0
  %v248 = vmax.f32 %v104, 0.0
  %v249 = vmax.f32 %v105, 0.0
  %v250 = vmax.f32 %v106, 0.0
  %v251 = vmax.f32 %v107, 0.0
  %v252 = vmax.f32 %v108, 0.0
  %v253 = vmax.f32 %v109, 0.0
  %v254 = vmax.f32 %v110, 0.0
  %v255 = vmax.f32 %v111, 0.0
  %v256 = vmax.f32 %v112, 0.0
  %v257 = vmax.f32 %v113, 0.0
  %v258 = vmax.f32 %v114, 0.0
  %v259 = vmax.f32 %v115, 0.0
  %v260 = vmax.f32 %v116, 0.0
  %v261 = vmax.f32 %v117, 0.0
  %v262 = vmax.f32 %v118, 0.0
  %v263 = vmax.f32 %v119, 0.0
  %v264 = vmax.f32 %v120, 0.0
  %v265 = vmax.f32 %v121, 0.0
  %v266 = vmax.f32 %v122, 0.0
  %v267 = vmax.f32 %v123, 0.0
  %v268 = vmax.f32 %v124, 0.0
  %v269 = vmax.f32 %v125, 0.0
  %v270 = vmax.f32 %v126, 0.0
  %v271 = vmax.f32 %v127, 0.0
  %v272 = vmax.f32 %v128, 0.0
  %v273 = vmax.f32 %v129, 0.0
  %v274 = vmax.f32 %v130, 0.0
  %v275 = vmax.f32 %v131, 0.0
  %v276 = vmax.f32 %v132, 0.0
  %v277 = vmax.f32 %v133, 0.0
  %v278 = vmax.f32 %v134, 0.0
  %v279 = vmax.f32 %v135, 0.0
  %v280 = vmax.f32 %v136, 0.0
  %v281 = vmax.f32 %v137, 0.0
  %v282 = vmax.f32 %v138, 0.0
  %v283 = vmax.f32 %v139, 0.0
  %v284 = vmax.f32 %v140, 0.0
  %v285 = vmax.f32 %v141, 0.0
  %v286 = vmax.f32 %v142, 0.0
  %v287 = vmax.f32 %v143, 0.0
  %v288 = vmax.f32 %v144, 0.0
  %v289 = vmax.f32 %v145, 0.0
  %v290 = vmax.f32 %v146, 0.0
  %v291 = vmax.f32 %v147, 0.0
  %v292 = vmax.f32 %v148, 0.0
  %v293 = vmax.f32 %v149, 0.0
  %v294 = vmax.f32 %v150, 0.0
  %v295 = vmax.f32 %v151, 0.0
  %v296 = vmax.f32 %v152, 0.0
  %v297 = vmax.f32 %v153, 0.0
  %v298 = vmax.f32 %v154, 0.0
  %v299 = vmax.f32 %v155, 0.0
  %v300 = vmax.f32 %v156, 0.0
  %v301 = vmax.f32 %v157, 0.0
  %v302 = vmax.f32 %v158, 0.0
  %v303 = vmax.f32 %v159, 0.0
  %v304 = vmax.f32 %v160, 0.0
  %v305 = vpack.c.bf16 %v162, %v161
  %v306 = vpack.c.bf16 %v164, %v163
  %v307 = vpack.c.bf16 %v166, %v165
  %v308 = vpack.c.bf16 %v168, %v167
  %v309 = vpack.c.bf16 %v170, %v169
  %v310 = vpack.c.bf16 %v172, %v171
  %v311 = vpack.c.bf16 %v174, %v173
  %v312 = vpack.c.bf16 %v176, %v175
  %v313 = vpack.c.bf16 %v178, %v177
  %v314 = vpack.c.bf16 %v180, %v179
  %v315 = vpack.c.bf16 %v182, %v181
  %v316 = vpack.c.bf16 %v184, %v183
  %v317 = vpack.c.bf16 %v186, %v185
  %v318 = vpack.c.bf16 %v188, %v187
  %v319 = vpack.c.bf16 %v190, %v189
  %v320 = vpack.c.bf16 %v192, %v191
  %v321 = vpack.c.bf16 %v194, %v193
  %v322 = vpack.c.bf16 %v196, %v195
  %v323 = vpack.c.bf16 %v198, %v197
  %v324 = vpack.c.bf16 %v200, %v199
  %v325 = vpack.c.bf16 %v202, %v201
  %v326 = vpack.c.bf16 %v204, %v203
  %v327 = vpack.c.bf16 %v206, %v205
  %v328 = vpack.c.bf16 %v208, %v207
  %v329 = vpack.c.bf16 %v210, %v209
  %v330 = vpack.c.bf16 %v212, %v211
  %v331 = vpack.c.bf16 %v214, %v213
  %v332 = vpack.c.bf16 %v216, %v215
  %v333 = vpack.c.bf16 %v218, %v217
  %v334 = vpack.c.bf16 %v220, %v219
  %v335 = vpack.c.bf16 %v222, %v221
  %v336 = vpack.c.bf16 %v224, %v223
  %v337 = vpack.c.bf16 %v226, %v225
  %v338 = vpack.c.bf16 %v228, %v227
  %v339 = vpack.c.bf16 %v230, %v229
  %v340 = vpack.c.bf16 %v232, %v231
  %v341 = vpack.c.bf16 %v234, %v233
  %v342 = vpack.c.bf16 %v236, %v235
  %v343 = vpack.c.bf16 %v238, %v237
  %v344 = vpack.c.bf16 %v240, %v239
  %v345 = vpack.c.bf16 %v242, %v241
  %v346 = vpack.c.bf16 %v244, %v243
  %v347 = vpack.c.bf16 %v246, %v245
  %v348 = vpack.c.bf16 %v248, %v247
  %v349 = vpack.c.bf16 %v250, %v249
  %v350 = vpack.c.bf16 %v252, %v251
  %v351 = vpack.c.bf16 %v254, %v253
  %v352 = vpack.c.bf16 %v256, %v255
  %v353 = vpack.c.bf16 %v258, %v257
  %v354 = vpack.c.bf16 %v260, %v259
  %v355 = vpack.c.bf16 %v262, %v261
  %v356 = vpack.c.bf16 %v264, %v263
  %v357 = vpack.c.bf16 %v266, %v265
  %v358 = vpack.c.bf16 %v268, %v267
  %v359 = vpack.c.bf16 %v270, %v269
  %v360 = vpack.c.bf16 %v272, %v271
  %v361 = vpack.c.bf16 %v274, %v273
  %v362 = vpack.c.bf16 %v276, %v275
  %v363 = vpack.c.bf16 %v278, %v277
  %v364 = vpack.c.bf16 %v280, %v279
  %v365 = vpack.c.bf16 %v282, %v281
  %v366 = vpack.c.bf16 %v284, %v283
  %v367 = vpack.c.bf16 %v286, %v285
  %v368 = vpack.c.bf16 %v288, %v287
  %v369 = vpack.c.bf16 %v290, %v289
  %v370 = vpack.c.bf16 %v292, %v291
  %v371 = vpack.c.bf16 %v294, %v293
  %v372 = vpack.c.bf16 %v296, %v295
  %v373 = vpack.c.bf16 %v298, %v297
  %v374 = vpack.c.bf16 %v300, %v299
  %v375 = vpack.c.bf16 %v302, %v301
  %v376 = vpack.c.bf16 %v304, %v303
  %v377 = vld [vmem:[%s1] sm:$0xff]
  %v378 = vld [vmem:[%s1 + $0x8] sm:$0xff]
  %v379 = vld [vmem:[%s1 + $0x10] sm:$0xff]
  %v380 = vld [vmem:[%s1 + $0x18] sm:$0xff]
  %v381 = vld [vmem:[%s1 + $0x20] sm:$0xf]
  %v382 = vld [vmem:[%s1 + $0x24] sm:$0xff]
  %v383 = vld [vmem:[%s1 + $0x2c] sm:$0xff]
  %v384 = vld [vmem:[%s1 + $0x34] sm:$0xff]
  %v385 = vld [vmem:[%s1 + $0x3c] sm:$0xff]
  %v386 = vld [vmem:[%s1 + $0x44] sm:$0xf]
  %v387 = vld [vmem:[%s1 + $0x48] sm:$0xff]
  %v388 = vld [vmem:[%s1 + $0x50] sm:$0xff]
  %v389 = vld [vmem:[%s1 + $0x58] sm:$0xff]
  %v390 = vld [vmem:[%s1 + $0x60] sm:$0xff]
  %v391 = vld [vmem:[%s1 + $0x68] sm:$0xf]
  %v392 = vld [vmem:[%s1 + $0x6c] sm:$0xff]
  %v393 = vld [vmem:[%s1 + $0x74] sm:$0xff]
  %v394 = vld [vmem:[%s1 + $0x7c] sm:$0xff]
  %v395 = vld [vmem:[%s1 + $0x84] sm:$0xff]
  %v396 = vld [vmem:[%s1 + $0x8c] sm:$0xf]
  %v417 = vunpack.c.l.b16 %v377
  %v418 = vunpack.c.h.b16 %v377
  %v419 = vunpack.c.l.b16 %v378
  %v420 = vunpack.c.h.b16 %v378
  %v421 = vunpack.c.l.b16 %v379
  %v422 = vunpack.c.h.b16 %v379
  %v423 = vunpack.c.l.b16 %v380
  %v424 = vunpack.c.h.b16 %v380
  %v425 = vunpack.c.l.b16 %v381
  %v426 = vunpack.c.l.b16 %v382
  %v427 = vunpack.c.h.b16 %v382
  %v428 = vunpack.c.l.b16 %v383
  %v429 = vunpack.c.h.b16 %v383
  %v430 = vunpack.c.l.b16 %v384
  %v431 = vunpack.c.h.b16 %v384
  %v432 = vunpack.c.l.b16 %v385
  %v433 = vunpack.c.h.b16 %v385
  %v434 = vunpack.c.l.b16 %v386
  %v435 = vunpack.c.l.b16 %v387
  %v436 = vunpack.c.h.b16 %v387
  %v437 = vunpack.c.l.b16 %v388
  %v438 = vunpack.c.h.b16 %v388
  %v439 = vunpack.c.l.b16 %v389
  %v440 = vunpack.c.h.b16 %v389
  %v441 = vunpack.c.l.b16 %v390
  %v442 = vunpack.c.h.b16 %v390
  %v443 = vunpack.c.l.b16 %v391
  %v444 = vunpack.c.l.b16 %v392
  %v445 = vunpack.c.h.b16 %v392
  %v446 = vunpack.c.l.b16 %v393
  %v447 = vunpack.c.h.b16 %v393
  %v448 = vunpack.c.l.b16 %v394
  %v449 = vunpack.c.h.b16 %v394
  %v450 = vunpack.c.l.b16 %v395
  %v451 = vunpack.c.h.b16 %v395
  %v452 = vunpack.c.l.b16 %v396
  %v453 = vpack.c.b16 %v426, %v417
  %v454 = vpack.c.b16 %v427, %v418
  %v455 = vpack.c.b16 %v428, %v419
  %v456 = vpack.c.b16 %v429, %v420
  %v457 = vpack.c.b16 %v430, %v421
  %v458 = vpack.c.b16 %v431, %v422
  %v459 = vpack.c.b16 %v432, %v423
  %v460 = vpack.c.b16 %v433, %v424
  %v461 = vpack.c.b16 %v434, %v425
  %v462 = vpack.c.b16 %v444, %v435
  %v463 = vpack.c.b16 %v445, %v436
  %v464 = vpack.c.b16 %v446, %v437
  %v465 = vpack.c.b16 %v447, %v438
  %v466 = vpack.c.b16 %v448, %v439
  %v467 = vpack.c.b16 %v449, %v440
  %v468 = vpack.c.b16 %v450, %v441
  %v469 = vpack.c.b16 %v451, %v442
  %v470 = vpack.c.b16 %v452, %v443
  %489 = vmatpush.bf16.msra.mxu0 %v312
  %490 = vmatpush.bf16.msra.mxu0 %v311
  %491 = vmatpush.bf16.msra.mxu0 %v310
  %492 = vmatpush.bf16.msra.mxu0 %v309
  %493 = vmatpush.bf16.msra.mxu0 %v308
  %494 = vmatpush.bf16.msra.mxu0 %v307
  %495 = vmatpush.bf16.msra.mxu0 %v306
  %496 = vmatpush.bf16.msra.mxu0 %v305
  %497 = vmatmul.bf16.gmra.mxu0 %v453
  %v498 = vpop.f32.mrf.mxu0
  %v499 = vadd.f32 0.0, %v498
  %v500 = vpop.f32.mrf.mxu0
  %v501 = vadd.f32 0.0, %v500
  %502 = vmatmul.bf16.gmra.mxu0 %v462
  %v503 = vpop.f32.mrf.mxu0
  %v504 = vadd.f32 0.0, %v503
  %v505 = vpop.f32.mrf.mxu0
  %v506 = vadd.f32 0.0, %v505
  %507 = vdwg.mxu0
  %508 = vmatpush.bf16.msra.mxu0 %v320
  %509 = vmatpush.bf16.msra.mxu0 %v319
  %510 = vmatpush.bf16.msra.mxu0 %v318
  %511 = vmatpush.bf16.msra.mxu0 %v317
  %512 = vmatpush.bf16.msra.mxu0 %v316
  %513 = vmatpush.bf16.msra.mxu0 %v315
  %514 = vmatpush.bf16.msra.mxu0 %v314
  %515 = vmatpush.bf16.msra.mxu0 %v313
  %516 = vmatmul.bf16.gmra.mxu0 %v454
  %v517 = vpop.f32.mrf.mxu0
  %v518 = vadd.f32 %v499, %v517
  %v519 = vpop.f32.mrf.mxu0
  %v520 = vadd.f32 %v501, %v519
  %521 = vmatmul.bf16.gmra.mxu0 %v463
  %v522 = vpop.f32.mrf.mxu0
  %v523 = vadd.f32 %v504, %v522
  %v524 = vpop.f32.mrf.mxu0
  %v525 = vadd.f32 %v506, %v524
  %526 = vdwg.mxu0
  %527 = vmatpush.bf16.msra.mxu0 %v328
  %528 = vmatpush.bf16.msra.mxu0 %v327
  %529 = vmatpush.bf16.msra.mxu0 %v326
  %530 = vmatpush.bf16.msra.mxu0 %v325
  %531 = vmatpush.bf16.msra.mxu0 %v324
  %532 = vmatpush.bf16.msra.mxu0 %v323
  %533 = vmatpush.bf16.msra.mxu0 %v322
  %534 = vmatpush.bf16.msra.mxu0 %v321
  %535 = vmatmul.bf16.gmra.mxu0 %v455
  %v536 = vpop.f32.mrf.mxu0
  %v537 = vadd.f32 %v518, %v536
  %v538 = vpop.f32.mrf.mxu0
  %v539 = vadd.f32 %v520, %v538
  %540 = vmatmul.bf16.gmra.mxu0 %v464
  %v541 = vpop.f32.mrf.mxu0
  %v542 = vadd.f32 %v523, %v541
  %v543 = vpop.f32.mrf.mxu0
  %v544 = vadd.f32 %v525, %v543
  %545 = vdwg.mxu0
  %546 = vmatpush.bf16.msra.mxu0 %v336
  %547 = vmatpush.bf16.msra.mxu0 %v335
  %548 = vmatpush.bf16.msra.mxu0 %v334
  %549 = vmatpush.bf16.msra.mxu0 %v333
  %550 = vmatpush.bf16.msra.mxu0 %v332
  %551 = vmatpush.bf16.msra.mxu0 %v331
  %552 = vmatpush.bf16.msra.mxu0 %v330
  %553 = vmatpush.bf16.msra.mxu0 %v329
  %554 = vmatmul.bf16.gmra.mxu0 %v456
  %v555 = vpop.f32.mrf.mxu0
  %v556 = vadd.f32 %v537, %v555
  %v557 = vpop.f32.mrf.mxu0
  %v558 = vadd.f32 %v539, %v557
  %559 = vmatmul.bf16.gmra.mxu0 %v465
  %v560 = vpop.f32.mrf.mxu0
  %v561 = vadd.f32 %v542, %v560
  %v562 = vpop.f32.mrf.mxu0
  %v563 = vadd.f32 %v544, %v562
  %564 = vdwg.mxu0
  %565 = vmatpush.bf16.msra.mxu0 %v344
  %566 = vmatpush.bf16.msra.mxu0 %v343
  %567 = vmatpush.bf16.msra.mxu0 %v342
  %568 = vmatpush.bf16.msra.mxu0 %v341
  %569 = vmatpush.bf16.msra.mxu0 %v340
  %570 = vmatpush.bf16.msra.mxu0 %v339
  %571 = vmatpush.bf16.msra.mxu0 %v338
  %572 = vmatpush.bf16.msra.mxu0 %v337
  %573 = vmatmul.bf16.gmra.mxu0 %v457
  %v574 = vpop.f32.mrf.mxu0
  %v575 = vadd.f32 %v556, %v574
  %v576 = vpop.f32.mrf.mxu0
  %v577 = vadd.f32 %v558, %v576
  %578 = vmatmul.bf16.gmra.mxu0 %v466
  %v579 = vpop.f32.mrf.mxu0
  %v580 = vadd.f32 %v561, %v579
  %v581 = vpop.f32.mrf.mxu0
  %v582 = vadd.f32 %v563, %v581
  %583 = vdwg.mxu0
  %584 = vmatpush.bf16.msra.mxu0 %v352
  %585 = vmatpush.bf16.msra.mxu0 %v351
  %586 = vmatpush.bf16.msra.mxu0 %v350
  %587 = vmatpush.bf16.msra.mxu0 %v349
  %588 = vmatpush.bf16.msra.mxu0 %v348
  %589 = vmatpush.bf16.msra.mxu0 %v347
  %590 = vmatpush.bf16.msra.mxu0 %v346
  %591 = vmatpush.bf16.msra.mxu0 %v345
  %592 = vmatmul.bf16.gmra.mxu0 %v458
  %v593 = vpop.f32.mrf.mxu0
  %v594 = vadd.f32 %v575, %v593
  %v595 = vpop.f32.mrf.mxu0
  %v596 = vadd.f32 %v577, %v595
  %597 = vmatmul.bf16.gmra.mxu0 %v467
  %v598 = vpop.f32.mrf.mxu0
  %v599 = vadd.f32 %v580, %v598
  %v600 = vpop.f32.mrf.mxu0
  %v601 = vadd.f32 %v582, %v600
  %602 = vdwg.mxu0
  %603 = vmatpush.bf16.msra.mxu0 %v360
  %604 = vmatpush.bf16.msra.mxu0 %v359
  %605 = vmatpush.bf16.msra.mxu0 %v358
  %606 = vmatpush.bf16.msra.mxu0 %v357
  %607 = vmatpush.bf16.msra.mxu0 %v356
  %608 = vmatpush.bf16.msra.mxu0 %v355
  %609 = vmatpush.bf16.msra.mxu0 %v354
  %610 = vmatpush.bf16.msra.mxu0 %v353
  %611 = vmatmul.bf16.gmra.mxu0 %v459
  %v612 = vpop.f32.mrf.mxu0
  %v613 = vadd.f32 %v594, %v612
  %v614 = vpop.f32.mrf.mxu0
  %v615 = vadd.f32 %v596, %v614
  %616 = vmatmul.bf16.gmra.mxu0 %v468
  %v617 = vpop.f32.mrf.mxu0
  %v618 = vadd.f32 %v599, %v617
  %v619 = vpop.f32.mrf.mxu0
  %v620 = vadd.f32 %v601, %v619
  %621 = vdwg.mxu0
  %622 = vmatpush.bf16.msra.mxu0 %v368
  %623 = vmatpush.bf16.msra.mxu0 %v367
  %624 = vmatpush.bf16.msra.mxu0 %v366
  %625 = vmatpush.bf16.msra.mxu0 %v365
  %626 = vmatpush.bf16.msra.mxu0 %v364
  %627 = vmatpush.bf16.msra.mxu0 %v363
  %628 = vmatpush.bf16.msra.mxu0 %v362
  %629 = vmatpush.bf16.msra.mxu0 %v361
  %630 = vmatmul.bf16.gmra.mxu0 %v460
  %v631 = vpop.f32.mrf.mxu0
  %v632 = vadd.f32 %v613, %v631
  %v633 = vpop.f32.mrf.mxu0
  %v634 = vadd.f32 %v615, %v633
  %635 = vmatmul.bf16.gmra.mxu0 %v469
  %v636 = vpop.f32.mrf.mxu0
  %v637 = vadd.f32 %v618, %v636
  %v638 = vpop.f32.mrf.mxu0
  %v639 = vadd.f32 %v620, %v638
  %640 = vdwg.mxu0
  %641 = vmatpush.bf16.msra.mxu0 %v376
  %642 = vmatpush.bf16.msra.mxu0 %v375
  %643 = vmatpush.bf16.msra.mxu0 %v374
  %644 = vmatpush.bf16.msra.mxu0 %v373
  %645 = vmatpush.bf16.msra.mxu0 %v372
  %646 = vmatpush.bf16.msra.mxu0 %v371
  %647 = vmatpush.bf16.msra.mxu0 %v370
  %648 = vmatpush.bf16.msra.mxu0 %v369
  %649 = vmatmul.bf16.gmra.mxu0 %v461
  %v650 = vpop.f32.mrf.mxu0
  %v651 = vadd.f32 %v632, %v650
  %v652 = vpop.f32.mrf.mxu0
  %v653 = vadd.f32 %v634, %v652
  %654 = vmatmul.bf16.gmra.mxu0 %v470
  %v655 = vpop.f32.mrf.mxu0
  %v656 = vadd.f32 %v637, %v655
  %v657 = vpop.f32.mrf.mxu0
  %v658 = vadd.f32 %v639, %v657
  %659 = vdwg.mxu0
  %vm660 = vcmask 64512
  %661 = vst.msk [vmem:[%s4] sm:$0xff] %vm660, %v651
  %662 = vst.msk [vmem:[%s4 + $0x8] sm:$0xff] %vm660, %v653
  %663 = vst.msk [vmem:[%s4 + $0x10] sm:$0xff] %vm660, %v656
  %664 = vst.msk [vmem:[%s4 + $0x18] sm:$0xff] %vm660, %v658
  %s665 = scalar_lea.vmem %s1, 144
  %v666 = vld [vmem:[%s665] sm:$0xff]
  %v667 = vld [vmem:[%s665 + $0x8] sm:$0xff]
  %v668 = vld [vmem:[%s665 + $0x10] sm:$0xff]
  %v669 = vld [vmem:[%s665 + $0x18] sm:$0xff]
  %v670 = vld [vmem:[%s665 + $0x20] sm:$0xf]
  %v671 = vld [vmem:[%s665 + $0x24] sm:$0xff]
  %v672 = vld [vmem:[%s665 + $0x2c] sm:$0xff]
  %v673 = vld [vmem:[%s665 + $0x34] sm:$0xff]
  %v674 = vld [vmem:[%s665 + $0x3c] sm:$0xff]
  %v675 = vld [vmem:[%s665 + $0x44] sm:$0xf]
  %v676 = vld [vmem:[%s665 + $0x48] sm:$0xff]
  %v677 = vld [vmem:[%s665 + $0x50] sm:$0xff]
  %v678 = vld [vmem:[%s665 + $0x58] sm:$0xff]
  %v679 = vld [vmem:[%s665 + $0x60] sm:$0xff]
  %v680 = vld [vmem:[%s665 + $0x68] sm:$0xf]
  %v681 = vld [vmem:[%s665 + $0x6c] sm:$0xff]
  %v682 = vld [vmem:[%s665 + $0x74] sm:$0xff]
  %v683 = vld [vmem:[%s665 + $0x7c] sm:$0xff]
  %v684 = vld [vmem:[%s665 + $0x84] sm:$0xff]
  %v685 = vld [vmem:[%s665 + $0x8c] sm:$0xf]
  %v706 = vunpack.c.l.b16 %v666
  %v707 = vunpack.c.h.b16 %v666
  %v708 = vunpack.c.l.b16 %v667
  %v709 = vunpack.c.h.b16 %v667
  %v710 = vunpack.c.l.b16 %v668
  %v711 = vunpack.c.h.b16 %v668
  %v712 = vunpack.c.l.b16 %v669
  %v713 = vunpack.c.h.b16 %v669
  %v714 = vunpack.c.l.b16 %v670
  %v715 = vunpack.c.l.b16 %v671
  %v716 = vunpack.c.h.b16 %v671
  %v717 = vunpack.c.l.b16 %v672
  %v718 = vunpack.c.h.b16 %v672
  %v719 = vunpack.c.l.b16 %v673
  %v720 = vunpack.c.h.b16 %v673
  %v721 = vunpack.c.l.b16 %v674
  %v722 = vunpack.c.h.b16 %v674
  %v723 = vunpack.c.l.b16 %v675
  %v724 = vunpack.c.l.b16 %v676
  %v725 = vunpack.c.h.b16 %v676
  %v726 = vunpack.c.l.b16 %v677
  %v727 = vunpack.c.h.b16 %v677
  %v728 = vunpack.c.l.b16 %v678
  %v729 = vunpack.c.h.b16 %v678
  %v730 = vunpack.c.l.b16 %v679
  %v731 = vunpack.c.h.b16 %v679
  %v732 = vunpack.c.l.b16 %v680
  %v733 = vunpack.c.l.b16 %v681
  %v734 = vunpack.c.h.b16 %v681
  %v735 = vunpack.c.l.b16 %v682
  %v736 = vunpack.c.h.b16 %v682
  %v737 = vunpack.c.l.b16 %v683
  %v738 = vunpack.c.h.b16 %v683
  %v739 = vunpack.c.l.b16 %v684
  %v740 = vunpack.c.h.b16 %v684
  %v741 = vunpack.c.l.b16 %v685
  %v742 = vpack.c.b16 %v715, %v706
  %v743 = vpack.c.b16 %v716, %v707
  %v744 = vpack.c.b16 %v717, %v708
  %v745 = vpack.c.b16 %v718, %v709
  %v746 = vpack.c.b16 %v719, %v710
  %v747 = vpack.c.b16 %v720, %v711
  %v748 = vpack.c.b16 %v721, %v712
  %v749 = vpack.c.b16 %v722, %v713
  %v750 = vpack.c.b16 %v723, %v714
  %v751 = vpack.c.b16 %v733, %v724
  %v752 = vpack.c.b16 %v734, %v725
  %v753 = vpack.c.b16 %v735, %v726
  %v754 = vpack.c.b16 %v736, %v727
  %v755 = vpack.c.b16 %v737, %v728
  %v756 = vpack.c.b16 %v738, %v729
  %v757 = vpack.c.b16 %v739, %v730
  %v758 = vpack.c.b16 %v740, %v731
  %v759 = vpack.c.b16 %v741, %v732
  %778 = vmatpush.bf16.msra.mxu0 %v312
  %779 = vmatpush.bf16.msra.mxu0 %v311
  %780 = vmatpush.bf16.msra.mxu0 %v310
  %781 = vmatpush.bf16.msra.mxu0 %v309
  %782 = vmatpush.bf16.msra.mxu0 %v308
  %783 = vmatpush.bf16.msra.mxu0 %v307
  %784 = vmatpush.bf16.msra.mxu0 %v306
  %785 = vmatpush.bf16.msra.mxu0 %v305
  %786 = vmatmul.bf16.gmra.mxu0 %v742
  %v787 = vpop.f32.mrf.mxu0
  %v788 = vadd.f32 0.0, %v787
  %v789 = vpop.f32.mrf.mxu0
  %v790 = vadd.f32 0.0, %v789
  %791 = vmatmul.bf16.gmra.mxu0 %v751
  %v792 = vpop.f32.mrf.mxu0
  %v793 = vadd.f32 0.0, %v792
  %v794 = vpop.f32.mrf.mxu0
  %v795 = vadd.f32 0.0, %v794
  %796 = vdwg.mxu0
  %797 = vmatpush.bf16.msra.mxu0 %v320
  %798 = vmatpush.bf16.msra.mxu0 %v319
  %799 = vmatpush.bf16.msra.mxu0 %v318
  %800 = vmatpush.bf16.msra.mxu0 %v317
  %801 = vmatpush.bf16.msra.mxu0 %v316
  %802 = vmatpush.bf16.msra.mxu0 %v315
  %803 = vmatpush.bf16.msra.mxu0 %v314
  %804 = vmatpush.bf16.msra.mxu0 %v313
  %805 = vmatmul.bf16.gmra.mxu0 %v743
  %v806 = vpop.f32.mrf.mxu0
  %v807 = vadd.f32 %v788, %v806
  %v808 = vpop.f32.mrf.mxu0
  %v809 = vadd.f32 %v790, %v808
  %810 = vmatmul.bf16.gmra.mxu0 %v752
  %v811 = vpop.f32.mrf.mxu0
  %v812 = vadd.f32 %v793, %v811
  %v813 = vpop.f32.mrf.mxu0
  %v814 = vadd.f32 %v795, %v813
  %815 = vdwg.mxu0
  %816 = vmatpush.bf16.msra.mxu0 %v328
  %817 = vmatpush.bf16.msra.mxu0 %v327
  %818 = vmatpush.bf16.msra.mxu0 %v326
  %819 = vmatpush.bf16.msra.mxu0 %v325
  %820 = vmatpush.bf16.msra.mxu0 %v324
  %821 = vmatpush.bf16.msra.mxu0 %v323
  %822 = vmatpush.bf16.msra.mxu0 %v322
  %823 = vmatpush.bf16.msra.mxu0 %v321
  %824 = vmatmul.bf16.gmra.mxu0 %v744
  %v825 = vpop.f32.mrf.mxu0
  %v826 = vadd.f32 %v807, %v825
  %v827 = vpop.f32.mrf.mxu0
  %v828 = vadd.f32 %v809, %v827
  %829 = vmatmul.bf16.gmra.mxu0 %v753
  %v830 = vpop.f32.mrf.mxu0
  %v831 = vadd.f32 %v812, %v830
  %v832 = vpop.f32.mrf.mxu0
  %v833 = vadd.f32 %v814, %v832
  %834 = vdwg.mxu0
  %835 = vmatpush.bf16.msra.mxu0 %v336
  %836 = vmatpush.bf16.msra.mxu0 %v335
  %837 = vmatpush.bf16.msra.mxu0 %v334
  %838 = vmatpush.bf16.msra.mxu0 %v333
  %839 = vmatpush.bf16.msra.mxu0 %v332
  %840 = vmatpush.bf16.msra.mxu0 %v331
  %841 = vmatpush.bf16.msra.mxu0 %v330
  %842 = vmatpush.bf16.msra.mxu0 %v329
  %843 = vmatmul.bf16.gmra.mxu0 %v745
  %v844 = vpop.f32.mrf.mxu0
  %v845 = vadd.f32 %v826, %v844
  %v846 = vpop.f32.mrf.mxu0
  %v847 = vadd.f32 %v828, %v846
  %848 = vmatmul.bf16.gmra.mxu0 %v754
  %v849 = vpop.f32.mrf.mxu0
  %v850 = vadd.f32 %v831, %v849
  %v851 = vpop.f32.mrf.mxu0
  %v852 = vadd.f32 %v833, %v851
  %853 = vdwg.mxu0
  %854 = vmatpush.bf16.msra.mxu0 %v344
  %855 = vmatpush.bf16.msra.mxu0 %v343
  %856 = vmatpush.bf16.msra.mxu0 %v342
  %857 = vmatpush.bf16.msra.mxu0 %v341
  %858 = vmatpush.bf16.msra.mxu0 %v340
  %859 = vmatpush.bf16.msra.mxu0 %v339
  %860 = vmatpush.bf16.msra.mxu0 %v338
  %861 = vmatpush.bf16.msra.mxu0 %v337
  %862 = vmatmul.bf16.gmra.mxu0 %v746
  %v863 = vpop.f32.mrf.mxu0
  %v864 = vadd.f32 %v845, %v863
  %v865 = vpop.f32.mrf.mxu0
  %v866 = vadd.f32 %v847, %v865
  %867 = vmatmul.bf16.gmra.mxu0 %v755
  %v868 = vpop.f32.mrf.mxu0
  %v869 = vadd.f32 %v850, %v868
  %v870 = vpop.f32.mrf.mxu0
  %v871 = vadd.f32 %v852, %v870
  %872 = vdwg.mxu0
  %873 = vmatpush.bf16.msra.mxu0 %v352
  %874 = vmatpush.bf16.msra.mxu0 %v351
  %875 = vmatpush.bf16.msra.mxu0 %v350
  %876 = vmatpush.bf16.msra.mxu0 %v349
  %877 = vmatpush.bf16.msra.mxu0 %v348
  %878 = vmatpush.bf16.msra.mxu0 %v347
  %879 = vmatpush.bf16.msra.mxu0 %v346
  %880 = vmatpush.bf16.msra.mxu0 %v345
  %881 = vmatmul.bf16.gmra.mxu0 %v747
  %v882 = vpop.f32.mrf.mxu0
  %v883 = vadd.f32 %v864, %v882
  %v884 = vpop.f32.mrf.mxu0
  %v885 = vadd.f32 %v866, %v884
  %886 = vmatmul.bf16.gmra.mxu0 %v756
  %v887 = vpop.f32.mrf.mxu0
  %v888 = vadd.f32 %v869, %v887
  %v889 = vpop.f32.mrf.mxu0
  %v890 = vadd.f32 %v871, %v889
  %891 = vdwg.mxu0
  %892 = vmatpush.bf16.msra.mxu0 %v360
  %893 = vmatpush.bf16.msra.mxu0 %v359
  %894 = vmatpush.bf16.msra.mxu0 %v358
  %895 = vmatpush.bf16.msra.mxu0 %v357
  %896 = vmatpush.bf16.msra.mxu0 %v356
  %897 = vmatpush.bf16.msra.mxu0 %v355
  %898 = vmatpush.bf16.msra.mxu0 %v354
  %899 = vmatpush.bf16.msra.mxu0 %v353
  %900 = vmatmul.bf16.gmra.mxu0 %v748
  %v901 = vpop.f32.mrf.mxu0
  %v902 = vadd.f32 %v883, %v901
  %v903 = vpop.f32.mrf.mxu0
  %v904 = vadd.f32 %v885, %v903
  %905 = vmatmul.bf16.gmra.mxu0 %v757
  %v906 = vpop.f32.mrf.mxu0
  %v907 = vadd.f32 %v888, %v906
  %v908 = vpop.f32.mrf.mxu0
  %v909 = vadd.f32 %v890, %v908
  %910 = vdwg.mxu0
  %911 = vmatpush.bf16.msra.mxu0 %v368
  %912 = vmatpush.bf16.msra.mxu0 %v367
  %913 = vmatpush.bf16.msra.mxu0 %v366
  %914 = vmatpush.bf16.msra.mxu0 %v365
  %915 = vmatpush.bf16.msra.mxu0 %v364
  %916 = vmatpush.bf16.msra.mxu0 %v363
  %917 = vmatpush.bf16.msra.mxu0 %v362
  %918 = vmatpush.bf16.msra.mxu0 %v361
  %919 = vmatmul.bf16.gmra.mxu0 %v749
  %v920 = vpop.f32.mrf.mxu0
  %v921 = vadd.f32 %v902, %v920
  %v922 = vpop.f32.mrf.mxu0
  %v923 = vadd.f32 %v904, %v922
  %924 = vmatmul.bf16.gmra.mxu0 %v758
  %v925 = vpop.f32.mrf.mxu0
  %v926 = vadd.f32 %v907, %v925
  %v927 = vpop.f32.mrf.mxu0
  %v928 = vadd.f32 %v909, %v927
  %929 = vdwg.mxu0
  %930 = vmatpush.bf16.msra.mxu0 %v376
  %931 = vmatpush.bf16.msra.mxu0 %v375
  %932 = vmatpush.bf16.msra.mxu0 %v374
  %933 = vmatpush.bf16.msra.mxu0 %v373
  %934 = vmatpush.bf16.msra.mxu0 %v372
  %935 = vmatpush.bf16.msra.mxu0 %v371
  %936 = vmatpush.bf16.msra.mxu0 %v370
  %937 = vmatpush.bf16.msra.mxu0 %v369
  %938 = vmatmul.bf16.gmra.mxu0 %v750
  %v939 = vpop.f32.mrf.mxu0
  %v940 = vadd.f32 %v921, %v939
  %v941 = vpop.f32.mrf.mxu0
  %v942 = vadd.f32 %v923, %v941
  %943 = vmatmul.bf16.gmra.mxu0 %v759
  %v944 = vpop.f32.mrf.mxu0
  %v945 = vadd.f32 %v926, %v944
  %v946 = vpop.f32.mrf.mxu0
  %v947 = vadd.f32 %v928, %v946
  %948 = vdwg.mxu0
  %953 = vrot.lane.b32.xlu0 %v940, 8
  %v954 = vpop.permute.xlu0 %953
  %955 = vrot.lane.b32.xlu0 %v942, 8
  %v956 = vpop.permute.xlu0 %955
  %957 = vrot.lane.b32.xlu0 %v945, 8
  %v958 = vpop.permute.xlu0 %957
  %959 = vrot.lane.b32.xlu0 %v947, 8
  %v960 = vpop.permute.xlu0 %959
  %vm965 = vcmask 130112
  %966 = vst.msk [vmem:[%s4] sm:$0xff] %vm965, %v954
  %967 = vst.msk [vmem:[%s4 + $0x8] sm:$0xff] %vm965, %v956
  %968 = vst.msk [vmem:[%s4 + $0x10] sm:$0xff] %vm965, %v958
  %969 = vst.msk [vmem:[%s4 + $0x18] sm:$0xff] %vm965, %v960
  %s970 = scalar_lea.vmem %s1, 288
  %v971 = vld [vmem:[%s970] sm:$0xff]
  %v972 = vld [vmem:[%s970 + $0x8] sm:$0xff]
  %v973 = vld [vmem:[%s970 + $0x10] sm:$0xff]
  %v974 = vld [vmem:[%s970 + $0x18] sm:$0xff]
  %v975 = vld [vmem:[%s970 + $0x20] sm:$0xf]
  %v976 = vld [vmem:[%s970 + $0x24] sm:$0xff]
  %v977 = vld [vmem:[%s970 + $0x2c] sm:$0xff]
  %v978 = vld [vmem:[%s970 + $0x34] sm:$0xff]
  %v979 = vld [vmem:[%s970 + $0x3c] sm:$0xff]
  %v980 = vld [vmem:[%s970 + $0x44] sm:$0xf]
  %v981 = vld [vmem:[%s970 + $0x48] sm:$0xff]
  %v982 = vld [vmem:[%s970 + $0x50] sm:$0xff]
  %v983 = vld [vmem:[%s970 + $0x58] sm:$0xff]
  %v984 = vld [vmem:[%s970 + $0x60] sm:$0xff]
  %v985 = vld [vmem:[%s970 + $0x68] sm:$0xf]
  %v986 = vld [vmem:[%s970 + $0x6c] sm:$0xff]
  %v987 = vld [vmem:[%s970 + $0x74] sm:$0xff]
  %v988 = vld [vmem:[%s970 + $0x7c] sm:$0xff]
  %v989 = vld [vmem:[%s970 + $0x84] sm:$0xff]
  %v990 = vld [vmem:[%s970 + $0x8c] sm:$0xf]
  %v1011 = vunpack.c.l.b16 %v971
  %v1012 = vunpack.c.h.b16 %v971
  %v1013 = vunpack.c.l.b16 %v972
  %v1014 = vunpack.c.h.b16 %v972
  %v1015 = vunpack.c.l.b16 %v973
  %v1016 = vunpack.c.h.b16 %v973
  %v1017 = vunpack.c.l.b16 %v974
  %v1018 = vunpack.c.h.b16 %v974
  %v1019 = vunpack.c.l.b16 %v975
  %v1020 = vunpack.c.l.b16 %v976
  %v1021 = vunpack.c.h.b16 %v976
  %v1022 = vunpack.c.l.b16 %v977
  %v1023 = vunpack.c.h.b16 %v977
  %v1024 = vunpack.c.l.b16 %v978
  %v1025 = vunpack.c.h.b16 %v978
  %v1026 = vunpack.c.l.b16 %v979
  %v1027 = vunpack.c.h.b16 %v979
  %v1028 = vunpack.c.l.b16 %v980
  %v1029 = vunpack.c.l.b16 %v981
  %v1030 = vunpack.c.h.b16 %v981
  %v1031 = vunpack.c.l.b16 %v982
  %v1032 = vunpack.c.h.b16 %v982
  %v1033 = vunpack.c.l.b16 %v983
  %v1034 = vunpack.c.h.b16 %v983
  %v1035 = vunpack.c.l.b16 %v984
  %v1036 = vunpack.c.h.b16 %v984
  %v1037 = vunpack.c.l.b16 %v985
  %v1038 = vunpack.c.l.b16 %v986
  %v1039 = vunpack.c.h.b16 %v986
  %v1040 = vunpack.c.l.b16 %v987
  %v1041 = vunpack.c.h.b16 %v987
  %v1042 = vunpack.c.l.b16 %v988
  %v1043 = vunpack.c.h.b16 %v988
  %v1044 = vunpack.c.l.b16 %v989
  %v1045 = vunpack.c.h.b16 %v989
  %v1046 = vunpack.c.l.b16 %v990
  %v1047 = vpack.c.b16 %v1020, %v1011
  %v1048 = vpack.c.b16 %v1021, %v1012
  %v1049 = vpack.c.b16 %v1022, %v1013
  %v1050 = vpack.c.b16 %v1023, %v1014
  %v1051 = vpack.c.b16 %v1024, %v1015
  %v1052 = vpack.c.b16 %v1025, %v1016
  %v1053 = vpack.c.b16 %v1026, %v1017
  %v1054 = vpack.c.b16 %v1027, %v1018
  %v1055 = vpack.c.b16 %v1028, %v1019
  %v1056 = vpack.c.b16 %v1038, %v1029
  %v1057 = vpack.c.b16 %v1039, %v1030
  %v1058 = vpack.c.b16 %v1040, %v1031
  %v1059 = vpack.c.b16 %v1041, %v1032
  %v1060 = vpack.c.b16 %v1042, %v1033
  %v1061 = vpack.c.b16 %v1043, %v1034
  %v1062 = vpack.c.b16 %v1044, %v1035
  %v1063 = vpack.c.b16 %v1045, %v1036
  %v1064 = vpack.c.b16 %v1046, %v1037
  %1083 = vmatpush.bf16.msra.mxu0 %v312
  %1084 = vmatpush.bf16.msra.mxu0 %v311
  %1085 = vmatpush.bf16.msra.mxu0 %v310
  %1086 = vmatpush.bf16.msra.mxu0 %v309
  %1087 = vmatpush.bf16.msra.mxu0 %v308
  %1088 = vmatpush.bf16.msra.mxu0 %v307
  %1089 = vmatpush.bf16.msra.mxu0 %v306
  %1090 = vmatpush.bf16.msra.mxu0 %v305
  %1091 = vmatmul.bf16.gmra.mxu0 %v1047
  %v1092 = vpop.f32.mrf.mxu0
  %v1093 = vadd.f32 0.0, %v1092
  %v1094 = vpop.f32.mrf.mxu0
  %v1095 = vadd.f32 0.0, %v1094
  %1096 = vmatmul.bf16.gmra.mxu0 %v1056
  %v1097 = vpop.f32.mrf.mxu0
  %v1098 = vadd.f32 0.0, %v1097
  %v1099 = vpop.f32.mrf.mxu0
  %v1100 = vadd.f32 0.0, %v1099
  %1101 = vdwg.mxu0
  %1102 = vmatpush.bf16.msra.mxu0 %v320
  %1103 = vmatpush.bf16.msra.mxu0 %v319
  %1104 = vmatpush.bf16.msra.mxu0 %v318
  %1105 = vmatpush.bf16.msra.mxu0 %v317
  %1106 = vmatpush.bf16.msra.mxu0 %v316
  %1107 = vmatpush.bf16.msra.mxu0 %v315
  %1108 = vmatpush.bf16.msra.mxu0 %v314
  %1109 = vmatpush.bf16.msra.mxu0 %v313
  %1110 = vmatmul.bf16.gmra.mxu0 %v1048
  %v1111 = vpop.f32.mrf.mxu0
  %v1112 = vadd.f32 %v1093, %v1111
  %v1113 = vpop.f32.mrf.mxu0
  %v1114 = vadd.f32 %v1095, %v1113
  %1115 = vmatmul.bf16.gmra.mxu0 %v1057
  %v1116 = vpop.f32.mrf.mxu0
  %v1117 = vadd.f32 %v1098, %v1116
  %v1118 = vpop.f32.mrf.mxu0
  %v1119 = vadd.f32 %v1100, %v1118
  %1120 = vdwg.mxu0
  %1121 = vmatpush.bf16.msra.mxu0 %v328
  %1122 = vmatpush.bf16.msra.mxu0 %v327
  %1123 = vmatpush.bf16.msra.mxu0 %v326
  %1124 = vmatpush.bf16.msra.mxu0 %v325
  %1125 = vmatpush.bf16.msra.mxu0 %v324
  %1126 = vmatpush.bf16.msra.mxu0 %v323
  %1127 = vmatpush.bf16.msra.mxu0 %v322
  %1128 = vmatpush.bf16.msra.mxu0 %v321
  %1129 = vmatmul.bf16.gmra.mxu0 %v1049
  %v1130 = vpop.f32.mrf.mxu0
  %v1131 = vadd.f32 %v1112, %v1130
  %v1132 = vpop.f32.mrf.mxu0
  %v1133 = vadd.f32 %v1114, %v1132
  %1134 = vmatmul.bf16.gmra.mxu0 %v1058
  %v1135 = vpop.f32.mrf.mxu0
  %v1136 = vadd.f32 %v1117, %v1135
  %v1137 = vpop.f32.mrf.mxu0
  %v1138 = vadd.f32 %v1119, %v1137
  %1139 = vdwg.mxu0
  %1140 = vmatpush.bf16.msra.mxu0 %v336
  %1141 = vmatpush.bf16.msra.mxu0 %v335
  %1142 = vmatpush.bf16.msra.mxu0 %v334
  %1143 = vmatpush.bf16.msra.mxu0 %v333
  %1144 = vmatpush.bf16.msra.mxu0 %v332
  %1145 = vmatpush.bf16.msra.mxu0 %v331
  %1146 = vmatpush.bf16.msra.mxu0 %v330
  %1147 = vmatpush.bf16.msra.mxu0 %v329
  %1148 = vmatmul.bf16.gmra.mxu0 %v1050
  %v1149 = vpop.f32.mrf.mxu0
  %v1150 = vadd.f32 %v1131, %v1149
  %v1151 = vpop.f32.mrf.mxu0
  %v1152 = vadd.f32 %v1133, %v1151
  %1153 = vmatmul.bf16.gmra.mxu0 %v1059
  %v1154 = vpop.f32.mrf.mxu0
  %v1155 = vadd.f32 %v1136, %v1154
  %v1156 = vpop.f32.mrf.mxu0
  %v1157 = vadd.f32 %v1138, %v1156
  %1158 = vdwg.mxu0
  %1159 = vmatpush.bf16.msra.mxu0 %v344
  %1160 = vmatpush.bf16.msra.mxu0 %v343
  %1161 = vmatpush.bf16.msra.mxu0 %v342
  %1162 = vmatpush.bf16.msra.mxu0 %v341
  %1163 = vmatpush.bf16.msra.mxu0 %v340
  %1164 = vmatpush.bf16.msra.mxu0 %v339
  %1165 = vmatpush.bf16.msra.mxu0 %v338
  %1166 = vmatpush.bf16.msra.mxu0 %v337
  %1167 = vmatmul.bf16.gmra.mxu0 %v1051
  %v1168 = vpop.f32.mrf.mxu0
  %v1169 = vadd.f32 %v1150, %v1168
  %v1170 = vpop.f32.mrf.mxu0
  %v1171 = vadd.f32 %v1152, %v1170
  %1172 = vmatmul.bf16.gmra.mxu0 %v1060
  %v1173 = vpop.f32.mrf.mxu0
  %v1174 = vadd.f32 %v1155, %v1173
  %v1175 = vpop.f32.mrf.mxu0
  %v1176 = vadd.f32 %v1157, %v1175
  %1177 = vdwg.mxu0
  %1178 = vmatpush.bf16.msra.mxu0 %v352
  %1179 = vmatpush.bf16.msra.mxu0 %v351
  %1180 = vmatpush.bf16.msra.mxu0 %v350
  %1181 = vmatpush.bf16.msra.mxu0 %v349
  %1182 = vmatpush.bf16.msra.mxu0 %v348
  %1183 = vmatpush.bf16.msra.mxu0 %v347
  %1184 = vmatpush.bf16.msra.mxu0 %v346
  %1185 = vmatpush.bf16.msra.mxu0 %v345
  %1186 = vmatmul.bf16.gmra.mxu0 %v1052
  %v1187 = vpop.f32.mrf.mxu0
  %v1188 = vadd.f32 %v1169, %v1187
  %v1189 = vpop.f32.mrf.mxu0
  %v1190 = vadd.f32 %v1171, %v1189
  %1191 = vmatmul.bf16.gmra.mxu0 %v1061
  %v1192 = vpop.f32.mrf.mxu0
  %v1193 = vadd.f32 %v1174, %v1192
  %v1194 = vpop.f32.mrf.mxu0
  %v1195 = vadd.f32 %v1176, %v1194
  %1196 = vdwg.mxu0
  %1197 = vmatpush.bf16.msra.mxu0 %v360
  %1198 = vmatpush.bf16.msra.mxu0 %v359
  %1199 = vmatpush.bf16.msra.mxu0 %v358
  %1200 = vmatpush.bf16.msra.mxu0 %v357
  %1201 = vmatpush.bf16.msra.mxu0 %v356
  %1202 = vmatpush.bf16.msra.mxu0 %v355
  %1203 = vmatpush.bf16.msra.mxu0 %v354
  %1204 = vmatpush.bf16.msra.mxu0 %v353
  %1205 = vmatmul.bf16.gmra.mxu0 %v1053
  %v1206 = vpop.f32.mrf.mxu0
  %v1207 = vadd.f32 %v1188, %v1206
  %v1208 = vpop.f32.mrf.mxu0
  %v1209 = vadd.f32 %v1190, %v1208
  %1210 = vmatmul.bf16.gmra.mxu0 %v1062
  %v1211 = vpop.f32.mrf.mxu0
  %v1212 = vadd.f32 %v1193, %v1211
  %v1213 = vpop.f32.mrf.mxu0
  %v1214 = vadd.f32 %v1195, %v1213
  %1215 = vdwg.mxu0
  %1216 = vmatpush.bf16.msra.mxu0 %v368
  %1217 = vmatpush.bf16.msra.mxu0 %v367
  %1218 = vmatpush.bf16.msra.mxu0 %v366
  %1219 = vmatpush.bf16.msra.mxu0 %v365
  %1220 = vmatpush.bf16.msra.mxu0 %v364
  %1221 = vmatpush.bf16.msra.mxu0 %v363
  %1222 = vmatpush.bf16.msra.mxu0 %v362
  %1223 = vmatpush.bf16.msra.mxu0 %v361
  %1224 = vmatmul.bf16.gmra.mxu0 %v1054
  %v1225 = vpop.f32.mrf.mxu0
  %v1226 = vadd.f32 %v1207, %v1225
  %v1227 = vpop.f32.mrf.mxu0
  %v1228 = vadd.f32 %v1209, %v1227
  %1229 = vmatmul.bf16.gmra.mxu0 %v1063
  %v1230 = vpop.f32.mrf.mxu0
  %v1231 = vadd.f32 %v1212, %v1230
  %v1232 = vpop.f32.mrf.mxu0
  %v1233 = vadd.f32 %v1214, %v1232
  %1234 = vdwg.mxu0
  %1235 = vmatpush.bf16.msra.mxu0 %v376
  %1236 = vmatpush.bf16.msra.mxu0 %v375
  %1237 = vmatpush.bf16.msra.mxu0 %v374
  %1238 = vmatpush.bf16.msra.mxu0 %v373
  %1239 = vmatpush.bf16.msra.mxu0 %v372
  %1240 = vmatpush.bf16.msra.mxu0 %v371
  %1241 = vmatpush.bf16.msra.mxu0 %v370
  %1242 = vmatpush.bf16.msra.mxu0 %v369
  %1243 = vmatmul.bf16.gmra.mxu0 %v1055
  %v1244 = vpop.f32.mrf.mxu0
  %v1245 = vadd.f32 %v1226, %v1244
  %v1246 = vpop.f32.mrf.mxu0
  %v1247 = vadd.f32 %v1228, %v1246
  %1248 = vmatmul.bf16.gmra.mxu0 %v1064
  %v1249 = vpop.f32.mrf.mxu0
  %v1250 = vadd.f32 %v1231, %v1249
  %v1251 = vpop.f32.mrf.mxu0
  %v1252 = vadd.f32 %v1233, %v1251
  %1253 = vdwg.mxu0
  %1258 = vrot.lane.b32.xlu0 %v1245, 16
  %v1259 = vpop.permute.xlu0 %1258
  %1260 = vrot.lane.b32.xlu0 %v1247, 16
  %v1261 = vpop.permute.xlu0 %1260
  %1262 = vrot.lane.b32.xlu0 %v1250, 16
  %v1263 = vpop.permute.xlu0 %1262
  %1264 = vrot.lane.b32.xlu0 %v1252, 16
  %v1265 = vpop.permute.xlu0 %1264
  %vm1270 = vcmask 195712
  %1271 = vst.msk [vmem:[%s4] sm:$0xff] %vm1270, %v1259
  %1272 = vst.msk [vmem:[%s4 + $0x8] sm:$0xff] %vm1270, %v1261
  %1273 = vst.msk [vmem:[%s4 + $0x10] sm:$0xff] %vm1270, %v1263
  %1274 = vst.msk [vmem:[%s4 + $0x18] sm:$0xff] %vm1270, %v1265
  %s1275 = scalar_lea.vmem %s1, 432
  %v1276 = vld [vmem:[%s1275] sm:$0xff]
  %v1277 = vld [vmem:[%s1275 + $0x8] sm:$0xff]
  %v1278 = vld [vmem:[%s1275 + $0x10] sm:$0xff]
  %v1279 = vld [vmem:[%s1275 + $0x18] sm:$0xff]
  %v1280 = vld [vmem:[%s1275 + $0x20] sm:$0xf]
  %v1281 = vld [vmem:[%s1275 + $0x24] sm:$0xff]
  %v1282 = vld [vmem:[%s1275 + $0x2c] sm:$0xff]
  %v1283 = vld [vmem:[%s1275 + $0x34] sm:$0xff]
  %v1284 = vld [vmem:[%s1275 + $0x3c] sm:$0xff]
  %v1285 = vld [vmem:[%s1275 + $0x44] sm:$0xf]
  %v1286 = vld [vmem:[%s1275 + $0x48] sm:$0xff]
  %v1287 = vld [vmem:[%s1275 + $0x50] sm:$0xff]
  %v1288 = vld [vmem:[%s1275 + $0x58] sm:$0xff]
  %v1289 = vld [vmem:[%s1275 + $0x60] sm:$0xff]
  %v1290 = vld [vmem:[%s1275 + $0x68] sm:$0xf]
  %v1291 = vld [vmem:[%s1275 + $0x6c] sm:$0xff]
  %v1292 = vld [vmem:[%s1275 + $0x74] sm:$0xff]
  %v1293 = vld [vmem:[%s1275 + $0x7c] sm:$0xff]
  %v1294 = vld [vmem:[%s1275 + $0x84] sm:$0xff]
  %v1295 = vld [vmem:[%s1275 + $0x8c] sm:$0xf]
  %v1316 = vunpack.c.l.b16 %v1276
  %v1317 = vunpack.c.h.b16 %v1276
  %v1318 = vunpack.c.l.b16 %v1277
  %v1319 = vunpack.c.h.b16 %v1277
  %v1320 = vunpack.c.l.b16 %v1278
  %v1321 = vunpack.c.h.b16 %v1278
  %v1322 = vunpack.c.l.b16 %v1279
  %v1323 = vunpack.c.h.b16 %v1279
  %v1324 = vunpack.c.l.b16 %v1280
  %v1325 = vunpack.c.l.b16 %v1281
  %v1326 = vunpack.c.h.b16 %v1281
  %v1327 = vunpack.c.l.b16 %v1282
  %v1328 = vunpack.c.h.b16 %v1282
  %v1329 = vunpack.c.l.b16 %v1283
  %v1330 = vunpack.c.h.b16 %v1283
  %v1331 = vunpack.c.l.b16 %v1284
  %v1332 = vunpack.c.h.b16 %v1284
  %v1333 = vunpack.c.l.b16 %v1285
  %v1334 = vunpack.c.l.b16 %v1286
  %v1335 = vunpack.c.h.b16 %v1286
  %v1336 = vunpack.c.l.b16 %v1287
  %v1337 = vunpack.c.h.b16 %v1287
  %v1338 = vunpack.c.l.b16 %v1288
  %v1339 = vunpack.c.h.b16 %v1288
  %v1340 = vunpack.c.l.b16 %v1289
  %v1341 = vunpack.c.h.b16 %v1289
  %v1342 = vunpack.c.l.b16 %v1290
  %v1343 = vunpack.c.l.b16 %v1291
  %v1344 = vunpack.c.h.b16 %v1291
  %v1345 = vunpack.c.l.b16 %v1292
  %v1346 = vunpack.c.h.b16 %v1292
  %v1347 = vunpack.c.l.b16 %v1293
  %v1348 = vunpack.c.h.b16 %v1293
  %v1349 = vunpack.c.l.b16 %v1294
  %v1350 = vunpack.c.h.b16 %v1294
  %v1351 = vunpack.c.l.b16 %v1295
  %v1352 = vpack.c.b16 %v1325, %v1316
  %v1353 = vpack.c.b16 %v1326, %v1317
  %v1354 = vpack.c.b16 %v1327, %v1318
  %v1355 = vpack.c.b16 %v1328, %v1319
  %v1356 = vpack.c.b16 %v1329, %v1320
  %v1357 = vpack.c.b16 %v1330, %v1321
  %v1358 = vpack.c.b16 %v1331, %v1322
  %v1359 = vpack.c.b16 %v1332, %v1323
  %v1360 = vpack.c.b16 %v1333, %v1324
  %v1361 = vpack.c.b16 %v1343, %v1334
  %v1362 = vpack.c.b16 %v1344, %v1335
  %v1363 = vpack.c.b16 %v1345, %v1336
  %v1364 = vpack.c.b16 %v1346, %v1337
  %v1365 = vpack.c.b16 %v1347, %v1338
  %v1366 = vpack.c.b16 %v1348, %v1339
  %v1367 = vpack.c.b16 %v1349, %v1340
  %v1368 = vpack.c.b16 %v1350, %v1341
  %v1369 = vpack.c.b16 %v1351, %v1342
  %1388 = vmatpush.bf16.msra.mxu0 %v312
  %1389 = vmatpush.bf16.msra.mxu0 %v311
  %1390 = vmatpush.bf16.msra.mxu0 %v310
  %1391 = vmatpush.bf16.msra.mxu0 %v309
  %1392 = vmatpush.bf16.msra.mxu0 %v308
  %1393 = vmatpush.bf16.msra.mxu0 %v307
  %1394 = vmatpush.bf16.msra.mxu0 %v306
  %1395 = vmatpush.bf16.msra.mxu0 %v305
  %1396 = vmatmul.bf16.gmra.mxu0 %v1352
  %v1397 = vpop.f32.mrf.mxu0
  %v1398 = vadd.f32 0.0, %v1397
  %v1399 = vpop.f32.mrf.mxu0
  %v1400 = vadd.f32 0.0, %v1399
  %1401 = vmatmul.bf16.gmra.mxu0 %v1361
  %v1402 = vpop.f32.mrf.mxu0
  %v1403 = vadd.f32 0.0, %v1402
  %v1404 = vpop.f32.mrf.mxu0
  %v1405 = vadd.f32 0.0, %v1404
  %1406 = vdwg.mxu0
  %1407 = vmatpush.bf16.msra.mxu0 %v320
  %1408 = vmatpush.bf16.msra.mxu0 %v319
  %1409 = vmatpush.bf16.msra.mxu0 %v318
  %1410 = vmatpush.bf16.msra.mxu0 %v317
  %1411 = vmatpush.bf16.msra.mxu0 %v316
  %1412 = vmatpush.bf16.msra.mxu0 %v315
  %1413 = vmatpush.bf16.msra.mxu0 %v314
  %1414 = vmatpush.bf16.msra.mxu0 %v313
  %1415 = vmatmul.bf16.gmra.mxu0 %v1353
  %v1416 = vpop.f32.mrf.mxu0
  %v1417 = vadd.f32 %v1398, %v1416
  %v1418 = vpop.f32.mrf.mxu0
  %v1419 = vadd.f32 %v1400, %v1418
  %1420 = vmatmul.bf16.gmra.mxu0 %v1362
  %v1421 = vpop.f32.mrf.mxu0
  %v1422 = vadd.f32 %v1403, %v1421
  %v1423 = vpop.f32.mrf.mxu0
  %v1424 = vadd.f32 %v1405, %v1423
  %1425 = vdwg.mxu0
  %1426 = vmatpush.bf16.msra.mxu0 %v328
  %1427 = vmatpush.bf16.msra.mxu0 %v327
  %1428 = vmatpush.bf16.msra.mxu0 %v326
  %1429 = vmatpush.bf16.msra.mxu0 %v325
  %1430 = vmatpush.bf16.msra.mxu0 %v324
  %1431 = vmatpush.bf16.msra.mxu0 %v323
  %1432 = vmatpush.bf16.msra.mxu0 %v322
  %1433 = vmatpush.bf16.msra.mxu0 %v321
  %1434 = vmatmul.bf16.gmra.mxu0 %v1354
  %v1435 = vpop.f32.mrf.mxu0
  %v1436 = vadd.f32 %v1417, %v1435
  %v1437 = vpop.f32.mrf.mxu0
  %v1438 = vadd.f32 %v1419, %v1437
  %1439 = vmatmul.bf16.gmra.mxu0 %v1363
  %v1440 = vpop.f32.mrf.mxu0
  %v1441 = vadd.f32 %v1422, %v1440
  %v1442 = vpop.f32.mrf.mxu0
  %v1443 = vadd.f32 %v1424, %v1442
  %1444 = vdwg.mxu0
  %1445 = vmatpush.bf16.msra.mxu0 %v336
  %1446 = vmatpush.bf16.msra.mxu0 %v335
  %1447 = vmatpush.bf16.msra.mxu0 %v334
  %1448 = vmatpush.bf16.msra.mxu0 %v333
  %1449 = vmatpush.bf16.msra.mxu0 %v332
  %1450 = vmatpush.bf16.msra.mxu0 %v331
  %1451 = vmatpush.bf16.msra.mxu0 %v330
  %1452 = vmatpush.bf16.msra.mxu0 %v329
  %1453 = vmatmul.bf16.gmra.mxu0 %v1355
  %v1454 = vpop.f32.mrf.mxu0
  %v1455 = vadd.f32 %v1436, %v1454
  %v1456 = vpop.f32.mrf.mxu0
  %v1457 = vadd.f32 %v1438, %v1456
  %1458 = vmatmul.bf16.gmra.mxu0 %v1364
  %v1459 = vpop.f32.mrf.mxu0
  %v1460 = vadd.f32 %v1441, %v1459
  %v1461 = vpop.f32.mrf.mxu0
  %v1462 = vadd.f32 %v1443, %v1461
  %1463 = vdwg.mxu0
  %1464 = vmatpush.bf16.msra.mxu0 %v344
  %1465 = vmatpush.bf16.msra.mxu0 %v343
  %1466 = vmatpush.bf16.msra.mxu0 %v342
  %1467 = vmatpush.bf16.msra.mxu0 %v341
  %1468 = vmatpush.bf16.msra.mxu0 %v340
  %1469 = vmatpush.bf16.msra.mxu0 %v339
  %1470 = vmatpush.bf16.msra.mxu0 %v338
  %1471 = vmatpush.bf16.msra.mxu0 %v337
  %1472 = vmatmul.bf16.gmra.mxu0 %v1356
  %v1473 = vpop.f32.mrf.mxu0
  %v1474 = vadd.f32 %v1455, %v1473
  %v1475 = vpop.f32.mrf.mxu0
  %v1476 = vadd.f32 %v1457, %v1475
  %1477 = vmatmul.bf16.gmra.mxu0 %v1365
  %v1478 = vpop.f32.mrf.mxu0
  %v1479 = vadd.f32 %v1460, %v1478
  %v1480 = vpop.f32.mrf.mxu0
  %v1481 = vadd.f32 %v1462, %v1480
  %1482 = vdwg.mxu0
  %1483 = vmatpush.bf16.msra.mxu0 %v352
  %1484 = vmatpush.bf16.msra.mxu0 %v351
  %1485 = vmatpush.bf16.msra.mxu0 %v350
  %1486 = vmatpush.bf16.msra.mxu0 %v349
  %1487 = vmatpush.bf16.msra.mxu0 %v348
  %1488 = vmatpush.bf16.msra.mxu0 %v347
  %1489 = vmatpush.bf16.msra.mxu0 %v346
  %1490 = vmatpush.bf16.msra.mxu0 %v345
  %1491 = vmatmul.bf16.gmra.mxu0 %v1357
  %v1492 = vpop.f32.mrf.mxu0
  %v1493 = vadd.f32 %v1474, %v1492
  %v1494 = vpop.f32.mrf.mxu0
  %v1495 = vadd.f32 %v1476, %v1494
  %1496 = vmatmul.bf16.gmra.mxu0 %v1366
  %v1497 = vpop.f32.mrf.mxu0
  %v1498 = vadd.f32 %v1479, %v1497
  %v1499 = vpop.f32.mrf.mxu0
  %v1500 = vadd.f32 %v1481, %v1499
  %1501 = vdwg.mxu0
  %1502 = vmatpush.bf16.msra.mxu0 %v360
  %1503 = vmatpush.bf16.msra.mxu0 %v359
  %1504 = vmatpush.bf16.msra.mxu0 %v358
  %1505 = vmatpush.bf16.msra.mxu0 %v357
  %1506 = vmatpush.bf16.msra.mxu0 %v356
  %1507 = vmatpush.bf16.msra.mxu0 %v355
  %1508 = vmatpush.bf16.msra.mxu0 %v354
  %1509 = vmatpush.bf16.msra.mxu0 %v353
  %1510 = vmatmul.bf16.gmra.mxu0 %v1358
  %v1511 = vpop.f32.mrf.mxu0
  %v1512 = vadd.f32 %v1493, %v1511
  %v1513 = vpop.f32.mrf.mxu0
  %v1514 = vadd.f32 %v1495, %v1513
  %1515 = vmatmul.bf16.gmra.mxu0 %v1367
  %v1516 = vpop.f32.mrf.mxu0
  %v1517 = vadd.f32 %v1498, %v1516
  %v1518 = vpop.f32.mrf.mxu0
  %v1519 = vadd.f32 %v1500, %v1518
  %1520 = vdwg.mxu0
  %1521 = vmatpush.bf16.msra.mxu0 %v368
  %1522 = vmatpush.bf16.msra.mxu0 %v367
  %1523 = vmatpush.bf16.msra.mxu0 %v366
  %1524 = vmatpush.bf16.msra.mxu0 %v365
  %1525 = vmatpush.bf16.msra.mxu0 %v364
  %1526 = vmatpush.bf16.msra.mxu0 %v363
  %1527 = vmatpush.bf16.msra.mxu0 %v362
  %1528 = vmatpush.bf16.msra.mxu0 %v361
  %1529 = vmatmul.bf16.gmra.mxu0 %v1359
  %v1530 = vpop.f32.mrf.mxu0
  %v1531 = vadd.f32 %v1512, %v1530
  %v1532 = vpop.f32.mrf.mxu0
  %v1533 = vadd.f32 %v1514, %v1532
  %1534 = vmatmul.bf16.gmra.mxu0 %v1368
  %v1535 = vpop.f32.mrf.mxu0
  %v1536 = vadd.f32 %v1517, %v1535
  %v1537 = vpop.f32.mrf.mxu0
  %v1538 = vadd.f32 %v1519, %v1537
  %1539 = vdwg.mxu0
  %1540 = vmatpush.bf16.msra.mxu0 %v376
  %1541 = vmatpush.bf16.msra.mxu0 %v375
  %1542 = vmatpush.bf16.msra.mxu0 %v374
  %1543 = vmatpush.bf16.msra.mxu0 %v373
  %1544 = vmatpush.bf16.msra.mxu0 %v372
  %1545 = vmatpush.bf16.msra.mxu0 %v371
  %1546 = vmatpush.bf16.msra.mxu0 %v370
  %1547 = vmatpush.bf16.msra.mxu0 %v369
  %1548 = vmatmul.bf16.gmra.mxu0 %v1360
  %v1549 = vpop.f32.mrf.mxu0
  %v1550 = vadd.f32 %v1531, %v1549
  %v1551 = vpop.f32.mrf.mxu0
  %v1552 = vadd.f32 %v1533, %v1551
  %1553 = vmatmul.bf16.gmra.mxu0 %v1369
  %v1554 = vpop.f32.mrf.mxu0
  %v1555 = vadd.f32 %v1536, %v1554
  %v1556 = vpop.f32.mrf.mxu0
  %v1557 = vadd.f32 %v1538, %v1556
  %1558 = vdwg.mxu0
  %1563 = vrot.lane.b32.xlu0 %v1550, 24
  %v1564 = vpop.permute.xlu0 %1563
  %1565 = vrot.lane.b32.xlu0 %v1552, 24
  %v1566 = vpop.permute.xlu0 %1565
  %1567 = vrot.lane.b32.xlu0 %v1555, 24
  %v1568 = vpop.permute.xlu0 %1567
  %1569 = vrot.lane.b32.xlu0 %v1557, 24
  %v1570 = vpop.permute.xlu0 %1569
  %vm1575 = vcmask 261312
  %1576 = vst.msk [vmem:[%s4] sm:$0xff] %vm1575, %v1564
  %1577 = vst.msk [vmem:[%s4 + $0x8] sm:$0xff] %vm1575, %v1566
  %1578 = vst.msk [vmem:[%s4 + $0x10] sm:$0xff] %vm1575, %v1568
  %1579 = vst.msk [vmem:[%s4 + $0x18] sm:$0xff] %vm1575, %v1570
  %v1580 = vld [vmem:[%s4] sm:$0xff]
  %v1581 = vld [vmem:[%s4 + $0x8] sm:$0xff]
  %v1582 = vld [vmem:[%s4 + $0x10] sm:$0xff]
  %v1583 = vld [vmem:[%s4 + $0x18] sm:$0xff]
  %vm1584 = vcmask 261120
  %v1585 = vsel %vm1584, %v1580, 0.0
  %1586 = vadd.xlane.f32.xlu0 %v1585
  %v1587 = vpop.xlane.xlu0 %1586
  %v1588 = vsel %vm1584, %v1581, 0.0
  %1589 = vadd.xlane.f32.xlu0 %v1588
  %v1590 = vpop.xlane.xlu0 %1589
  %v1591 = vsel %vm1584, %v1582, 0.0
  %1592 = vadd.xlane.f32.xlu0 %v1591
  %v1593 = vpop.xlane.xlu0 %1592
  %v1594 = vsel %vm1584, %v1583, 0.0
  %1595 = vadd.xlane.f32.xlu0 %v1594
  %v1596 = vpop.xlane.xlu0 %1595
  %v1597 = vrcp.pop 32.0
  %v1598 = vmul.f32 32.0, %v1597
  %v1599 = vsub.f32 1.0, %v1598
  %v1600 = vmul.f32 %v1597, %v1599
  %v1601 = vadd.f32 %v1597, %v1600
  %vm1602 = vweird.f32 %v1597
  %v1603 = vsel %vm1602, %v1597, %v1601
  %v1604 = vmul.f32 %v1587, %v1603
  %v1605 = vmul.f32 %v1590, %v1603
  %v1606 = vmul.f32 %v1593, %v1603
  %v1607 = vmul.f32 %v1596, %v1603
  %v1608 = vsub.f32 %v1580, %v1604
  %v1609 = vsub.f32 %v1581, %v1605
  %v1610 = vsub.f32 %v1582, %v1606
  %v1611 = vsub.f32 %v1583, %v1607
  %v1612 = vmul.f32 %v1608, %v1608
  %v1613 = vmul.f32 %v1609, %v1609
  %v1614 = vmul.f32 %v1610, %v1610
  %v1615 = vmul.f32 %v1611, %v1611
  %v1616 = vsel %vm1584, %v1612, 0.0
  %1617 = vadd.xlane.f32.xlu0 %v1616
  %v1618 = vpop.xlane.xlu0 %1617
  %v1619 = vsel %vm1584, %v1613, 0.0
  %1620 = vadd.xlane.f32.xlu0 %v1619
  %v1621 = vpop.xlane.xlu0 %1620
  %v1622 = vsel %vm1584, %v1614, 0.0
  %1623 = vadd.xlane.f32.xlu0 %v1622
  %v1624 = vpop.xlane.xlu0 %1623
  %v1625 = vsel %vm1584, %v1615, 0.0
  %1626 = vadd.xlane.f32.xlu0 %v1625
  %v1627 = vpop.xlane.xlu0 %1626
  %v1628 = vmul.f32 %v1618, %v1603
  %v1629 = vmul.f32 %v1621, %v1603
  %v1630 = vmul.f32 %v1624, %v1603
  %v1631 = vmul.f32 %v1627, %v1603
  %v1632 = vld [vmem:[%s2] sm:$0xff]
  %v1633 = vld [vmem:[%s2 + $0x8] sm:$0xff]
  %v1634 = vld [vmem:[%s2 + $0x10] sm:$0xff]
  %v1635 = vld [vmem:[%s2 + $0x18] sm:$0xff]
  %v1636 = vadd.f32 %v1628, 1e-05
  %v1637 = vadd.f32 %v1629, 1e-05
  %v1638 = vadd.f32 %v1630, 1e-05
  %v1639 = vadd.f32 %v1631, 1e-05
  %v1640 = vrsqrt.pop %v1636
  %v1641 = vmul.f32 %v1640, %v1636
  %v1642 = vmul.f32 %v1641, %v1640
  %v1643 = vmul.f32 0.5, %v1642
  %v1644 = vsub.f32 1.5, %v1643
  %v1645 = vmul.f32 %v1640, %v1644
  %vm1646 = vweird.f32 %v1636
  %vm1647 = vweird.f32 %v1640
  %vm1648 = vmor %vm1646, %vm1647
  %v1649 = vsel %vm1648, %v1640, %v1645
  %v1650 = vrsqrt.pop %v1637
  %v1651 = vmul.f32 %v1650, %v1637
  %v1652 = vmul.f32 %v1651, %v1650
  %v1653 = vmul.f32 0.5, %v1652
  %v1654 = vsub.f32 1.5, %v1653
  %v1655 = vmul.f32 %v1650, %v1654
  %vm1656 = vweird.f32 %v1637
  %vm1657 = vweird.f32 %v1650
  %vm1658 = vmor %vm1656, %vm1657
  %v1659 = vsel %vm1658, %v1650, %v1655
  %v1660 = vrsqrt.pop %v1638
  %v1661 = vmul.f32 %v1660, %v1638
  %v1662 = vmul.f32 %v1661, %v1660
  %v1663 = vmul.f32 0.5, %v1662
  %v1664 = vsub.f32 1.5, %v1663
  %v1665 = vmul.f32 %v1660, %v1664
  %vm1666 = vweird.f32 %v1638
  %vm1667 = vweird.f32 %v1660
  %vm1668 = vmor %vm1666, %vm1667
  %v1669 = vsel %vm1668, %v1660, %v1665
  %v1670 = vrsqrt.pop %v1639
  %v1671 = vmul.f32 %v1670, %v1639
  %v1672 = vmul.f32 %v1671, %v1670
  %v1673 = vmul.f32 0.5, %v1672
  %v1674 = vsub.f32 1.5, %v1673
  %v1675 = vmul.f32 %v1670, %v1674
  %vm1676 = vweird.f32 %v1639
  %vm1677 = vweird.f32 %v1670
  %vm1678 = vmor %vm1676, %vm1677
  %v1679 = vsel %vm1678, %v1670, %v1675
  %v1680 = vmul.f32 %v1632, %v1649
  %v1681 = vmul.f32 %v1633, %v1659
  %v1682 = vmul.f32 %v1634, %v1669
  %v1683 = vmul.f32 %v1635, %v1679
  %v1684 = vld [vmem:[%s3] sm:$0xff]
  %v1685 = vld [vmem:[%s3 + $0x8] sm:$0xff]
  %v1686 = vld [vmem:[%s3 + $0x10] sm:$0xff]
  %v1687 = vld [vmem:[%s3 + $0x18] sm:$0xff]
  %v1688 = vmul.f32 %v1604, %v1680
  %v1689 = vmul.f32 %v1605, %v1681
  %v1690 = vmul.f32 %v1606, %v1682
  %v1691 = vmul.f32 %v1607, %v1683
  %v1692 = vsub.f32 %v1684, %v1688
  %v1693 = vsub.f32 %v1685, %v1689
  %v1694 = vsub.f32 %v1686, %v1690
  %v1695 = vsub.f32 %v1687, %v1691
  %1697 = vset.pattern.permute.xlu0 0
  %1698 = vperm.xlu0 %1697, %v1680
  %v1699 = vpop.permute.xlu0 %1698
  %1702 = vset.pattern.permute.xlu0 0
  %1703 = vperm.xlu0 %1702, %v1681
  %v1704 = vpop.permute.xlu0 %1703
  %1707 = vset.pattern.permute.xlu0 0
  %1708 = vperm.xlu0 %1707, %v1682
  %v1709 = vpop.permute.xlu0 %1708
  %1712 = vset.pattern.permute.xlu0 0
  %1713 = vperm.xlu0 %1712, %v1683
  %v1714 = vpop.permute.xlu0 %1713
  %v1716 = vmul.f32 %v1580, %v1699
  %v1717 = vmul.f32 %v1581, %v1704
  %v1718 = vmul.f32 %v1582, %v1709
  %v1719 = vmul.f32 %v1583, %v1714
  %1721 = vset.pattern.permute.xlu0 0
  %1722 = vperm.xlu0 %1721, %v1692
  %v1723 = vpop.permute.xlu0 %1722
  %1726 = vset.pattern.permute.xlu0 0
  %1727 = vperm.xlu0 %1726, %v1693
  %v1728 = vpop.permute.xlu0 %1727
  %1731 = vset.pattern.permute.xlu0 0
  %1732 = vperm.xlu0 %1731, %v1694
  %v1733 = vpop.permute.xlu0 %1732
  %1736 = vset.pattern.permute.xlu0 0
  %1737 = vperm.xlu0 %1736, %v1695
  %v1738 = vpop.permute.xlu0 %1737
  %v1740 = vadd.f32 %v1716, %v1723
  %v1741 = vadd.f32 %v1717, %v1728
  %v1742 = vadd.f32 %v1718, %v1733
  %v1743 = vadd.f32 %v1719, %v1738
  %1744 = vst.msk [vmem:[%s4] sm:$0xff] %vm1584, %v1740
  %1745 = vst.msk [vmem:[%s4 + $0x8] sm:$0xff] %vm1584, %v1741
  %1746 = vst.msk [vmem:[%s4 + $0x10] sm:$0xff] %vm1584, %v1742
  %1747 = vst.msk [vmem:[%s4 + $0x18] sm:$0xff] %vm1584, %v1743
  // Predicated region
  $region18: #{unet_forward.16} parent=0 // pred_check
    _
  $region19: #{unet_forward.16} parent=0 // pred_check_branch
    %1749 = sbr.rel (0) target = $region21
  $region20: #{unet_forward.16} parent=0 // pred_region
    _
  $region21: #{unet_forward.16} parent=0 // pred_fallthru
    _
  // Predicated region
  $region22: #{unet_forward.16} parent=0 // pred_check
    _
  $region23: #{unet_forward.16} parent=0 // pred_check_branch
    %1751 = sbr.rel (0) target = $region25
  $region24: #{unet_forward.16} parent=0 // pred_region
    _
  $region25: #{unet_forward.16} parent=0 // pred_fallthru
    _

// kernel: unet_forward.17
$region0: #{unet_forward.17}
  #allocation0 [shape = 'u32[]', space=smem, size = 0x4, offset = 0x4, fixed_abs, tag = 'smem constant byte address 0x4 - core index']
  #allocation1 [shape = 'u32[72,128]{1,0:T(1,128)}', space=vmem, size = 0x9000, scoped, tag = 'internal scratch']
  %s0 = inlined_call_operand.vmem [shape: f32[576,32], index: 0, kind: input, shape index: {}]
  %s1 = inlined_call_operand.vmem [shape: bf16[4,16,576], index: 1, kind: input, shape index: {}]
  %s2 = inlined_call_operand.vmem [shape: f32[16,1], index: 2, kind: input, shape index: {}]
  %s3 = inlined_call_operand.vmem [shape: f32[16,1], index: 3, kind: input, shape index: {}]
  %s4 = inlined_call_operand.vmem [shape: f32[16,128], index: 4, kind: output, shape index: {}]
  %s5 = sld [smem:[#allocation0]]
  $region26: #{unet_forward.17} parent=0
    _
  %s7 = ssub.s32 1, %s5
  %s8 = scalar_select 0, %s7, %s5
  // Predicated region
  $region2: #{unet_forward.17} parent=0 // pred_check
    _
  $region3: #{unet_forward.17} parent=0 // pred_check_branch
    %10 = sbr.rel (0) target = $region5
  $region4: #{unet_forward.17} parent=0 // pred_region
    _
  $region5: #{unet_forward.17} parent=0 // pred_fallthru
    _
  // Predicated region
  $region6: #{unet_forward.17} parent=0 // pred_check
    _
  $region7: #{unet_forward.17} parent=0 // pred_check_branch
    %12 = sbr.rel (0) target = $region9
  $region8: #{unet_forward.17} parent=0 // pred_region
    _
  $region9: #{unet_forward.17} parent=0 // pred_fallthru
    _
  // Predicated region
  $region10: #{unet_forward.17} parent=0 // pred_check
    _
  $region11: #{unet_forward.17} parent=0 // pred_check_branch
    %14 = sbr.rel (0) target = $region13
  $region12: #{unet_forward.17} parent=0 // pred_region
    _
  $region13: #{unet_forward.17} parent=0 // pred_fallthru
    _
  // Predicated region
  $region14: #{unet_forward.17} parent=0 // pred_check
    _
  $region15: #{unet_forward.17} parent=0 // pred_check_branch
    %16 = sbr.rel (0) target = $region17
  $region16: #{unet_forward.17} parent=0 // pred_region
    _
  $region17: #{unet_forward.17} parent=0 // pred_fallthru
    _
  %v18 = vld [vmem:[%s0] sm:$0xff]
  %v19 = vld [vmem:[%s0 + $0x8] sm:$0xff]
  %v20 = vld [vmem:[%s0 + $0x10] sm:$0xff]
  %v21 = vld [vmem:[%s0 + $0x18] sm:$0xff]
  %v22 = vld [vmem:[%s0 + $0x20] sm:$0xff]
  %v23 = vld [vmem:[%s0 + $0x28] sm:$0xff]
  %v24 = vld [vmem:[%s0 + $0x30] sm:$0xff]
  %v25 = vld [vmem:[%s0 + $0x38] sm:$0xff]
  %v26 = vld [vmem:[%s0 + $0x40] sm:$0xff]
  %v27 = vld [vmem:[%s0 + $0x48] sm:$0xff]
  %v28 = vld [vmem:[%s0 + $0x50] sm:$0xff]
  %v29 = vld [vmem:[%s0 + $0x58] sm:$0xff]
  %v30 = vld [vmem:[%s0 + $0x60] sm:$0xff]
  %v31 = vld [vmem:[%s0 + $0x68] sm:$0xff]
  %v32 = vld [vmem:[%s0 + $0x70] sm:$0xff]
  %v33 = vld [vmem:[%s0 + $0x78] sm:$0xff]
  %v34 = vld [vmem:[%s0 + $0x80] sm:$0xff]
  %v35 = vld [vmem:[%s0 + $0x88] sm:$0xff]
  %v36 = vld [vmem:[%s0 + $0x90] sm:$0xff]
  %v37 = vld [vmem:[%s0 + $0x98] sm:$0xff]
  %v38 = vld [vmem:[%s0 + $0xa0] sm:$0xff]
  %v39 = vld [vmem:[%s0 + $0xa8] sm:$0xff]
  %v40 = vld [vmem:[%s0 + $0xb0] sm:$0xff]
  %v41 = vld [vmem:[%s0 + $0xb8] sm:$0xff]
  %v42 = vld [vmem:[%s0 + $0xc0] sm:$0xff]
  %v43 = vld [vmem:[%s0 + $0xc8] sm:$0xff]
  %v44 = vld [vmem:[%s0 + $0xd0] sm:$0xff]
  %v45 = vld [vmem:[%s0 + $0xd8] sm:$0xff]
  %v46 = vld [vmem:[%s0 + $0xe0] sm:$0xff]
  %v47 = vld [vmem:[%s0 + $0xe8] sm:$0xff]
  %v48 = vld [vmem:[%s0 + $0xf0] sm:$0xff]
  %v49 = vld [vmem:[%s0 + $0xf8] sm:$0xff]
  %v50 = vld [vmem:[%s0 + $0x100] sm:$0xff]
  %v51 = vld [vmem:[%s0 + $0x108] sm:$0xff]
  %v52 = vld [vmem:[%s0 + $0x110] sm:$0xff]
  %v53 = vld [vmem:[%s0 + $0x118] sm:$0xff]
  %v54 = vld [vmem:[%s0 + $0x120] sm:$0xff]
  %v55 = vld [vmem:[%s0 + $0x128] sm:$0xff]
  %v56 = vld [vmem:[%s0 + $0x130] sm:$0xff]
  %v57 = vld [vmem:[%s0 + $0x138] sm:$0xff]
  %v58 = vld [vmem:[%s0 + $0x140] sm:$0xff]
  %v59 = vld [vmem:[%s0 + $0x148] sm:$0xff]
  %v60 = vld [vmem:[%s0 + $0x150] sm:$0xff]
  %v61 = vld [vmem:[%s0 + $0x158] sm:$0xff]
  %v62 = vld [vmem:[%s0 + $0x160] sm:$0xff]
  %v63 = vld [vmem:[%s0 + $0x168] sm:$0xff]
  %v64 = vld [vmem:[%s0 + $0x170] sm:$0xff]
  %v65 = vld [vmem:[%s0 + $0x178] sm:$0xff]
  %v66 = vld [vmem:[%s0 + $0x180] sm:$0xff]
  %v67 = vld [vmem:[%s0 + $0x188] sm:$0xff]
  %v68 = vld [vmem:[%s0 + $0x190] sm:$0xff]
  %v69 = vld [vmem:[%s0 + $0x198] sm:$0xff]
  %v70 = vld [vmem:[%s0 + $0x1a0] sm:$0xff]
  %v71 = vld [vmem:[%s0 + $0x1a8] sm:$0xff]
  %v72 = vld [vmem:[%s0 + $0x1b0] sm:$0xff]
  %v73 = vld [vmem:[%s0 + $0x1b8] sm:$0xff]
  %v74 = vld [vmem:[%s0 + $0x1c0] sm:$0xff]
  %v75 = vld [vmem:[%s0 + $0x1c8] sm:$0xff]
  %v76 = vld [vmem:[%s0 + $0x1d0] sm:$0xff]
  %v77 = vld [vmem:[%s0 + $0x1d8] sm:$0xff]
  %v78 = vld [vmem:[%s0 + $0x1e0] sm:$0xff]
  %v79 = vld [vmem:[%s0 + $0x1e8] sm:$0xff]
  %v80 = vld [vmem:[%s0 + $0x1f0] sm:$0xff]
  %v81 = vld [vmem:[%s0 + $0x1f8] sm:$0xff]
  %v82 = vld [vmem:[%s0 + $0x200] sm:$0xff]
  %v83 = vld [vmem:[%s0 + $0x208] sm:$0xff]
  %v84 = vld [vmem:[%s0 + $0x210] sm:$0xff]
  %v85 = vld [vmem:[%s0 + $0x218] sm:$0xff]
  %v86 = vld [vmem:[%s0 + $0x220] sm:$0xff]
  %v87 = vld [vmem:[%s0 + $0x228] sm:$0xff]
  %v88 = vld [vmem:[%s0 + $0x230] sm:$0xff]
  %v89 = vld [vmem:[%s0 + $0x238] sm:$0xff]
  %v90 = vmax.f32 %v18, 0.0
  %v91 = vmax.f32 %v19, 0.0
  %v92 = vmax.f32 %v20, 0.0
  %v93 = vmax.f32 %v21, 0.0
  %v94 = vmax.f32 %v22, 0.0
  %v95 = vmax.f32 %v23, 0.0
  %v96 = vmax.f32 %v24, 0.0
  %v97 = vmax.f32 %v25, 0.0
  %v98 = vmax.f32 %v26, 0.0
  %v99 = vmax.f32 %v27, 0.0
  %v100 = vmax.f32 %v28, 0.0
  %v101 = vmax.f32 %v29, 0.0
  %v102 = vmax.f32 %v30, 0.0
  %v103 = vmax.f32 %v31, 0.0
  %v104 = vmax.f32 %v32, 0.0
  %v105 = vmax.f32 %v33, 0.0
  %v106 = vmax.f32 %v34, 0.0
  %v107 = vmax.f32 %v35, 0.0
  %v108 = vmax.f32 %v36, 0.0
  %v109 = vmax.f32 %v37, 0.0
  %v110 = vmax.f32 %v38, 0.0
  %v111 = vmax.f32 %v39, 0.0
  %v112 = vmax.f32 %v40, 0.0
  %v113 = vmax.f32 %v41, 0.0
  %v114 = vmax.f32 %v42, 0.0
  %v115 = vmax.f32 %v43, 0.0
  %v116 = vmax.f32 %v44, 0.0
  %v117 = vmax.f32 %v45, 0.0
  %v118 = vmax.f32 %v46, 0.0
  %v119 = vmax.f32 %v47, 0.0
  %v120 = vmax.f32 %v48, 0.0
  %v121 = vmax.f32 %v49, 0.0
  %v122 = vmax.f32 %v50, 0.0
  %v123 = vmax.f32 %v51, 0.0
  %v124 = vmax.f32 %v52, 0.0
  %v125 = vmax.f32 %v53, 0.0
  %v126 = vmax.f32 %v54, 0.0
  %v127 = vmax.f32 %v55, 0.0
  %v128 = vmax.f32 %v56, 0.0
  %v129 = vmax.f32 %v57, 0.0
  %v130 = vmax.f32 %v58, 0.0
  %v131 = vmax.f32 %v59, 0.0
  %v132 = vmax.f32 %v60, 0.0
  %v133 = vmax.f32 %v61, 0.0
  %v134 = vmax.f32 %v62, 0.0
  %v135 = vmax.f32 %v63, 0.0
  %v136 = vmax.f32 %v64, 0.0
  %v137 = vmax.f32 %v65, 0.0
  %v138 = vmax.f32 %v66, 0.0
  %v139 = vmax.f32 %v67, 0.0
  %v140 = vmax.f32 %v68, 0.0
  %v141 = vmax.f32 %v69, 0.0
  %v142 = vmax.f32 %v70, 0.0
  %v143 = vmax.f32 %v71, 0.0
  %v144 = vmax.f32 %v72, 0.0
  %v145 = vmax.f32 %v73, 0.0
  %v146 = vmax.f32 %v74, 0.0
  %v147 = vmax.f32 %v75, 0.0
  %v148 = vmax.f32 %v76, 0.0
  %v149 = vmax.f32 %v77, 0.0
  %v150 = vmax.f32 %v78, 0.0
  %v151 = vmax.f32 %v79, 0.0
  %v152 = vmax.f32 %v80, 0.0
  %v153 = vmax.f32 %v81, 0.0
  %v154 = vmax.f32 %v82, 0.0
  %v155 = vmax.f32 %v83, 0.0
  %v156 = vmax.f32 %v84, 0.0
  %v157 = vmax.f32 %v85, 0.0
  %v158 = vmax.f32 %v86, 0.0
  %v159 = vmax.f32 %v87, 0.0
  %v160 = vmax.f32 %v88, 0.0
  %v161 = vmax.f32 %v89, 0.0
  %v162 = vpack.c.bf16 %v91, %v90
  %v163 = vpack.c.bf16 %v93, %v92
  %v164 = vpack.c.bf16 %v95, %v94
  %v165 = vpack.c.bf16 %v97, %v96
  %v166 = vpack.c.bf16 %v99, %v98
  %v167 = vpack.c.bf16 %v101, %v100
  %v168 = vpack.c.bf16 %v103, %v102
  %v169 = vpack.c.bf16 %v105, %v104
  %v170 = vpack.c.bf16 %v107, %v106
  %v171 = vpack.c.bf16 %v109, %v108
  %v172 = vpack.c.bf16 %v111, %v110
  %v173 = vpack.c.bf16 %v113, %v112
  %v174 = vpack.c.bf16 %v115, %v114
  %v175 = vpack.c.bf16 %v117, %v116
  %v176 = vpack.c.bf16 %v119, %v118
  %v177 = vpack.c.bf16 %v121, %v120
  %v178 = vpack.c.bf16 %v123, %v122
  %v179 = vpack.c.bf16 %v125, %v124
  %v180 = vpack.c.bf16 %v127, %v126
  %v181 = vpack.c.bf16 %v129, %v128
  %v182 = vpack.c.bf16 %v131, %v130
  %v183 = vpack.c.bf16 %v133, %v132
  %v184 = vpack.c.bf16 %v135, %v134
  %v185 = vpack.c.bf16 %v137, %v136
  %v186 = vpack.c.bf16 %v139, %v138
  %v187 = vpack.c.bf16 %v141, %v140
  %v188 = vpack.c.bf16 %v143, %v142
  %v189 = vpack.c.bf16 %v145, %v144
  %v190 = vpack.c.bf16 %v147, %v146
  %v191 = vpack.c.bf16 %v149, %v148
  %v192 = vpack.c.bf16 %v151, %v150
  %v193 = vpack.c.bf16 %v153, %v152
  %v194 = vpack.c.bf16 %v155, %v154
  %v195 = vpack.c.bf16 %v157, %v156
  %v196 = vpack.c.bf16 %v159, %v158
  %v197 = vpack.c.bf16 %v161, %v160
  %v198 = vld [vmem:[%s1] sm:$0xff]
  %v199 = vld [vmem:[%s1 + $0x8] sm:$0xff]
  %v200 = vld [vmem:[%s1 + $0x10] sm:$0xf]
  %v201 = vld [vmem:[%s1 + $0x14] sm:$0xff]
  %v202 = vld [vmem:[%s1 + $0x1c] sm:$0xff]
  %v203 = vld [vmem:[%s1 + $0x24] sm:$0xf]
  %v210 = vunpack.c.l.b16 %v198
  %v211 = vunpack.c.h.b16 %v198
  %v212 = vunpack.c.l.b16 %v199
  %v213 = vunpack.c.h.b16 %v199
  %v214 = vunpack.c.l.b16 %v200
  %v215 = vunpack.c.l.b16 %v201
  %v216 = vunpack.c.h.b16 %v201
  %v217 = vunpack.c.l.b16 %v202
  %v218 = vunpack.c.h.b16 %v202
  %v219 = vunpack.c.l.b16 %v203
  %v220 = vpack.c.b16 %v215, %v210
  %v221 = vpack.c.b16 %v216, %v211
  %v222 = vpack.c.b16 %v217, %v212
  %v223 = vpack.c.b16 %v218, %v213
  %v224 = vpack.c.b16 %v219, %v214
  %vm229 = vcmask 523264
  %v231 = vsel %vm229, %v224, 0
  %233 = vmatpush.bf16.msra.mxu0 %v169
  %234 = vmatpush.bf16.msra.mxu0 %v168
  %235 = vmatpush.bf16.msra.mxu0 %v167
  %236 = vmatpush.bf16.msra.mxu0 %v166
  %237 = vmatpush.bf16.msra.mxu0 %v165
  %238 = vmatpush.bf16.msra.mxu0 %v164
  %239 = vmatpush.bf16.msra.mxu0 %v163
  %240 = vmatpush.bf16.msra.mxu0 %v162
  %241 = vmatmul.bf16.gmra.mxu0 %v220
  %v242 = vpop.f32.mrf.mxu0
  %v243 = vadd.f32 0.0, %v242
  %v244 = vpop.f32.mrf.mxu0
  %v245 = vadd.f32 0.0, %v244
  %246 = vdwg.mxu0
  %247 = vmatpush.bf16.msra.mxu0 %v177
  %248 = vmatpush.bf16.msra.mxu0 %v176
  %249 = vmatpush.bf16.msra.mxu0 %v175
  %250 = vmatpush.bf16.msra.mxu0 %v174
  %251 = vmatpush.bf16.msra.mxu0 %v173
  %252 = vmatpush.bf16.msra.mxu0 %v172
  %253 = vmatpush.bf16.msra.mxu0 %v171
  %254 = vmatpush.bf16.msra.mxu0 %v170
  %255 = vmatmul.bf16.gmra.mxu0 %v221
  %v256 = vpop.f32.mrf.mxu0
  %v257 = vadd.f32 %v243, %v256
  %v258 = vpop.f32.mrf.mxu0
  %v259 = vadd.f32 %v245, %v258
  %260 = vdwg.mxu0
  %261 = vmatpush.bf16.msra.mxu0 %v185
  %262 = vmatpush.bf16.msra.mxu0 %v184
  %263 = vmatpush.bf16.msra.mxu0 %v183
  %264 = vmatpush.bf16.msra.mxu0 %v182
  %265 = vmatpush.bf16.msra.mxu0 %v181
  %266 = vmatpush.bf16.msra.mxu0 %v180
  %267 = vmatpush.bf16.msra.mxu0 %v179
  %268 = vmatpush.bf16.msra.mxu0 %v178
  %269 = vmatmul.bf16.gmra.mxu0 %v222
  %v270 = vpop.f32.mrf.mxu0
  %v271 = vadd.f32 %v257, %v270
  %v272 = vpop.f32.mrf.mxu0
  %v273 = vadd.f32 %v259, %v272
  %274 = vdwg.mxu0
  %275 = vmatpush.bf16.msra.mxu0 %v193
  %276 = vmatpush.bf16.msra.mxu0 %v192
  %277 = vmatpush.bf16.msra.mxu0 %v191
  %278 = vmatpush.bf16.msra.mxu0 %v190
  %279 = vmatpush.bf16.msra.mxu0 %v189
  %280 = vmatpush.bf16.msra.mxu0 %v188
  %281 = vmatpush.bf16.msra.mxu0 %v187
  %282 = vmatpush.bf16.msra.mxu0 %v186
  %283 = vmatmul.bf16.gmra.mxu0 %v223
  %v284 = vpop.f32.mrf.mxu0
  %v285 = vadd.f32 %v271, %v284
  %v286 = vpop.f32.mrf.mxu0
  %v287 = vadd.f32 %v273, %v286
  %288 = vdwg.mxu0
  %289 = vmatpush.bf16.msra.mxu0 0
  %290 = vmatpush.bf16.msra.mxu0 0
  %291 = vmatpush.bf16.msra.mxu0 0
  %292 = vmatpush.bf16.msra.mxu0 0
  %293 = vmatpush.bf16.msra.mxu0 %v197
  %294 = vmatpush.bf16.msra.mxu0 %v196
  %295 = vmatpush.bf16.msra.mxu0 %v195
  %296 = vmatpush.bf16.msra.mxu0 %v194
  %297 = vmatmul.bf16.gmra.mxu0 %v231
  %v298 = vpop.f32.mrf.mxu0
  %v299 = vadd.f32 %v285, %v298
  %v300 = vpop.f32.mrf.mxu0
  %v301 = vadd.f32 %v287, %v300
  %302 = vdwg.mxu0
  %vm303 = vcmask 261120
  %304 = vst.msk [vmem:[%s4] sm:$0xff] %vm303, %v299
  %305 = vst.msk [vmem:[%s4 + $0x8] sm:$0xff] %vm303, %v301
  %s306 = scalar_lea.vmem %s1, 40
  %v307 = vld [vmem:[%s306] sm:$0xff]
  %v308 = vld [vmem:[%s306 + $0x8] sm:$0xff]
  %v309 = vld [vmem:[%s306 + $0x10] sm:$0xf]
  %v310 = vld [vmem:[%s306 + $0x14] sm:$0xff]
  %v311 = vld [vmem:[%s306 + $0x1c] sm:$0xff]
  %v312 = vld [vmem:[%s306 + $0x24] sm:$0xf]
  %v319 = vunpack.c.l.b16 %v307
  %v320 = vunpack.c.h.b16 %v307
  %v321 = vunpack.c.l.b16 %v308
  %v322 = vunpack.c.h.b16 %v308
  %v323 = vunpack.c.l.b16 %v309
  %v324 = vunpack.c.l.b16 %v310
  %v325 = vunpack.c.h.b16 %v310
  %v326 = vunpack.c.l.b16 %v311
  %v327 = vunpack.c.h.b16 %v311
  %v328 = vunpack.c.l.b16 %v312
  %v329 = vpack.c.b16 %v324, %v319
  %v330 = vpack.c.b16 %v325, %v320
  %v331 = vpack.c.b16 %v326, %v321
  %v332 = vpack.c.b16 %v327, %v322
  %v333 = vpack.c.b16 %v328, %v323
  %v339 = vsel %vm229, %v333, 0
  %341 = vmatpush.bf16.msra.mxu0 %v169
  %342 = vmatpush.bf16.msra.mxu0 %v168
  %343 = vmatpush.bf16.msra.mxu0 %v167
  %344 = vmatpush.bf16.msra.mxu0 %v166
  %345 = vmatpush.bf16.msra.mxu0 %v165
  %346 = vmatpush.bf16.msra.mxu0 %v164
  %347 = vmatpush.bf16.msra.mxu0 %v163
  %348 = vmatpush.bf16.msra.mxu0 %v162
  %349 = vmatmul.bf16.gmra.mxu0 %v329
  %v350 = vpop.f32.mrf.mxu0
  %v351 = vadd.f32 0.0, %v350
  %v352 = vpop.f32.mrf.mxu0
  %v353 = vadd.f32 0.0, %v352
  %354 = vdwg.mxu0
  %355 = vmatpush.bf16.msra.mxu0 %v177
  %356 = vmatpush.bf16.msra.mxu0 %v176
  %357 = vmatpush.bf16.msra.mxu0 %v175
  %358 = vmatpush.bf16.msra.mxu0 %v174
  %359 = vmatpush.bf16.msra.mxu0 %v173
  %360 = vmatpush.bf16.msra.mxu0 %v172
  %361 = vmatpush.bf16.msra.mxu0 %v171
  %362 = vmatpush.bf16.msra.mxu0 %v170
  %363 = vmatmul.bf16.gmra.mxu0 %v330
  %v364 = vpop.f32.mrf.mxu0
  %v365 = vadd.f32 %v351, %v364
  %v366 = vpop.f32.mrf.mxu0
  %v367 = vadd.f32 %v353, %v366
  %368 = vdwg.mxu0
  %369 = vmatpush.bf16.msra.mxu0 %v185
  %370 = vmatpush.bf16.msra.mxu0 %v184
  %371 = vmatpush.bf16.msra.mxu0 %v183
  %372 = vmatpush.bf16.msra.mxu0 %v182
  %373 = vmatpush.bf16.msra.mxu0 %v181
  %374 = vmatpush.bf16.msra.mxu0 %v180
  %375 = vmatpush.bf16.msra.mxu0 %v179
  %376 = vmatpush.bf16.msra.mxu0 %v178
  %377 = vmatmul.bf16.gmra.mxu0 %v331
  %v378 = vpop.f32.mrf.mxu0
  %v379 = vadd.f32 %v365, %v378
  %v380 = vpop.f32.mrf.mxu0
  %v381 = vadd.f32 %v367, %v380
  %382 = vdwg.mxu0
  %383 = vmatpush.bf16.msra.mxu0 %v193
  %384 = vmatpush.bf16.msra.mxu0 %v192
  %385 = vmatpush.bf16.msra.mxu0 %v191
  %386 = vmatpush.bf16.msra.mxu0 %v190
  %387 = vmatpush.bf16.msra.mxu0 %v189
  %388 = vmatpush.bf16.msra.mxu0 %v188
  %389 = vmatpush.bf16.msra.mxu0 %v187
  %390 = vmatpush.bf16.msra.mxu0 %v186
  %391 = vmatmul.bf16.gmra.mxu0 %v332
  %v392 = vpop.f32.mrf.mxu0
  %v393 = vadd.f32 %v379, %v392
  %v394 = vpop.f32.mrf.mxu0
  %v395 = vadd.f32 %v381, %v394
  %396 = vdwg.mxu0
  %397 = vmatpush.bf16.msra.mxu0 0
  %398 = vmatpush.bf16.msra.mxu0 0
  %399 = vmatpush.bf16.msra.mxu0 0
  %400 = vmatpush.bf16.msra.mxu0 0
  %401 = vmatpush.bf16.msra.mxu0 %v197
  %402 = vmatpush.bf16.msra.mxu0 %v196
  %403 = vmatpush.bf16.msra.mxu0 %v195
  %404 = vmatpush.bf16.msra.mxu0 %v194
  %405 = vmatmul.bf16.gmra.mxu0 %v339
  %v406 = vpop.f32.mrf.mxu0
  %v407 = vadd.f32 %v393, %v406
  %v408 = vpop.f32.mrf.mxu0
  %v409 = vadd.f32 %v395, %v408
  %410 = vdwg.mxu0
  %413 = vrot.lane.b32.xlu0 %v407, 32
  %v414 = vpop.permute.xlu0 %413
  %415 = vrot.lane.b32.xlu0 %v409, 32
  %v416 = vpop.permute.xlu0 %415
  %vm419 = vcmask 523520
  %420 = vst.msk [vmem:[%s4] sm:$0xff] %vm419, %v414
  %421 = vst.msk [vmem:[%s4 + $0x8] sm:$0xff] %vm419, %v416
  %s422 = scalar_lea.vmem %s1, 80
  %v423 = vld [vmem:[%s422] sm:$0xff]
  %v424 = vld [vmem:[%s422 + $0x8] sm:$0xff]
  %v425 = vld [vmem:[%s422 + $0x10] sm:$0xf]
  %v426 = vld [vmem:[%s422 + $0x14] sm:$0xff]
  %v427 = vld [vmem:[%s422 + $0x1c] sm:$0xff]
  %v428 = vld [vmem:[%s422 + $0x24] sm:$0xf]
  %v435 = vunpack.c.l.b16 %v423
  %v436 = vunpack.c.h.b16 %v423
  %v437 = vunpack.c.l.b16 %v424
  %v438 = vunpack.c.h.b16 %v424
  %v439 = vunpack.c.l.b16 %v425
  %v440 = vunpack.c.l.b16 %v426
  %v441 = vunpack.c.h.b16 %v426
  %v442 = vunpack.c.l.b16 %v427
  %v443 = vunpack.c.h.b16 %v427
  %v444 = vunpack.c.l.b16 %v428
  %v445 = vpack.c.b16 %v440, %v435
  %v446 = vpack.c.b16 %v441, %v436
  %v447 = vpack.c.b16 %v442, %v437
  %v448 = vpack.c.b16 %v443, %v438
  %v449 = vpack.c.b16 %v444, %v439
  %v455 = vsel %vm229, %v449, 0
  %457 = vmatpush.bf16.msra.mxu0 %v169
  %458 = vmatpush.bf16.msra.mxu0 %v168
  %459 = vmatpush.bf16.msra.mxu0 %v167
  %460 = vmatpush.bf16.msra.mxu0 %v166
  %461 = vmatpush.bf16.msra.mxu0 %v165
  %462 = vmatpush.bf16.msra.mxu0 %v164
  %463 = vmatpush.bf16.msra.mxu0 %v163
  %464 = vmatpush.bf16.msra.mxu0 %v162
  %465 = vmatmul.bf16.gmra.mxu0 %v445
  %v466 = vpop.f32.mrf.mxu0
  %v467 = vadd.f32 0.0, %v466
  %v468 = vpop.f32.mrf.mxu0
  %v469 = vadd.f32 0.0, %v468
  %470 = vdwg.mxu0
  %471 = vmatpush.bf16.msra.mxu0 %v177
  %472 = vmatpush.bf16.msra.mxu0 %v176
  %473 = vmatpush.bf16.msra.mxu0 %v175
  %474 = vmatpush.bf16.msra.mxu0 %v174
  %475 = vmatpush.bf16.msra.mxu0 %v173
  %476 = vmatpush.bf16.msra.mxu0 %v172
  %477 = vmatpush.bf16.msra.mxu0 %v171
  %478 = vmatpush.bf16.msra.mxu0 %v170
  %479 = vmatmul.bf16.gmra.mxu0 %v446
  %v480 = vpop.f32.mrf.mxu0
  %v481 = vadd.f32 %v467, %v480
  %v482 = vpop.f32.mrf.mxu0
  %v483 = vadd.f32 %v469, %v482
  %484 = vdwg.mxu0
  %485 = vmatpush.bf16.msra.mxu0 %v185
  %486 = vmatpush.bf16.msra.mxu0 %v184
  %487 = vmatpush.bf16.msra.mxu0 %v183
  %488 = vmatpush.bf16.msra.mxu0 %v182
  %489 = vmatpush.bf16.msra.mxu0 %v181
  %490 = vmatpush.bf16.msra.mxu0 %v180
  %491 = vmatpush.bf16.msra.mxu0 %v179
  %492 = vmatpush.bf16.msra.mxu0 %v178
  %493 = vmatmul.bf16.gmra.mxu0 %v447
  %v494 = vpop.f32.mrf.mxu0
  %v495 = vadd.f32 %v481, %v494
  %v496 = vpop.f32.mrf.mxu0
  %v497 = vadd.f32 %v483, %v496
  %498 = vdwg.mxu0
  %499 = vmatpush.bf16.msra.mxu0 %v193
  %500 = vmatpush.bf16.msra.mxu0 %v192
  %501 = vmatpush.bf16.msra.mxu0 %v191
  %502 = vmatpush.bf16.msra.mxu0 %v190
  %503 = vmatpush.bf16.msra.mxu0 %v189
  %504 = vmatpush.bf16.msra.mxu0 %v188
  %505 = vmatpush.bf16.msra.mxu0 %v187
  %506 = vmatpush.bf16.msra.mxu0 %v186
  %507 = vmatmul.bf16.gmra.mxu0 %v448
  %v508 = vpop.f32.mrf.mxu0
  %v509 = vadd.f32 %v495, %v508
  %v510 = vpop.f32.mrf.mxu0
  %v511 = vadd.f32 %v497, %v510
  %512 = vdwg.mxu0
  %513 = vmatpush.bf16.msra.mxu0 0
  %514 = vmatpush.bf16.msra.mxu0 0
  %515 = vmatpush.bf16.msra.mxu0 0
  %516 = vmatpush.bf16.msra.mxu0 0
  %517 = vmatpush.bf16.msra.mxu0 %v197
  %518 = vmatpush.bf16.msra.mxu0 %v196
  %519 = vmatpush.bf16.msra.mxu0 %v195
  %520 = vmatpush.bf16.msra.mxu0 %v194
  %521 = vmatmul.bf16.gmra.mxu0 %v455
  %v522 = vpop.f32.mrf.mxu0
  %v523 = vadd.f32 %v509, %v522
  %v524 = vpop.f32.mrf.mxu0
  %v525 = vadd.f32 %v511, %v524
  %526 = vdwg.mxu0
  %529 = vrot.lane.b32.xlu0 %v523, 64
  %v530 = vpop.permute.xlu0 %529
  %531 = vrot.lane.b32.xlu0 %v525, 64
  %v532 = vpop.permute.xlu0 %531
  %vm535 = vcmask 785920
  %536 = vst.msk [vmem:[%s4] sm:$0xff] %vm535, %v530
  %537 = vst.msk [vmem:[%s4 + $0x8] sm:$0xff] %vm535, %v532
  %s538 = scalar_lea.vmem %s1, 120
  %v539 = vld [vmem:[%s538] sm:$0xff]
  %v540 = vld [vmem:[%s538 + $0x8] sm:$0xff]
  %v541 = vld [vmem:[%s538 + $0x10] sm:$0xf]
  %v542 = vld [vmem:[%s538 + $0x14] sm:$0xff]
  %v543 = vld [vmem:[%s538 + $0x1c] sm:$0xff]
  %v544 = vld [vmem:[%s538 + $0x24] sm:$0xf]
  %v551 = vunpack.c.l.b16 %v539
  %v552 = vunpack.c.h.b16 %v539
  %v553 = vunpack.c.l.b16 %v540
  %v554 = vunpack.c.h.b16 %v540
  %v555 = vunpack.c.l.b16 %v541
  %v556 = vunpack.c.l.b16 %v542
  %v557 = vunpack.c.h.b16 %v542
  %v558 = vunpack.c.l.b16 %v543
  %v559 = vunpack.c.h.b16 %v543
  %v560 = vunpack.c.l.b16 %v544
  %v561 = vpack.c.b16 %v556, %v551
  %v562 = vpack.c.b16 %v557, %v552
  %v563 = vpack.c.b16 %v558, %v553
  %v564 = vpack.c.b16 %v559, %v554
  %v565 = vpack.c.b16 %v560, %v555
  %v571 = vsel %vm229, %v565, 0
  %573 = vmatpush.bf16.msra.mxu0 %v169
  %574 = vmatpush.bf16.msra.mxu0 %v168
  %575 = vmatpush.bf16.msra.mxu0 %v167
  %576 = vmatpush.bf16.msra.mxu0 %v166
  %577 = vmatpush.bf16.msra.mxu0 %v165
  %578 = vmatpush.bf16.msra.mxu0 %v164
  %579 = vmatpush.bf16.msra.mxu0 %v163
  %580 = vmatpush.bf16.msra.mxu0 %v162
  %581 = vmatmul.bf16.gmra.mxu0 %v561
  %v582 = vpop.f32.mrf.mxu0
  %v583 = vadd.f32 0.0, %v582
  %v584 = vpop.f32.mrf.mxu0
  %v585 = vadd.f32 0.0, %v584
  %586 = vdwg.mxu0
  %587 = vmatpush.bf16.msra.mxu0 %v177
  %588 = vmatpush.bf16.msra.mxu0 %v176
  %589 = vmatpush.bf16.msra.mxu0 %v175
  %590 = vmatpush.bf16.msra.mxu0 %v174
  %591 = vmatpush.bf16.msra.mxu0 %v173
  %592 = vmatpush.bf16.msra.mxu0 %v172
  %593 = vmatpush.bf16.msra.mxu0 %v171
  %594 = vmatpush.bf16.msra.mxu0 %v170
  %595 = vmatmul.bf16.gmra.mxu0 %v562
  %v596 = vpop.f32.mrf.mxu0
  %v597 = vadd.f32 %v583, %v596
  %v598 = vpop.f32.mrf.mxu0
  %v599 = vadd.f32 %v585, %v598
  %600 = vdwg.mxu0
  %601 = vmatpush.bf16.msra.mxu0 %v185
  %602 = vmatpush.bf16.msra.mxu0 %v184
  %603 = vmatpush.bf16.msra.mxu0 %v183
  %604 = vmatpush.bf16.msra.mxu0 %v182
  %605 = vmatpush.bf16.msra.mxu0 %v181
  %606 = vmatpush.bf16.msra.mxu0 %v180
  %607 = vmatpush.bf16.msra.mxu0 %v179
  %608 = vmatpush.bf16.msra.mxu0 %v178
  %609 = vmatmul.bf16.gmra.mxu0 %v563
  %v610 = vpop.f32.mrf.mxu0
  %v611 = vadd.f32 %v597, %v610
  %v612 = vpop.f32.mrf.mxu0
  %v613 = vadd.f32 %v599, %v612
  %614 = vdwg.mxu0
  %615 = vmatpush.bf16.msra.mxu0 %v193
  %616 = vmatpush.bf16.msra.mxu0 %v192
  %617 = vmatpush.bf16.msra.mxu0 %v191
  %618 = vmatpush.bf16.msra.mxu0 %v190
  %619 = vmatpush.bf16.msra.mxu0 %v189
  %620 = vmatpush.bf16.msra.mxu0 %v188
  %621 = vmatpush.bf16.msra.mxu0 %v187
  %622 = vmatpush.bf16.msra.mxu0 %v186
  %623 = vmatmul.bf16.gmra.mxu0 %v564
  %v624 = vpop.f32.mrf.mxu0
  %v625 = vadd.f32 %v611, %v624
  %v626 = vpop.f32.mrf.mxu0
  %v627 = vadd.f32 %v613, %v626
  %628 = vdwg.mxu0
  %629 = vmatpush.bf16.msra.mxu0 0
  %630 = vmatpush.bf16.msra.mxu0 0
  %631 = vmatpush.bf16.msra.mxu0 0
  %632 = vmatpush.bf16.msra.mxu0 0
  %633 = vmatpush.bf16.msra.mxu0 %v197
  %634 = vmatpush.bf16.msra.mxu0 %v196
  %635 = vmatpush.bf16.msra.mxu0 %v195
  %636 = vmatpush.bf16.msra.mxu0 %v194
  %637 = vmatmul.bf16.gmra.mxu0 %v571
  %v638 = vpop.f32.mrf.mxu0
  %v639 = vadd.f32 %v625, %v638
  %v640 = vpop.f32.mrf.mxu0
  %v641 = vadd.f32 %v627, %v640
  %642 = vdwg.mxu0
  %645 = vrot.lane.b32.xlu0 %v639, 96
  %v646 = vpop.permute.xlu0 %645
  %647 = vrot.lane.b32.xlu0 %v641, 96
  %v648 = vpop.permute.xlu0 %647
  %vm651 = vcmask 1048320
  %652 = vst.msk [vmem:[%s4] sm:$0xff] %vm651, %v646
  %653 = vst.msk [vmem:[%s4 + $0x8] sm:$0xff] %vm651, %v648
  %v654 = vld [vmem:[%s4] sm:$0xff]
  %v655 = vld [vmem:[%s4 + $0x8] sm:$0xff]
  %656 = vadd.xlane.f32.xlu0 %v654
  %v657 = vpop.xlane.xlu0 %656
  %658 = vadd.xlane.f32.xlu0 %v655
  %v659 = vpop.xlane.xlu0 %658
  %v660 = vrcp.pop 128.0
  %v661 = vmul.f32 128.0, %v660
  %v662 = vsub.f32 1.0, %v661
  %v663 = vmul.f32 %v660, %v662
  %v664 = vadd.f32 %v660, %v663
  %vm665 = vweird.f32 %v660
  %v666 = vsel %vm665, %v660, %v664
  %v667 = vmul.f32 %v657, %v666
  %v668 = vmul.f32 %v659, %v666
  %v669 = vsub.f32 %v654, %v667
  %v670 = vsub.f32 %v655, %v668
  %v671 = vmul.f32 %v669, %v669
  %v672 = vmul.f32 %v670, %v670
  %673 = vadd.xlane.f32.xlu0 %v671
  %v674 = vpop.xlane.xlu0 %673
  %675 = vadd.xlane.f32.xlu0 %v672
  %v676 = vpop.xlane.xlu0 %675
  %v677 = vmul.f32 %v674, %v666
  %v678 = vmul.f32 %v676, %v666
  %v679 = vld [vmem:[%s2] sm:$0xff]
  %v680 = vld [vmem:[%s2 + $0x8] sm:$0xff]
  %v681 = vadd.f32 %v677, 1e-05
  %v682 = vadd.f32 %v678, 1e-05
  %v683 = vrsqrt.pop %v681
  %v684 = vmul.f32 %v683, %v681
  %v685 = vmul.f32 %v684, %v683
  %v686 = vmul.f32 0.5, %v685
  %v687 = vsub.f32 1.5, %v686
  %v688 = vmul.f32 %v683, %v687
  %vm689 = vweird.f32 %v681
  %vm690 = vweird.f32 %v683
  %vm691 = vmor %vm689, %vm690
  %v692 = vsel %vm691, %v683, %v688
  %v693 = vrsqrt.pop %v682
  %v694 = vmul.f32 %v693, %v682
  %v695 = vmul.f32 %v694, %v693
  %v696 = vmul.f32 0.5, %v695
  %v697 = vsub.f32 1.5, %v696
  %v698 = vmul.f32 %v693, %v697
  %vm699 = vweird.f32 %v682
  %vm700 = vweird.f32 %v693
  %vm701 = vmor %vm699, %vm700
  %v702 = vsel %vm701, %v693, %v698
  %v703 = vmul.f32 %v679, %v692
  %v704 = vmul.f32 %v680, %v702
  %v705 = vld [vmem:[%s3] sm:$0xff]
  %v706 = vld [vmem:[%s3 + $0x8] sm:$0xff]
  %v707 = vmul.f32 %v667, %v703
  %v708 = vmul.f32 %v668, %v704
  %v709 = vsub.f32 %v705, %v707
  %v710 = vsub.f32 %v706, %v708
  %712 = vset.pattern.permute.xlu0 0
  %713 = vperm.xlu0 %712, %v703
  %v714 = vpop.permute.xlu0 %713
  %717 = vset.pattern.permute.xlu0 0
  %718 = vperm.xlu0 %717, %v704
  %v719 = vpop.permute.xlu0 %718
  %v721 = vmul.f32 %v654, %v714
  %v722 = vmul.f32 %v655, %v719
  %724 = vset.pattern.permute.xlu0 0
  %725 = vperm.xlu0 %724, %v709
  %v726 = vpop.permute.xlu0 %725
  %729 = vset.pattern.permute.xlu0 0
  %730 = vperm.xlu0 %729, %v710
  %v731 = vpop.permute.xlu0 %730
  %v733 = vadd.f32 %v721, %v726
  %v734 = vadd.f32 %v722, %v731
  %735 = vst [vmem:[%s4] sm:$0xff] %v733
  %736 = vst [vmem:[%s4 + $0x8] sm:$0xff] %v734
  // Predicated region
  $region18: #{unet_forward.17} parent=0 // pred_check
    _
  $region19: #{unet_forward.17} parent=0 // pred_check_branch
    %738 = sbr.rel (0) target = $region21
  $region20: #{unet_forward.17} parent=0 // pred_region
    _
  $region21: #{unet_forward.17} parent=0 // pred_fallthru
    _
  // Predicated region
  $region22: #{unet_forward.17} parent=0 // pred_check
    _
  $region23: #{unet_forward.17} parent=0 // pred_check_branch
    %740 = sbr.rel (0) target = $region25
  $region24: #{unet_forward.17} parent=0 // pred_region
    _
  $region25: #{unet_forward.17} parent=0 // pred_fallthru
    _

// kernel: unet_forward.18
$region0: #{unet_forward.18}
  #allocation0 [shape = 'u32[]', space=smem, size = 0x4, offset = 0x4, fixed_abs, tag = 'smem constant byte address 0x4 - core index']
  #allocation1 [shape = 'u32[72,128]{1,0:T(1,128)}', space=vmem, size = 0x9000, scoped, tag = 'internal scratch']
  %s0 = inlined_call_operand.vmem [shape: f32[288,128], index: 0, kind: input, shape index: {}]
  %s1 = inlined_call_operand.vmem [shape: bf16[4,8,288], index: 1, kind: input, shape index: {}]
  %s2 = inlined_call_operand.vmem [shape: f32[8,1], index: 2, kind: input, shape index: {}]
  %s3 = inlined_call_operand.vmem [shape: f32[8,1], index: 3, kind: input, shape index: {}]
  %s4 = inlined_call_operand.vmem [shape: f32[8,512], index: 4, kind: output, shape index: {}]
  %s5 = sld [smem:[#allocation0]]
  $region26: #{unet_forward.18} parent=0
    _
  %s7 = ssub.s32 1, %s5
  %s8 = scalar_select 0, %s7, %s5
  // Predicated region
  $region2: #{unet_forward.18} parent=0 // pred_check
    _
  $region3: #{unet_forward.18} parent=0 // pred_check_branch
    %10 = sbr.rel (0) target = $region5
  $region4: #{unet_forward.18} parent=0 // pred_region
    _
  $region5: #{unet_forward.18} parent=0 // pred_fallthru
    _
  // Predicated region
  $region6: #{unet_forward.18} parent=0 // pred_check
    _
  $region7: #{unet_forward.18} parent=0 // pred_check_branch
    %12 = sbr.rel (0) target = $region9
  $region8: #{unet_forward.18} parent=0 // pred_region
    _
  $region9: #{unet_forward.18} parent=0 // pred_fallthru
    _
  // Predicated region
  $region10: #{unet_forward.18} parent=0 // pred_check
    _
  $region11: #{unet_forward.18} parent=0 // pred_check_branch
    %14 = sbr.rel (0) target = $region13
  $region12: #{unet_forward.18} parent=0 // pred_region
    _
  $region13: #{unet_forward.18} parent=0 // pred_fallthru
    _
  // Predicated region
  $region14: #{unet_forward.18} parent=0 // pred_check
    _
  $region15: #{unet_forward.18} parent=0 // pred_check_branch
    %16 = sbr.rel (0) target = $region17
  $region16: #{unet_forward.18} parent=0 // pred_region
    _
  $region17: #{unet_forward.18} parent=0 // pred_fallthru
    _
  %v18 = vld [vmem:[%s0] sm:$0xff]
  %v19 = vld [vmem:[%s0 + $0x8] sm:$0xff]
  %v20 = vld [vmem:[%s0 + $0x10] sm:$0xff]
  %v21 = vld [vmem:[%s0 + $0x18] sm:$0xff]
  %v22 = vld [vmem:[%s0 + $0x20] sm:$0xff]
  %v23 = vld [vmem:[%s0 + $0x28] sm:$0xff]
  %v24 = vld [vmem:[%s0 + $0x30] sm:$0xff]
  %v25 = vld [vmem:[%s0 + $0x38] sm:$0xff]
  %v26 = vld [vmem:[%s0 + $0x40] sm:$0xff]
  %v27 = vld [vmem:[%s0 + $0x48] sm:$0xff]
  %v28 = vld [vmem:[%s0 + $0x50] sm:$0xff]
  %v29 = vld [vmem:[%s0 + $0x58] sm:$0xff]
  %v30 = vld [vmem:[%s0 + $0x60] sm:$0xff]
  %v31 = vld [vmem:[%s0 + $0x68] sm:$0xff]
  %v32 = vld [vmem:[%s0 + $0x70] sm:$0xff]
  %v33 = vld [vmem:[%s0 + $0x78] sm:$0xff]
  %v34 = vld [vmem:[%s0 + $0x80] sm:$0xff]
  %v35 = vld [vmem:[%s0 + $0x88] sm:$0xff]
  %v36 = vld [vmem:[%s0 + $0x90] sm:$0xff]
  %v37 = vld [vmem:[%s0 + $0x98] sm:$0xff]
  %v38 = vld [vmem:[%s0 + $0xa0] sm:$0xff]
  %v39 = vld [vmem:[%s0 + $0xa8] sm:$0xff]
  %v40 = vld [vmem:[%s0 + $0xb0] sm:$0xff]
  %v41 = vld [vmem:[%s0 + $0xb8] sm:$0xff]
  %v42 = vld [vmem:[%s0 + $0xc0] sm:$0xff]
  %v43 = vld [vmem:[%s0 + $0xc8] sm:$0xff]
  %v44 = vld [vmem:[%s0 + $0xd0] sm:$0xff]
  %v45 = vld [vmem:[%s0 + $0xd8] sm:$0xff]
  %v46 = vld [vmem:[%s0 + $0xe0] sm:$0xff]
  %v47 = vld [vmem:[%s0 + $0xe8] sm:$0xff]
  %v48 = vld [vmem:[%s0 + $0xf0] sm:$0xff]
  %v49 = vld [vmem:[%s0 + $0xf8] sm:$0xff]
  %v50 = vld [vmem:[%s0 + $0x100] sm:$0xff]
  %v51 = vld [vmem:[%s0 + $0x108] sm:$0xff]
  %v52 = vld [vmem:[%s0 + $0x110] sm:$0xff]
  %v53 = vld [vmem:[%s0 + $0x118] sm:$0xff]
  %v54 = vmax.f32 %v18, 0.0
  %v55 = vmax.f32 %v19, 0.0
  %v56 = vmax.f32 %v20, 0.0
  %v57 = vmax.f32 %v21, 0.0
  %v58 = vmax.f32 %v22, 0.0
  %v59 = vmax.f32 %v23, 0.0
  %v60 = vmax.f32 %v24, 0.0
  %v61 = vmax.f32 %v25, 0.0
  %v62 = vmax.f32 %v26, 0.0
  %v63 = vmax.f32 %v27, 0.0
  %v64 = vmax.f32 %v28, 0.0
  %v65 = vmax.f32 %v29, 0.0
  %v66 = vmax.f32 %v30, 0.0
  %v67 = vmax.f32 %v31, 0.0
  %v68 = vmax.f32 %v32, 0.0
  %v69 = vmax.f32 %v33, 0.0
  %v70 = vmax.f32 %v34, 0.0
  %v71 = vmax.f32 %v35, 0.0
  %v72 = vmax.f32 %v36, 0.0
  %v73 = vmax.f32 %v37, 0.0
  %v74 = vmax.f32 %v38, 0.0
  %v75 = vmax.f32 %v39, 0.0
  %v76 = vmax.f32 %v40, 0.0
  %v77 = vmax.f32 %v41, 0.0
  %v78 = vmax.f32 %v42, 0.0
  %v79 = vmax.f32 %v43, 0.0
  %v80 = vmax.f32 %v44, 0.0
  %v81 = vmax.f32 %v45, 0.0
  %v82 = vmax.f32 %v46, 0.0
  %v83 = vmax.f32 %v47, 0.0
  %v84 = vmax.f32 %v48, 0.0
  %v85 = vmax.f32 %v49, 0.0
  %v86 = vmax.f32 %v50, 0.0
  %v87 = vmax.f32 %v51, 0.0
  %v88 = vmax.f32 %v52, 0.0
  %v89 = vmax.f32 %v53, 0.0
  %v90 = vpack.c.bf16 %v55, %v54
  %v91 = vpack.c.bf16 %v57, %v56
  %v92 = vpack.c.bf16 %v59, %v58
  %v93 = vpack.c.bf16 %v61, %v60
  %v94 = vpack.c.bf16 %v63, %v62
  %v95 = vpack.c.bf16 %v65, %v64
  %v96 = vpack.c.bf16 %v67, %v66
  %v97 = vpack.c.bf16 %v69, %v68
  %v98 = vpack.c.bf16 %v71, %v70
  %v99 = vpack.c.bf16 %v73, %v72
  %v100 = vpack.c.bf16 %v75, %v74
  %v101 = vpack.c.bf16 %v77, %v76
  %v102 = vpack.c.bf16 %v79, %v78
  %v103 = vpack.c.bf16 %v81, %v80
  %v104 = vpack.c.bf16 %v83, %v82
  %v105 = vpack.c.bf16 %v85, %v84
  %v106 = vpack.c.bf16 %v87, %v86
  %v107 = vpack.c.bf16 %v89, %v88
  %v108 = vld [vmem:[%s1] sm:$0xff]
  %v109 = vld [vmem:[%s1 + $0x8] sm:$0xf]
  %v112 = vunpack.c.l.b16 %v108
  %v113 = vunpack.c.h.b16 %v108
  %v114 = vunpack.c.l.b16 %v109
  %v115 = vpack.c.b16 %v112, %v112
  %v116 = vpack.c.b16 %v113, %v113
  %v117 = vpack.c.b16 %v114, %v114
  %vm120 = vcmask 261120
  %v122 = vsel %vm120, %v117, 0
  %124 = vmatpush.bf16.msra.mxu0 %v97
  %125 = vmatpush.bf16.msra.mxu0 %v96
  %126 = vmatpush.bf16.msra.mxu0 %v95
  %127 = vmatpush.bf16.msra.mxu0 %v94
  %128 = vmatpush.bf16.msra.mxu0 %v93
  %129 = vmatpush.bf16.msra.mxu0 %v92
  %130 = vmatpush.bf16.msra.mxu0 %v91
  %131 = vmatpush.bf16.msra.mxu0 %v90
  %132 = vmatmul.bf16.gmra.mxu0 %v115
  %v133 = vpop.f32.mrf.mxu0
  %v134 = vadd.f32 0.0, %v133
  %v135 = vpop.f32.mrf.mxu0
  %136 = vdwg.mxu0
  %137 = vmatpush.bf16.msra.mxu0 %v105
  %138 = vmatpush.bf16.msra.mxu0 %v104
  %139 = vmatpush.bf16.msra.mxu0 %v103
  %140 = vmatpush.bf16.msra.mxu0 %v102
  %141 = vmatpush.bf16.msra.mxu0 %v101
  %142 = vmatpush.bf16.msra.mxu0 %v100
  %143 = vmatpush.bf16.msra.mxu0 %v99
  %144 = vmatpush.bf16.msra.mxu0 %v98
  %145 = vmatmul.bf16.gmra.mxu0 %v116
  %v146 = vpop.f32.mrf.mxu0
  %v147 = vadd.f32 %v134, %v146
  %v148 = vpop.f32.mrf.mxu0
  %149 = vdwg.mxu0
  %150 = vmatpush.bf16.msra.mxu0 0
  %151 = vmatpush.bf16.msra.mxu0 0
  %152 = vmatpush.bf16.msra.mxu0 0
  %153 = vmatpush.bf16.msra.mxu0 0
  %154 = vmatpush.bf16.msra.mxu0 0
  %155 = vmatpush.bf16.msra.mxu0 0
  %156 = vmatpush.bf16.msra.mxu0 %v107
  %157 = vmatpush.bf16.msra.mxu0 %v106
  %158 = vmatmul.bf16.gmra.mxu0 %v122
  %v159 = vpop.f32.mrf.mxu0
  %v160 = vadd.f32 %v147, %v159
  %v161 = vpop.f32.mrf.mxu0
  %162 = vdwg.mxu0
  %163 = vst [vmem:[%s4] sm:$0xff] %v160
  %s164 = scalar_lea.vmem %s1, 12
  %v165 = vld [vmem:[%s164] sm:$0xff]
  %v166 = vld [vmem:[%s164 + $0x8] sm:$0xf]
  %v169 = vunpack.c.l.b16 %v165
  %v170 = vunpack.c.h.b16 %v165
  %v171 = vunpack.c.l.b16 %v166
  %v172 = vpack.c.b16 %v169, %v169
  %v173 = vpack.c.b16 %v170, %v170
  %v174 = vpack.c.b16 %v171, %v171
  %v178 = vsel %vm120, %v174, 0
  %180 = vmatpush.bf16.msra.mxu0 %v97
  %181 = vmatpush.bf16.msra.mxu0 %v96
  %182 = vmatpush.bf16.msra.mxu0 %v95
  %183 = vmatpush.bf16.msra.mxu0 %v94
  %184 = vmatpush.bf16.msra.mxu0 %v93
  %185 = vmatpush.bf16.msra.mxu0 %v92
  %186 = vmatpush.bf16.msra.mxu0 %v91
  %187 = vmatpush.bf16.msra.mxu0 %v90
  %188 = vmatmul.bf16.gmra.mxu0 %v172
  %v189 = vpop.f32.mrf.mxu0
  %v190 = vadd.f32 0.0, %v189
  %v191 = vpop.f32.mrf.mxu0
  %192 = vdwg.mxu0
  %193 = vmatpush.bf16.msra.mxu0 %v105
  %194 = vmatpush.bf16.msra.mxu0 %v104
  %195 = vmatpush.bf16.msra.mxu0 %v103
  %196 = vmatpush.bf16.msra.mxu0 %v102
  %197 = vmatpush.bf16.msra.mxu0 %v101
  %198 = vmatpush.bf16.msra.mxu0 %v100
  %199 = vmatpush.bf16.msra.mxu0 %v99
  %200 = vmatpush.bf16.msra.mxu0 %v98
  %201 = vmatmul.bf16.gmra.mxu0 %v173
  %v202 = vpop.f32.mrf.mxu0
  %v203 = vadd.f32 %v190, %v202
  %v204 = vpop.f32.mrf.mxu0
  %205 = vdwg.mxu0
  %206 = vmatpush.bf16.msra.mxu0 0
  %207 = vmatpush.bf16.msra.mxu0 0
  %208 = vmatpush.bf16.msra.mxu0 0
  %209 = vmatpush.bf16.msra.mxu0 0
  %210 = vmatpush.bf16.msra.mxu0 0
  %211 = vmatpush.bf16.msra.mxu0 0
  %212 = vmatpush.bf16.msra.mxu0 %v107
  %213 = vmatpush.bf16.msra.mxu0 %v106
  %214 = vmatmul.bf16.gmra.mxu0 %v178
  %v215 = vpop.f32.mrf.mxu0
  %v216 = vadd.f32 %v203, %v215
  %v217 = vpop.f32.mrf.mxu0
  %218 = vdwg.mxu0
  %219 = vst [vmem:[%s4 + $0x8] sm:$0xff] %v216
  %s220 = scalar_lea.vmem %s1, 24
  %v221 = vld [vmem:[%s220] sm:$0xff]
  %v222 = vld [vmem:[%s220 + $0x8] sm:$0xf]
  %v225 = vunpack.c.l.b16 %v221
  %v226 = vunpack.c.h.b16 %v221
  %v227 = vunpack.c.l.b16 %v222
  %v228 = vpack.c.b16 %v225, %v225
  %v229 = vpack.c.b16 %v226, %v226
  %v230 = vpack.c.b16 %v227, %v227
  %v234 = vsel %vm120, %v230, 0
  %236 = vmatpush.bf16.msra.mxu0 %v97
  %237 = vmatpush.bf16.msra.mxu0 %v96
  %238 = vmatpush.bf16.msra.mxu0 %v95
  %239 = vmatpush.bf16.msra.mxu0 %v94
  %240 = vmatpush.bf16.msra.mxu0 %v93
  %241 = vmatpush.bf16.msra.mxu0 %v92
  %242 = vmatpush.bf16.msra.mxu0 %v91
  %243 = vmatpush.bf16.msra.mxu0 %v90
  %244 = vmatmul.bf16.gmra.mxu0 %v228
  %v245 = vpop.f32.mrf.mxu0
  %v246 = vadd.f32 0.0, %v245
  %v247 = vpop.f32.mrf.mxu0
  %248 = vdwg.mxu0
  %249 = vmatpush.bf16.msra.mxu0 %v105
  %250 = vmatpush.bf16.msra.mxu0 %v104
  %251 = vmatpush.bf16.msra.mxu0 %v103
  %252 = vmatpush.bf16.msra.mxu0 %v102
  %253 = vmatpush.bf16.msra.mxu0 %v101
  %254 = vmatpush.bf16.msra.mxu0 %v100
  %255 = vmatpush.bf16.msra.mxu0 %v99
  %256 = vmatpush.bf16.msra.mxu0 %v98
  %257 = vmatmul.bf16.gmra.mxu0 %v229
  %v258 = vpop.f32.mrf.mxu0
  %v259 = vadd.f32 %v246, %v258
  %v260 = vpop.f32.mrf.mxu0
  %261 = vdwg.mxu0
  %262 = vmatpush.bf16.msra.mxu0 0
  %263 = vmatpush.bf16.msra.mxu0 0
  %264 = vmatpush.bf16.msra.mxu0 0
  %265 = vmatpush.bf16.msra.mxu0 0
  %266 = vmatpush.bf16.msra.mxu0 0
  %267 = vmatpush.bf16.msra.mxu0 0
  %268 = vmatpush.bf16.msra.mxu0 %v107
  %269 = vmatpush.bf16.msra.mxu0 %v106
  %270 = vmatmul.bf16.gmra.mxu0 %v234
  %v271 = vpop.f32.mrf.mxu0
  %v272 = vadd.f32 %v259, %v271
  %v273 = vpop.f32.mrf.mxu0
  %274 = vdwg.mxu0
  %275 = vst [vmem:[%s4 + $0x10] sm:$0xff] %v272
  %s276 = scalar_lea.vmem %s1, 36
  %v277 = vld [vmem:[%s276] sm:$0xff]
  %v278 = vld [vmem:[%s276 + $0x8] sm:$0xf]
  %v281 = vunpack.c.l.b16 %v277
  %v282 = vunpack.c.h.b16 %v277
  %v283 = vunpack.c.l.b16 %v278
  %v284 = vpack.c.b16 %v281, %v281
  %v285 = vpack.c.b16 %v282, %v282
  %v286 = vpack.c.b16 %v283, %v283
  %v290 = vsel %vm120, %v286, 0
  %292 = vmatpush.bf16.msra.mxu0 %v97
  %293 = vmatpush.bf16.msra.mxu0 %v96
  %294 = vmatpush.bf16.msra.mxu0 %v95
  %295 = vmatpush.bf16.msra.mxu0 %v94
  %296 = vmatpush.bf16.msra.mxu0 %v93
  %297 = vmatpush.bf16.msra.mxu0 %v92
  %298 = vmatpush.bf16.msra.mxu0 %v91
  %299 = vmatpush.bf16.msra.mxu0 %v90
  %300 = vmatmul.bf16.gmra.mxu0 %v284
  %v301 = vpop.f32.mrf.mxu0
  %v302 = vadd.f32 0.0, %v301
  %v303 = vpop.f32.mrf.mxu0
  %304 = vdwg.mxu0
  %305 = vmatpush.bf16.msra.mxu0 %v105
  %306 = vmatpush.bf16.msra.mxu0 %v104
  %307 = vmatpush.bf16.msra.mxu0 %v103
  %308 = vmatpush.bf16.msra.mxu0 %v102
  %309 = vmatpush.bf16.msra.mxu0 %v101
  %310 = vmatpush.bf16.msra.mxu0 %v100
  %311 = vmatpush.bf16.msra.mxu0 %v99
  %312 = vmatpush.bf16.msra.mxu0 %v98
  %313 = vmatmul.bf16.gmra.mxu0 %v285
  %v314 = vpop.f32.mrf.mxu0
  %v315 = vadd.f32 %v302, %v314
  %v316 = vpop.f32.mrf.mxu0
  %317 = vdwg.mxu0
  %318 = vmatpush.bf16.msra.mxu0 0
  %319 = vmatpush.bf16.msra.mxu0 0
  %320 = vmatpush.bf16.msra.mxu0 0
  %321 = vmatpush.bf16.msra.mxu0 0
  %322 = vmatpush.bf16.msra.mxu0 0
  %323 = vmatpush.bf16.msra.mxu0 0
  %324 = vmatpush.bf16.msra.mxu0 %v107
  %325 = vmatpush.bf16.msra.mxu0 %v106
  %326 = vmatmul.bf16.gmra.mxu0 %v290
  %v327 = vpop.f32.mrf.mxu0
  %v328 = vadd.f32 %v315, %v327
  %v329 = vpop.f32.mrf.mxu0
  %330 = vdwg.mxu0
  %331 = vst [vmem:[%s4 + $0x18] sm:$0xff] %v328
  %v332 = vld [vmem:[%s4] sm:$0xff]
  %v333 = vld [vmem:[%s4 + $0x8] sm:$0xff]
  %v334 = vld [vmem:[%s4 + $0x10] sm:$0xff]
  %v335 = vld [vmem:[%s4 + $0x18] sm:$0xff]
  %v336 = vadd.f32 %v332, %v333
  %v337 = vadd.f32 %v336, %v334
  %v338 = vadd.f32 %v337, %v335
  %339 = vadd.xlane.f32.xlu0 %v338
  %v340 = vpop.xlane.xlu0 %339
  %v341 = vrcp.pop 512.0
  %v342 = vmul.f32 512.0, %v341
  %v343 = vsub.f32 1.0, %v342
  %v344 = vmul.f32 %v341, %v343
  %v345 = vadd.f32 %v341, %v344
  %vm346 = vweird.f32 %v341
  %v347 = vsel %vm346, %v341, %v345
  %v348 = vmul.f32 %v340, %v347
  %v349 = vsub.f32 %v332, %v348
  %v350 = vsub.f32 %v333, %v348
  %v351 = vsub.f32 %v334, %v348
  %v352 = vsub.f32 %v335, %v348
  %v353 = vmul.f32 %v349, %v349
  %v354 = vmul.f32 %v350, %v350
  %v355 = vmul.f32 %v351, %v351
  %v356 = vmul.f32 %v352, %v352
  %v357 = vadd.f32 %v353, %v354
  %v358 = vadd.f32 %v357, %v355
  %v359 = vadd.f32 %v358, %v356
  %360 = vadd.xlane.f32.xlu0 %v359
  %v361 = vpop.xlane.xlu0 %360
  %v362 = vmul.f32 %v361, %v347
  %v363 = vld [vmem:[%s2] sm:$0xff]
  %v364 = vadd.f32 %v362, 1e-05
  %v365 = vrsqrt.pop %v364
  %v366 = vmul.f32 %v365, %v364
  %v367 = vmul.f32 %v366, %v365
  %v368 = vmul.f32 0.5, %v367
  %v369 = vsub.f32 1.5, %v368
  %v370 = vmul.f32 %v365, %v369
  %vm371 = vweird.f32 %v364
  %vm372 = vweird.f32 %v365
  %vm373 = vmor %vm371, %vm372
  %v374 = vsel %vm373, %v365, %v370
  %v375 = vmul.f32 %v363, %v374
  %v376 = vld [vmem:[%s3] sm:$0xff]
  %v377 = vmul.f32 %v348, %v375
  %v378 = vsub.f32 %v376, %v377
  %380 = vset.pattern.permute.xlu0 0
  %381 = vperm.xlu0 %380, %v375
  %v382 = vpop.permute.xlu0 %381
  %v384 = vmul.f32 %v332, %v382
  %v385 = vmul.f32 %v333, %v382
  %v386 = vmul.f32 %v334, %v382
  %v387 = vmul.f32 %v335, %v382
  %389 = vset.pattern.permute.xlu0 0
  %390 = vperm.xlu0 %389, %v378
  %v391 = vpop.permute.xlu0 %390
  %v393 = vadd.f32 %v384, %v391
  %v394 = vadd.f32 %v385, %v391
  %v395 = vadd.f32 %v386, %v391
  %v396 = vadd.f32 %v387, %v391
  %397 = vst [vmem:[%s4] sm:$0xff] %v393
  %398 = vst [vmem:[%s4 + $0x8] sm:$0xff] %v394
  %399 = vst [vmem:[%s4 + $0x10] sm:$0xff] %v395
  %400 = vst [vmem:[%s4 + $0x18] sm:$0xff] %v396
  // Predicated region
  $region18: #{unet_forward.18} parent=0 // pred_check
    _
  $region19: #{unet_forward.18} parent=0 // pred_check_branch
    %402 = sbr.rel (0) target = $region21
  $region20: #{unet_forward.18} parent=0 // pred_region
    _
  $region21: #{unet_forward.18} parent=0 // pred_fallthru
    _
  // Predicated region
  $region22: #{unet_forward.18} parent=0 // pred_check
    _
  $region23: #{unet_forward.18} parent=0 // pred_check_branch
    %404 = sbr.rel (0) target = $region25
  $region24: #{unet_forward.18} parent=0 // pred_region
    _
  $region25: #{unet_forward.18} parent=0 // pred_fallthru
    _

// kernel: unet_forward.19
$region0: #{unet_forward.19}
  #allocation0 [shape = 'u32[]', space=smem, size = 0x4, offset = 0x4, fixed_abs, tag = 'smem constant byte address 0x4 - core index']
  #allocation1 [shape = 'u32[72,128]{1,0:T(1,128)}', space=vmem, size = 0x9000, scoped, tag = 'internal scratch']
  %s0 = inlined_call_operand.vmem [shape: f32[144,512], index: 0, kind: input, shape index: {}]
  %s1 = inlined_call_operand.vmem [shape: bf16[4,3,144], index: 1, kind: input, shape index: {}]
  %s2 = inlined_call_operand.vmem [shape: f32[3,1], index: 2, kind: input, shape index: {}]
  %s3 = inlined_call_operand.vmem [shape: f32[3,2048], index: 3, kind: output, shape index: {}]
  %s4 = sld [smem:[#allocation0]]
  $region22: #{unet_forward.19} parent=0
    _
  %s6 = ssub.s32 1, %s4
  %s7 = scalar_select 0, %s6, %s4
  // Predicated region
  $region2: #{unet_forward.19} parent=0 // pred_check
    _
  $region3: #{unet_forward.19} parent=0 // pred_check_branch
    %9 = sbr.rel (0) target = $region5
  $region4: #{unet_forward.19} parent=0 // pred_region
    _
  $region5: #{unet_forward.19} parent=0 // pred_fallthru
    _
  // Predicated region
  $region6: #{unet_forward.19} parent=0 // pred_check
    _
  $region7: #{unet_forward.19} parent=0 // pred_check_branch
    %11 = sbr.rel (0) target = $region9
  $region8: #{unet_forward.19} parent=0 // pred_region
    _
  $region9: #{unet_forward.19} parent=0 // pred_fallthru
    _
  // Predicated region
  $region10: #{unet_forward.19} parent=0 // pred_check
    _
  $region11: #{unet_forward.19} parent=0 // pred_check_branch
    %13 = sbr.rel (0) target = $region13
  $region12: #{unet_forward.19} parent=0 // pred_region
    _
  $region13: #{unet_forward.19} parent=0 // pred_fallthru
    _
  %v15 = vld [vmem:[%s0] sm:$0xff]
  %v16 = vld [vmem:[%s0 + $0x8] sm:$0xff]
  %v17 = vld [vmem:[%s0 + $0x10] sm:$0xff]
  %v18 = vld [vmem:[%s0 + $0x18] sm:$0xff]
  %v19 = vld [vmem:[%s0 + $0x20] sm:$0xff]
  %v20 = vld [vmem:[%s0 + $0x28] sm:$0xff]
  %v21 = vld [vmem:[%s0 + $0x30] sm:$0xff]
  %v22 = vld [vmem:[%s0 + $0x38] sm:$0xff]
  %v23 = vld [vmem:[%s0 + $0x40] sm:$0xff]
  %v24 = vld [vmem:[%s0 + $0x48] sm:$0xff]
  %v25 = vld [vmem:[%s0 + $0x50] sm:$0xff]
  %v26 = vld [vmem:[%s0 + $0x58] sm:$0xff]
  %v27 = vld [vmem:[%s0 + $0x60] sm:$0xff]
  %v28 = vld [vmem:[%s0 + $0x68] sm:$0xff]
  %v29 = vld [vmem:[%s0 + $0x70] sm:$0xff]
  %v30 = vld [vmem:[%s0 + $0x78] sm:$0xff]
  %v31 = vld [vmem:[%s0 + $0x80] sm:$0xff]
  %v32 = vld [vmem:[%s0 + $0x88] sm:$0xff]
  %v33 = vld [vmem:[%s0 + $0x90] sm:$0xff]
  %v34 = vld [vmem:[%s0 + $0x98] sm:$0xff]
  %v35 = vld [vmem:[%s0 + $0xa0] sm:$0xff]
  %v36 = vld [vmem:[%s0 + $0xa8] sm:$0xff]
  %v37 = vld [vmem:[%s0 + $0xb0] sm:$0xff]
  %v38 = vld [vmem:[%s0 + $0xb8] sm:$0xff]
  %v39 = vld [vmem:[%s0 + $0xc0] sm:$0xff]
  %v40 = vld [vmem:[%s0 + $0xc8] sm:$0xff]
  %v41 = vld [vmem:[%s0 + $0xd0] sm:$0xff]
  %v42 = vld [vmem:[%s0 + $0xd8] sm:$0xff]
  %v43 = vld [vmem:[%s0 + $0xe0] sm:$0xff]
  %v44 = vld [vmem:[%s0 + $0xe8] sm:$0xff]
  %v45 = vld [vmem:[%s0 + $0xf0] sm:$0xff]
  %v46 = vld [vmem:[%s0 + $0xf8] sm:$0xff]
  %v47 = vld [vmem:[%s0 + $0x100] sm:$0xff]
  %v48 = vld [vmem:[%s0 + $0x108] sm:$0xff]
  %v49 = vld [vmem:[%s0 + $0x110] sm:$0xff]
  %v50 = vld [vmem:[%s0 + $0x118] sm:$0xff]
  %v51 = vld [vmem:[%s0 + $0x120] sm:$0xff]
  %v52 = vld [vmem:[%s0 + $0x128] sm:$0xff]
  %v53 = vld [vmem:[%s0 + $0x130] sm:$0xff]
  %v54 = vld [vmem:[%s0 + $0x138] sm:$0xff]
  %v55 = vld [vmem:[%s0 + $0x140] sm:$0xff]
  %v56 = vld [vmem:[%s0 + $0x148] sm:$0xff]
  %v57 = vld [vmem:[%s0 + $0x150] sm:$0xff]
  %v58 = vld [vmem:[%s0 + $0x158] sm:$0xff]
  %v59 = vld [vmem:[%s0 + $0x160] sm:$0xff]
  %v60 = vld [vmem:[%s0 + $0x168] sm:$0xff]
  %v61 = vld [vmem:[%s0 + $0x170] sm:$0xff]
  %v62 = vld [vmem:[%s0 + $0x178] sm:$0xff]
  %v63 = vld [vmem:[%s0 + $0x180] sm:$0xff]
  %v64 = vld [vmem:[%s0 + $0x188] sm:$0xff]
  %v65 = vld [vmem:[%s0 + $0x190] sm:$0xff]
  %v66 = vld [vmem:[%s0 + $0x198] sm:$0xff]
  %v67 = vld [vmem:[%s0 + $0x1a0] sm:$0xff]
  %v68 = vld [vmem:[%s0 + $0x1a8] sm:$0xff]
  %v69 = vld [vmem:[%s0 + $0x1b0] sm:$0xff]
  %v70 = vld [vmem:[%s0 + $0x1b8] sm:$0xff]
  %v71 = vld [vmem:[%s0 + $0x1c0] sm:$0xff]
  %v72 = vld [vmem:[%s0 + $0x1c8] sm:$0xff]
  %v73 = vld [vmem:[%s0 + $0x1d0] sm:$0xff]
  %v74 = vld [vmem:[%s0 + $0x1d8] sm:$0xff]
  %v75 = vld [vmem:[%s0 + $0x1e0] sm:$0xff]
  %v76 = vld [vmem:[%s0 + $0x1e8] sm:$0xff]
  %v77 = vld [vmem:[%s0 + $0x1f0] sm:$0xff]
  %v78 = vld [vmem:[%s0 + $0x1f8] sm:$0xff]
  %v79 = vld [vmem:[%s0 + $0x200] sm:$0xff]
  %v80 = vld [vmem:[%s0 + $0x208] sm:$0xff]
  %v81 = vld [vmem:[%s0 + $0x210] sm:$0xff]
  %v82 = vld [vmem:[%s0 + $0x218] sm:$0xff]
  %v83 = vld [vmem:[%s0 + $0x220] sm:$0xff]
  %v84 = vld [vmem:[%s0 + $0x228] sm:$0xff]
  %v85 = vld [vmem:[%s0 + $0x230] sm:$0xff]
  %v86 = vld [vmem:[%s0 + $0x238] sm:$0xff]
  %v87 = vmax.f32 %v15, 0.0
  %v88 = vmax.f32 %v16, 0.0
  %v89 = vmax.f32 %v17, 0.0
  %v90 = vmax.f32 %v18, 0.0
  %v91 = vmax.f32 %v19, 0.0
  %v92 = vmax.f32 %v20, 0.0
  %v93 = vmax.f32 %v21, 0.0
  %v94 = vmax.f32 %v22, 0.0
  %v95 = vmax.f32 %v23, 0.0
  %v96 = vmax.f32 %v24, 0.0
  %v97 = vmax.f32 %v25, 0.0
  %v98 = vmax.f32 %v26, 0.0
  %v99 = vmax.f32 %v27, 0.0
  %v100 = vmax.f32 %v28, 0.0
  %v101 = vmax.f32 %v29, 0.0
  %v102 = vmax.f32 %v30, 0.0
  %v103 = vmax.f32 %v31, 0.0
  %v104 = vmax.f32 %v32, 0.0
  %v105 = vmax.f32 %v33, 0.0
  %v106 = vmax.f32 %v34, 0.0
  %v107 = vmax.f32 %v35, 0.0
  %v108 = vmax.f32 %v36, 0.0
  %v109 = vmax.f32 %v37, 0.0
  %v110 = vmax.f32 %v38, 0.0
  %v111 = vmax.f32 %v39, 0.0
  %v112 = vmax.f32 %v40, 0.0
  %v113 = vmax.f32 %v41, 0.0
  %v114 = vmax.f32 %v42, 0.0
  %v115 = vmax.f32 %v43, 0.0
  %v116 = vmax.f32 %v44, 0.0
  %v117 = vmax.f32 %v45, 0.0
  %v118 = vmax.f32 %v46, 0.0
  %v119 = vmax.f32 %v47, 0.0
  %v120 = vmax.f32 %v48, 0.0
  %v121 = vmax.f32 %v49, 0.0
  %v122 = vmax.f32 %v50, 0.0
  %v123 = vmax.f32 %v51, 0.0
  %v124 = vmax.f32 %v52, 0.0
  %v125 = vmax.f32 %v53, 0.0
  %v126 = vmax.f32 %v54, 0.0
  %v127 = vmax.f32 %v55, 0.0
  %v128 = vmax.f32 %v56, 0.0
  %v129 = vmax.f32 %v57, 0.0
  %v130 = vmax.f32 %v58, 0.0
  %v131 = vmax.f32 %v59, 0.0
  %v132 = vmax.f32 %v60, 0.0
  %v133 = vmax.f32 %v61, 0.0
  %v134 = vmax.f32 %v62, 0.0
  %v135 = vmax.f32 %v63, 0.0
  %v136 = vmax.f32 %v64, 0.0
  %v137 = vmax.f32 %v65, 0.0
  %v138 = vmax.f32 %v66, 0.0
  %v139 = vmax.f32 %v67, 0.0
  %v140 = vmax.f32 %v68, 0.0
  %v141 = vmax.f32 %v69, 0.0
  %v142 = vmax.f32 %v70, 0.0
  %v143 = vmax.f32 %v71, 0.0
  %v144 = vmax.f32 %v72, 0.0
  %v145 = vmax.f32 %v73, 0.0
  %v146 = vmax.f32 %v74, 0.0
  %v147 = vmax.f32 %v75, 0.0
  %v148 = vmax.f32 %v76, 0.0
  %v149 = vmax.f32 %v77, 0.0
  %v150 = vmax.f32 %v78, 0.0
  %v151 = vmax.f32 %v79, 0.0
  %v152 = vmax.f32 %v80, 0.0
  %v153 = vmax.f32 %v81, 0.0
  %v154 = vmax.f32 %v82, 0.0
  %v155 = vmax.f32 %v83, 0.0
  %v156 = vmax.f32 %v84, 0.0
  %v157 = vmax.f32 %v85, 0.0
  %v158 = vmax.f32 %v86, 0.0
  %v159 = vpack.c.bf16 %v91, %v87
  %v160 = vpack.c.bf16 %v92, %v88
  %v161 = vpack.c.bf16 %v93, %v89
  %v162 = vpack.c.bf16 %v94, %v90
  %v163 = vpack.c.bf16 %v99, %v95
  %v164 = vpack.c.bf16 %v100, %v96
  %v165 = vpack.c.bf16 %v101, %v97
  %v166 = vpack.c.bf16 %v102, %v98
  %v167 = vpack.c.bf16 %v107, %v103
  %v168 = vpack.c.bf16 %v108, %v104
  %v169 = vpack.c.bf16 %v109, %v105
  %v170 = vpack.c.bf16 %v110, %v106
  %v171 = vpack.c.bf16 %v115, %v111
  %v172 = vpack.c.bf16 %v116, %v112
  %v173 = vpack.c.bf16 %v117, %v113
  %v174 = vpack.c.bf16 %v118, %v114
  %v175 = vpack.c.bf16 %v123, %v119
  %v176 = vpack.c.bf16 %v124, %v120
  %v177 = vpack.c.bf16 %v125, %v121
  %v178 = vpack.c.bf16 %v126, %v122
  %v179 = vpack.c.bf16 %v131, %v127
  %v180 = vpack.c.bf16 %v132, %v128
  %v181 = vpack.c.bf16 %v133, %v129
  %v182 = vpack.c.bf16 %v134, %v130
  %v183 = vpack.c.bf16 %v139, %v135
  %v184 = vpack.c.bf16 %v140, %v136
  %v185 = vpack.c.bf16 %v141, %v137
  %v186 = vpack.c.bf16 %v142, %v138
  %v187 = vpack.c.bf16 %v147, %v143
  %v188 = vpack.c.bf16 %v148, %v144
  %v189 = vpack.c.bf16 %v149, %v145
  %v190 = vpack.c.bf16 %v150, %v146
  %v191 = vpack.c.bf16 %v155, %v151
  %v192 = vpack.c.bf16 %v156, %v152
  %v193 = vpack.c.bf16 %v157, %v153
  %v194 = vpack.c.bf16 %v158, %v154
  %v195 = vld [vmem:[%s1] sm:$0xf]
  %v196 = vld [vmem:[%s2] sm:$0x7]
  %198 = vset.pattern.permute.xlu0 0
  %199 = vperm.xlu0 %198, %v196
  %v200 = vpop.permute.xlu0 %199
  %203 = vst [vmem:[#allocation1] ss:$4 sm:$0xff] %v195
  %v204 = vld.sshfl [vmem:[#allocation1] sm:$0xff pattern:$0x73625140]
  %v205 = vld.sshfl [vmem:[#allocation1 + $0x8] sm:$0xff pattern:$0x73625140]
  %vm207 = vcmask 130048
  %v208 = vsel %vm207, %v205, 0
  %210 = vmatpush.bf16.msra.mxu0 %v187
  %211 = vmatpush.bf16.msra.mxu0 %v183
  %212 = vmatpush.bf16.msra.mxu0 %v179
  %213 = vmatpush.bf16.msra.mxu0 %v175
  %214 = vmatpush.bf16.msra.mxu0 %v171
  %215 = vmatpush.bf16.msra.mxu0 %v167
  %216 = vmatpush.bf16.msra.mxu0 %v163
  %217 = vmatpush.bf16.msra.mxu0 %v159
  %218 = vmatmul.bf16.gmra.mxu0 %v204
  %v219 = vpop.f32.mrf.mxu0
  %v220 = vadd.f32 %v200, %v219
  %v221 = vpop.f32.mrf.mxu0
  %222 = vdwg.mxu0
  %223 = vmatpush.bf16.msra.mxu0 0
  %224 = vmatpush.bf16.msra.mxu0 0
  %225 = vmatpush.bf16.msra.mxu0 0
  %226 = vmatpush.bf16.msra.mxu0 0
  %227 = vmatpush.bf16.msra.mxu0 0
  %228 = vmatpush.bf16.msra.mxu0 0
  %229 = vmatpush.bf16.msra.mxu0 0
  %230 = vmatpush.bf16.msra.mxu0 %v191
  %231 = vmatmul.bf16.gmra.mxu0 %v208
  %v232 = vpop.f32.mrf.mxu0
  %v233 = vadd.f32 %v220, %v232
  %v234 = vpop.f32.mrf.mxu0
  %235 = vdwg.mxu0
  %236 = vmatpush.bf16.msra.mxu0 %v188
  %237 = vmatpush.bf16.msra.mxu0 %v184
  %238 = vmatpush.bf16.msra.mxu0 %v180
  %239 = vmatpush.bf16.msra.mxu0 %v176
  %240 = vmatpush.bf16.msra.mxu0 %v172
  %241 = vmatpush.bf16.msra.mxu0 %v168
  %242 = vmatpush.bf16.msra.mxu0 %v164
  %243 = vmatpush.bf16.msra.mxu0 %v160
  %244 = vmatmul.bf16.gmra.mxu0 %v204
  %v245 = vpop.f32.mrf.mxu0
  %v246 = vadd.f32 %v200, %v245
  %v247 = vpop.f32.mrf.mxu0
  %248 = vdwg.mxu0
  %249 = vmatpush.bf16.msra.mxu0 0
  %250 = vmatpush.bf16.msra.mxu0 0
  %251 = vmatpush.bf16.msra.mxu0 0
  %252 = vmatpush.bf16.msra.mxu0 0
  %253 = vmatpush.bf16.msra.mxu0 0
  %254 = vmatpush.bf16.msra.mxu0 0
  %255 = vmatpush.bf16.msra.mxu0 0
  %256 = vmatpush.bf16.msra.mxu0 %v192
  %257 = vmatmul.bf16.gmra.mxu0 %v208
  %v258 = vpop.f32.mrf.mxu0
  %v259 = vadd.f32 %v246, %v258
  %v260 = vpop.f32.mrf.mxu0
  %261 = vdwg.mxu0
  %262 = vmatpush.bf16.msra.mxu0 %v189
  %263 = vmatpush.bf16.msra.mxu0 %v185
  %264 = vmatpush.bf16.msra.mxu0 %v181
  %265 = vmatpush.bf16.msra.mxu0 %v177
  %266 = vmatpush.bf16.msra.mxu0 %v173
  %267 = vmatpush.bf16.msra.mxu0 %v169
  %268 = vmatpush.bf16.msra.mxu0 %v165
  %269 = vmatpush.bf16.msra.mxu0 %v161
  %270 = vmatmul.bf16.gmra.mxu0 %v204
  %v271 = vpop.f32.mrf.mxu0
  %v272 = vadd.f32 %v200, %v271
  %v273 = vpop.f32.mrf.mxu0
  %274 = vdwg.mxu0
  %275 = vmatpush.bf16.msra.mxu0 0
  %276 = vmatpush.bf16.msra.mxu0 0
  %277 = vmatpush.bf16.msra.mxu0 0
  %278 = vmatpush.bf16.msra.mxu0 0
  %279 = vmatpush.bf16.msra.mxu0 0
  %280 = vmatpush.bf16.msra.mxu0 0
  %281 = vmatpush.bf16.msra.mxu0 0
  %282 = vmatpush.bf16.msra.mxu0 %v193
  %283 = vmatmul.bf16.gmra.mxu0 %v208
  %v284 = vpop.f32.mrf.mxu0
  %v285 = vadd.f32 %v272, %v284
  %v286 = vpop.f32.mrf.mxu0
  %287 = vdwg.mxu0
  %288 = vmatpush.bf16.msra.mxu0 %v190
  %289 = vmatpush.bf16.msra.mxu0 %v186
  %290 = vmatpush.bf16.msra.mxu0 %v182
  %291 = vmatpush.bf16.msra.mxu0 %v178
  %292 = vmatpush.bf16.msra.mxu0 %v174
  %293 = vmatpush.bf16.msra.mxu0 %v170
  %294 = vmatpush.bf16.msra.mxu0 %v166
  %295 = vmatpush.bf16.msra.mxu0 %v162
  %296 = vmatmul.bf16.gmra.mxu0 %v204
  %v297 = vpop.f32.mrf.mxu0
  %v298 = vadd.f32 %v200, %v297
  %v299 = vpop.f32.mrf.mxu0
  %300 = vdwg.mxu0
  %301 = vmatpush.bf16.msra.mxu0 0
  %302 = vmatpush.bf16.msra.mxu0 0
  %303 = vmatpush.bf16.msra.mxu0 0
  %304 = vmatpush.bf16.msra.mxu0 0
  %305 = vmatpush.bf16.msra.mxu0 0
  %306 = vmatpush.bf16.msra.mxu0 0
  %307 = vmatpush.bf16.msra.mxu0 0
  %308 = vmatpush.bf16.msra.mxu0 %v194
  %309 = vmatmul.bf16.gmra.mxu0 %v208
  %v310 = vpop.f32.mrf.mxu0
  %v311 = vadd.f32 %v298, %v310
  %v312 = vpop.f32.mrf.mxu0
  %313 = vdwg.mxu0
  %v314 = vtanh.pop %v233
  %v315 = vtanh.pop %v259
  %v316 = vtanh.pop %v285
  %v317 = vtanh.pop %v311
  %v322 = vrot.slane %v315, 4
  %v323 = vrot.slane %v317, 4
  %vm324 = vcmask 1043456
  %v325 = vsel %vm324, %v314, %v322
  %v326 = vsel %vm324, %v316, %v323
  %329 = vst [vmem:[%s3] sm:$0x77] %v325
  %330 = vst [vmem:[%s3 + $0x8] sm:$0x77] %v326
  %s331 = scalar_lea.vmem %s1, 4
  %v332 = vld [vmem:[%s331] sm:$0xf]
  %v333 = vld [vmem:[%s2] sm:$0x7]
  %335 = vset.pattern.permute.xlu0 0
  %336 = vperm.xlu0 %335, %v333
  %v337 = vpop.permute.xlu0 %336
  %340 = vst [vmem:[#allocation1] ss:$4 sm:$0xff] %v332
  %v341 = vld.sshfl [vmem:[#allocation1] sm:$0xff pattern:$0x73625140]
  %v342 = vld.sshfl [vmem:[#allocation1 + $0x8] sm:$0xff pattern:$0x73625140]
  %v344 = vsel %vm207, %v342, 0
  %346 = vmatpush.bf16.msra.mxu0 %v187
  %347 = vmatpush.bf16.msra.mxu0 %v183
  %348 = vmatpush.bf16.msra.mxu0 %v179
  %349 = vmatpush.bf16.msra.mxu0 %v175
  %350 = vmatpush.bf16.msra.mxu0 %v171
  %351 = vmatpush.bf16.msra.mxu0 %v167
  %352 = vmatpush.bf16.msra.mxu0 %v163
  %353 = vmatpush.bf16.msra.mxu0 %v159
  %354 = vmatmul.bf16.gmra.mxu0 %v341
  %v355 = vpop.f32.mrf.mxu0
  %v356 = vadd.f32 %v337, %v355
  %v357 = vpop.f32.mrf.mxu0
  %358 = vdwg.mxu0
  %359 = vmatpush.bf16.msra.mxu0 0
  %360 = vmatpush.bf16.msra.mxu0 0
  %361 = vmatpush.bf16.msra.mxu0 0
  %362 = vmatpush.bf16.msra.mxu0 0
  %363 = vmatpush.bf16.msra.mxu0 0
  %364 = vmatpush.bf16.msra.mxu0 0
  %365 = vmatpush.bf16.msra.mxu0 0
  %366 = vmatpush.bf16.msra.mxu0 %v191
  %367 = vmatmul.bf16.gmra.mxu0 %v344
  %v368 = vpop.f32.mrf.mxu0
  %v369 = vadd.f32 %v356, %v368
  %v370 = vpop.f32.mrf.mxu0
  %371 = vdwg.mxu0
  %372 = vmatpush.bf16.msra.mxu0 %v188
  %373 = vmatpush.bf16.msra.mxu0 %v184
  %374 = vmatpush.bf16.msra.mxu0 %v180
  %375 = vmatpush.bf16.msra.mxu0 %v176
  %376 = vmatpush.bf16.msra.mxu0 %v172
  %377 = vmatpush.bf16.msra.mxu0 %v168
  %378 = vmatpush.bf16.msra.mxu0 %v164
  %379 = vmatpush.bf16.msra.mxu0 %v160
  %380 = vmatmul.bf16.gmra.mxu0 %v341
  %v381 = vpop.f32.mrf.mxu0
  %v382 = vadd.f32 %v337, %v381
  %v383 = vpop.f32.mrf.mxu0
  %384 = vdwg.mxu0
  %385 = vmatpush.bf16.msra.mxu0 0
  %386 = vmatpush.bf16.msra.mxu0 0
  %387 = vmatpush.bf16.msra.mxu0 0
  %388 = vmatpush.bf16.msra.mxu0 0
  %389 = vmatpush.bf16.msra.mxu0 0
  %390 = vmatpush.bf16.msra.mxu0 0
  %391 = vmatpush.bf16.msra.mxu0 0
  %392 = vmatpush.bf16.msra.mxu0 %v192
  %393 = vmatmul.bf16.gmra.mxu0 %v344
  %v394 = vpop.f32.mrf.mxu0
  %v395 = vadd.f32 %v382, %v394
  %v396 = vpop.f32.mrf.mxu0
  %397 = vdwg.mxu0
  %398 = vmatpush.bf16.msra.mxu0 %v189
  %399 = vmatpush.bf16.msra.mxu0 %v185
  %400 = vmatpush.bf16.msra.mxu0 %v181
  %401 = vmatpush.bf16.msra.mxu0 %v177
  %402 = vmatpush.bf16.msra.mxu0 %v173
  %403 = vmatpush.bf16.msra.mxu0 %v169
  %404 = vmatpush.bf16.msra.mxu0 %v165
  %405 = vmatpush.bf16.msra.mxu0 %v161
  %406 = vmatmul.bf16.gmra.mxu0 %v341
  %v407 = vpop.f32.mrf.mxu0
  %v408 = vadd.f32 %v337, %v407
  %v409 = vpop.f32.mrf.mxu0
  %410 = vdwg.mxu0
  %411 = vmatpush.bf16.msra.mxu0 0
  %412 = vmatpush.bf16.msra.mxu0 0
  %413 = vmatpush.bf16.msra.mxu0 0
  %414 = vmatpush.bf16.msra.mxu0 0
  %415 = vmatpush.bf16.msra.mxu0 0
  %416 = vmatpush.bf16.msra.mxu0 0
  %417 = vmatpush.bf16.msra.mxu0 0
  %418 = vmatpush.bf16.msra.mxu0 %v193
  %419 = vmatmul.bf16.gmra.mxu0 %v344
  %v420 = vpop.f32.mrf.mxu0
  %v421 = vadd.f32 %v408, %v420
  %v422 = vpop.f32.mrf.mxu0
  %423 = vdwg.mxu0
  %424 = vmatpush.bf16.msra.mxu0 %v190
  %425 = vmatpush.bf16.msra.mxu0 %v186
  %426 = vmatpush.bf16.msra.mxu0 %v182
  %427 = vmatpush.bf16.msra.mxu0 %v178
  %428 = vmatpush.bf16.msra.mxu0 %v174
  %429 = vmatpush.bf16.msra.mxu0 %v170
  %430 = vmatpush.bf16.msra.mxu0 %v166
  %431 = vmatpush.bf16.msra.mxu0 %v162
  %432 = vmatmul.bf16.gmra.mxu0 %v341
  %v433 = vpop.f32.mrf.mxu0
  %v434 = vadd.f32 %v337, %v433
  %v435 = vpop.f32.mrf.mxu0
  %436 = vdwg.mxu0
  %437 = vmatpush.bf16.msra.mxu0 0
  %438 = vmatpush.bf16.msra.mxu0 0
  %439 = vmatpush.bf16.msra.mxu0 0
  %440 = vmatpush.bf16.msra.mxu0 0
  %441 = vmatpush.bf16.msra.mxu0 0
  %442 = vmatpush.bf16.msra.mxu0 0
  %443 = vmatpush.bf16.msra.mxu0 0
  %444 = vmatpush.bf16.msra.mxu0 %v194
  %445 = vmatmul.bf16.gmra.mxu0 %v344
  %v446 = vpop.f32.mrf.mxu0
  %v447 = vadd.f32 %v434, %v446
  %v448 = vpop.f32.mrf.mxu0
  %449 = vdwg.mxu0
  %v450 = vtanh.pop %v369
  %v451 = vtanh.pop %v395
  %v452 = vtanh.pop %v421
  %v453 = vtanh.pop %v447
  %v458 = vrot.slane %v451, 4
  %v459 = vrot.slane %v453, 4
  %v460 = vsel %vm324, %v450, %v458
  %v461 = vsel %vm324, %v452, %v459
  %464 = vst [vmem:[%s3 + $0x10] sm:$0x77] %v460
  %465 = vst [vmem:[%s3 + $0x18] sm:$0x77] %v461
  %s466 = scalar_lea.vmem %s1, 8
  %v467 = vld [vmem:[%s466] sm:$0xf]
  %v468 = vld [vmem:[%s2] sm:$0x7]
  %470 = vset.pattern.permute.xlu0 0
  %471 = vperm.xlu0 %470, %v468
  %v472 = vpop.permute.xlu0 %471
  %475 = vst [vmem:[#allocation1] ss:$4 sm:$0xff] %v467
  %v476 = vld.sshfl [vmem:[#allocation1] sm:$0xff pattern:$0x73625140]
  %v477 = vld.sshfl [vmem:[#allocation1 + $0x8] sm:$0xff pattern:$0x73625140]
  %v479 = vsel %vm207, %v477, 0
  %481 = vmatpush.bf16.msra.mxu0 %v187
  %482 = vmatpush.bf16.msra.mxu0 %v183
  %483 = vmatpush.bf16.msra.mxu0 %v179
  %484 = vmatpush.bf16.msra.mxu0 %v175
  %485 = vmatpush.bf16.msra.mxu0 %v171
  %486 = vmatpush.bf16.msra.mxu0 %v167
  %487 = vmatpush.bf16.msra.mxu0 %v163
  %488 = vmatpush.bf16.msra.mxu0 %v159
  %489 = vmatmul.bf16.gmra.mxu0 %v476
  %v490 = vpop.f32.mrf.mxu0
  %v491 = vadd.f32 %v472, %v490
  %v492 = vpop.f32.mrf.mxu0
  %493 = vdwg.mxu0
  %494 = vmatpush.bf16.msra.mxu0 0
  %495 = vmatpush.bf16.msra.mxu0 0
  %496 = vmatpush.bf16.msra.mxu0 0
  %497 = vmatpush.bf16.msra.mxu0 0
  %498 = vmatpush.bf16.msra.mxu0 0
  %499 = vmatpush.bf16.msra.mxu0 0
  %500 = vmatpush.bf16.msra.mxu0 0
  %501 = vmatpush.bf16.msra.mxu0 %v191
  %502 = vmatmul.bf16.gmra.mxu0 %v479
  %v503 = vpop.f32.mrf.mxu0
  %v504 = vadd.f32 %v491, %v503
  %v505 = vpop.f32.mrf.mxu0
  %506 = vdwg.mxu0
  %507 = vmatpush.bf16.msra.mxu0 %v188
  %508 = vmatpush.bf16.msra.mxu0 %v184
  %509 = vmatpush.bf16.msra.mxu0 %v180
  %510 = vmatpush.bf16.msra.mxu0 %v176
  %511 = vmatpush.bf16.msra.mxu0 %v172
  %512 = vmatpush.bf16.msra.mxu0 %v168
  %513 = vmatpush.bf16.msra.mxu0 %v164
  %514 = vmatpush.bf16.msra.mxu0 %v160
  %515 = vmatmul.bf16.gmra.mxu0 %v476
  %v516 = vpop.f32.mrf.mxu0
  %v517 = vadd.f32 %v472, %v516
  %v518 = vpop.f32.mrf.mxu0
  %519 = vdwg.mxu0
  %520 = vmatpush.bf16.msra.mxu0 0
  %521 = vmatpush.bf16.msra.mxu0 0
  %522 = vmatpush.bf16.msra.mxu0 0
  %523 = vmatpush.bf16.msra.mxu0 0
  %524 = vmatpush.bf16.msra.mxu0 0
  %525 = vmatpush.bf16.msra.mxu0 0
  %526 = vmatpush.bf16.msra.mxu0 0
  %527 = vmatpush.bf16.msra.mxu0 %v192
  %528 = vmatmul.bf16.gmra.mxu0 %v479
  %v529 = vpop.f32.mrf.mxu0
  %v530 = vadd.f32 %v517, %v529
  %v531 = vpop.f32.mrf.mxu0
  %532 = vdwg.mxu0
  %533 = vmatpush.bf16.msra.mxu0 %v189
  %534 = vmatpush.bf16.msra.mxu0 %v185
  %535 = vmatpush.bf16.msra.mxu0 %v181
  %536 = vmatpush.bf16.msra.mxu0 %v177
  %537 = vmatpush.bf16.msra.mxu0 %v173
  %538 = vmatpush.bf16.msra.mxu0 %v169
  %539 = vmatpush.bf16.msra.mxu0 %v165
  %540 = vmatpush.bf16.msra.mxu0 %v161
  %541 = vmatmul.bf16.gmra.mxu0 %v476
  %v542 = vpop.f32.mrf.mxu0
  %v543 = vadd.f32 %v472, %v542
  %v544 = vpop.f32.mrf.mxu0
  %545 = vdwg.mxu0
  %546 = vmatpush.bf16.msra.mxu0 0
  %547 = vmatpush.bf16.msra.mxu0 0
  %548 = vmatpush.bf16.msra.mxu0 0
  %549 = vmatpush.bf16.msra.mxu0 0
  %550 = vmatpush.bf16.msra.mxu0 0
  %551 = vmatpush.bf16.msra.mxu0 0
  %552 = vmatpush.bf16.msra.mxu0 0
  %553 = vmatpush.bf16.msra.mxu0 %v193
  %554 = vmatmul.bf16.gmra.mxu0 %v479
  %v555 = vpop.f32.mrf.mxu0
  %v556 = vadd.f32 %v543, %v555
  %v557 = vpop.f32.mrf.mxu0
  %558 = vdwg.mxu0
  %559 = vmatpush.bf16.msra.mxu0 %v190
  %560 = vmatpush.bf16.msra.mxu0 %v186
  %561 = vmatpush.bf16.msra.mxu0 %v182
  %562 = vmatpush.bf16.msra.mxu0 %v178
  %563 = vmatpush.bf16.msra.mxu0 %v174
  %564 = vmatpush.bf16.msra.mxu0 %v170
  %565 = vmatpush.bf16.msra.mxu0 %v166
  %566 = vmatpush.bf16.msra.mxu0 %v162
  %567 = vmatmul.bf16.gmra.mxu0 %v476
  %v568 = vpop.f32.mrf.mxu0
  %v569 = vadd.f32 %v472, %v568
  %v570 = vpop.f32.mrf.mxu0
  %571 = vdwg.mxu0
  %572 = vmatpush.bf16.msra.mxu0 0
  %573 = vmatpush.bf16.msra.mxu0 0
  %574 = vmatpush.bf16.msra.mxu0 0
  %575 = vmatpush.bf16.msra.mxu0 0
  %576 = vmatpush.bf16.msra.mxu0 0
  %577 = vmatpush.bf16.msra.mxu0 0
  %578 = vmatpush.bf16.msra.mxu0 0
  %579 = vmatpush.bf16.msra.mxu0 %v194
  %580 = vmatmul.bf16.gmra.mxu0 %v479
  %v581 = vpop.f32.mrf.mxu0
  %v582 = vadd.f32 %v569, %v581
  %v583 = vpop.f32.mrf.mxu0
  %584 = vdwg.mxu0
  %v585 = vtanh.pop %v504
  %v586 = vtanh.pop %v530
  %v587 = vtanh.pop %v556
  %v588 = vtanh.pop %v582
  %v593 = vrot.slane %v586, 4
  %v594 = vrot.slane %v588, 4
  %v595 = vsel %vm324, %v585, %v593
  %v596 = vsel %vm324, %v587, %v594
  %599 = vst [vmem:[%s3 + $0x20] sm:$0x77] %v595
  %600 = vst [vmem:[%s3 + $0x28] sm:$0x77] %v596
  %s601 = scalar_lea.vmem %s1, 12
  %v602 = vld [vmem:[%s601] sm:$0xf]
  %v603 = vld [vmem:[%s2] sm:$0x7]
  %605 = vset.pattern.permute.xlu0 0
  %606 = vperm.xlu0 %605, %v603
  %v607 = vpop.permute.xlu0 %606
  %610 = vst [vmem:[#allocation1] ss:$4 sm:$0xff] %v602
  %v611 = vld.sshfl [vmem:[#allocation1] sm:$0xff pattern:$0x73625140]
  %v612 = vld.sshfl [vmem:[#allocation1 + $0x8] sm:$0xff pattern:$0x73625140]
  %v614 = vsel %vm207, %v612, 0
  %616 = vmatpush.bf16.msra.mxu0 %v187
  %617 = vmatpush.bf16.msra.mxu0 %v183
  %618 = vmatpush.bf16.msra.mxu0 %v179
  %619 = vmatpush.bf16.msra.mxu0 %v175
  %620 = vmatpush.bf16.msra.mxu0 %v171
  %621 = vmatpush.bf16.msra.mxu0 %v167
  %622 = vmatpush.bf16.msra.mxu0 %v163
  %623 = vmatpush.bf16.msra.mxu0 %v159
  %624 = vmatmul.bf16.gmra.mxu0 %v611
  %v625 = vpop.f32.mrf.mxu0
  %v626 = vadd.f32 %v607, %v625
  %v627 = vpop.f32.mrf.mxu0
  %628 = vdwg.mxu0
  %629 = vmatpush.bf16.msra.mxu0 0
  %630 = vmatpush.bf16.msra.mxu0 0
  %631 = vmatpush.bf16.msra.mxu0 0
  %632 = vmatpush.bf16.msra.mxu0 0
  %633 = vmatpush.bf16.msra.mxu0 0
  %634 = vmatpush.bf16.msra.mxu0 0
  %635 = vmatpush.bf16.msra.mxu0 0
  %636 = vmatpush.bf16.msra.mxu0 %v191
  %637 = vmatmul.bf16.gmra.mxu0 %v614
  %v638 = vpop.f32.mrf.mxu0
  %v639 = vadd.f32 %v626, %v638
  %v640 = vpop.f32.mrf.mxu0
  %641 = vdwg.mxu0
  %642 = vmatpush.bf16.msra.mxu0 %v188
  %643 = vmatpush.bf16.msra.mxu0 %v184
  %644 = vmatpush.bf16.msra.mxu0 %v180
  %645 = vmatpush.bf16.msra.mxu0 %v176
  %646 = vmatpush.bf16.msra.mxu0 %v172
  %647 = vmatpush.bf16.msra.mxu0 %v168
  %648 = vmatpush.bf16.msra.mxu0 %v164
  %649 = vmatpush.bf16.msra.mxu0 %v160
  %650 = vmatmul.bf16.gmra.mxu0 %v611
  %v651 = vpop.f32.mrf.mxu0
  %v652 = vadd.f32 %v607, %v651
  %v653 = vpop.f32.mrf.mxu0
  %654 = vdwg.mxu0
  %655 = vmatpush.bf16.msra.mxu0 0
  %656 = vmatpush.bf16.msra.mxu0 0
  %657 = vmatpush.bf16.msra.mxu0 0
  %658 = vmatpush.bf16.msra.mxu0 0
  %659 = vmatpush.bf16.msra.mxu0 0
  %660 = vmatpush.bf16.msra.mxu0 0
  %661 = vmatpush.bf16.msra.mxu0 0
  %662 = vmatpush.bf16.msra.mxu0 %v192
  %663 = vmatmul.bf16.gmra.mxu0 %v614
  %v664 = vpop.f32.mrf.mxu0
  %v665 = vadd.f32 %v652, %v664
  %v666 = vpop.f32.mrf.mxu0
  %667 = vdwg.mxu0
  %668 = vmatpush.bf16.msra.mxu0 %v189
  %669 = vmatpush.bf16.msra.mxu0 %v185
  %670 = vmatpush.bf16.msra.mxu0 %v181
  %671 = vmatpush.bf16.msra.mxu0 %v177
  %672 = vmatpush.bf16.msra.mxu0 %v173
  %673 = vmatpush.bf16.msra.mxu0 %v169
  %674 = vmatpush.bf16.msra.mxu0 %v165
  %675 = vmatpush.bf16.msra.mxu0 %v161
  %676 = vmatmul.bf16.gmra.mxu0 %v611
  %v677 = vpop.f32.mrf.mxu0
  %v678 = vadd.f32 %v607, %v677
  %v679 = vpop.f32.mrf.mxu0
  %680 = vdwg.mxu0
  %681 = vmatpush.bf16.msra.mxu0 0
  %682 = vmatpush.bf16.msra.mxu0 0
  %683 = vmatpush.bf16.msra.mxu0 0
  %684 = vmatpush.bf16.msra.mxu0 0
  %685 = vmatpush.bf16.msra.mxu0 0
  %686 = vmatpush.bf16.msra.mxu0 0
  %687 = vmatpush.bf16.msra.mxu0 0
  %688 = vmatpush.bf16.msra.mxu0 %v193
  %689 = vmatmul.bf16.gmra.mxu0 %v614
  %v690 = vpop.f32.mrf.mxu0
  %v691 = vadd.f32 %v678, %v690
  %v692 = vpop.f32.mrf.mxu0
  %693 = vdwg.mxu0
  %694 = vmatpush.bf16.msra.mxu0 %v190
  %695 = vmatpush.bf16.msra.mxu0 %v186
  %696 = vmatpush.bf16.msra.mxu0 %v182
  %697 = vmatpush.bf16.msra.mxu0 %v178
  %698 = vmatpush.bf16.msra.mxu0 %v174
  %699 = vmatpush.bf16.msra.mxu0 %v170
  %700 = vmatpush.bf16.msra.mxu0 %v166
  %701 = vmatpush.bf16.msra.mxu0 %v162
  %702 = vmatmul.bf16.gmra.mxu0 %v611
  %v703 = vpop.f32.mrf.mxu0
  %v704 = vadd.f32 %v607, %v703
  %v705 = vpop.f32.mrf.mxu0
  %706 = vdwg.mxu0
  %707 = vmatpush.bf16.msra.mxu0 0
  %708 = vmatpush.bf16.msra.mxu0 0
  %709 = vmatpush.bf16.msra.mxu0 0
  %710 = vmatpush.bf16.msra.mxu0 0
  %711 = vmatpush.bf16.msra.mxu0 0
  %712 = vmatpush.bf16.msra.mxu0 0
  %713 = vmatpush.bf16.msra.mxu0 0
  %714 = vmatpush.bf16.msra.mxu0 %v194
  %715 = vmatmul.bf16.gmra.mxu0 %v614
  %v716 = vpop.f32.mrf.mxu0
  %v717 = vadd.f32 %v704, %v716
  %v718 = vpop.f32.mrf.mxu0
  %719 = vdwg.mxu0
  %v720 = vtanh.pop %v639
  %v721 = vtanh.pop %v665
  %v722 = vtanh.pop %v691
  %v723 = vtanh.pop %v717
  %v728 = vrot.slane %v721, 4
  %v729 = vrot.slane %v723, 4
  %v730 = vsel %vm324, %v720, %v728
  %v731 = vsel %vm324, %v722, %v729
  %734 = vst [vmem:[%s3 + $0x30] sm:$0x77] %v730
  %735 = vst [vmem:[%s3 + $0x38] sm:$0x77] %v731
  // Predicated region
  $region14: #{unet_forward.19} parent=0 // pred_check
    _
  $region15: #{unet_forward.19} parent=0 // pred_check_branch
    %737 = sbr.rel (0) target = $region17
  $region16: #{unet_forward.19} parent=0 // pred_region
    _
  $region17: #{unet_forward.19} parent=0 // pred_fallthru
    _
  // Predicated region
  $region18: #{unet_forward.19} parent=0 // pred_check
    _
  $region19: #{unet_forward.19} parent=0 // pred_check_branch
    %739 = sbr.rel (0) target = $region21
  $region20: #{unet_forward.19} parent=0 // pred_region
    _
  $region21: #{unet_forward.19} parent=0 // pred_fallthru
    _

</llo_original>
